<compile_context>
chip_gen: v5e
topology: v5e:2x2
jax: 0.10.0
libtpu: 0.0.40
codegen_flags: <defaults>
</compile_context>

<pallas_src>
import functools

import jax
import jax.numpy as jnp
from jax import lax
from jax.experimental import pallas as pl
from jax.experimental.pallas import tpu as pltpu

EPS = 1e-5
LANE = 128
# 128 MiB physical VMEM on v5e/v6e; on v7x (64 MiB) keep this <= ~48 MiB.
VMEM_LIMIT = 64 * 1024 * 1024
# Per-grid-step working-set target used to size B_TILE (includes double
# buffering).  Conservative so the same sizing also fits v7x.
BLOCK_BUDGET = 24 * 1024 * 1024


def _round_up(n, m):
    return ((n + m - 1) // m) * m


def _pick_btile(n, per_image_bytes, fixed_bytes=0):
    """Largest divisor of n whose working set fits the VMEM budget."""
    budget = max(BLOCK_BUDGET - fixed_bytes, per_image_bytes)
    bt = 1
    for d in range(1, n + 1):
        if n % d == 0 and d * per_image_bytes <= budget:
            bt = d
    return bt


# ---------------------------------------------------------------------------
# Kernel 1: 3x3 conv (pad=1, bias=False) + per-block BatchNorm partial stats.
# ---------------------------------------------------------------------------
def _conv_stats_kernel(x_ref, w_ref, y_ref, stat_ref, *, H, W):
    """Grid: (N // B_TILE,), "parallel" (stats are per-block partials).

    x_ref   : (B, (H+4)*W, Cin)  bf16  H-padded (2 rows top/bottom), flattened
    w_ref   : (9, Cin, Cout)     bf16  per-tap weights, tap k = dy*3 + dx
    y_ref   : (B, H*W, Cout)     bf16  pre-BN conv output for this block
    stat_ref: (2, Cout)          f32   [sum; sum of squares] over B*H*W rows
    """
    B = x_ref.shape[0]
    cin = x_ref.shape[-1]
    cout = w_ref.shape[-1]
    HW = H * W
    M = B * HW

    # Column index of every output row -> masks for the W-border taps
    # (H borders are handled by the zero padding rows themselves).
    col = lax.broadcasted_iota(jnp.int32, (M, 1), 0) % W
    left_ok = col != 0          # dx == 0 reads pixel (w-1): invalid at w == 0
    right_ok = col != (W - 1)   # dx == 2 reads pixel (w+1): invalid at w == W-1

    # TODO(synk): on v6e/v7x the 256-deep MXU is only half filled at K=128;
    # staging two taps into one (M, 2*Cin) buffer would halve MXU pushes.
    acc = jnp.zeros((M, cout), jnp.float32)
    for dy in range(3):
        for dx in range(3):
            start = (dy + 1) * W + dx - 1                     # static offset
            tap = x_ref[:, pl.ds(start, HW), :].reshape(M, cin)   # bf16
            if dx == 0:
                tap = jnp.where(left_ok, tap, jnp.zeros_like(tap))
            elif dx == 2:
                tap = jnp.where(right_ok, tap, jnp.zeros_like(tap))
            acc = acc + jnp.dot(tap, w_ref[dy * 3 + dx],
                                preferred_element_type=jnp.float32)

    y_ref[...] = acc.reshape(B, HW, cout).astype(y_ref.dtype)

    # Per-block partial BN statistics (f32).  No carried accumulator, so the
    # batch grid axis stays "parallel" (megacore on v7x).  Note: E[x^2]-E[x]^2
    # in f32 can lose precision when |mean| >> std; the epilogue clamps var>=0.
    stat_ref[0:1, :] = jnp.sum(acc, axis=0, keepdims=True)
    stat_ref[1:2, :] = jnp.sum(acc * acc, axis=0, keepdims=True)


def conv3x3_stats(x_pad_flat, w_taps, n, h, w):
    """x (N,(H+4)*W,Cin) bf16, w (9,Cin,Cout) bf16
    -> y (N,H*W,Cout) bf16, stats (nblk,2,Cout) f32 partial sums."""
    cin = x_pad_flat.shape[-1]
    cout = w_taps.shape[-1]
    hw = h * w
    per_img = (2 * ((h + 4) * w * cin * 2)       # input block, double-buffered
               + 2 * (hw * cout * 2)             # bf16 output block, d-buffered
               + hw * cout * 4)                  # f32 accumulator
    wbytes = 2 * (9 * cin * cout * 2)
    bt = _pick_btile(n, per_img, fixed_bytes=wbytes)
    nblk = n // bt

    kernel = functools.partial(_conv_stats_kernel, H=h, W=w)
    y, stats = pl.pallas_call(
        kernel,
        grid=(nblk,),
        in_specs=[
            pl.BlockSpec((bt, (h + 4) * w, cin), lambda i: (i, 0, 0)),
            pl.BlockSpec((9, cin, cout), lambda i: (0, 0, 0)),
        ],
        out_specs=(
            pl.BlockSpec((bt, hw, cout), lambda i: (i, 0, 0)),
            pl.BlockSpec((2, cout), lambda i: (i, 0)),
        ),
        out_shape=(
            jax.ShapeDtypeStruct((n, hw, cout), jnp.bfloat16),
            jax.ShapeDtypeStruct((nblk * 2, cout), jnp.float32),
        ),
        compiler_params=pltpu.CompilerParams(
            dimension_semantics=("parallel",),
            vmem_limit_bytes=VMEM_LIMIT,
        ),
    )(x_pad_flat, w_taps)
    return y, stats.reshape(nblk, 2, cout)


# ---------------------------------------------------------------------------
# Kernel 2: BN(train) + ReLU epilogue, optional fused 2x2 pool, optional
#           H-padded output layout (so the next conv needs no jnp.pad).
# ---------------------------------------------------------------------------
def _bn_act_kernel(y_ref, stat_ref, g_ref, b_ref, o_ref, *,
                   count, H, W, pool, pad_out):
    """y_ref (B,H*W,C) bf16; stat_ref (nblk,2,C) f32 partials; g/b (1,C) f32.
    o_ref: (B, R, C) bf16 where R = rows(+4*Wn padding rows if pad_out)."""
    B = y_ref.shape[0]
    C = y_ref.shape[-1]
    HW = H * W

    inv = 1.0 / count
    stats = jnp.sum(stat_ref[...], axis=0)               # (2, C) global sums
    mean = stats[0] * inv                                 # (C,)
    var = jnp.maximum(stats[1] * inv - mean * mean, 0.0)
    scale = g_ref[0] * lax.rsqrt(var + EPS)
    shift = b_ref[0] - mean * scale

    # BN + ReLU in f32 (stats come from the f32 conv accumulator; y itself is
    # bf16-rounded -> tiny, documented inconsistency vs. the reference).
    z = jnp.maximum(y_ref[...].astype(jnp.float32) * scale + shift, 0.0)

    if pool is None:
        out = z
        wn, interior = W, HW
    else:
        ho, wo = H // 2, W // 2
        # Contiguous load already done; pool via value reshapes + reduces
        # (no strided ref slicing -> clean lowering, single vld per block).
        z4 = z.reshape(B, ho, 2 * W, C)                   # row pairs
        top = z4[:, :, :W, :]
        bot = z4[:, :, W:, :]
        if pool == "max":
            r = jnp.maximum(top, bot)
        else:                                             # avg
            r = top + bot
        r = r.reshape(B, ho * wo, 2, C)                   # column pairs
        if pool == "max":
            out = jnp.maximum(r[:, :, 0, :], r[:, :, 1, :])
        else:
            out = (r[:, :, 0, :] + r[:, :, 1, :]) * 0.25
        wn, interior = wo, ho * wo

    out = out.astype(o_ref.dtype)
    if pad_out:
        zero = jnp.zeros((B, 2 * wn, C), o_ref.dtype)
        o_ref[:, pl.ds(0, 2 * wn), :] = zero              # top 2 pad rows
        o_ref[:, pl.ds(2 * wn, interior), :] = out        # interior
        o_ref[:, pl.ds(2 * wn + interior, 2 * wn), :] = zero   # bottom 2 rows
    else:
        o_ref[...] = out


def bn_act(y, stats, gamma, beta, n, h, w, *, pool=None, pad_out=True):
    """Returns (activation, ho, wo).  activation is (N, rows, C) bf16 where
    rows = (ho+4)*wo if pad_out (ready for the next conv) else ho*wo."""
    c = y.shape[-1]
    hw = h * w
    ho, wo = (h, w) if pool is None else (h // 2, w // 2)
    out_rows = (ho + 4) * wo if pad_out else ho * wo
    per_img = 2 * (hw * c * 2) + 2 * (out_rows * c * 2)
    bt = _pick_btile(n, per_img)
    nblk_s = stats.shape[0]

    kernel = functools.partial(_bn_act_kernel, count=float(n * hw),
                               H=h, W=w, pool=pool, pad_out=pad_out)
    out = pl.pallas_call(
        kernel,
        grid=(n // bt,),
        in_specs=[
            pl.BlockSpec((bt, hw, c), lambda i: (i, 0, 0)),
            pl.BlockSpec((nblk_s, 2, c), lambda i: (0, 0, 0)),
            pl.BlockSpec((1, c), lambda i: (0, 0)),
            pl.BlockSpec((1, c), lambda i: (0, 0)),
        ],
        out_specs=pl.BlockSpec((bt, out_rows, c), lambda i: (i, 0, 0)),
        out_shape=jax.ShapeDtypeStruct((n, out_rows, c), jnp.bfloat16),
        compiler_params=pltpu.CompilerParams(
            dimension_semantics=("parallel",),
            vmem_limit_bytes=VMEM_LIMIT,
        ),
    )(y, stats, gamma, beta)
    return out, ho, wo


# ---------------------------------------------------------------------------
# Kernel 3: classifier  MaskedLinear -> BatchNorm1d(train) -> ReLU -> Linear.
# ---------------------------------------------------------------------------
_VMEM = pl.BlockSpec(memory_space=pltpu.MemorySpace.VMEM)


def _classifier_kernel(x_ref, w1_ref, b1_ref, g_ref, be_ref, w2_ref, b2_ref,
                       o_ref):
    h = jnp.dot(x_ref[...], w1_ref[...],
                preferred_element_type=jnp.float32) + b1_ref[...]
    nrows = h.shape[0]
    mean = jnp.sum(h, axis=0, keepdims=True) / nrows
    var = jnp.sum((h - mean) ** 2, axis=0, keepdims=True) / nrows
    h = (h - mean) * lax.rsqrt(var + EPS) * g_ref[...] + be_ref[...]
    h = jnp.maximum(h, 0.0).astype(w2_ref.dtype)
    o_ref[...] = jnp.dot(h, w2_ref[...],
                         preferred_element_type=jnp.float32) + b2_ref[...]


def classifier(x, w1, b1, g, be, w2, b2):
    n, nc_pad = x.shape[0], w2.shape[1]
    return pl.pallas_call(
        _classifier_kernel,
        out_shape=jax.ShapeDtypeStruct((n, nc_pad), jnp.float32),
        in_specs=[_VMEM] * 7,
        out_specs=_VMEM,
    )(x, w1, b1, g, be, w2, b2)


# ---------------------------------------------------------------------------
# Parameters (constructor-compatible random init, channel-padded to 128 lanes)
# ---------------------------------------------------------------------------
def init_params(key, cfg, *, in_hw, num_classes=10, hidden=512):
    # NOTE: padding every channel count to 128 is wasteful for cfg entries of
    # 16/32/64; accepted here for lane-dense stores (documented review item).
    params = {"conv": []}
    cin_real, cin_pad = 3, 3
    h = in_hw
    for v in cfg:
        if v == "M":
            h //= 2
            continue
        cout_pad = _round_up(v, LANE)
        key, k1 = jax.random.split(key)
        fan_in = 9 * cin_real
        wk = jax.random.normal(k1, (9, cin_real, v), jnp.float32) / jnp.sqrt(fan_in)
        wk = jnp.pad(wk, ((0, 0), (0, cin_pad - cin_real), (0, cout_pad - v)))
        gamma = jnp.pad(jnp.full((1, v), 0.5, jnp.float32),      # BN2d weight=0.5
                        ((0, 0), (0, cout_pad - v)))             # padded ch -> 0
        beta = jnp.zeros((1, cout_pad), jnp.float32)             # BN2d bias=0
        params["conv"].append((wk.astype(jnp.bfloat16), gamma, beta))
        cin_real, cin_pad = v, cout_pad
    h //= 2                                                      # final AvgPool2d(2)

    key, k1, k2, k3, k4 = jax.random.split(key, 5)
    nc_pad = _round_up(num_classes, LANE)
    f_real = cin_real * h * h
    # w1 built directly in NHWC-flatten order (h, w, c_pad) -> no runtime
    # transpose before the classifier; padded-channel rows are zero.
    w1 = jax.random.normal(k1, (h, h, cin_real, hidden), jnp.float32) / jnp.sqrt(f_real)
    w1 = jnp.pad(w1, ((0, 0), (0, 0), (0, cin_pad - cin_real), (0, 0)))
    w1 = w1.reshape(h * h * cin_pad, hidden)
    b1 = jax.random.normal(k2, (1, hidden), jnp.float32) * 0.01
    g1 = jnp.ones((1, hidden), jnp.float32)                      # BN1d defaults
    be1 = jnp.zeros((1, hidden), jnp.float32)
    w2 = jax.random.normal(k3, (hidden, num_classes), jnp.float32) / jnp.sqrt(hidden)
    w2 = jnp.pad(w2, ((0, 0), (0, nc_pad - num_classes)))
    b2 = jnp.pad(jax.random.normal(k4, (1, num_classes), jnp.float32) * 0.01,
                 ((0, 0), (0, nc_pad - num_classes)))
    params["cls"] = (w1.astype(jnp.bfloat16), b1, g1, be1,
                     w2.astype(jnp.bfloat16), b2)
    return params


# ---------------------------------------------------------------------------
# Forward pass
# ---------------------------------------------------------------------------
def masked_vgg_forward(x_nchw, params, cfg, num_classes=10):
    if cfg[0] == "M" or cfg[-1] == "M" or any(
            cfg[i] == "M" and cfg[i - 1] == "M" for i in range(1, len(cfg))):
        # TODO(synk): standalone pooling for an 'M' that does not follow a conv
        # (never occurs in defaultcfg) is not implemented.
        raise NotImplementedError("every 'M' must follow a conv entry")

    # NCHW -> NHWC (channels on the lane axis), bf16 activations.  Only the
    # first layer pads in the wrapper; every later layer receives the padded
    # layout directly from the fused epilogue.
    x = jnp.transpose(x_nchw, (0, 2, 3, 1)).astype(jnp.bfloat16)
    n, h, w, cin0 = x.shape
    xp = jnp.pad(x, ((0, 0), (2, 2), (0, 0), (0, 0))).reshape(n, (h + 4) * w, cin0)

    conv_params = params["conv"]
    ci, i = 0, 0
    feat3 = None
    while i < len(cfg):
        w_taps, gamma, beta = conv_params[ci]
        ci += 1
        # TODO(synk): first layer (Cin=3) could use a single K=27 im2col matmul
        # instead of nine K=3 matmuls; kept on the generic path for simplicity.
        y, stats = conv3x3_stats(xp, w_taps, n, h, w)
        nxt = cfg[i + 1] if i + 1 < len(cfg) else None
        if nxt == "M":                                    # fuse MaxPool2d(2)
            xp, h, w = bn_act(y, stats, gamma, beta, n, h, w,
                              pool="max", pad_out=True)
            i += 2
        elif i + 1 == len(cfg):                           # fuse final AvgPool2d(2)
            feat3, h, w = bn_act(y, stats, gamma, beta, n, h, w,
                                 pool="avg", pad_out=False)
            i += 1
        else:
            xp, h, w = bn_act(y, stats, gamma, beta, n, h, w,
                              pool=None, pad_out=True)
            i += 1

    # NHWC flatten (w1 rows were permuted at init to match, so this equals the
    # PyTorch x.view(N, -1) semantics with no runtime transpose).
    feat = feat3.reshape(n, -1)
    logits = classifier(feat, *params["cls"])
    return logits[:, :num_classes]                        # drop class padding


# ---------------------------------------------------------------------------
if __name__ == "__main__":
    # Small constructor-compatible cfg: spatial 8 ->8 ->8 -M-> 4 -M-> 2
    # -AvgPool2d(2)-> 1, so the flatten dim equals cfg[-1], matching
    # MaskedLinear(cfg[-1] * 1, 512) for cifar10.  Exercises all three
    # epilogue variants (plain, +maxpool, +avgpool).
    cfg = (16, 16, "M", 32, "M", 64)
    key = jax.random.PRNGKey(0)
    kx, kp = jax.random.split(key)
    x = jax.random.normal(kx, (2, 3, 8, 8), jnp.float32)   # NCHW like PyTorch
    params = init_params(kp, cfg, in_hw=8, num_classes=10, hidden=512)

    fwd = jax.jit(functools.partial(masked_vgg_forward, cfg=cfg, num_classes=10))
    y = fwd(x, params)
    y = jax.block_until_ready(y)
    assert y.shape == (2, 10), y.shape
    assert bool(jnp.all(jnp.isfinite(y)))
    print("KERNEL_OK")
</pallas_src>

<mosaic_0001>
module attributes {stable_mosaic.version = 11 : i64} {
  func.func @_conv_stats_kernel(%arg0: i32, %arg1: memref<2x96x3xbf16, #tpu.memory_space<vmem>>, %arg2: memref<9x3x128xbf16, #tpu.memory_space<vmem>>, %arg3: memref<2x64x128xbf16, #tpu.memory_space<vmem>>, %arg4: memref<2x128xf32, #tpu.memory_space<vmem>>) attributes {dimension_semantics = [#tpu.dimension_semantics<parallel>], iteration_bounds = array<i64: 1>, scalar_prefetch = 0 : i64, scratch_operands = 0 : i64, tpu.core_type = #tpu.core_type<tc>, window_params = [{transform_indices = @transform_0, window_bounds = array<i64: 2, 96, 3>}, {pipeline_mode = #tpu.pipeline_mode<synchronous>, transform_indices = @transform_1, window_bounds = array<i64: 9, 3, 128>}, {transform_indices = @transform_2, window_bounds = array<i64: 2, 64, 128>}, {transform_indices = @transform_3, window_bounds = array<i64: 2, 128>}]} {
    %0 = tpu.iota {dimensions = array<i32: 0>} : vector<128x1xi32>
    %c8_i32 = arith.constant 8 : i32
    %c0_i32 = arith.constant 0 : i32
    %1 = arith.cmpi eq, %c8_i32, %c0_i32 : i32
    %c1_i32 = arith.constant 1 : i32
    %2 = arith.select %1, %c1_i32, %c8_i32 : i32
    %3 = vector.broadcast %2 : i32 to vector<128x1xi32>
    %4 = arith.remsi %0, %3 : vector<128x1xi32>
    %c0_i32_0 = arith.constant 0 : i32
    %5 = vector.broadcast %c0_i32_0 : i32 to vector<128x1xi32>
    %6 = arith.cmpi ne, %4, %5 : vector<128x1xi32>
    %c0_i32_1 = arith.constant 0 : i32
    %7 = vector.broadcast %c0_i32_1 : i32 to vector<128x1xi32>
    %8 = arith.cmpi slt, %4, %7 : vector<128x1xi32>
    %c0_i32_2 = arith.constant 0 : i32
    %9 = arith.cmpi slt, %2, %c0_i32_2 : i32
    %10 = vector.broadcast %9 : i1 to vector<128x1xi1>
    %11 = vector.broadcast %10 : vector<128x1xi1> to vector<128x1xi1>
    %12 = arith.xori %8, %11 : vector<128x1xi1>
    %13 = arith.andi %12, %6 : vector<128x1xi1>
    %14 = vector.broadcast %2 : i32 to vector<128x1xi32>
    %15 = arith.addi %4, %14 : vector<128x1xi32>
    %16 = arith.select %13, %15, %4 : vector<128x1xi1>, vector<128x1xi32>
    %c0_i32_3 = arith.constant 0 : i32
    %17 = vector.broadcast %c0_i32_3 : i32 to vector<128x1xi32>
    %18 = arith.cmpi ne, %16, %17 : vector<128x1xi32>
    %c7_i32 = arith.constant 7 : i32
    %19 = vector.broadcast %c7_i32 : i32 to vector<128x1xi32>
    %20 = arith.cmpi ne, %16, %19 : vector<128x1xi32>
    %cst = arith.constant 0.000000e+00 : f32
    %21 = vector.broadcast %cst : f32 to vector<128x128xf32>
    %c0 = arith.constant 0 : index
    %c7 = arith.constant 7 : index
    %c0_4 = arith.constant 0 : index
    %22 = vector.load %arg1[%c0, %c7, %c0_4] : memref<2x96x3xbf16, #tpu.memory_space<vmem>>, vector<2x64x3xbf16>
    %23 = vector.shape_cast %22 : vector<2x64x3xbf16> to vector<128x3xbf16>
    %cst_5 = arith.constant 0.000000e+00 : bf16
    %24 = vector.broadcast %cst_5 : bf16 to vector<128x3xbf16>
    %25 = vector.shape_cast %18 : vector<128x1xi1> to vector<128x1xi1>
    %26 = vector.broadcast %25 : vector<128x1xi1> to vector<128x3xi1>
    %27 = arith.select %26, %23, %24 : vector<128x3xi1>, vector<128x3xbf16>
    %c0_6 = arith.constant 0 : index
    %c0_7 = arith.constant 0 : index
    %c0_8 = arith.constant 0 : index
    %28 = vector.load %arg2[%c0_6, %c0_7, %c0_8] : memref<9x3x128xbf16, #tpu.memory_space<vmem>>, vector<1x3x128xbf16>
    %29 = vector.shape_cast %28 : vector<1x3x128xbf16> to vector<3x128xbf16>
    %cst_9 = arith.constant dense<0.000000e+00> : vector<128x128xf32>
    %30 = tpu.matmul %27, %29, %cst_9 {dimension_numbers = #tpu.dot_dimension_numbers<[1], [0], [0], [1], [0, 0, 1, 1], [], []>} : vector<128x3xbf16>, vector<3x128xbf16>, vector<128x128xf32> -> vector<128x128xf32>
    %31 = arith.addf %21, %30 : vector<128x128xf32>
    %c0_10 = arith.constant 0 : index
    %c8 = arith.constant 8 : index
    %c0_11 = arith.constant 0 : index
    %32 = vector.load %arg1[%c0_10, %c8, %c0_11] : memref<2x96x3xbf16, #tpu.memory_space<vmem>>, vector<2x64x3xbf16>
    %33 = vector.shape_cast %32 : vector<2x64x3xbf16> to vector<128x3xbf16>
    %c1 = arith.constant 1 : index
    %c0_12 = arith.constant 0 : index
    %c0_13 = arith.constant 0 : index
    %34 = vector.load %arg2[%c1, %c0_12, %c0_13] : memref<9x3x128xbf16, #tpu.memory_space<vmem>>, vector<1x3x128xbf16>
    %35 = vector.shape_cast %34 : vector<1x3x128xbf16> to vector<3x128xbf16>
    %cst_14 = arith.constant dense<0.000000e+00> : vector<128x128xf32>
    %36 = tpu.matmul %33, %35, %cst_14 {dimension_numbers = #tpu.dot_dimension_numbers<[1], [0], [0], [1], [0, 0, 1, 1], [], []>} : vector<128x3xbf16>, vector<3x128xbf16>, vector<128x128xf32> -> vector<128x128xf32>
    %37 = arith.addf %31, %36 : vector<128x128xf32>
    %c0_15 = arith.constant 0 : index
    %c9 = arith.constant 9 : index
    %c0_16 = arith.constant 0 : index
    %38 = vector.load %arg1[%c0_15, %c9, %c0_16] : memref<2x96x3xbf16, #tpu.memory_space<vmem>>, vector<2x64x3xbf16>
    %39 = vector.shape_cast %38 : vector<2x64x3xbf16> to vector<128x3xbf16>
    %cst_17 = arith.constant 0.000000e+00 : bf16
    %40 = vector.broadcast %cst_17 : bf16 to vector<128x3xbf16>
    %41 = vector.shape_cast %20 : vector<128x1xi1> to vector<128x1xi1>
    %42 = vector.broadcast %41 : vector<128x1xi1> to vector<128x3xi1>
    %43 = arith.select %42, %39, %40 : vector<128x3xi1>, vector<128x3xbf16>
    %c2 = arith.constant 2 : index
    %c0_18 = arith.constant 0 : index
    %c0_19 = arith.constant 0 : index
    %44 = vector.load %arg2[%c2, %c0_18, %c0_19] : memref<9x3x128xbf16, #tpu.memory_space<vmem>>, vector<1x3x128xbf16>
    %45 = vector.shape_cast %44 : vector<1x3x128xbf16> to vector<3x128xbf16>
    %cst_20 = arith.constant dense<0.000000e+00> : vector<128x128xf32>
    %46 = tpu.matmul %43, %45, %cst_20 {dimension_numbers = #tpu.dot_dimension_numbers<[1], [0], [0], [1], [0, 0, 1, 1], [], []>} : vector<128x3xbf16>, vector<3x128xbf16>, vector<128x128xf32> -> vector<128x128xf32>
    %47 = arith.addf %37, %46 : vector<128x128xf32>
    %c0_21 = arith.constant 0 : index
    %c15 = arith.constant 15 : index
    %c0_22 = arith.constant 0 : index
    %48 = vector.load %arg1[%c0_21, %c15, %c0_22] : memref<2x96x3xbf16, #tpu.memory_space<vmem>>, vector<2x64x3xbf16>
    %49 = vector.shape_cast %48 : vector<2x64x3xbf16> to vector<128x3xbf16>
    %cst_23 = arith.constant 0.000000e+00 : bf16
    %50 = vector.broadcast %cst_23 : bf16 to vector<128x3xbf16>
    %51 = vector.shape_cast %18 : vector<128x1xi1> to vector<128x1xi1>
    %52 = vector.broadcast %51 : vector<128x1xi1> to vector<128x3xi1>
    %53 = arith.select %52, %49, %50 : vector<128x3xi1>, vector<128x3xbf16>
    %c3 = arith.constant 3 : index
    %c0_24 = arith.constant 0 : index
    %c0_25 = arith.constant 0 : index
    %54 = vector.load %arg2[%c3, %c0_24, %c0_25] : memref<9x3x128xbf16, #tpu.memory_space<vmem>>, vector<1x3x128xbf16>
    %55 = vector.shape_cast %54 : vector<1x3x128xbf16> to vector<3x128xbf16>
    %cst_26 = arith.constant dense<0.000000e+00> : vector<128x128xf32>
    %56 = tpu.matmul %53, %55, %cst_26 {dimension_numbers = #tpu.dot_dimension_numbers<[1], [0], [0], [1], [0, 0, 1, 1], [], []>} : vector<128x3xbf16>, vector<3x128xbf16>, vector<128x128xf32> -> vector<128x128xf32>
    %57 = arith.addf %47, %56 : vector<128x128xf32>
    %c0_27 = arith.constant 0 : index
    %c16 = arith.constant 16 : index
    %c0_28 = arith.constant 0 : index
    %58 = vector.load %arg1[%c0_27, %c16, %c0_28] : memref<2x96x3xbf16, #tpu.memory_space<vmem>>, vector<2x64x3xbf16>
    %59 = vector.shape_cast %58 : vector<2x64x3xbf16> to vector<128x3xbf16>
    %c4 = arith.constant 4 : index
    %c0_29 = arith.constant 0 : index
    %c0_30 = arith.constant 0 : index
    %60 = vector.load %arg2[%c4, %c0_29, %c0_30] : memref<9x3x128xbf16, #tpu.memory_space<vmem>>, vector<1x3x128xbf16>
    %61 = vector.shape_cast %60 : vector<1x3x128xbf16> to vector<3x128xbf16>
    %cst_31 = arith.constant dense<0.000000e+00> : vector<128x128xf32>
    %62 = tpu.matmul %59, %61, %cst_31 {dimension_numbers = #tpu.dot_dimension_numbers<[1], [0], [0], [1], [0, 0, 1, 1], [], []>} : vector<128x3xbf16>, vector<3x128xbf16>, vector<128x128xf32> -> vector<128x128xf32>
    %63 = arith.addf %57, %62 : vector<128x128xf32>
    %c0_32 = arith.constant 0 : index
    %c17 = arith.constant 17 : index
    %c0_33 = arith.constant 0 : index
    %64 = vector.load %arg1[%c0_32, %c17, %c0_33] : memref<2x96x3xbf16, #tpu.memory_space<vmem>>, vector<2x64x3xbf16>
    %65 = vector.shape_cast %64 : vector<2x64x3xbf16> to vector<128x3xbf16>
    %cst_34 = arith.constant 0.000000e+00 : bf16
    %66 = vector.broadcast %cst_34 : bf16 to vector<128x3xbf16>
    %67 = vector.shape_cast %20 : vector<128x1xi1> to vector<128x1xi1>
    %68 = vector.broadcast %67 : vector<128x1xi1> to vector<128x3xi1>
    %69 = arith.select %68, %65, %66 : vector<128x3xi1>, vector<128x3xbf16>
    %c5 = arith.constant 5 : index
    %c0_35 = arith.constant 0 : index
    %c0_36 = arith.constant 0 : index
    %70 = vector.load %arg2[%c5, %c0_35, %c0_36] : memref<9x3x128xbf16, #tpu.memory_space<vmem>>, vector<1x3x128xbf16>
    %71 = vector.shape_cast %70 : vector<1x3x128xbf16> to vector<3x128xbf16>
    %cst_37 = arith.constant dense<0.000000e+00> : vector<128x128xf32>
    %72 = tpu.matmul %69, %71, %cst_37 {dimension_numbers = #tpu.dot_dimension_numbers<[1], [0], [0], [1], [0, 0, 1, 1], [], []>} : vector<128x3xbf16>, vector<3x128xbf16>, vector<128x128xf32> -> vector<128x128xf32>
    %73 = arith.addf %63, %72 : vector<128x128xf32>
    %c0_38 = arith.constant 0 : index
    %c23 = arith.constant 23 : index
    %c0_39 = arith.constant 0 : index
    %74 = vector.load %arg1[%c0_38, %c23, %c0_39] : memref<2x96x3xbf16, #tpu.memory_space<vmem>>, vector<2x64x3xbf16>
    %75 = vector.shape_cast %74 : vector<2x64x3xbf16> to vector<128x3xbf16>
    %cst_40 = arith.constant 0.000000e+00 : bf16
    %76 = vector.broadcast %cst_40 : bf16 to vector<128x3xbf16>
    %77 = vector.shape_cast %18 : vector<128x1xi1> to vector<128x1xi1>
    %78 = vector.broadcast %77 : vector<128x1xi1> to vector<128x3xi1>
    %79 = arith.select %78, %75, %76 : vector<128x3xi1>, vector<128x3xbf16>
    %c6 = arith.constant 6 : index
    %c0_41 = arith.constant 0 : index
    %c0_42 = arith.constant 0 : index
    %80 = vector.load %arg2[%c6, %c0_41, %c0_42] : memref<9x3x128xbf16, #tpu.memory_space<vmem>>, vector<1x3x128xbf16>
    %81 = vector.shape_cast %80 : vector<1x3x128xbf16> to vector<3x128xbf16>
    %cst_43 = arith.constant dense<0.000000e+00> : vector<128x128xf32>
    %82 = tpu.matmul %79, %81, %cst_43 {dimension_numbers = #tpu.dot_dimension_numbers<[1], [0], [0], [1], [0, 0, 1, 1], [], []>} : vector<128x3xbf16>, vector<3x128xbf16>, vector<128x128xf32> -> vector<128x128xf32>
    %83 = arith.addf %73, %82 : vector<128x128xf32>
    %c0_44 = arith.constant 0 : index
    %c24 = arith.constant 24 : index
    %c0_45 = arith.constant 0 : index
    %84 = vector.load %arg1[%c0_44, %c24, %c0_45] : memref<2x96x3xbf16, #tpu.memory_space<vmem>>, vector<2x64x3xbf16>
    %85 = vector.shape_cast %84 : vector<2x64x3xbf16> to vector<128x3xbf16>
    %c7_46 = arith.constant 7 : index
    %c0_47 = arith.constant 0 : index
    %c0_48 = arith.constant 0 : index
    %86 = vector.load %arg2[%c7_46, %c0_47, %c0_48] : memref<9x3x128xbf16, #tpu.memory_space<vmem>>, vector<1x3x128xbf16>
    %87 = vector.shape_cast %86 : vector<1x3x128xbf16> to vector<3x128xbf16>
    %cst_49 = arith.constant dense<0.000000e+00> : vector<128x128xf32>
    %88 = tpu.matmul %85, %87, %cst_49 {dimension_numbers = #tpu.dot_dimension_numbers<[1], [0], [0], [1], [0, 0, 1, 1], [], []>} : vector<128x3xbf16>, vector<3x128xbf16>, vector<128x128xf32> -> vector<128x128xf32>
    %89 = arith.addf %83, %88 : vector<128x128xf32>
    %c0_50 = arith.constant 0 : index
    %c25 = arith.constant 25 : index
    %c0_51 = arith.constant 0 : index
    %90 = vector.load %arg1[%c0_50, %c25, %c0_51] : memref<2x96x3xbf16, #tpu.memory_space<vmem>>, vector<2x64x3xbf16>
    %91 = vector.shape_cast %90 : vector<2x64x3xbf16> to vector<128x3xbf16>
    %cst_52 = arith.constant 0.000000e+00 : bf16
    %92 = vector.broadcast %cst_52 : bf16 to vector<128x3xbf16>
    %93 = vector.shape_cast %20 : vector<128x1xi1> to vector<128x1xi1>
    %94 = vector.broadcast %93 : vector<128x1xi1> to vector<128x3xi1>
    %95 = arith.select %94, %91, %92 : vector<128x3xi1>, vector<128x3xbf16>
    %c8_53 = arith.constant 8 : index
    %c0_54 = arith.constant 0 : index
    %c0_55 = arith.constant 0 : index
    %96 = vector.load %arg2[%c8_53, %c0_54, %c0_55] : memref<9x3x128xbf16, #tpu.memory_space<vmem>>, vector<1x3x128xbf16>
    %97 = vector.shape_cast %96 : vector<1x3x128xbf16> to vector<3x128xbf16>
    %cst_56 = arith.constant dense<0.000000e+00> : vector<128x128xf32>
    %98 = tpu.matmul %95, %97, %cst_56 {dimension_numbers = #tpu.dot_dimension_numbers<[1], [0], [0], [1], [0, 0, 1, 1], [], []>} : vector<128x3xbf16>, vector<3x128xbf16>, vector<128x128xf32> -> vector<128x128xf32>
    %99 = arith.addf %89, %98 : vector<128x128xf32>
    %100 = vector.shape_cast %99 : vector<128x128xf32> to vector<2x64x128xf32>
    %101 = arith.truncf %100 : vector<2x64x128xf32> to vector<2x64x128xbf16>
    %c0_57 = arith.constant 0 : index
    %c0_58 = arith.constant 0 : index
    %c0_59 = arith.constant 0 : index
    %102 = vector.load %arg3[%c0_57, %c0_58, %c0_59] : memref<2x64x128xbf16, #tpu.memory_space<vmem>>, vector<2x64x128xbf16>
    tpu.vector_store %arg3[%c0_57, %c0_58, %c0_59], %101 {strides = array<i32>} : memref<2x64x128xbf16, #tpu.memory_space<vmem>>, vector<2x64x128xbf16>,
    %cst_60 = arith.constant dense<0.000000e+00> : vector<128xf32>
    %103 = vector.multi_reduction <add>, %99, %cst_60 [0] : vector<128x128xf32> to vector<128xf32>
    %104 = vector.shape_cast %103 : vector<128xf32> to vector<1x128xf32>
    %c0_61 = arith.constant 0 : index
    %c0_62 = arith.constant 0 : index
    %105 = vector.load %arg4[%c0_61, %c0_62] : memref<2x128xf32, #tpu.memory_space<vmem>>, vector<1x128xf32>
    tpu.vector_store %arg4[%c0_61, %c0_62], %104 {strides = array<i32>} : memref<2x128xf32, #tpu.memory_space<vmem>>, vector<1x128xf32>,
    %106 = arith.mulf %99, %99 : vector<128x128xf32>
    %cst_63 = arith.constant dense<0.000000e+00> : vector<128xf32>
    %107 = vector.multi_reduction <add>, %106, %cst_63 [0] : vector<128x128xf32> to vector<128xf32>
    %108 = vector.shape_cast %107 : vector<128xf32> to vector<1x128xf32>
    %c1_64 = arith.constant 1 : index
    %c0_65 = arith.constant 0 : index
    %109 = vector.load %arg4[%c1_64, %c0_65] : memref<2x128xf32, #tpu.memory_space<vmem>>, vector<1x128xf32>
    tpu.vector_store %arg4[%c1_64, %c0_65], %108 {strides = array<i32>} : memref<2x128xf32, #tpu.memory_space<vmem>>, vector<1x128xf32>,
    return
  }
  func.func @transform_0(%arg0: i32) -> (i32, i32, i32) {
    %c0_i32 = arith.constant 0 : i32
    %c0_i32_0 = arith.constant 0 : i32
    %c0_i32_1 = arith.constant 0 : i32
    return %arg0, %c0_i32, %c0_i32_0 : i32, i32, i32
  }
  func.func @transform_1(%arg0: i32) -> (i32, i32, i32) {
    %c0_i32 = arith.constant 0 : i32
    %c0_i32_0 = arith.constant 0 : i32
    %c0_i32_1 = arith.constant 0 : i32
    %c0_i32_2 = arith.constant 0 : i32
    return %c0_i32, %c0_i32_0, %c0_i32_1 : i32, i32, i32
  }
  func.func @transform_2(%arg0: i32) -> (i32, i32, i32) {
    %c0_i32 = arith.constant 0 : i32
    %c0_i32_0 = arith.constant 0 : i32
    %c0_i32_1 = arith.constant 0 : i32
    return %arg0, %c0_i32, %c0_i32_0 : i32, i32, i32
  }
  func.func @transform_3(%arg0: i32) -> (i32, i32) {
    %c0_i32 = arith.constant 0 : i32
    %c0_i32_0 = arith.constant 0 : i32
    return %arg0, %c0_i32 : i32, i32
  }
}

module attributes {stable_mosaic.version = 11 : i64} {
  func.func @_bn_act_kernel(%arg0: i32, %arg1: memref<2x64x128xbf16, #tpu.memory_space<vmem>>, %arg2: memref<1x2x128xf32, #tpu.memory_space<vmem>>, %arg3: memref<1x128xf32, #tpu.memory_space<vmem>>, %arg4: memref<1x128xf32, #tpu.memory_space<vmem>>, %arg5: memref<2x96x128xbf16, #tpu.memory_space<vmem>>) attributes {dimension_semantics = [#tpu.dimension_semantics<parallel>], iteration_bounds = array<i64: 1>, scalar_prefetch = 0 : i64, scratch_operands = 0 : i64, tpu.core_type = #tpu.core_type<tc>, window_params = [{transform_indices = @transform_0, window_bounds = array<i64: 2, 64, 128>}, {pipeline_mode = #tpu.pipeline_mode<synchronous>, transform_indices = @transform_1, window_bounds = array<i64: 1, 2, 128>}, {pipeline_mode = #tpu.pipeline_mode<synchronous>, transform_indices = @transform_2, window_bounds = array<i64: 1, 128>}, {pipeline_mode = #tpu.pipeline_mode<synchronous>, transform_indices = @transform_3, window_bounds = array<i64: 1, 128>}, {transform_indices = @transform_4, window_bounds = array<i64: 2, 96, 128>}]} {
    %c0 = arith.constant 0 : index
    %c0_0 = arith.constant 0 : index
    %c0_1 = arith.constant 0 : index
    %0 = vector.load %arg2[%c0, %c0_0, %c0_1] : memref<1x2x128xf32, #tpu.memory_space<vmem>>, vector<1x2x128xf32>
    %cst = arith.constant dense<0.000000e+00> : vector<2x128xf32>
    %1 = vector.multi_reduction <add>, %0, %cst [0] : vector<1x2x128xf32> to vector<2x128xf32>
    %2 = vector.extract_strided_slice %1 {offsets = [0, 0], sizes = [1, 128], strides = [1, 1]} : vector<2x128xf32> to vector<1x128xf32>
    %3 = vector.shape_cast %2 : vector<1x128xf32> to vector<128xf32>
    %cst_2 = arith.constant 7.812500e-03 : f32
    %4 = vector.broadcast %cst_2 : f32 to vector<128xf32>
    %5 = arith.mulf %3, %4 : vector<128xf32>
    %6 = vector.extract_strided_slice %1 {offsets = [1, 0], sizes = [1, 128], strides = [1, 1]} : vector<2x128xf32> to vector<1x128xf32>
    %7 = vector.shape_cast %6 : vector<1x128xf32> to vector<128xf32>
    %cst_3 = arith.constant 7.812500e-03 : f32
    %8 = vector.broadcast %cst_3 : f32 to vector<128xf32>
    %9 = arith.mulf %7, %8 : vector<128xf32>
    %10 = arith.mulf %5, %5 : vector<128xf32>
    %11 = arith.subf %9, %10 : vector<128xf32>
    %cst_4 = arith.constant 0.000000e+00 : f32
    %12 = vector.broadcast %cst_4 : f32 to vector<128xf32>
    %13 = arith.maximumf %11, %12 : vector<128xf32>
    %c0_5 = arith.constant 0 : index
    %c0_6 = arith.constant 0 : index
    %14 = vector.load %arg3[%c0_5, %c0_6] : memref<1x128xf32, #tpu.memory_space<vmem>>, vector<1x128xf32>
    %15 = vector.shape_cast %14 : vector<1x128xf32> to vector<128xf32>
    %cst_7 = arith.constant 9.99999974E-6 : f32
    %16 = vector.broadcast %cst_7 : f32 to vector<128xf32>
    %17 = arith.addf %13, %16 : vector<128xf32>
    %18 = math.rsqrt %17 : vector<128xf32>
    %19 = arith.mulf %15, %18 : vector<128xf32>
    %c0_8 = arith.constant 0 : index
    %c0_9 = arith.constant 0 : index
    %20 = vector.load %arg4[%c0_8, %c0_9] : memref<1x128xf32, #tpu.memory_space<vmem>>, vector<1x128xf32>
    %21 = vector.shape_cast %20 : vector<1x128xf32> to vector<128xf32>
    %22 = arith.mulf %5, %19 : vector<128xf32>
    %23 = arith.subf %21, %22 : vector<128xf32>
    %c0_10 = arith.constant 0 : index
    %c0_11 = arith.constant 0 : index
    %c0_12 = arith.constant 0 : index
    %24 = vector.load %arg1[%c0_10, %c0_11, %c0_12] : memref<2x64x128xbf16, #tpu.memory_space<vmem>>, vector<2x64x128xbf16>
    %25 = arith.extf %24 : vector<2x64x128xbf16> to vector<2x64x128xf32>
    %26 = vector.shape_cast %19 : vector<128xf32> to vector<1x1x128xf32>
    %27 = vector.broadcast %26 : vector<1x1x128xf32> to vector<2x64x128xf32>
    %28 = arith.mulf %25, %27 : vector<2x64x128xf32>
    %29 = vector.shape_cast %23 : vector<128xf32> to vector<1x1x128xf32>
    %30 = vector.broadcast %29 : vector<1x1x128xf32> to vector<2x64x128xf32>
    %31 = arith.addf %28, %30 : vector<2x64x128xf32>
    %cst_13 = arith.constant 0.000000e+00 : f32
    %32 = vector.broadcast %cst_13 : f32 to vector<2x64x128xf32>
    %33 = arith.maximumf %31, %32 : vector<2x64x128xf32>
    %34 = arith.truncf %33 : vector<2x64x128xf32> to vector<2x64x128xbf16>
    %cst_14 = arith.constant 0.000000e+00 : bf16
    %35 = vector.broadcast %cst_14 : bf16 to vector<2x16x128xbf16>
    %c0_15 = arith.constant 0 : index
    %c0_16 = arith.constant 0 : index
    %c0_17 = arith.constant 0 : index
    %36 = vector.load %arg5[%c0_15, %c0_16, %c0_17] : memref<2x96x128xbf16, #tpu.memory_space<vmem>>, vector<2x16x128xbf16>
    tpu.vector_store %arg5[%c0_15, %c0_16, %c0_17], %35 {strides = array<i32>} : memref<2x96x128xbf16, #tpu.memory_space<vmem>>, vector<2x16x128xbf16>,
    %c0_18 = arith.constant 0 : index
    %c16 = arith.constant 16 : index
    %c0_19 = arith.constant 0 : index
    %37 = vector.load %arg5[%c0_18, %c16, %c0_19] : memref<2x96x128xbf16, #tpu.memory_space<vmem>>, vector<2x64x128xbf16>
    tpu.vector_store %arg5[%c0_18, %c16, %c0_19], %34 {strides = array<i32>} : memref<2x96x128xbf16, #tpu.memory_space<vmem>>, vector<2x64x128xbf16>,
    %c0_20 = arith.constant 0 : index
    %c80 = arith.constant 80 : index
    %c0_21 = arith.constant 0 : index
    %38 = vector.load %arg5[%c0_20, %c80, %c0_21] : memref<2x96x128xbf16, #tpu.memory_space<vmem>>, vector<2x16x128xbf16>
    tpu.vector_store %arg5[%c0_20, %c80, %c0_21], %35 {strides = array<i32>} : memref<2x96x128xbf16, #tpu.memory_space<vmem>>, vector<2x16x128xbf16>,
    return
  }
  func.func @transform_0(%arg0: i32) -> (i32, i32, i32) {
    %c0_i32 = arith.constant 0 : i32
    %c0_i32_0 = arith.constant 0 : i32
    %c0_i32_1 = arith.constant 0 : i32
    return %arg0, %c0_i32, %c0_i32_0 : i32, i32, i32
  }
  func.func @transform_1(%arg0: i32) -> (i32, i32, i32) {
    %c0_i32 = arith.constant 0 : i32
    %c0_i32_0 = arith.constant 0 : i32
    %c0_i32_1 = arith.constant 0 : i32
    %c0_i32_2 = arith.constant 0 : i32
    return %c0_i32, %c0_i32_0, %c0_i32_1 : i32, i32, i32
  }
  func.func @transform_2(%arg0: i32) -> (i32, i32) {
    %c0_i32 = arith.constant 0 : i32
    %c0_i32_0 = arith.constant 0 : i32
    %c0_i32_1 = arith.constant 0 : i32
    return %c0_i32, %c0_i32_0 : i32, i32
  }
  func.func @transform_3(%arg0: i32) -> (i32, i32) {
    %c0_i32 = arith.constant 0 : i32
    %c0_i32_0 = arith.constant 0 : i32
    %c0_i32_1 = arith.constant 0 : i32
    return %c0_i32, %c0_i32_0 : i32, i32
  }
  func.func @transform_4(%arg0: i32) -> (i32, i32, i32) {
    %c0_i32 = arith.constant 0 : i32
    %c0_i32_0 = arith.constant 0 : i32
    %c0_i32_1 = arith.constant 0 : i32
    return %arg0, %c0_i32, %c0_i32_0 : i32, i32, i32
  }
}

module attributes {stable_mosaic.version = 11 : i64} {
  func.func @_bn_act_kernel(%arg0: i32, %arg1: memref<2x64x128xbf16, #tpu.memory_space<vmem>>, %arg2: memref<1x2x128xf32, #tpu.memory_space<vmem>>, %arg3: memref<1x128xf32, #tpu.memory_space<vmem>>, %arg4: memref<1x128xf32, #tpu.memory_space<vmem>>, %arg5: memref<2x32x128xbf16, #tpu.memory_space<vmem>>) attributes {dimension_semantics = [#tpu.dimension_semantics<parallel>], iteration_bounds = array<i64: 1>, scalar_prefetch = 0 : i64, scratch_operands = 0 : i64, tpu.core_type = #tpu.core_type<tc>, window_params = [{transform_indices = @transform_0, window_bounds = array<i64: 2, 64, 128>}, {pipeline_mode = #tpu.pipeline_mode<synchronous>, transform_indices = @transform_1, window_bounds = array<i64: 1, 2, 128>}, {pipeline_mode = #tpu.pipeline_mode<synchronous>, transform_indices = @transform_2, window_bounds = array<i64: 1, 128>}, {pipeline_mode = #tpu.pipeline_mode<synchronous>, transform_indices = @transform_3, window_bounds = array<i64: 1, 128>}, {transform_indices = @transform_4, window_bounds = array<i64: 2, 32, 128>}]} {
    %c0 = arith.constant 0 : index
    %c0_0 = arith.constant 0 : index
    %c0_1 = arith.constant 0 : index
    %0 = vector.load %arg2[%c0, %c0_0, %c0_1] : memref<1x2x128xf32, #tpu.memory_space<vmem>>, vector<1x2x128xf32>
    %cst = arith.constant dense<0.000000e+00> : vector<2x128xf32>
    %1 = vector.multi_reduction <add>, %0, %cst [0] : vector<1x2x128xf32> to vector<2x128xf32>
    %2 = vector.extract_strided_slice %1 {offsets = [0, 0], sizes = [1, 128], strides = [1, 1]} : vector<2x128xf32> to vector<1x128xf32>
    %3 = vector.shape_cast %2 : vector<1x128xf32> to vector<128xf32>
    %cst_2 = arith.constant 7.812500e-03 : f32
    %4 = vector.broadcast %cst_2 : f32 to vector<128xf32>
    %5 = arith.mulf %3, %4 : vector<128xf32>
    %6 = vector.extract_strided_slice %1 {offsets = [1, 0], sizes = [1, 128], strides = [1, 1]} : vector<2x128xf32> to vector<1x128xf32>
    %7 = vector.shape_cast %6 : vector<1x128xf32> to vector<128xf32>
    %cst_3 = arith.constant 7.812500e-03 : f32
    %8 = vector.broadcast %cst_3 : f32 to vector<128xf32>
    %9 = arith.mulf %7, %8 : vector<128xf32>
    %10 = arith.mulf %5, %5 : vector<128xf32>
    %11 = arith.subf %9, %10 : vector<128xf32>
    %cst_4 = arith.constant 0.000000e+00 : f32
    %12 = vector.broadcast %cst_4 : f32 to vector<128xf32>
    %13 = arith.maximumf %11, %12 : vector<128xf32>
    %c0_5 = arith.constant 0 : index
    %c0_6 = arith.constant 0 : index
    %14 = vector.load %arg3[%c0_5, %c0_6] : memref<1x128xf32, #tpu.memory_space<vmem>>, vector<1x128xf32>
    %15 = vector.shape_cast %14 : vector<1x128xf32> to vector<128xf32>
    %cst_7 = arith.constant 9.99999974E-6 : f32
    %16 = vector.broadcast %cst_7 : f32 to vector<128xf32>
    %17 = arith.addf %13, %16 : vector<128xf32>
    %18 = math.rsqrt %17 : vector<128xf32>
    %19 = arith.mulf %15, %18 : vector<128xf32>
    %c0_8 = arith.constant 0 : index
    %c0_9 = arith.constant 0 : index
    %20 = vector.load %arg4[%c0_8, %c0_9] : memref<1x128xf32, #tpu.memory_space<vmem>>, vector<1x128xf32>
    %21 = vector.shape_cast %20 : vector<1x128xf32> to vector<128xf32>
    %22 = arith.mulf %5, %19 : vector<128xf32>
    %23 = arith.subf %21, %22 : vector<128xf32>
    %c0_10 = arith.constant 0 : index
    %c0_11 = arith.constant 0 : index
    %c0_12 = arith.constant 0 : index
    %24 = vector.load %arg1[%c0_10, %c0_11, %c0_12] : memref<2x64x128xbf16, #tpu.memory_space<vmem>>, vector<2x64x128xbf16>
    %25 = arith.extf %24 : vector<2x64x128xbf16> to vector<2x64x128xf32>
    %26 = vector.shape_cast %19 : vector<128xf32> to vector<1x1x128xf32>
    %27 = vector.broadcast %26 : vector<1x1x128xf32> to vector<2x64x128xf32>
    %28 = arith.mulf %25, %27 : vector<2x64x128xf32>
    %29 = vector.shape_cast %23 : vector<128xf32> to vector<1x1x128xf32>
    %30 = vector.broadcast %29 : vector<1x1x128xf32> to vector<2x64x128xf32>
    %31 = arith.addf %28, %30 : vector<2x64x128xf32>
    %cst_13 = arith.constant 0.000000e+00 : f32
    %32 = vector.broadcast %cst_13 : f32 to vector<2x64x128xf32>
    %33 = arith.maximumf %31, %32 : vector<2x64x128xf32>
    %34 = vector.shape_cast %33 : vector<2x64x128xf32> to vector<2x4x16x128xf32>
    %35 = vector.extract_strided_slice %34 {offsets = [0, 0, 0, 0], sizes = [2, 4, 8, 128], strides = [1, 1, 1, 1]} : vector<2x4x16x128xf32> to vector<2x4x8x128xf32>
    %36 = vector.extract_strided_slice %34 {offsets = [0, 0, 8, 0], sizes = [2, 4, 8, 128], strides = [1, 1, 1, 1]} : vector<2x4x16x128xf32> to vector<2x4x8x128xf32>
    %37 = arith.maximumf %35, %36 : vector<2x4x8x128xf32>
    %38 = vector.shape_cast %37 : vector<2x4x8x128xf32> to vector<2x16x2x128xf32>
    %39 = vector.extract_strided_slice %38 {offsets = [0, 0, 0, 0], sizes = [2, 16, 1, 128], strides = [1, 1, 1, 1]} : vector<2x16x2x128xf32> to vector<2x16x1x128xf32>
    %40 = vector.shape_cast %39 : vector<2x16x1x128xf32> to vector<2x16x128xf32>
    %41 = vector.extract_strided_slice %38 {offsets = [0, 0, 1, 0], sizes = [2, 16, 1, 128], strides = [1, 1, 1, 1]} : vector<2x16x2x128xf32> to vector<2x16x1x128xf32>
    %42 = vector.shape_cast %41 : vector<2x16x1x128xf32> to vector<2x16x128xf32>
    %43 = arith.maximumf %40, %42 : vector<2x16x128xf32>
    %44 = arith.truncf %43 : vector<2x16x128xf32> to vector<2x16x128xbf16>
    %cst_14 = arith.constant 0.000000e+00 : bf16
    %45 = vector.broadcast %cst_14 : bf16 to vector<2x8x128xbf16>
    %c0_15 = arith.constant 0 : index
    %c0_16 = arith.constant 0 : index
    %c0_17 = arith.constant 0 : index
    %46 = vector.load %arg5[%c0_15, %c0_16, %c0_17] : memref<2x32x128xbf16, #tpu.memory_space<vmem>>, vector<2x8x128xbf16>
    tpu.vector_store %arg5[%c0_15, %c0_16, %c0_17], %45 {strides = array<i32>} : memref<2x32x128xbf16, #tpu.memory_space<vmem>>, vector<2x8x128xbf16>,
    %c0_18 = arith.constant 0 : index
    %c8 = arith.constant 8 : index
    %c0_19 = arith.constant 0 : index
    %47 = vector.load %arg5[%c0_18, %c8, %c0_19] : memref<2x32x128xbf16, #tpu.memory_space<vmem>>, vector<2x16x128xbf16>
    tpu.vector_store %arg5[%c0_18, %c8, %c0_19], %44 {strides = array<i32>} : memref<2x32x128xbf16, #tpu.memory_space<vmem>>, vector<2x16x128xbf16>,
    %c0_20 = arith.constant 0 : index
    %c24 = arith.constant 24 : index
    %c0_21 = arith.constant 0 : index
    %48 = vector.load %arg5[%c0_20, %c24, %c0_21] : memref<2x32x128xbf16, #tpu.memory_space<vmem>>, vector<2x8x128xbf16>
    tpu.vector_store %arg5[%c0_20, %c24, %c0_21], %45 {strides = array<i32>} : memref<2x32x128xbf16, #tpu.memory_space<vmem>>, vector<2x8x128xbf16>,
    return
  }
  func.func @transform_0(%arg0: i32) -> (i32, i32, i32) {
    %c0_i32 = arith.constant 0 : i32
    %c0_i32_0 = arith.constant 0 : i32
    %c0_i32_1 = arith.constant 0 : i32
    return %arg0, %c0_i32, %c0_i32_0 : i32, i32, i32
  }
  func.func @transform_1(%arg0: i32) -> (i32, i32, i32) {
    %c0_i32 = arith.constant 0 : i32
    %c0_i32_0 = arith.constant 0 : i32
    %c0_i32_1 = arith.constant 0 : i32
    %c0_i32_2 = arith.constant 0 : i32
    return %c0_i32, %c0_i32_0, %c0_i32_1 : i32, i32, i32
  }
  func.func @transform_2(%arg0: i32) -> (i32, i32) {
    %c0_i32 = arith.constant 0 : i32
    %c0_i32_0 = arith.constant 0 : i32
    %c0_i32_1 = arith.constant 0 : i32
    return %c0_i32, %c0_i32_0 : i32, i32
  }
  func.func @transform_3(%arg0: i32) -> (i32, i32) {
    %c0_i32 = arith.constant 0 : i32
    %c0_i32_0 = arith.constant 0 : i32
    %c0_i32_1 = arith.constant 0 : i32
    return %c0_i32, %c0_i32_0 : i32, i32
  }
  func.func @transform_4(%arg0: i32) -> (i32, i32, i32) {
    %c0_i32 = arith.constant 0 : i32
    %c0_i32_0 = arith.constant 0 : i32
    %c0_i32_1 = arith.constant 0 : i32
    return %arg0, %c0_i32, %c0_i32_0 : i32, i32, i32
  }
}

module attributes {stable_mosaic.version = 11 : i64} {
  func.func @_conv_stats_kernel(%arg0: i32, %arg1: memref<2x96x128xbf16, #tpu.memory_space<vmem>>, %arg2: memref<9x128x128xbf16, #tpu.memory_space<vmem>>, %arg3: memref<2x64x128xbf16, #tpu.memory_space<vmem>>, %arg4: memref<2x128xf32, #tpu.memory_space<vmem>>) attributes {dimension_semantics = [#tpu.dimension_semantics<parallel>], iteration_bounds = array<i64: 1>, scalar_prefetch = 0 : i64, scratch_operands = 0 : i64, tpu.core_type = #tpu.core_type<tc>, window_params = [{transform_indices = @transform_0, window_bounds = array<i64: 2, 96, 128>}, {pipeline_mode = #tpu.pipeline_mode<synchronous>, transform_indices = @transform_1, window_bounds = array<i64: 9, 128, 128>}, {transform_indices = @transform_2, window_bounds = array<i64: 2, 64, 128>}, {transform_indices = @transform_3, window_bounds = array<i64: 2, 128>}]} {
    %0 = tpu.iota {dimensions = array<i32: 0>} : vector<128x1xi32>
    %c8_i32 = arith.constant 8 : i32
    %c0_i32 = arith.constant 0 : i32
    %1 = arith.cmpi eq, %c8_i32, %c0_i32 : i32
    %c1_i32 = arith.constant 1 : i32
    %2 = arith.select %1, %c1_i32, %c8_i32 : i32
    %3 = vector.broadcast %2 : i32 to vector<128x1xi32>
    %4 = arith.remsi %0, %3 : vector<128x1xi32>
    %c0_i32_0 = arith.constant 0 : i32
    %5 = vector.broadcast %c0_i32_0 : i32 to vector<128x1xi32>
    %6 = arith.cmpi ne, %4, %5 : vector<128x1xi32>
    %c0_i32_1 = arith.constant 0 : i32
    %7 = vector.broadcast %c0_i32_1 : i32 to vector<128x1xi32>
    %8 = arith.cmpi slt, %4, %7 : vector<128x1xi32>
    %c0_i32_2 = arith.constant 0 : i32
    %9 = arith.cmpi slt, %2, %c0_i32_2 : i32
    %10 = vector.broadcast %9 : i1 to vector<128x1xi1>
    %11 = vector.broadcast %10 : vector<128x1xi1> to vector<128x1xi1>
    %12 = arith.xori %8, %11 : vector<128x1xi1>
    %13 = arith.andi %12, %6 : vector<128x1xi1>
    %14 = vector.broadcast %2 : i32 to vector<128x1xi32>
    %15 = arith.addi %4, %14 : vector<128x1xi32>
    %16 = arith.select %13, %15, %4 : vector<128x1xi1>, vector<128x1xi32>
    %c0_i32_3 = arith.constant 0 : i32
    %17 = vector.broadcast %c0_i32_3 : i32 to vector<128x1xi32>
    %18 = arith.cmpi ne, %16, %17 : vector<128x1xi32>
    %c7_i32 = arith.constant 7 : i32
    %19 = vector.broadcast %c7_i32 : i32 to vector<128x1xi32>
    %20 = arith.cmpi ne, %16, %19 : vector<128x1xi32>
    %cst = arith.constant 0.000000e+00 : f32
    %21 = vector.broadcast %cst : f32 to vector<128x128xf32>
    %c0 = arith.constant 0 : index
    %c7 = arith.constant 7 : index
    %c0_4 = arith.constant 0 : index
    %22 = vector.load %arg1[%c0, %c7, %c0_4] : memref<2x96x128xbf16, #tpu.memory_space<vmem>>, vector<2x64x128xbf16>
    %23 = vector.shape_cast %22 : vector<2x64x128xbf16> to vector<128x128xbf16>
    %cst_5 = arith.constant 0.000000e+00 : bf16
    %24 = vector.broadcast %cst_5 : bf16 to vector<128x128xbf16>
    %25 = vector.shape_cast %18 : vector<128x1xi1> to vector<128x1xi1>
    %26 = vector.broadcast %25 : vector<128x1xi1> to vector<128x128xi1>
    %27 = arith.select %26, %23, %24 : vector<128x128xi1>, vector<128x128xbf16>
    %c0_6 = arith.constant 0 : index
    %c0_7 = arith.constant 0 : index
    %c0_8 = arith.constant 0 : index
    %28 = vector.load %arg2[%c0_6, %c0_7, %c0_8] : memref<9x128x128xbf16, #tpu.memory_space<vmem>>, vector<1x128x128xbf16>
    %29 = vector.shape_cast %28 : vector<1x128x128xbf16> to vector<128x128xbf16>
    %cst_9 = arith.constant dense<0.000000e+00> : vector<128x128xf32>
    %30 = tpu.matmul %27, %29, %cst_9 {dimension_numbers = #tpu.dot_dimension_numbers<[1], [0], [0], [1], [0, 0, 1, 1], [], []>} : vector<128x128xbf16>, vector<128x128xbf16>, vector<128x128xf32> -> vector<128x128xf32>
    %31 = arith.addf %21, %30 : vector<128x128xf32>
    %c0_10 = arith.constant 0 : index
    %c8 = arith.constant 8 : index
    %c0_11 = arith.constant 0 : index
    %32 = vector.load %arg1[%c0_10, %c8, %c0_11] : memref<2x96x128xbf16, #tpu.memory_space<vmem>>, vector<2x64x128xbf16>
    %33 = vector.shape_cast %32 : vector<2x64x128xbf16> to vector<128x128xbf16>
    %c1 = arith.constant 1 : index
    %c0_12 = arith.constant 0 : index
    %c0_13 = arith.constant 0 : index
    %34 = vector.load %arg2[%c1, %c0_12, %c0_13] : memref<9x128x128xbf16, #tpu.memory_space<vmem>>, vector<1x128x128xbf16>
    %35 = vector.shape_cast %34 : vector<1x128x128xbf16> to vector<128x128xbf16>
    %cst_14 = arith.constant dense<0.000000e+00> : vector<128x128xf32>
    %36 = tpu.matmul %33, %35, %cst_14 {dimension_numbers = #tpu.dot_dimension_numbers<[1], [0], [0], [1], [0, 0, 1, 1], [], []>} : vector<128x128xbf16>, vector<128x128xbf16>, vector<128x128xf32> -> vector<128x128xf32>
    %37 = arith.addf %31, %36 : vector<128x128xf32>
    %c0_15 = arith.constant 0 : index
    %c9 = arith.constant 9 : index
    %c0_16 = arith.constant 0 : index
    %38 = vector.load %arg1[%c0_15, %c9, %c0_16] : memref<2x96x128xbf16, #tpu.memory_space<vmem>>, vector<2x64x128xbf16>
    %39 = vector.shape_cast %38 : vector<2x64x128xbf16> to vector<128x128xbf16>
    %cst_17 = arith.constant 0.000000e+00 : bf16
    %40 = vector.broadcast %cst_17 : bf16 to vector<128x128xbf16>
    %41 = vector.shape_cast %20 : vector<128x1xi1> to vector<128x1xi1>
    %42 = vector.broadcast %41 : vector<128x1xi1> to vector<128x128xi1>
    %43 = arith.select %42, %39, %40 : vector<128x128xi1>, vector<128x128xbf16>
    %c2 = arith.constant 2 : index
    %c0_18 = arith.constant 0 : index
    %c0_19 = arith.constant 0 : index
    %44 = vector.load %arg2[%c2, %c0_18, %c0_19] : memref<9x128x128xbf16, #tpu.memory_space<vmem>>, vector<1x128x128xbf16>
    %45 = vector.shape_cast %44 : vector<1x128x128xbf16> to vector<128x128xbf16>
    %cst_20 = arith.constant dense<0.000000e+00> : vector<128x128xf32>
    %46 = tpu.matmul %43, %45, %cst_20 {dimension_numbers = #tpu.dot_dimension_numbers<[1], [0], [0], [1], [0, 0, 1, 1], [], []>} : vector<128x128xbf16>, vector<128x128xbf16>, vector<128x128xf32> -> vector<128x128xf32>
    %47 = arith.addf %37, %46 : vector<128x128xf32>
    %c0_21 = arith.constant 0 : index
    %c15 = arith.constant 15 : index
    %c0_22 = arith.constant 0 : index
    %48 = vector.load %arg1[%c0_21, %c15, %c0_22] : memref<2x96x128xbf16, #tpu.memory_space<vmem>>, vector<2x64x128xbf16>
    %49 = vector.shape_cast %48 : vector<2x64x128xbf16> to vector<128x128xbf16>
    %cst_23 = arith.constant 0.000000e+00 : bf16
    %50 = vector.broadcast %cst_23 : bf16 to vector<128x128xbf16>
    %51 = vector.shape_cast %18 : vector<128x1xi1> to vector<128x1xi1>
    %52 = vector.broadcast %51 : vector<128x1xi1> to vector<128x128xi1>
    %53 = arith.select %52, %49, %50 : vector<128x128xi1>, vector<128x128xbf16>
    %c3 = arith.constant 3 : index
    %c0_24 = arith.constant 0 : index
    %c0_25 = arith.constant 0 : index
    %54 = vector.load %arg2[%c3, %c0_24, %c0_25] : memref<9x128x128xbf16, #tpu.memory_space<vmem>>, vector<1x128x128xbf16>
    %55 = vector.shape_cast %54 : vector<1x128x128xbf16> to vector<128x128xbf16>
    %cst_26 = arith.constant dense<0.000000e+00> : vector<128x128xf32>
    %56 = tpu.matmul %53, %55, %cst_26 {dimension_numbers = #tpu.dot_dimension_numbers<[1], [0], [0], [1], [0, 0, 1, 1], [], []>} : vector<128x128xbf16>, vector<128x128xbf16>, vector<128x128xf32> -> vector<128x128xf32>
    %57 = arith.addf %47, %56 : vector<128x128xf32>
    %c0_27 = arith.constant 0 : index
    %c16 = arith.constant 16 : index
    %c0_28 = arith.constant 0 : index
    %58 = vector.load %arg1[%c0_27, %c16, %c0_28] : memref<2x96x128xbf16, #tpu.memory_space<vmem>>, vector<2x64x128xbf16>
    %59 = vector.shape_cast %58 : vector<2x64x128xbf16> to vector<128x128xbf16>
    %c4 = arith.constant 4 : index
    %c0_29 = arith.constant 0 : index
    %c0_30 = arith.constant 0 : index
    %60 = vector.load %arg2[%c4, %c0_29, %c0_30] : memref<9x128x128xbf16, #tpu.memory_space<vmem>>, vector<1x128x128xbf16>
    %61 = vector.shape_cast %60 : vector<1x128x128xbf16> to vector<128x128xbf16>
    %cst_31 = arith.constant dense<0.000000e+00> : vector<128x128xf32>
    %62 = tpu.matmul %59, %61, %cst_31 {dimension_numbers = #tpu.dot_dimension_numbers<[1], [0], [0], [1], [0, 0, 1, 1], [], []>} : vector<128x128xbf16>, vector<128x128xbf16>, vector<128x128xf32> -> vector<128x128xf32>
    %63 = arith.addf %57, %62 : vector<128x128xf32>
    %c0_32 = arith.constant 0 : index
    %c17 = arith.constant 17 : index
    %c0_33 = arith.constant 0 : index
    %64 = vector.load %arg1[%c0_32, %c17, %c0_33] : memref<2x96x128xbf16, #tpu.memory_space<vmem>>, vector<2x64x128xbf16>
    %65 = vector.shape_cast %64 : vector<2x64x128xbf16> to vector<128x128xbf16>
    %cst_34 = arith.constant 0.000000e+00 : bf16
    %66 = vector.broadcast %cst_34 : bf16 to vector<128x128xbf16>
    %67 = vector.shape_cast %20 : vector<128x1xi1> to vector<128x1xi1>
    %68 = vector.broadcast %67 : vector<128x1xi1> to vector<128x128xi1>
    %69 = arith.select %68, %65, %66 : vector<128x128xi1>, vector<128x128xbf16>
    %c5 = arith.constant 5 : index
    %c0_35 = arith.constant 0 : index
    %c0_36 = arith.constant 0 : index
    %70 = vector.load %arg2[%c5, %c0_35, %c0_36] : memref<9x128x128xbf16, #tpu.memory_space<vmem>>, vector<1x128x128xbf16>
    %71 = vector.shape_cast %70 : vector<1x128x128xbf16> to vector<128x128xbf16>
    %cst_37 = arith.constant dense<0.000000e+00> : vector<128x128xf32>
    %72 = tpu.matmul %69, %71, %cst_37 {dimension_numbers = #tpu.dot_dimension_numbers<[1], [0], [0], [1], [0, 0, 1, 1], [], []>} : vector<128x128xbf16>, vector<128x128xbf16>, vector<128x128xf32> -> vector<128x128xf32>
    %73 = arith.addf %63, %72 : vector<128x128xf32>
    %c0_38 = arith.constant 0 : index
    %c23 = arith.constant 23 : index
    %c0_39 = arith.constant 0 : index
    %74 = vector.load %arg1[%c0_38, %c23, %c0_39] : memref<2x96x128xbf16, #tpu.memory_space<vmem>>, vector<2x64x128xbf16>
    %75 = vector.shape_cast %74 : vector<2x64x128xbf16> to vector<128x128xbf16>
    %cst_40 = arith.constant 0.000000e+00 : bf16
    %76 = vector.broadcast %cst_40 : bf16 to vector<128x128xbf16>
    %77 = vector.shape_cast %18 : vector<128x1xi1> to vector<128x1xi1>
    %78 = vector.broadcast %77 : vector<128x1xi1> to vector<128x128xi1>
    %79 = arith.select %78, %75, %76 : vector<128x128xi1>, vector<128x128xbf16>
    %c6 = arith.constant 6 : index
    %c0_41 = arith.constant 0 : index
    %c0_42 = arith.constant 0 : index
    %80 = vector.load %arg2[%c6, %c0_41, %c0_42] : memref<9x128x128xbf16, #tpu.memory_space<vmem>>, vector<1x128x128xbf16>
    %81 = vector.shape_cast %80 : vector<1x128x128xbf16> to vector<128x128xbf16>
    %cst_43 = arith.constant dense<0.000000e+00> : vector<128x128xf32>
    %82 = tpu.matmul %79, %81, %cst_43 {dimension_numbers = #tpu.dot_dimension_numbers<[1], [0], [0], [1], [0, 0, 1, 1], [], []>} : vector<128x128xbf16>, vector<128x128xbf16>, vector<128x128xf32> -> vector<128x128xf32>
    %83 = arith.addf %73, %82 : vector<128x128xf32>
    %c0_44 = arith.constant 0 : index
    %c24 = arith.constant 24 : index
    %c0_45 = arith.constant 0 : index
    %84 = vector.load %arg1[%c0_44, %c24, %c0_45] : memref<2x96x128xbf16, #tpu.memory_space<vmem>>, vector<2x64x128xbf16>
    %85 = vector.shape_cast %84 : vector<2x64x128xbf16> to vector<128x128xbf16>
    %c7_46 = arith.constant 7 : index
    %c0_47 = arith.constant 0 : index
    %c0_48 = arith.constant 0 : index
    %86 = vector.load %arg2[%c7_46, %c0_47, %c0_48] : memref<9x128x128xbf16, #tpu.memory_space<vmem>>, vector<1x128x128xbf16>
    %87 = vector.shape_cast %86 : vector<1x128x128xbf16> to vector<128x128xbf16>
    %cst_49 = arith.constant dense<0.000000e+00> : vector<128x128xf32>
    %88 = tpu.matmul %85, %87, %cst_49 {dimension_numbers = #tpu.dot_dimension_numbers<[1], [0], [0], [1], [0, 0, 1, 1], [], []>} : vector<128x128xbf16>, vector<128x128xbf16>, vector<128x128xf32> -> vector<128x128xf32>
    %89 = arith.addf %83, %88 : vector<128x128xf32>
    %c0_50 = arith.constant 0 : index
    %c25 = arith.constant 25 : index
    %c0_51 = arith.constant 0 : index
    %90 = vector.load %arg1[%c0_50, %c25, %c0_51] : memref<2x96x128xbf16, #tpu.memory_space<vmem>>, vector<2x64x128xbf16>
    %91 = vector.shape_cast %90 : vector<2x64x128xbf16> to vector<128x128xbf16>
    %cst_52 = arith.constant 0.000000e+00 : bf16
    %92 = vector.broadcast %cst_52 : bf16 to vector<128x128xbf16>
    %93 = vector.shape_cast %20 : vector<128x1xi1> to vector<128x1xi1>
    %94 = vector.broadcast %93 : vector<128x1xi1> to vector<128x128xi1>
    %95 = arith.select %94, %91, %92 : vector<128x128xi1>, vector<128x128xbf16>
    %c8_53 = arith.constant 8 : index
    %c0_54 = arith.constant 0 : index
    %c0_55 = arith.constant 0 : index
    %96 = vector.load %arg2[%c8_53, %c0_54, %c0_55] : memref<9x128x128xbf16, #tpu.memory_space<vmem>>, vector<1x128x128xbf16>
    %97 = vector.shape_cast %96 : vector<1x128x128xbf16> to vector<128x128xbf16>
    %cst_56 = arith.constant dense<0.000000e+00> : vector<128x128xf32>
    %98 = tpu.matmul %95, %97, %cst_56 {dimension_numbers = #tpu.dot_dimension_numbers<[1], [0], [0], [1], [0, 0, 1, 1], [], []>} : vector<128x128xbf16>, vector<128x128xbf16>, vector<128x128xf32> -> vector<128x128xf32>
    %99 = arith.addf %89, %98 : vector<128x128xf32>
    %100 = vector.shape_cast %99 : vector<128x128xf32> to vector<2x64x128xf32>
    %101 = arith.truncf %100 : vector<2x64x128xf32> to vector<2x64x128xbf16>
    %c0_57 = arith.constant 0 : index
    %c0_58 = arith.constant 0 : index
    %c0_59 = arith.constant 0 : index
    %102 = vector.load %arg3[%c0_57, %c0_58, %c0_59] : memref<2x64x128xbf16, #tpu.memory_space<vmem>>, vector<2x64x128xbf16>
    tpu.vector_store %arg3[%c0_57, %c0_58, %c0_59], %101 {strides = array<i32>} : memref<2x64x128xbf16, #tpu.memory_space<vmem>>, vector<2x64x128xbf16>,
    %cst_60 = arith.constant dense<0.000000e+00> : vector<128xf32>
    %103 = vector.multi_reduction <add>, %99, %cst_60 [0] : vector<128x128xf32> to vector<128xf32>
    %104 = vector.shape_cast %103 : vector<128xf32> to vector<1x128xf32>
    %c0_61 = arith.constant 0 : index
    %c0_62 = arith.constant 0 : index
    %105 = vector.load %arg4[%c0_61, %c0_62] : memref<2x128xf32, #tpu.memory_space<vmem>>, vector<1x128xf32>
    tpu.vector_store %arg4[%c0_61, %c0_62], %104 {strides = array<i32>} : memref<2x128xf32, #tpu.memory_space<vmem>>, vector<1x128xf32>,
    %106 = arith.mulf %99, %99 : vector<128x128xf32>
    %cst_63 = arith.constant dense<0.000000e+00> : vector<128xf32>
    %107 = vector.multi_reduction <add>, %106, %cst_63 [0] : vector<128x128xf32> to vector<128xf32>
    %108 = vector.shape_cast %107 : vector<128xf32> to vector<1x128xf32>
    %c1_64 = arith.constant 1 : index
    %c0_65 = arith.constant 0 : index
    %109 = vector.load %arg4[%c1_64, %c0_65] : memref<2x128xf32, #tpu.memory_space<vmem>>, vector<1x128xf32>
    tpu.vector_store %arg4[%c1_64, %c0_65], %108 {strides = array<i32>} : memref<2x128xf32, #tpu.memory_space<vmem>>, vector<1x128xf32>,
    return
  }
  func.func @transform_0(%arg0: i32) -> (i32, i32, i32) {
    %c0_i32 = arith.constant 0 : i32
    %c0_i32_0 = arith.constant 0 : i32
    %c0_i32_1 = arith.constant 0 : i32
    return %arg0, %c0_i32, %c0_i32_0 : i32, i32, i32
  }
  func.func @transform_1(%arg0: i32) -> (i32, i32, i32) {
    %c0_i32 = arith.constant 0 : i32
    %c0_i32_0 = arith.constant 0 : i32
    %c0_i32_1 = arith.constant 0 : i32
    %c0_i32_2 = arith.constant 0 : i32
    return %c0_i32, %c0_i32_0, %c0_i32_1 : i32, i32, i32
  }
  func.func @transform_2(%arg0: i32) -> (i32, i32, i32) {
    %c0_i32 = arith.constant 0 : i32
    %c0_i32_0 = arith.constant 0 : i32
    %c0_i32_1 = arith.constant 0 : i32
    return %arg0, %c0_i32, %c0_i32_0 : i32, i32, i32
  }
  func.func @transform_3(%arg0: i32) -> (i32, i32) {
    %c0_i32 = arith.constant 0 : i32
    %c0_i32_0 = arith.constant 0 : i32
    return %arg0, %c0_i32 : i32, i32
  }
}

module attributes {stable_mosaic.version = 11 : i64} {
  func.func @_conv_stats_kernel(%arg0: i32, %arg1: memref<2x32x128xbf16, #tpu.memory_space<vmem>>, %arg2: memref<9x128x128xbf16, #tpu.memory_space<vmem>>, %arg3: memref<2x16x128xbf16, #tpu.memory_space<vmem>>, %arg4: memref<2x128xf32, #tpu.memory_space<vmem>>) attributes {dimension_semantics = [#tpu.dimension_semantics<parallel>], iteration_bounds = array<i64: 1>, scalar_prefetch = 0 : i64, scratch_operands = 0 : i64, tpu.core_type = #tpu.core_type<tc>, window_params = [{transform_indices = @transform_0, window_bounds = array<i64: 2, 32, 128>}, {pipeline_mode = #tpu.pipeline_mode<synchronous>, transform_indices = @transform_1, window_bounds = array<i64: 9, 128, 128>}, {transform_indices = @transform_2, window_bounds = array<i64: 2, 16, 128>}, {transform_indices = @transform_3, window_bounds = array<i64: 2, 128>}]} {
    %0 = tpu.iota {dimensions = array<i32: 0>} : vector<32x1xi32>
    %c4_i32 = arith.constant 4 : i32
    %c0_i32 = arith.constant 0 : i32
    %1 = arith.cmpi eq, %c4_i32, %c0_i32 : i32
    %c1_i32 = arith.constant 1 : i32
    %2 = arith.select %1, %c1_i32, %c4_i32 : i32
    %3 = vector.broadcast %2 : i32 to vector<32x1xi32>
    %4 = arith.remsi %0, %3 : vector<32x1xi32>
    %c0_i32_0 = arith.constant 0 : i32
    %5 = vector.broadcast %c0_i32_0 : i32 to vector<32x1xi32>
    %6 = arith.cmpi ne, %4, %5 : vector<32x1xi32>
    %c0_i32_1 = arith.constant 0 : i32
    %7 = vector.broadcast %c0_i32_1 : i32 to vector<32x1xi32>
    %8 = arith.cmpi slt, %4, %7 : vector<32x1xi32>
    %c0_i32_2 = arith.constant 0 : i32
    %9 = arith.cmpi slt, %2, %c0_i32_2 : i32
    %10 = vector.broadcast %9 : i1 to vector<32x1xi1>
    %11 = vector.broadcast %10 : vector<32x1xi1> to vector<32x1xi1>
    %12 = arith.xori %8, %11 : vector<32x1xi1>
    %13 = arith.andi %12, %6 : vector<32x1xi1>
    %14 = vector.broadcast %2 : i32 to vector<32x1xi32>
    %15 = arith.addi %4, %14 : vector<32x1xi32>
    %16 = arith.select %13, %15, %4 : vector<32x1xi1>, vector<32x1xi32>
    %c0_i32_3 = arith.constant 0 : i32
    %17 = vector.broadcast %c0_i32_3 : i32 to vector<32x1xi32>
    %18 = arith.cmpi ne, %16, %17 : vector<32x1xi32>
    %c3_i32 = arith.constant 3 : i32
    %19 = vector.broadcast %c3_i32 : i32 to vector<32x1xi32>
    %20 = arith.cmpi ne, %16, %19 : vector<32x1xi32>
    %cst = arith.constant 0.000000e+00 : f32
    %21 = vector.broadcast %cst : f32 to vector<32x128xf32>
    %c0 = arith.constant 0 : index
    %c3 = arith.constant 3 : index
    %c0_4 = arith.constant 0 : index
    %22 = vector.load %arg1[%c0, %c3, %c0_4] : memref<2x32x128xbf16, #tpu.memory_space<vmem>>, vector<2x16x128xbf16>
    %23 = vector.shape_cast %22 : vector<2x16x128xbf16> to vector<32x128xbf16>
    %cst_5 = arith.constant 0.000000e+00 : bf16
    %24 = vector.broadcast %cst_5 : bf16 to vector<32x128xbf16>
    %25 = vector.shape_cast %18 : vector<32x1xi1> to vector<32x1xi1>
    %26 = vector.broadcast %25 : vector<32x1xi1> to vector<32x128xi1>
    %27 = arith.select %26, %23, %24 : vector<32x128xi1>, vector<32x128xbf16>
    %c0_6 = arith.constant 0 : index
    %c0_7 = arith.constant 0 : index
    %c0_8 = arith.constant 0 : index
    %28 = vector.load %arg2[%c0_6, %c0_7, %c0_8] : memref<9x128x128xbf16, #tpu.memory_space<vmem>>, vector<1x128x128xbf16>
    %29 = vector.shape_cast %28 : vector<1x128x128xbf16> to vector<128x128xbf16>
    %cst_9 = arith.constant dense<0.000000e+00> : vector<32x128xf32>
    %30 = tpu.matmul %27, %29, %cst_9 {dimension_numbers = #tpu.dot_dimension_numbers<[1], [0], [0], [1], [0, 0, 1, 1], [], []>} : vector<32x128xbf16>, vector<128x128xbf16>, vector<32x128xf32> -> vector<32x128xf32>
    %31 = arith.addf %21, %30 : vector<32x128xf32>
    %c0_10 = arith.constant 0 : index
    %c4 = arith.constant 4 : index
    %c0_11 = arith.constant 0 : index
    %32 = vector.load %arg1[%c0_10, %c4, %c0_11] : memref<2x32x128xbf16, #tpu.memory_space<vmem>>, vector<2x16x128xbf16>
    %33 = vector.shape_cast %32 : vector<2x16x128xbf16> to vector<32x128xbf16>
    %c1 = arith.constant 1 : index
    %c0_12 = arith.constant 0 : index
    %c0_13 = arith.constant 0 : index
    %34 = vector.load %arg2[%c1, %c0_12, %c0_13] : memref<9x128x128xbf16, #tpu.memory_space<vmem>>, vector<1x128x128xbf16>
    %35 = vector.shape_cast %34 : vector<1x128x128xbf16> to vector<128x128xbf16>
    %cst_14 = arith.constant dense<0.000000e+00> : vector<32x128xf32>
    %36 = tpu.matmul %33, %35, %cst_14 {dimension_numbers = #tpu.dot_dimension_numbers<[1], [0], [0], [1], [0, 0, 1, 1], [], []>} : vector<32x128xbf16>, vector<128x128xbf16>, vector<32x128xf32> -> vector<32x128xf32>
    %37 = arith.addf %31, %36 : vector<32x128xf32>
    %c0_15 = arith.constant 0 : index
    %c5 = arith.constant 5 : index
    %c0_16 = arith.constant 0 : index
    %38 = vector.load %arg1[%c0_15, %c5, %c0_16] : memref<2x32x128xbf16, #tpu.memory_space<vmem>>, vector<2x16x128xbf16>
    %39 = vector.shape_cast %38 : vector<2x16x128xbf16> to vector<32x128xbf16>
    %cst_17 = arith.constant 0.000000e+00 : bf16
    %40 = vector.broadcast %cst_17 : bf16 to vector<32x128xbf16>
    %41 = vector.shape_cast %20 : vector<32x1xi1> to vector<32x1xi1>
    %42 = vector.broadcast %41 : vector<32x1xi1> to vector<32x128xi1>
    %43 = arith.select %42, %39, %40 : vector<32x128xi1>, vector<32x128xbf16>
    %c2 = arith.constant 2 : index
    %c0_18 = arith.constant 0 : index
    %c0_19 = arith.constant 0 : index
    %44 = vector.load %arg2[%c2, %c0_18, %c0_19] : memref<9x128x128xbf16, #tpu.memory_space<vmem>>, vector<1x128x128xbf16>
    %45 = vector.shape_cast %44 : vector<1x128x128xbf16> to vector<128x128xbf16>
    %cst_20 = arith.constant dense<0.000000e+00> : vector<32x128xf32>
    %46 = tpu.matmul %43, %45, %cst_20 {dimension_numbers = #tpu.dot_dimension_numbers<[1], [0], [0], [1], [0, 0, 1, 1], [], []>} : vector<32x128xbf16>, vector<128x128xbf16>, vector<32x128xf32> -> vector<32x128xf32>
    %47 = arith.addf %37, %46 : vector<32x128xf32>
    %c0_21 = arith.constant 0 : index
    %c7 = arith.constant 7 : index
    %c0_22 = arith.constant 0 : index
    %48 = vector.load %arg1[%c0_21, %c7, %c0_22] : memref<2x32x128xbf16, #tpu.memory_space<vmem>>, vector<2x16x128xbf16>
    %49 = vector.shape_cast %48 : vector<2x16x128xbf16> to vector<32x128xbf16>
    %cst_23 = arith.constant 0.000000e+00 : bf16
    %50 = vector.broadcast %cst_23 : bf16 to vector<32x128xbf16>
    %51 = vector.shape_cast %18 : vector<32x1xi1> to vector<32x1xi1>
    %52 = vector.broadcast %51 : vector<32x1xi1> to vector<32x128xi1>
    %53 = arith.select %52, %49, %50 : vector<32x128xi1>, vector<32x128xbf16>
    %c3_24 = arith.constant 3 : index
    %c0_25 = arith.constant 0 : index
    %c0_26 = arith.constant 0 : index
    %54 = vector.load %arg2[%c3_24, %c0_25, %c0_26] : memref<9x128x128xbf16, #tpu.memory_space<vmem>>, vector<1x128x128xbf16>
    %55 = vector.shape_cast %54 : vector<1x128x128xbf16> to vector<128x128xbf16>
    %cst_27 = arith.constant dense<0.000000e+00> : vector<32x128xf32>
    %56 = tpu.matmul %53, %55, %cst_27 {dimension_numbers = #tpu.dot_dimension_numbers<[1], [0], [0], [1], [0, 0, 1, 1], [], []>} : vector<32x128xbf16>, vector<128x128xbf16>, vector<32x128xf32> -> vector<32x128xf32>
    %57 = arith.addf %47, %56 : vector<32x128xf32>
    %c0_28 = arith.constant 0 : index
    %c8 = arith.constant 8 : index
    %c0_29 = arith.constant 0 : index
    %58 = vector.load %arg1[%c0_28, %c8, %c0_29] : memref<2x32x128xbf16, #tpu.memory_space<vmem>>, vector<2x16x128xbf16>
    %59 = vector.shape_cast %58 : vector<2x16x128xbf16> to vector<32x128xbf16>
    %c4_30 = arith.constant 4 : index
    %c0_31 = arith.constant 0 : index
    %c0_32 = arith.constant 0 : index
    %60 = vector.load %arg2[%c4_30, %c0_31, %c0_32] : memref<9x128x128xbf16, #tpu.memory_space<vmem>>, vector<1x128x128xbf16>
    %61 = vector.shape_cast %60 : vector<1x128x128xbf16> to vector<128x128xbf16>
    %cst_33 = arith.constant dense<0.000000e+00> : vector<32x128xf32>
    %62 = tpu.matmul %59, %61, %cst_33 {dimension_numbers = #tpu.dot_dimension_numbers<[1], [0], [0], [1], [0, 0, 1, 1], [], []>} : vector<32x128xbf16>, vector<128x128xbf16>, vector<32x128xf32> -> vector<32x128xf32>
    %63 = arith.addf %57, %62 : vector<32x128xf32>
    %c0_34 = arith.constant 0 : index
    %c9 = arith.constant 9 : index
    %c0_35 = arith.constant 0 : index
    %64 = vector.load %arg1[%c0_34, %c9, %c0_35] : memref<2x32x128xbf16, #tpu.memory_space<vmem>>, vector<2x16x128xbf16>
    %65 = vector.shape_cast %64 : vector<2x16x128xbf16> to vector<32x128xbf16>
    %cst_36 = arith.constant 0.000000e+00 : bf16
    %66 = vector.broadcast %cst_36 : bf16 to vector<32x128xbf16>
    %67 = vector.shape_cast %20 : vector<32x1xi1> to vector<32x1xi1>
    %68 = vector.broadcast %67 : vector<32x1xi1> to vector<32x128xi1>
    %69 = arith.select %68, %65, %66 : vector<32x128xi1>, vector<32x128xbf16>
    %c5_37 = arith.constant 5 : index
    %c0_38 = arith.constant 0 : index
    %c0_39 = arith.constant 0 : index
    %70 = vector.load %arg2[%c5_37, %c0_38, %c0_39] : memref<9x128x128xbf16, #tpu.memory_space<vmem>>, vector<1x128x128xbf16>
    %71 = vector.shape_cast %70 : vector<1x128x128xbf16> to vector<128x128xbf16>
    %cst_40 = arith.constant dense<0.000000e+00> : vector<32x128xf32>
    %72 = tpu.matmul %69, %71, %cst_40 {dimension_numbers = #tpu.dot_dimension_numbers<[1], [0], [0], [1], [0, 0, 1, 1], [], []>} : vector<32x128xbf16>, vector<128x128xbf16>, vector<32x128xf32> -> vector<32x128xf32>
    %73 = arith.addf %63, %72 : vector<32x128xf32>
    %c0_41 = arith.constant 0 : index
    %c11 = arith.constant 11 : index
    %c0_42 = arith.constant 0 : index
    %74 = vector.load %arg1[%c0_41, %c11, %c0_42] : memref<2x32x128xbf16, #tpu.memory_space<vmem>>, vector<2x16x128xbf16>
    %75 = vector.shape_cast %74 : vector<2x16x128xbf16> to vector<32x128xbf16>
    %cst_43 = arith.constant 0.000000e+00 : bf16
    %76 = vector.broadcast %cst_43 : bf16 to vector<32x128xbf16>
    %77 = vector.shape_cast %18 : vector<32x1xi1> to vector<32x1xi1>
    %78 = vector.broadcast %77 : vector<32x1xi1> to vector<32x128xi1>
    %79 = arith.select %78, %75, %76 : vector<32x128xi1>, vector<32x128xbf16>
    %c6 = arith.constant 6 : index
    %c0_44 = arith.constant 0 : index
    %c0_45 = arith.constant 0 : index
    %80 = vector.load %arg2[%c6, %c0_44, %c0_45] : memref<9x128x128xbf16, #tpu.memory_space<vmem>>, vector<1x128x128xbf16>
    %81 = vector.shape_cast %80 : vector<1x128x128xbf16> to vector<128x128xbf16>
    %cst_46 = arith.constant dense<0.000000e+00> : vector<32x128xf32>
    %82 = tpu.matmul %79, %81, %cst_46 {dimension_numbers = #tpu.dot_dimension_numbers<[1], [0], [0], [1], [0, 0, 1, 1], [], []>} : vector<32x128xbf16>, vector<128x128xbf16>, vector<32x128xf32> -> vector<32x128xf32>
    %83 = arith.addf %73, %82 : vector<32x128xf32>
    %c0_47 = arith.constant 0 : index
    %c12 = arith.constant 12 : index
    %c0_48 = arith.constant 0 : index
    %84 = vector.load %arg1[%c0_47, %c12, %c0_48] : memref<2x32x128xbf16, #tpu.memory_space<vmem>>, vector<2x16x128xbf16>
    %85 = vector.shape_cast %84 : vector<2x16x128xbf16> to vector<32x128xbf16>
    %c7_49 = arith.constant 7 : index
    %c0_50 = arith.constant 0 : index
    %c0_51 = arith.constant 0 : index
    %86 = vector.load %arg2[%c7_49, %c0_50, %c0_51] : memref<9x128x128xbf16, #tpu.memory_space<vmem>>, vector<1x128x128xbf16>
    %87 = vector.shape_cast %86 : vector<1x128x128xbf16> to vector<128x128xbf16>
    %cst_52 = arith.constant dense<0.000000e+00> : vector<32x128xf32>
    %88 = tpu.matmul %85, %87, %cst_52 {dimension_numbers = #tpu.dot_dimension_numbers<[1], [0], [0], [1], [0, 0, 1, 1], [], []>} : vector<32x128xbf16>, vector<128x128xbf16>, vector<32x128xf32> -> vector<32x128xf32>
    %89 = arith.addf %83, %88 : vector<32x128xf32>
    %c0_53 = arith.constant 0 : index
    %c13 = arith.constant 13 : index
    %c0_54 = arith.constant 0 : index
    %90 = vector.load %arg1[%c0_53, %c13, %c0_54] : memref<2x32x128xbf16, #tpu.memory_space<vmem>>, vector<2x16x128xbf16>
    %91 = vector.shape_cast %90 : vector<2x16x128xbf16> to vector<32x128xbf16>
    %cst_55 = arith.constant 0.000000e+00 : bf16
    %92 = vector.broadcast %cst_55 : bf16 to vector<32x128xbf16>
    %93 = vector.shape_cast %20 : vector<32x1xi1> to vector<32x1xi1>
    %94 = vector.broadcast %93 : vector<32x1xi1> to vector<32x128xi1>
    %95 = arith.select %94, %91, %92 : vector<32x128xi1>, vector<32x128xbf16>
    %c8_56 = arith.constant 8 : index
    %c0_57 = arith.constant 0 : index
    %c0_58 = arith.constant 0 : index
    %96 = vector.load %arg2[%c8_56, %c0_57, %c0_58] : memref<9x128x128xbf16, #tpu.memory_space<vmem>>, vector<1x128x128xbf16>
    %97 = vector.shape_cast %96 : vector<1x128x128xbf16> to vector<128x128xbf16>
    %cst_59 = arith.constant dense<0.000000e+00> : vector<32x128xf32>
    %98 = tpu.matmul %95, %97, %cst_59 {dimension_numbers = #tpu.dot_dimension_numbers<[1], [0], [0], [1], [0, 0, 1, 1], [], []>} : vector<32x128xbf16>, vector<128x128xbf16>, vector<32x128xf32> -> vector<32x128xf32>
    %99 = arith.addf %89, %98 : vector<32x128xf32>
    %100 = vector.shape_cast %99 : vector<32x128xf32> to vector<2x16x128xf32>
    %101 = arith.truncf %100 : vector<2x16x128xf32> to vector<2x16x128xbf16>
    %c0_60 = arith.constant 0 : index
    %c0_61 = arith.constant 0 : index
    %c0_62 = arith.constant 0 : index
    %102 = vector.load %arg3[%c0_60, %c0_61, %c0_62] : memref<2x16x128xbf16, #tpu.memory_space<vmem>>, vector<2x16x128xbf16>
    tpu.vector_store %arg3[%c0_60, %c0_61, %c0_62], %101 {strides = array<i32>} : memref<2x16x128xbf16, #tpu.memory_space<vmem>>, vector<2x16x128xbf16>,
    %cst_63 = arith.constant dense<0.000000e+00> : vector<128xf32>
    %103 = vector.multi_reduction <add>, %99, %cst_63 [0] : vector<32x128xf32> to vector<128xf32>
    %104 = vector.shape_cast %103 : vector<128xf32> to vector<1x128xf32>
    %c0_64 = arith.constant 0 : index
    %c0_65 = arith.constant 0 : index
    %105 = vector.load %arg4[%c0_64, %c0_65] : memref<2x128xf32, #tpu.memory_space<vmem>>, vector<1x128xf32>
    tpu.vector_store %arg4[%c0_64, %c0_65], %104 {strides = array<i32>} : memref<2x128xf32, #tpu.memory_space<vmem>>, vector<1x128xf32>,
    %106 = arith.mulf %99, %99 : vector<32x128xf32>
    %cst_66 = arith.constant dense<0.000000e+00> : vector<128xf32>
    %107 = vector.multi_reduction <add>, %106, %cst_66 [0] : vector<32x128xf32> to vector<128xf32>
    %108 = vector.shape_cast %107 : vector<128xf32> to vector<1x128xf32>
    %c1_67 = arith.constant 1 : index
    %c0_68 = arith.constant 0 : index
    %109 = vector.load %arg4[%c1_67, %c0_68] : memref<2x128xf32, #tpu.memory_space<vmem>>, vector<1x128xf32>
    tpu.vector_store %arg4[%c1_67, %c0_68], %108 {strides = array<i32>} : memref<2x128xf32, #tpu.memory_space<vmem>>, vector<1x128xf32>,
    return
  }
  func.func @transform_0(%arg0: i32) -> (i32, i32, i32) {
    %c0_i32 = arith.constant 0 : i32
    %c0_i32_0 = arith.constant 0 : i32
    %c0_i32_1 = arith.constant 0 : i32
    return %arg0, %c0_i32, %c0_i32_0 : i32, i32, i32
  }
  func.func @transform_1(%arg0: i32) -> (i32, i32, i32) {
    %c0_i32 = arith.constant 0 : i32
    %c0_i32_0 = arith.constant 0 : i32
    %c0_i32_1 = arith.constant 0 : i32
    %c0_i32_2 = arith.constant 0 : i32
    return %c0_i32, %c0_i32_0, %c0_i32_1 : i32, i32, i32
  }
  func.func @transform_2(%arg0: i32) -> (i32, i32, i32) {
    %c0_i32 = arith.constant 0 : i32
    %c0_i32_0 = arith.constant 0 : i32
    %c0_i32_1 = arith.constant 0 : i32
    return %arg0, %c0_i32, %c0_i32_0 : i32, i32, i32
  }
  func.func @transform_3(%arg0: i32) -> (i32, i32) {
    %c0_i32 = arith.constant 0 : i32
    %c0_i32_0 = arith.constant 0 : i32
    return %arg0, %c0_i32 : i32, i32
  }
}

module attributes {stable_mosaic.version = 11 : i64} {
  func.func @_bn_act_kernel(%arg0: i32, %arg1: memref<2x16x128xbf16, #tpu.memory_space<vmem>>, %arg2: memref<1x2x128xf32, #tpu.memory_space<vmem>>, %arg3: memref<1x128xf32, #tpu.memory_space<vmem>>, %arg4: memref<1x128xf32, #tpu.memory_space<vmem>>, %arg5: memref<2x12x128xbf16, #tpu.memory_space<vmem>>) attributes {dimension_semantics = [#tpu.dimension_semantics<parallel>], iteration_bounds = array<i64: 1>, scalar_prefetch = 0 : i64, scratch_operands = 0 : i64, tpu.core_type = #tpu.core_type<tc>, window_params = [{transform_indices = @transform_0, window_bounds = array<i64: 2, 16, 128>}, {pipeline_mode = #tpu.pipeline_mode<synchronous>, transform_indices = @transform_1, window_bounds = array<i64: 1, 2, 128>}, {pipeline_mode = #tpu.pipeline_mode<synchronous>, transform_indices = @transform_2, window_bounds = array<i64: 1, 128>}, {pipeline_mode = #tpu.pipeline_mode<synchronous>, transform_indices = @transform_3, window_bounds = array<i64: 1, 128>}, {transform_indices = @transform_4, window_bounds = array<i64: 2, 12, 128>}]} {
    %c0 = arith.constant 0 : index
    %c0_0 = arith.constant 0 : index
    %c0_1 = arith.constant 0 : index
    %0 = vector.load %arg2[%c0, %c0_0, %c0_1] : memref<1x2x128xf32, #tpu.memory_space<vmem>>, vector<1x2x128xf32>
    %cst = arith.constant dense<0.000000e+00> : vector<2x128xf32>
    %1 = vector.multi_reduction <add>, %0, %cst [0] : vector<1x2x128xf32> to vector<2x128xf32>
    %2 = vector.extract_strided_slice %1 {offsets = [0, 0], sizes = [1, 128], strides = [1, 1]} : vector<2x128xf32> to vector<1x128xf32>
    %3 = vector.shape_cast %2 : vector<1x128xf32> to vector<128xf32>
    %cst_2 = arith.constant 3.125000e-02 : f32
    %4 = vector.broadcast %cst_2 : f32 to vector<128xf32>
    %5 = arith.mulf %3, %4 : vector<128xf32>
    %6 = vector.extract_strided_slice %1 {offsets = [1, 0], sizes = [1, 128], strides = [1, 1]} : vector<2x128xf32> to vector<1x128xf32>
    %7 = vector.shape_cast %6 : vector<1x128xf32> to vector<128xf32>
    %cst_3 = arith.constant 3.125000e-02 : f32
    %8 = vector.broadcast %cst_3 : f32 to vector<128xf32>
    %9 = arith.mulf %7, %8 : vector<128xf32>
    %10 = arith.mulf %5, %5 : vector<128xf32>
    %11 = arith.subf %9, %10 : vector<128xf32>
    %cst_4 = arith.constant 0.000000e+00 : f32
    %12 = vector.broadcast %cst_4 : f32 to vector<128xf32>
    %13 = arith.maximumf %11, %12 : vector<128xf32>
    %c0_5 = arith.constant 0 : index
    %c0_6 = arith.constant 0 : index
    %14 = vector.load %arg3[%c0_5, %c0_6] : memref<1x128xf32, #tpu.memory_space<vmem>>, vector<1x128xf32>
    %15 = vector.shape_cast %14 : vector<1x128xf32> to vector<128xf32>
    %cst_7 = arith.constant 9.99999974E-6 : f32
    %16 = vector.broadcast %cst_7 : f32 to vector<128xf32>
    %17 = arith.addf %13, %16 : vector<128xf32>
    %18 = math.rsqrt %17 : vector<128xf32>
    %19 = arith.mulf %15, %18 : vector<128xf32>
    %c0_8 = arith.constant 0 : index
    %c0_9 = arith.constant 0 : index
    %20 = vector.load %arg4[%c0_8, %c0_9] : memref<1x128xf32, #tpu.memory_space<vmem>>, vector<1x128xf32>
    %21 = vector.shape_cast %20 : vector<1x128xf32> to vector<128xf32>
    %22 = arith.mulf %5, %19 : vector<128xf32>
    %23 = arith.subf %21, %22 : vector<128xf32>
    %c0_10 = arith.constant 0 : index
    %c0_11 = arith.constant 0 : index
    %c0_12 = arith.constant 0 : index
    %24 = vector.load %arg1[%c0_10, %c0_11, %c0_12] : memref<2x16x128xbf16, #tpu.memory_space<vmem>>, vector<2x16x128xbf16>
    %25 = arith.extf %24 : vector<2x16x128xbf16> to vector<2x16x128xf32>
    %26 = vector.shape_cast %19 : vector<128xf32> to vector<1x1x128xf32>
    %27 = vector.broadcast %26 : vector<1x1x128xf32> to vector<2x16x128xf32>
    %28 = arith.mulf %25, %27 : vector<2x16x128xf32>
    %29 = vector.shape_cast %23 : vector<128xf32> to vector<1x1x128xf32>
    %30 = vector.broadcast %29 : vector<1x1x128xf32> to vector<2x16x128xf32>
    %31 = arith.addf %28, %30 : vector<2x16x128xf32>
    %cst_13 = arith.constant 0.000000e+00 : f32
    %32 = vector.broadcast %cst_13 : f32 to vector<2x16x128xf32>
    %33 = arith.maximumf %31, %32 : vector<2x16x128xf32>
    %34 = vector.shape_cast %33 : vector<2x16x128xf32> to vector<2x2x8x128xf32>
    %35 = vector.extract_strided_slice %34 {offsets = [0, 0, 0, 0], sizes = [2, 2, 4, 128], strides = [1, 1, 1, 1]} : vector<2x2x8x128xf32> to vector<2x2x4x128xf32>
    %36 = vector.extract_strided_slice %34 {offsets = [0, 0, 4, 0], sizes = [2, 2, 4, 128], strides = [1, 1, 1, 1]} : vector<2x2x8x128xf32> to vector<2x2x4x128xf32>
    %37 = arith.maximumf %35, %36 : vector<2x2x4x128xf32>
    %38 = vector.shape_cast %37 : vector<2x2x4x128xf32> to vector<2x4x2x128xf32>
    %39 = vector.extract_strided_slice %38 {offsets = [0, 0, 0, 0], sizes = [2, 4, 1, 128], strides = [1, 1, 1, 1]} : vector<2x4x2x128xf32> to vector<2x4x1x128xf32>
    %40 = vector.shape_cast %39 : vector<2x4x1x128xf32> to vector<2x4x128xf32>
    %41 = vector.extract_strided_slice %38 {offsets = [0, 0, 1, 0], sizes = [2, 4, 1, 128], strides = [1, 1, 1, 1]} : vector<2x4x2x128xf32> to vector<2x4x1x128xf32>
    %42 = vector.shape_cast %41 : vector<2x4x1x128xf32> to vector<2x4x128xf32>
    %43 = arith.maximumf %40, %42 : vector<2x4x128xf32>
    %44 = arith.truncf %43 : vector<2x4x128xf32> to vector<2x4x128xbf16>
    %cst_14 = arith.constant 0.000000e+00 : bf16
    %45 = vector.broadcast %cst_14 : bf16 to vector<2x4x128xbf16>
    %c0_15 = arith.constant 0 : index
    %c0_16 = arith.constant 0 : index
    %c0_17 = arith.constant 0 : index
    %46 = vector.load %arg5[%c0_15, %c0_16, %c0_17] : memref<2x12x128xbf16, #tpu.memory_space<vmem>>, vector<2x4x128xbf16>
    tpu.vector_store %arg5[%c0_15, %c0_16, %c0_17], %45 {strides = array<i32>} : memref<2x12x128xbf16, #tpu.memory_space<vmem>>, vector<2x4x128xbf16>,
    %c0_18 = arith.constant 0 : index
    %c4 = arith.constant 4 : index
    %c0_19 = arith.constant 0 : index
    %47 = vector.load %arg5[%c0_18, %c4, %c0_19] : memref<2x12x128xbf16, #tpu.memory_space<vmem>>, vector<2x4x128xbf16>
    tpu.vector_store %arg5[%c0_18, %c4, %c0_19], %44 {strides = array<i32>} : memref<2x12x128xbf16, #tpu.memory_space<vmem>>, vector<2x4x128xbf16>,
    %c0_20 = arith.constant 0 : index
    %c8 = arith.constant 8 : index
    %c0_21 = arith.constant 0 : index
    %48 = vector.load %arg5[%c0_20, %c8, %c0_21] : memref<2x12x128xbf16, #tpu.memory_space<vmem>>, vector<2x4x128xbf16>
    tpu.vector_store %arg5[%c0_20, %c8, %c0_21], %45 {strides = array<i32>} : memref<2x12x128xbf16, #tpu.memory_space<vmem>>, vector<2x4x128xbf16>,
    return
  }
  func.func @transform_0(%arg0: i32) -> (i32, i32, i32) {
    %c0_i32 = arith.constant 0 : i32
    %c0_i32_0 = arith.constant 0 : i32
    %c0_i32_1 = arith.constant 0 : i32
    return %arg0, %c0_i32, %c0_i32_0 : i32, i32, i32
  }
  func.func @transform_1(%arg0: i32) -> (i32, i32, i32) {
    %c0_i32 = arith.constant 0 : i32
    %c0_i32_0 = arith.constant 0 : i32
    %c0_i32_1 = arith.constant 0 : i32
    %c0_i32_2 = arith.constant 0 : i32
    return %c0_i32, %c0_i32_0, %c0_i32_1 : i32, i32, i32
  }
  func.func @transform_2(%arg0: i32) -> (i32, i32) {
    %c0_i32 = arith.constant 0 : i32
    %c0_i32_0 = arith.constant 0 : i32
    %c0_i32_1 = arith.constant 0 : i32
    return %c0_i32, %c0_i32_0 : i32, i32
  }
  func.func @transform_3(%arg0: i32) -> (i32, i32) {
    %c0_i32 = arith.constant 0 : i32
    %c0_i32_0 = arith.constant 0 : i32
    %c0_i32_1 = arith.constant 0 : i32
    return %c0_i32, %c0_i32_0 : i32, i32
  }
  func.func @transform_4(%arg0: i32) -> (i32, i32, i32) {
    %c0_i32 = arith.constant 0 : i32
    %c0_i32_0 = arith.constant 0 : i32
    %c0_i32_1 = arith.constant 0 : i32
    return %arg0, %c0_i32, %c0_i32_0 : i32, i32, i32
  }
}

module attributes {stable_mosaic.version = 11 : i64} {
  func.func @_conv_stats_kernel(%arg0: i32, %arg1: memref<2x12x128xbf16, #tpu.memory_space<vmem>>, %arg2: memref<9x128x128xbf16, #tpu.memory_space<vmem>>, %arg3: memref<2x4x128xbf16, #tpu.memory_space<vmem>>, %arg4: memref<2x128xf32, #tpu.memory_space<vmem>>) attributes {dimension_semantics = [#tpu.dimension_semantics<parallel>], iteration_bounds = array<i64: 1>, scalar_prefetch = 0 : i64, scratch_operands = 0 : i64, tpu.core_type = #tpu.core_type<tc>, window_params = [{transform_indices = @transform_0, window_bounds = array<i64: 2, 12, 128>}, {pipeline_mode = #tpu.pipeline_mode<synchronous>, transform_indices = @transform_1, window_bounds = array<i64: 9, 128, 128>}, {transform_indices = @transform_2, window_bounds = array<i64: 2, 4, 128>}, {transform_indices = @transform_3, window_bounds = array<i64: 2, 128>}]} {
    %0 = tpu.iota {dimensions = array<i32: 0>} : vector<8x1xi32>
    %c2_i32 = arith.constant 2 : i32
    %c0_i32 = arith.constant 0 : i32
    %1 = arith.cmpi eq, %c2_i32, %c0_i32 : i32
    %c1_i32 = arith.constant 1 : i32
    %2 = arith.select %1, %c1_i32, %c2_i32 : i32
    %3 = vector.broadcast %2 : i32 to vector<8x1xi32>
    %4 = arith.remsi %0, %3 : vector<8x1xi32>
    %c0_i32_0 = arith.constant 0 : i32
    %5 = vector.broadcast %c0_i32_0 : i32 to vector<8x1xi32>
    %6 = arith.cmpi ne, %4, %5 : vector<8x1xi32>
    %c0_i32_1 = arith.constant 0 : i32
    %7 = vector.broadcast %c0_i32_1 : i32 to vector<8x1xi32>
    %8 = arith.cmpi slt, %4, %7 : vector<8x1xi32>
    %c0_i32_2 = arith.constant 0 : i32
    %9 = arith.cmpi slt, %2, %c0_i32_2 : i32
    %10 = vector.broadcast %9 : i1 to vector<8x1xi1>
    %11 = vector.broadcast %10 : vector<8x1xi1> to vector<8x1xi1>
    %12 = arith.xori %8, %11 : vector<8x1xi1>
    %13 = arith.andi %12, %6 : vector<8x1xi1>
    %14 = vector.broadcast %2 : i32 to vector<8x1xi32>
    %15 = arith.addi %4, %14 : vector<8x1xi32>
    %16 = arith.select %13, %15, %4 : vector<8x1xi1>, vector<8x1xi32>
    %c0_i32_3 = arith.constant 0 : i32
    %17 = vector.broadcast %c0_i32_3 : i32 to vector<8x1xi32>
    %18 = arith.cmpi ne, %16, %17 : vector<8x1xi32>
    %c1_i32_4 = arith.constant 1 : i32
    %19 = vector.broadcast %c1_i32_4 : i32 to vector<8x1xi32>
    %20 = arith.cmpi ne, %16, %19 : vector<8x1xi32>
    %cst = arith.constant 0.000000e+00 : f32
    %21 = vector.broadcast %cst : f32 to vector<8x128xf32>
    %c0 = arith.constant 0 : index
    %c1 = arith.constant 1 : index
    %c0_5 = arith.constant 0 : index
    %22 = vector.load %arg1[%c0, %c1, %c0_5] : memref<2x12x128xbf16, #tpu.memory_space<vmem>>, vector<2x4x128xbf16>
    %23 = vector.shape_cast %22 : vector<2x4x128xbf16> to vector<8x128xbf16>
    %cst_6 = arith.constant 0.000000e+00 : bf16
    %24 = vector.broadcast %cst_6 : bf16 to vector<8x128xbf16>
    %25 = vector.shape_cast %18 : vector<8x1xi1> to vector<8x1xi1>
    %26 = vector.broadcast %25 : vector<8x1xi1> to vector<8x128xi1>
    %27 = arith.select %26, %23, %24 : vector<8x128xi1>, vector<8x128xbf16>
    %c0_7 = arith.constant 0 : index
    %c0_8 = arith.constant 0 : index
    %c0_9 = arith.constant 0 : index
    %28 = vector.load %arg2[%c0_7, %c0_8, %c0_9] : memref<9x128x128xbf16, #tpu.memory_space<vmem>>, vector<1x128x128xbf16>
    %29 = vector.shape_cast %28 : vector<1x128x128xbf16> to vector<128x128xbf16>
    %cst_10 = arith.constant dense<0.000000e+00> : vector<8x128xf32>
    %30 = tpu.matmul %27, %29, %cst_10 {dimension_numbers = #tpu.dot_dimension_numbers<[1], [0], [0], [1], [0, 0, 1, 1], [], []>} : vector<8x128xbf16>, vector<128x128xbf16>, vector<8x128xf32> -> vector<8x128xf32>
    %31 = arith.addf %21, %30 : vector<8x128xf32>
    %c0_11 = arith.constant 0 : index
    %c2 = arith.constant 2 : index
    %c0_12 = arith.constant 0 : index
    %32 = vector.load %arg1[%c0_11, %c2, %c0_12] : memref<2x12x128xbf16, #tpu.memory_space<vmem>>, vector<2x4x128xbf16>
    %33 = vector.shape_cast %32 : vector<2x4x128xbf16> to vector<8x128xbf16>
    %c1_13 = arith.constant 1 : index
    %c0_14 = arith.constant 0 : index
    %c0_15 = arith.constant 0 : index
    %34 = vector.load %arg2[%c1_13, %c0_14, %c0_15] : memref<9x128x128xbf16, #tpu.memory_space<vmem>>, vector<1x128x128xbf16>
    %35 = vector.shape_cast %34 : vector<1x128x128xbf16> to vector<128x128xbf16>
    %cst_16 = arith.constant dense<0.000000e+00> : vector<8x128xf32>
    %36 = tpu.matmul %33, %35, %cst_16 {dimension_numbers = #tpu.dot_dimension_numbers<[1], [0], [0], [1], [0, 0, 1, 1], [], []>} : vector<8x128xbf16>, vector<128x128xbf16>, vector<8x128xf32> -> vector<8x128xf32>
    %37 = arith.addf %31, %36 : vector<8x128xf32>
    %c0_17 = arith.constant 0 : index
    %c3 = arith.constant 3 : index
    %c0_18 = arith.constant 0 : index
    %38 = vector.load %arg1[%c0_17, %c3, %c0_18] : memref<2x12x128xbf16, #tpu.memory_space<vmem>>, vector<2x4x128xbf16>
    %39 = vector.shape_cast %38 : vector<2x4x128xbf16> to vector<8x128xbf16>
    %cst_19 = arith.constant 0.000000e+00 : bf16
    %40 = vector.broadcast %cst_19 : bf16 to vector<8x128xbf16>
    %41 = vector.shape_cast %20 : vector<8x1xi1> to vector<8x1xi1>
    %42 = vector.broadcast %41 : vector<8x1xi1> to vector<8x128xi1>
    %43 = arith.select %42, %39, %40 : vector<8x128xi1>, vector<8x128xbf16>
    %c2_20 = arith.constant 2 : index
    %c0_21 = arith.constant 0 : index
    %c0_22 = arith.constant 0 : index
    %44 = vector.load %arg2[%c2_20, %c0_21, %c0_22] : memref<9x128x128xbf16, #tpu.memory_space<vmem>>, vector<1x128x128xbf16>
    %45 = vector.shape_cast %44 : vector<1x128x128xbf16> to vector<128x128xbf16>
    %cst_23 = arith.constant dense<0.000000e+00> : vector<8x128xf32>
    %46 = tpu.matmul %43, %45, %cst_23 {dimension_numbers = #tpu.dot_dimension_numbers<[1], [0], [0], [1], [0, 0, 1, 1], [], []>} : vector<8x128xbf16>, vector<128x128xbf16>, vector<8x128xf32> -> vector<8x128xf32>
    %47 = arith.addf %37, %46 : vector<8x128xf32>
    %c0_24 = arith.constant 0 : index
    %c3_25 = arith.constant 3 : index
    %c0_26 = arith.constant 0 : index
    %48 = vector.load %arg1[%c0_24, %c3_25, %c0_26] : memref<2x12x128xbf16, #tpu.memory_space<vmem>>, vector<2x4x128xbf16>
    %49 = vector.shape_cast %48 : vector<2x4x128xbf16> to vector<8x128xbf16>
    %cst_27 = arith.constant 0.000000e+00 : bf16
    %50 = vector.broadcast %cst_27 : bf16 to vector<8x128xbf16>
    %51 = vector.shape_cast %18 : vector<8x1xi1> to vector<8x1xi1>
    %52 = vector.broadcast %51 : vector<8x1xi1> to vector<8x128xi1>
    %53 = arith.select %52, %49, %50 : vector<8x128xi1>, vector<8x128xbf16>
    %c3_28 = arith.constant 3 : index
    %c0_29 = arith.constant 0 : index
    %c0_30 = arith.constant 0 : index
    %54 = vector.load %arg2[%c3_28, %c0_29, %c0_30] : memref<9x128x128xbf16, #tpu.memory_space<vmem>>, vector<1x128x128xbf16>
    %55 = vector.shape_cast %54 : vector<1x128x128xbf16> to vector<128x128xbf16>
    %cst_31 = arith.constant dense<0.000000e+00> : vector<8x128xf32>
    %56 = tpu.matmul %53, %55, %cst_31 {dimension_numbers = #tpu.dot_dimension_numbers<[1], [0], [0], [1], [0, 0, 1, 1], [], []>} : vector<8x128xbf16>, vector<128x128xbf16>, vector<8x128xf32> -> vector<8x128xf32>
    %57 = arith.addf %47, %56 : vector<8x128xf32>
    %c0_32 = arith.constant 0 : index
    %c4 = arith.constant 4 : index
    %c0_33 = arith.constant 0 : index
    %58 = vector.load %arg1[%c0_32, %c4, %c0_33] : memref<2x12x128xbf16, #tpu.memory_space<vmem>>, vector<2x4x128xbf16>
    %59 = vector.shape_cast %58 : vector<2x4x128xbf16> to vector<8x128xbf16>
    %c4_34 = arith.constant 4 : index
    %c0_35 = arith.constant 0 : index
    %c0_36 = arith.constant 0 : index
    %60 = vector.load %arg2[%c4_34, %c0_35, %c0_36] : memref<9x128x128xbf16, #tpu.memory_space<vmem>>, vector<1x128x128xbf16>
    %61 = vector.shape_cast %60 : vector<1x128x128xbf16> to vector<128x128xbf16>
    %cst_37 = arith.constant dense<0.000000e+00> : vector<8x128xf32>
    %62 = tpu.matmul %59, %61, %cst_37 {dimension_numbers = #tpu.dot_dimension_numbers<[1], [0], [0], [1], [0, 0, 1, 1], [], []>} : vector<8x128xbf16>, vector<128x128xbf16>, vector<8x128xf32> -> vector<8x128xf32>
    %63 = arith.addf %57, %62 : vector<8x128xf32>
    %c0_38 = arith.constant 0 : index
    %c5 = arith.constant 5 : index
    %c0_39 = arith.constant 0 : index
    %64 = vector.load %arg1[%c0_38, %c5, %c0_39] : memref<2x12x128xbf16, #tpu.memory_space<vmem>>, vector<2x4x128xbf16>
    %65 = vector.shape_cast %64 : vector<2x4x128xbf16> to vector<8x128xbf16>
    %cst_40 = arith.constant 0.000000e+00 : bf16
    %66 = vector.broadcast %cst_40 : bf16 to vector<8x128xbf16>
    %67 = vector.shape_cast %20 : vector<8x1xi1> to vector<8x1xi1>
    %68 = vector.broadcast %67 : vector<8x1xi1> to vector<8x128xi1>
    %69 = arith.select %68, %65, %66 : vector<8x128xi1>, vector<8x128xbf16>
    %c5_41 = arith.constant 5 : index
    %c0_42 = arith.constant 0 : index
    %c0_43 = arith.constant 0 : index
    %70 = vector.load %arg2[%c5_41, %c0_42, %c0_43] : memref<9x128x128xbf16, #tpu.memory_space<vmem>>, vector<1x128x128xbf16>
    %71 = vector.shape_cast %70 : vector<1x128x128xbf16> to vector<128x128xbf16>
    %cst_44 = arith.constant dense<0.000000e+00> : vector<8x128xf32>
    %72 = tpu.matmul %69, %71, %cst_44 {dimension_numbers = #tpu.dot_dimension_numbers<[1], [0], [0], [1], [0, 0, 1, 1], [], []>} : vector<8x128xbf16>, vector<128x128xbf16>, vector<8x128xf32> -> vector<8x128xf32>
    %73 = arith.addf %63, %72 : vector<8x128xf32>
    %c0_45 = arith.constant 0 : index
    %c5_46 = arith.constant 5 : index
    %c0_47 = arith.constant 0 : index
    %74 = vector.load %arg1[%c0_45, %c5_46, %c0_47] : memref<2x12x128xbf16, #tpu.memory_space<vmem>>, vector<2x4x128xbf16>
    %75 = vector.shape_cast %74 : vector<2x4x128xbf16> to vector<8x128xbf16>
    %cst_48 = arith.constant 0.000000e+00 : bf16
    %76 = vector.broadcast %cst_48 : bf16 to vector<8x128xbf16>
    %77 = vector.shape_cast %18 : vector<8x1xi1> to vector<8x1xi1>
    %78 = vector.broadcast %77 : vector<8x1xi1> to vector<8x128xi1>
    %79 = arith.select %78, %75, %76 : vector<8x128xi1>, vector<8x128xbf16>
    %c6 = arith.constant 6 : index
    %c0_49 = arith.constant 0 : index
    %c0_50 = arith.constant 0 : index
    %80 = vector.load %arg2[%c6, %c0_49, %c0_50] : memref<9x128x128xbf16, #tpu.memory_space<vmem>>, vector<1x128x128xbf16>
    %81 = vector.shape_cast %80 : vector<1x128x128xbf16> to vector<128x128xbf16>
    %cst_51 = arith.constant dense<0.000000e+00> : vector<8x128xf32>
    %82 = tpu.matmul %79, %81, %cst_51 {dimension_numbers = #tpu.dot_dimension_numbers<[1], [0], [0], [1], [0, 0, 1, 1], [], []>} : vector<8x128xbf16>, vector<128x128xbf16>, vector<8x128xf32> -> vector<8x128xf32>
    %83 = arith.addf %73, %82 : vector<8x128xf32>
    %c0_52 = arith.constant 0 : index
    %c6_53 = arith.constant 6 : index
    %c0_54 = arith.constant 0 : index
    %84 = vector.load %arg1[%c0_52, %c6_53, %c0_54] : memref<2x12x128xbf16, #tpu.memory_space<vmem>>, vector<2x4x128xbf16>
    %85 = vector.shape_cast %84 : vector<2x4x128xbf16> to vector<8x128xbf16>
    %c7 = arith.constant 7 : index
    %c0_55 = arith.constant 0 : index
    %c0_56 = arith.constant 0 : index
    %86 = vector.load %arg2[%c7, %c0_55, %c0_56] : memref<9x128x128xbf16, #tpu.memory_space<vmem>>, vector<1x128x128xbf16>
    %87 = vector.shape_cast %86 : vector<1x128x128xbf16> to vector<128x128xbf16>
    %cst_57 = arith.constant dense<0.000000e+00> : vector<8x128xf32>
    %88 = tpu.matmul %85, %87, %cst_57 {dimension_numbers = #tpu.dot_dimension_numbers<[1], [0], [0], [1], [0, 0, 1, 1], [], []>} : vector<8x128xbf16>, vector<128x128xbf16>, vector<8x128xf32> -> vector<8x128xf32>
    %89 = arith.addf %83, %88 : vector<8x128xf32>
    %c0_58 = arith.constant 0 : index
    %c7_59 = arith.constant 7 : index
    %c0_60 = arith.constant 0 : index
    %90 = vector.load %arg1[%c0_58, %c7_59, %c0_60] : memref<2x12x128xbf16, #tpu.memory_space<vmem>>, vector<2x4x128xbf16>
    %91 = vector.shape_cast %90 : vector<2x4x128xbf16> to vector<8x128xbf16>
    %cst_61 = arith.constant 0.000000e+00 : bf16
    %92 = vector.broadcast %cst_61 : bf16 to vector<8x128xbf16>
    %93 = vector.shape_cast %20 : vector<8x1xi1> to vector<8x1xi1>
    %94 = vector.broadcast %93 : vector<8x1xi1> to vector<8x128xi1>
    %95 = arith.select %94, %91, %92 : vector<8x128xi1>, vector<8x128xbf16>
    %c8 = arith.constant 8 : index
    %c0_62 = arith.constant 0 : index
    %c0_63 = arith.constant 0 : index
    %96 = vector.load %arg2[%c8, %c0_62, %c0_63] : memref<9x128x128xbf16, #tpu.memory_space<vmem>>, vector<1x128x128xbf16>
    %97 = vector.shape_cast %96 : vector<1x128x128xbf16> to vector<128x128xbf16>
    %cst_64 = arith.constant dense<0.000000e+00> : vector<8x128xf32>
    %98 = tpu.matmul %95, %97, %cst_64 {dimension_numbers = #tpu.dot_dimension_numbers<[1], [0], [0], [1], [0, 0, 1, 1], [], []>} : vector<8x128xbf16>, vector<128x128xbf16>, vector<8x128xf32> -> vector<8x128xf32>
    %99 = arith.addf %89, %98 : vector<8x128xf32>
    %100 = vector.shape_cast %99 : vector<8x128xf32> to vector<2x4x128xf32>
    %101 = arith.truncf %100 : vector<2x4x128xf32> to vector<2x4x128xbf16>
    %c0_65 = arith.constant 0 : index
    %c0_66 = arith.constant 0 : index
    %c0_67 = arith.constant 0 : index
    %102 = vector.load %arg3[%c0_65, %c0_66, %c0_67] : memref<2x4x128xbf16, #tpu.memory_space<vmem>>, vector<2x4x128xbf16>
    tpu.vector_store %arg3[%c0_65, %c0_66, %c0_67], %101 {strides = array<i32>} : memref<2x4x128xbf16, #tpu.memory_space<vmem>>, vector<2x4x128xbf16>,
    %cst_68 = arith.constant dense<0.000000e+00> : vector<128xf32>
    %103 = vector.multi_reduction <add>, %99, %cst_68 [0] : vector<8x128xf32> to vector<128xf32>
    %104 = vector.shape_cast %103 : vector<128xf32> to vector<1x128xf32>
    %c0_69 = arith.constant 0 : index
    %c0_70 = arith.constant 0 : index
    %105 = vector.load %arg4[%c0_69, %c0_70] : memref<2x128xf32, #tpu.memory_space<vmem>>, vector<1x128xf32>
    tpu.vector_store %arg4[%c0_69, %c0_70], %104 {strides = array<i32>} : memref<2x128xf32, #tpu.memory_space<vmem>>, vector<1x128xf32>,
    %106 = arith.mulf %99, %99 : vector<8x128xf32>
    %cst_71 = arith.constant dense<0.000000e+00> : vector<128xf32>
    %107 = vector.multi_reduction <add>, %106, %cst_71 [0] : vector<8x128xf32> to vector<128xf32>
    %108 = vector.shape_cast %107 : vector<128xf32> to vector<1x128xf32>
    %c1_72 = arith.constant 1 : index
    %c0_73 = arith.constant 0 : index
    %109 = vector.load %arg4[%c1_72, %c0_73] : memref<2x128xf32, #tpu.memory_space<vmem>>, vector<1x128xf32>
    tpu.vector_store %arg4[%c1_72, %c0_73], %108 {strides = array<i32>} : memref<2x128xf32, #tpu.memory_space<vmem>>, vector<1x128xf32>,
    return
  }
  func.func @transform_0(%arg0: i32) -> (i32, i32, i32) {
    %c0_i32 = arith.constant 0 : i32
    %c0_i32_0 = arith.constant 0 : i32
    %c0_i32_1 = arith.constant 0 : i32
    return %arg0, %c0_i32, %c0_i32_0 : i32, i32, i32
  }
  func.func @transform_1(%arg0: i32) -> (i32, i32, i32) {
    %c0_i32 = arith.constant 0 : i32
    %c0_i32_0 = arith.constant 0 : i32
    %c0_i32_1 = arith.constant 0 : i32
    %c0_i32_2 = arith.constant 0 : i32
    return %c0_i32, %c0_i32_0, %c0_i32_1 : i32, i32, i32
  }
  func.func @transform_2(%arg0: i32) -> (i32, i32, i32) {
    %c0_i32 = arith.constant 0 : i32
    %c0_i32_0 = arith.constant 0 : i32
    %c0_i32_1 = arith.constant 0 : i32
    return %arg0, %c0_i32, %c0_i32_0 : i32, i32, i32
  }
  func.func @transform_3(%arg0: i32) -> (i32, i32) {
    %c0_i32 = arith.constant 0 : i32
    %c0_i32_0 = arith.constant 0 : i32
    return %arg0, %c0_i32 : i32, i32
  }
}

module attributes {stable_mosaic.version = 11 : i64} {
  func.func @_bn_act_kernel(%arg0: i32, %arg1: memref<2x4x128xbf16, #tpu.memory_space<vmem>>, %arg2: memref<1x2x128xf32, #tpu.memory_space<vmem>>, %arg3: memref<1x128xf32, #tpu.memory_space<vmem>>, %arg4: memref<1x128xf32, #tpu.memory_space<vmem>>, %arg5: memref<2x1x128xbf16, #tpu.memory_space<vmem>>) attributes {dimension_semantics = [#tpu.dimension_semantics<parallel>], iteration_bounds = array<i64: 1>, scalar_prefetch = 0 : i64, scratch_operands = 0 : i64, tpu.core_type = #tpu.core_type<tc>, window_params = [{transform_indices = @transform_0, window_bounds = array<i64: 2, 4, 128>}, {pipeline_mode = #tpu.pipeline_mode<synchronous>, transform_indices = @transform_1, window_bounds = array<i64: 1, 2, 128>}, {pipeline_mode = #tpu.pipeline_mode<synchronous>, transform_indices = @transform_2, window_bounds = array<i64: 1, 128>}, {pipeline_mode = #tpu.pipeline_mode<synchronous>, transform_indices = @transform_3, window_bounds = array<i64: 1, 128>}, {transform_indices = @transform_4, window_bounds = array<i64: 2, 1, 128>}]} {
    %c0 = arith.constant 0 : index
    %c0_0 = arith.constant 0 : index
    %c0_1 = arith.constant 0 : index
    %0 = vector.load %arg2[%c0, %c0_0, %c0_1] : memref<1x2x128xf32, #tpu.memory_space<vmem>>, vector<1x2x128xf32>
    %cst = arith.constant dense<0.000000e+00> : vector<2x128xf32>
    %1 = vector.multi_reduction <add>, %0, %cst [0] : vector<1x2x128xf32> to vector<2x128xf32>
    %2 = vector.extract_strided_slice %1 {offsets = [0, 0], sizes = [1, 128], strides = [1, 1]} : vector<2x128xf32> to vector<1x128xf32>
    %3 = vector.shape_cast %2 : vector<1x128xf32> to vector<128xf32>
    %cst_2 = arith.constant 1.250000e-01 : f32
    %4 = vector.broadcast %cst_2 : f32 to vector<128xf32>
    %5 = arith.mulf %3, %4 : vector<128xf32>
    %6 = vector.extract_strided_slice %1 {offsets = [1, 0], sizes = [1, 128], strides = [1, 1]} : vector<2x128xf32> to vector<1x128xf32>
    %7 = vector.shape_cast %6 : vector<1x128xf32> to vector<128xf32>
    %cst_3 = arith.constant 1.250000e-01 : f32
    %8 = vector.broadcast %cst_3 : f32 to vector<128xf32>
    %9 = arith.mulf %7, %8 : vector<128xf32>
    %10 = arith.mulf %5, %5 : vector<128xf32>
    %11 = arith.subf %9, %10 : vector<128xf32>
    %cst_4 = arith.constant 0.000000e+00 : f32
    %12 = vector.broadcast %cst_4 : f32 to vector<128xf32>
    %13 = arith.maximumf %11, %12 : vector<128xf32>
    %c0_5 = arith.constant 0 : index
    %c0_6 = arith.constant 0 : index
    %14 = vector.load %arg3[%c0_5, %c0_6] : memref<1x128xf32, #tpu.memory_space<vmem>>, vector<1x128xf32>
    %15 = vector.shape_cast %14 : vector<1x128xf32> to vector<128xf32>
    %cst_7 = arith.constant 9.99999974E-6 : f32
    %16 = vector.broadcast %cst_7 : f32 to vector<128xf32>
    %17 = arith.addf %13, %16 : vector<128xf32>
    %18 = math.rsqrt %17 : vector<128xf32>
    %19 = arith.mulf %15, %18 : vector<128xf32>
    %c0_8 = arith.constant 0 : index
    %c0_9 = arith.constant 0 : index
    %20 = vector.load %arg4[%c0_8, %c0_9] : memref<1x128xf32, #tpu.memory_space<vmem>>, vector<1x128xf32>
    %21 = vector.shape_cast %20 : vector<1x128xf32> to vector<128xf32>
    %22 = arith.mulf %5, %19 : vector<128xf32>
    %23 = arith.subf %21, %22 : vector<128xf32>
    %c0_10 = arith.constant 0 : index
    %c0_11 = arith.constant 0 : index
    %c0_12 = arith.constant 0 : index
    %24 = vector.load %arg1[%c0_10, %c0_11, %c0_12] : memref<2x4x128xbf16, #tpu.memory_space<vmem>>, vector<2x4x128xbf16>
    %25 = arith.extf %24 : vector<2x4x128xbf16> to vector<2x4x128xf32>
    %26 = vector.shape_cast %19 : vector<128xf32> to vector<1x1x128xf32>
    %27 = vector.broadcast %26 : vector<1x1x128xf32> to vector<2x4x128xf32>
    %28 = arith.mulf %25, %27 : vector<2x4x128xf32>
    %29 = vector.shape_cast %23 : vector<128xf32> to vector<1x1x128xf32>
    %30 = vector.broadcast %29 : vector<1x1x128xf32> to vector<2x4x128xf32>
    %31 = arith.addf %28, %30 : vector<2x4x128xf32>
    %cst_13 = arith.constant 0.000000e+00 : f32
    %32 = vector.broadcast %cst_13 : f32 to vector<2x4x128xf32>
    %33 = arith.maximumf %31, %32 : vector<2x4x128xf32>
    %34 = vector.shape_cast %33 : vector<2x4x128xf32> to vector<2x1x4x128xf32>
    %35 = vector.extract_strided_slice %34 {offsets = [0, 0, 0, 0], sizes = [2, 1, 2, 128], strides = [1, 1, 1, 1]} : vector<2x1x4x128xf32> to vector<2x1x2x128xf32>
    %36 = vector.extract_strided_slice %34 {offsets = [0, 0, 2, 0], sizes = [2, 1, 2, 128], strides = [1, 1, 1, 1]} : vector<2x1x4x128xf32> to vector<2x1x2x128xf32>
    %37 = arith.addf %35, %36 : vector<2x1x2x128xf32>
    %38 = vector.extract_strided_slice %37 {offsets = [0, 0, 0, 0], sizes = [2, 1, 1, 128], strides = [1, 1, 1, 1]} : vector<2x1x2x128xf32> to vector<2x1x1x128xf32>
    %39 = vector.shape_cast %38 : vector<2x1x1x128xf32> to vector<2x1x128xf32>
    %40 = vector.extract_strided_slice %37 {offsets = [0, 0, 1, 0], sizes = [2, 1, 1, 128], strides = [1, 1, 1, 1]} : vector<2x1x2x128xf32> to vector<2x1x1x128xf32>
    %41 = vector.shape_cast %40 : vector<2x1x1x128xf32> to vector<2x1x128xf32>
    %42 = arith.addf %39, %41 : vector<2x1x128xf32>
    %cst_14 = arith.constant 2.500000e-01 : f32
    %43 = vector.broadcast %cst_14 : f32 to vector<2x1x128xf32>
    %44 = arith.mulf %42, %43 : vector<2x1x128xf32>
    %45 = arith.truncf %44 : vector<2x1x128xf32> to vector<2x1x128xbf16>
    %c0_15 = arith.constant 0 : index
    %c0_16 = arith.constant 0 : index
    %c0_17 = arith.constant 0 : index
    %46 = vector.load %arg5[%c0_15, %c0_16, %c0_17] : memref<2x1x128xbf16, #tpu.memory_space<vmem>>, vector<2x1x128xbf16>
    tpu.vector_store %arg5[%c0_15, %c0_16, %c0_17], %45 {strides = array<i32>} : memref<2x1x128xbf16, #tpu.memory_space<vmem>>, vector<2x1x128xbf16>,
    return
  }
  func.func @transform_0(%arg0: i32) -> (i32, i32, i32) {
    %c0_i32 = arith.constant 0 : i32
    %c0_i32_0 = arith.constant 0 : i32
    %c0_i32_1 = arith.constant 0 : i32
    return %arg0, %c0_i32, %c0_i32_0 : i32, i32, i32
  }
  func.func @transform_1(%arg0: i32) -> (i32, i32, i32) {
    %c0_i32 = arith.constant 0 : i32
    %c0_i32_0 = arith.constant 0 : i32
    %c0_i32_1 = arith.constant 0 : i32
    %c0_i32_2 = arith.constant 0 : i32
    return %c0_i32, %c0_i32_0, %c0_i32_1 : i32, i32, i32
  }
  func.func @transform_2(%arg0: i32) -> (i32, i32) {
    %c0_i32 = arith.constant 0 : i32
    %c0_i32_0 = arith.constant 0 : i32
    %c0_i32_1 = arith.constant 0 : i32
    return %c0_i32, %c0_i32_0 : i32, i32
  }
  func.func @transform_3(%arg0: i32) -> (i32, i32) {
    %c0_i32 = arith.constant 0 : i32
    %c0_i32_0 = arith.constant 0 : i32
    %c0_i32_1 = arith.constant 0 : i32
    return %c0_i32, %c0_i32_0 : i32, i32
  }
  func.func @transform_4(%arg0: i32) -> (i32, i32, i32) {
    %c0_i32 = arith.constant 0 : i32
    %c0_i32_0 = arith.constant 0 : i32
    %c0_i32_1 = arith.constant 0 : i32
    return %arg0, %c0_i32, %c0_i32_0 : i32, i32, i32
  }
}

module attributes {stable_mosaic.version = 11 : i64} {
  func.func @_classifier_kernel(%arg0: memref<2x128xbf16, #tpu.memory_space<vmem>>, %arg1: memref<128x512xbf16, #tpu.memory_space<vmem>>, %arg2: memref<1x512xf32, #tpu.memory_space<vmem>>, %arg3: memref<1x512xf32, #tpu.memory_space<vmem>>, %arg4: memref<1x512xf32, #tpu.memory_space<vmem>>, %arg5: memref<512x128xbf16, #tpu.memory_space<vmem>>, %arg6: memref<1x128xf32, #tpu.memory_space<vmem>>, %arg7: memref<2x128xf32, #tpu.memory_space<vmem>>) attributes {dimension_semantics = [], scalar_prefetch = 0 : i64, scratch_operands = 0 : i64, tpu.core_type = #tpu.core_type<tc>} {
    %c0 = arith.constant 0 : index
    %c0_0 = arith.constant 0 : index
    %0 = vector.load %arg0[%c0, %c0_0] : memref<2x128xbf16, #tpu.memory_space<vmem>>, vector<2x128xbf16>
    %c0_1 = arith.constant 0 : index
    %c0_2 = arith.constant 0 : index
    %1 = vector.load %arg1[%c0_1, %c0_2] : memref<128x512xbf16, #tpu.memory_space<vmem>>, vector<128x512xbf16>
    %cst = arith.constant dense<0.000000e+00> : vector<2x512xf32>
    %2 = tpu.matmul %0, %1, %cst {dimension_numbers = #tpu.dot_dimension_numbers<[1], [0], [0], [1], [0, 0, 1, 1], [], []>} : vector<2x128xbf16>, vector<128x512xbf16>, vector<2x512xf32> -> vector<2x512xf32>
    %c0_3 = arith.constant 0 : index
    %c0_4 = arith.constant 0 : index
    %3 = vector.load %arg2[%c0_3, %c0_4] : memref<1x512xf32, #tpu.memory_space<vmem>>, vector<1x512xf32>
    %4 = vector.broadcast %3 : vector<1x512xf32> to vector<2x512xf32>
    %5 = arith.addf %2, %4 : vector<2x512xf32>
    %cst_5 = arith.constant dense<0.000000e+00> : vector<512xf32>
    %6 = vector.multi_reduction <add>, %5, %cst_5 [0] : vector<2x512xf32> to vector<512xf32>
    %7 = vector.shape_cast %6 : vector<512xf32> to vector<1x512xf32>
    %cst_6 = arith.constant 2.000000e+00 : f32
    %8 = vector.broadcast %cst_6 : f32 to vector<1x512xf32>
    %9 = arith.divf %7, %8 : vector<1x512xf32>
    %10 = vector.broadcast %9 : vector<1x512xf32> to vector<2x512xf32>
    %11 = arith.subf %5, %10 : vector<2x512xf32>
    %12 = arith.mulf %11, %11 : vector<2x512xf32>
    %cst_7 = arith.constant dense<0.000000e+00> : vector<512xf32>
    %13 = vector.multi_reduction <add>, %12, %cst_7 [0] : vector<2x512xf32> to vector<512xf32>
    %14 = vector.shape_cast %13 : vector<512xf32> to vector<1x512xf32>
    %cst_8 = arith.constant 2.000000e+00 : f32
    %15 = vector.broadcast %cst_8 : f32 to vector<1x512xf32>
    %16 = arith.divf %14, %15 : vector<1x512xf32>
    %17 = vector.broadcast %9 : vector<1x512xf32> to vector<2x512xf32>
    %18 = arith.subf %5, %17 : vector<2x512xf32>
    %cst_9 = arith.constant 9.99999974E-6 : f32
    %19 = vector.broadcast %cst_9 : f32 to vector<1x512xf32>
    %20 = arith.addf %16, %19 : vector<1x512xf32>
    %21 = math.rsqrt %20 : vector<1x512xf32>
    %22 = vector.broadcast %21 : vector<1x512xf32> to vector<2x512xf32>
    %23 = arith.mulf %18, %22 : vector<2x512xf32>
    %c0_10 = arith.constant 0 : index
    %c0_11 = arith.constant 0 : index
    %24 = vector.load %arg3[%c0_10, %c0_11] : memref<1x512xf32, #tpu.memory_space<vmem>>, vector<1x512xf32>
    %25 = vector.broadcast %24 : vector<1x512xf32> to vector<2x512xf32>
    %26 = arith.mulf %23, %25 : vector<2x512xf32>
    %c0_12 = arith.constant 0 : index
    %c0_13 = arith.constant 0 : index
    %27 = vector.load %arg4[%c0_12, %c0_13] : memref<1x512xf32, #tpu.memory_space<vmem>>, vector<1x512xf32>
    %28 = vector.broadcast %27 : vector<1x512xf32> to vector<2x512xf32>
    %29 = arith.addf %26, %28 : vector<2x512xf32>
    %cst_14 = arith.constant 0.000000e+00 : f32
    %30 = vector.broadcast %cst_14 : f32 to vector<2x512xf32>
    %31 = arith.maximumf %29, %30 : vector<2x512xf32>
    %32 = arith.truncf %31 : vector<2x512xf32> to vector<2x512xbf16>
    %c0_15 = arith.constant 0 : index
    %c0_16 = arith.constant 0 : index
    %33 = vector.load %arg5[%c0_15, %c0_16] : memref<512x128xbf16, #tpu.memory_space<vmem>>, vector<512x128xbf16>
    %cst_17 = arith.constant dense<0.000000e+00> : vector<2x128xf32>
    %34 = tpu.matmul %32, %33, %cst_17 {dimension_numbers = #tpu.dot_dimension_numbers<[1], [0], [0], [1], [0, 0, 1, 1], [], []>} : vector<2x512xbf16>, vector<512x128xbf16>, vector<2x128xf32> -> vector<2x128xf32>
    %c0_18 = arith.constant 0 : index
    %c0_19 = arith.constant 0 : index
    %35 = vector.load %arg6[%c0_18, %c0_19] : memref<1x128xf32, #tpu.memory_space<vmem>>, vector<1x128xf32>
    %36 = vector.broadcast %35 : vector<1x128xf32> to vector<2x128xf32>
    %37 = arith.addf %34, %36 : vector<2x128xf32>
    %c0_20 = arith.constant 0 : index
    %c0_21 = arith.constant 0 : index
    %38 = vector.load %arg7[%c0_20, %c0_21] : memref<2x128xf32, #tpu.memory_space<vmem>>, vector<2x128xf32>
    tpu.vector_store %arg7[%c0_20, %c0_21], %37 {strides = array<i32>} : memref<2x128xf32, #tpu.memory_space<vmem>>, vector<2x128xf32>,
    return
  }
}

</mosaic_0001>

<llo_original>
// kernel: masked_vgg_forward.10
$region0: #{masked_vgg_forward.10}
  #allocation0 [shape = 'u32[]', space=smem, size = 0x4, offset = 0x4, fixed_abs, tag = 'smem constant byte address 0x4 - core index']
  #allocation1 [shape = 'u32[72,128]{1,0:T(1,128)}', space=vmem, size = 0x9000, scoped, tag = 'internal scratch']
  %s0 = inlined_call_operand.vmem [shape: bf16[2,64,128], index: 0, kind: input, shape index: {}]
  %s1 = inlined_call_operand.vmem [shape: f32[1,2,128], index: 1, kind: input, shape index: {}]
  %s2 = inlined_call_operand.vmem [shape: f32[1,128], index: 2, kind: input, shape index: {}]
  %s3 = inlined_call_operand.vmem [shape: f32[1,128], index: 3, kind: input, shape index: {}]
  %s4 = inlined_call_operand.vmem [shape: bf16[2,96,128], index: 4, kind: output, shape index: {}]
  %s5 = sld [smem:[#allocation0]]
  $region26: #{masked_vgg_forward.10} parent=0
    _
  %s7 = ssub.s32 1, %s5
  %s8 = scalar_select 0, %s7, %s5
  // Predicated region
  $region2: #{masked_vgg_forward.10} parent=0 // pred_check
    _
  $region3: #{masked_vgg_forward.10} parent=0 // pred_check_branch
    %10 = sbr.rel (0) target = $region5
  $region4: #{masked_vgg_forward.10} parent=0 // pred_region
    _
  $region5: #{masked_vgg_forward.10} parent=0 // pred_fallthru
    _
  // Predicated region
  $region6: #{masked_vgg_forward.10} parent=0 // pred_check
    _
  $region7: #{masked_vgg_forward.10} parent=0 // pred_check_branch
    %12 = sbr.rel (0) target = $region9
  $region8: #{masked_vgg_forward.10} parent=0 // pred_region
    _
  $region9: #{masked_vgg_forward.10} parent=0 // pred_fallthru
    _
  // Predicated region
  $region10: #{masked_vgg_forward.10} parent=0 // pred_check
    _
  $region11: #{masked_vgg_forward.10} parent=0 // pred_check_branch
    %14 = sbr.rel (0) target = $region13
  $region12: #{masked_vgg_forward.10} parent=0 // pred_region
    _
  $region13: #{masked_vgg_forward.10} parent=0 // pred_fallthru
    _
  // Predicated region
  $region14: #{masked_vgg_forward.10} parent=0 // pred_check
    _
  $region15: #{masked_vgg_forward.10} parent=0 // pred_check_branch
    %16 = sbr.rel (0) target = $region17
  $region16: #{masked_vgg_forward.10} parent=0 // pred_region
    _
  $region17: #{masked_vgg_forward.10} parent=0 // pred_fallthru
    _
  %v18 = vld [vmem:[%s1] sm:$0x3]
  %v19 = vadd.f32 %v18, 0.0
  %v20 = vmul.f32 %v19, 0.0078125
  %v21 = vmul.f32 %v20, %v20
  %v23 = vrot.slane %v21, 7
  %v25 = vsub.f32 %v20, %v23
  %v26 = vmax.f32 %v25, 0.0
  %v27 = vld [vmem:[%s2] sm:$0x1]
  %v28 = vadd.f32 %v26, 1e-05
  %v29 = vrsqrt.pop %v28
  %v30 = vmul.f32 %v29, %v28
  %v31 = vmul.f32 %v30, %v29
  %v32 = vmul.f32 0.5, %v31
  %v33 = vsub.f32 1.5, %v32
  %v34 = vmul.f32 %v29, %v33
  %vm35 = vweird.f32 %v28
  %vm36 = vweird.f32 %v29
  %vm37 = vmor %vm35, %vm36
  %v38 = vsel %vm37, %v29, %v34
  %40 = vst [vmem:[#allocation1] sm:$0xff] %v38
  %s41 = scalar_lea.vmem [#allocation1], 1
  %v42 = vld [vmem:[%s41] ss:$9 sm:$0xff]
  %v44 = vmul.f32 %v27, %v42
  %v45 = vld [vmem:[%s3] sm:$0x1]
  %v46 = vmul.f32 %v20, %v44
  %v47 = vsub.f32 %v45, %v46
  %v48 = vld [vmem:[%s0] sm:$0xf]
  %v49 = vld [vmem:[%s0 + $0x4] sm:$0xf]
  %v50 = vld [vmem:[%s0 + $0x8] sm:$0xf]
  %v51 = vld [vmem:[%s0 + $0xc] sm:$0xf]
  %v52 = vld [vmem:[%s0 + $0x10] sm:$0xf]
  %v53 = vld [vmem:[%s0 + $0x14] sm:$0xf]
  %v54 = vld [vmem:[%s0 + $0x18] sm:$0xf]
  %v55 = vld [vmem:[%s0 + $0x1c] sm:$0xf]
  %v56 = vld [vmem:[%s0 + $0x20] sm:$0xf]
  %v57 = vld [vmem:[%s0 + $0x24] sm:$0xf]
  %v58 = vld [vmem:[%s0 + $0x28] sm:$0xf]
  %v59 = vld [vmem:[%s0 + $0x2c] sm:$0xf]
  %v60 = vld [vmem:[%s0 + $0x30] sm:$0xf]
  %v61 = vld [vmem:[%s0 + $0x34] sm:$0xf]
  %v62 = vld [vmem:[%s0 + $0x38] sm:$0xf]
  %v63 = vld [vmem:[%s0 + $0x3c] sm:$0xf]
  %v64 = vunpack.c.l.bf16 %v48
  %v65 = vunpack.c.l.bf16 %v49
  %v66 = vunpack.c.l.bf16 %v50
  %v67 = vunpack.c.l.bf16 %v51
  %v68 = vunpack.c.l.bf16 %v52
  %v69 = vunpack.c.l.bf16 %v53
  %v70 = vunpack.c.l.bf16 %v54
  %v71 = vunpack.c.l.bf16 %v55
  %v72 = vunpack.c.l.bf16 %v56
  %v73 = vunpack.c.l.bf16 %v57
  %v74 = vunpack.c.l.bf16 %v58
  %v75 = vunpack.c.l.bf16 %v59
  %v76 = vunpack.c.l.bf16 %v60
  %v77 = vunpack.c.l.bf16 %v61
  %v78 = vunpack.c.l.bf16 %v62
  %v79 = vunpack.c.l.bf16 %v63
  %v81 = vperm.slane %v44, 0
  %v83 = vmul.f32 %v64, %v81
  %v84 = vmul.f32 %v65, %v81
  %v85 = vmul.f32 %v66, %v81
  %v86 = vmul.f32 %v67, %v81
  %v87 = vmul.f32 %v68, %v81
  %v88 = vmul.f32 %v69, %v81
  %v89 = vmul.f32 %v70, %v81
  %v90 = vmul.f32 %v71, %v81
  %v91 = vmul.f32 %v72, %v81
  %v92 = vmul.f32 %v73, %v81
  %v93 = vmul.f32 %v74, %v81
  %v94 = vmul.f32 %v75, %v81
  %v95 = vmul.f32 %v76, %v81
  %v96 = vmul.f32 %v77, %v81
  %v97 = vmul.f32 %v78, %v81
  %v98 = vmul.f32 %v79, %v81
  %v100 = vperm.slane %v47, 0
  %v102 = vadd.f32 %v83, %v100
  %v103 = vadd.f32 %v84, %v100
  %v104 = vadd.f32 %v85, %v100
  %v105 = vadd.f32 %v86, %v100
  %v106 = vadd.f32 %v87, %v100
  %v107 = vadd.f32 %v88, %v100
  %v108 = vadd.f32 %v89, %v100
  %v109 = vadd.f32 %v90, %v100
  %v110 = vadd.f32 %v91, %v100
  %v111 = vadd.f32 %v92, %v100
  %v112 = vadd.f32 %v93, %v100
  %v113 = vadd.f32 %v94, %v100
  %v114 = vadd.f32 %v95, %v100
  %v115 = vadd.f32 %v96, %v100
  %v116 = vadd.f32 %v97, %v100
  %v117 = vadd.f32 %v98, %v100
  %v118 = vmax.f32 %v102, 0.0
  %v119 = vmax.f32 %v103, 0.0
  %v120 = vmax.f32 %v104, 0.0
  %v121 = vmax.f32 %v105, 0.0
  %v122 = vmax.f32 %v106, 0.0
  %v123 = vmax.f32 %v107, 0.0
  %v124 = vmax.f32 %v108, 0.0
  %v125 = vmax.f32 %v109, 0.0
  %v126 = vmax.f32 %v110, 0.0
  %v127 = vmax.f32 %v111, 0.0
  %v128 = vmax.f32 %v112, 0.0
  %v129 = vmax.f32 %v113, 0.0
  %v130 = vmax.f32 %v114, 0.0
  %v131 = vmax.f32 %v115, 0.0
  %v132 = vmax.f32 %v116, 0.0
  %v133 = vmax.f32 %v117, 0.0
  %v134 = vpack.c.bf16 %v118, %v118
  %v135 = vpack.c.bf16 %v119, %v119
  %v136 = vpack.c.bf16 %v120, %v120
  %v137 = vpack.c.bf16 %v121, %v121
  %v138 = vpack.c.bf16 %v122, %v122
  %v139 = vpack.c.bf16 %v123, %v123
  %v140 = vpack.c.bf16 %v124, %v124
  %v141 = vpack.c.bf16 %v125, %v125
  %v142 = vpack.c.bf16 %v126, %v126
  %v143 = vpack.c.bf16 %v127, %v127
  %v144 = vpack.c.bf16 %v128, %v128
  %v145 = vpack.c.bf16 %v129, %v129
  %v146 = vpack.c.bf16 %v130, %v130
  %v147 = vpack.c.bf16 %v131, %v131
  %v148 = vpack.c.bf16 %v132, %v132
  %v149 = vpack.c.bf16 %v133, %v133
  %150 = vst [vmem:[%s4] sm:$0xf] 0
  %151 = vst [vmem:[%s4 + $0x4] sm:$0xf] 0
  %152 = vst [vmem:[%s4 + $0x30] sm:$0xf] 0
  %153 = vst [vmem:[%s4 + $0x34] sm:$0xf] 0
  %154 = vst [vmem:[%s4 + $0x8] sm:$0xf] %v134
  %155 = vst [vmem:[%s4 + $0xc] sm:$0xf] %v135
  %156 = vst [vmem:[%s4 + $0x10] sm:$0xf] %v136
  %157 = vst [vmem:[%s4 + $0x14] sm:$0xf] %v137
  %158 = vst [vmem:[%s4 + $0x18] sm:$0xf] %v138
  %159 = vst [vmem:[%s4 + $0x1c] sm:$0xf] %v139
  %160 = vst [vmem:[%s4 + $0x20] sm:$0xf] %v140
  %161 = vst [vmem:[%s4 + $0x24] sm:$0xf] %v141
  %162 = vst [vmem:[%s4 + $0x38] sm:$0xf] %v142
  %163 = vst [vmem:[%s4 + $0x3c] sm:$0xf] %v143
  %164 = vst [vmem:[%s4 + $0x40] sm:$0xf] %v144
  %165 = vst [vmem:[%s4 + $0x44] sm:$0xf] %v145
  %166 = vst [vmem:[%s4 + $0x48] sm:$0xf] %v146
  %167 = vst [vmem:[%s4 + $0x4c] sm:$0xf] %v147
  %168 = vst [vmem:[%s4 + $0x50] sm:$0xf] %v148
  %169 = vst [vmem:[%s4 + $0x54] sm:$0xf] %v149
  %170 = vst [vmem:[%s4 + $0x28] sm:$0xf] 0
  %171 = vst [vmem:[%s4 + $0x2c] sm:$0xf] 0
  %172 = vst [vmem:[%s4 + $0x58] sm:$0xf] 0
  %173 = vst [vmem:[%s4 + $0x5c] sm:$0xf] 0
  // Predicated region
  $region18: #{masked_vgg_forward.10} parent=0 // pred_check
    _
  $region19: #{masked_vgg_forward.10} parent=0 // pred_check_branch
    %175 = sbr.rel (0) target = $region21
  $region20: #{masked_vgg_forward.10} parent=0 // pred_region
    _
  $region21: #{masked_vgg_forward.10} parent=0 // pred_fallthru
    _
  // Predicated region
  $region22: #{masked_vgg_forward.10} parent=0 // pred_check
    _
  $region23: #{masked_vgg_forward.10} parent=0 // pred_check_branch
    %177 = sbr.rel (0) target = $region25
  $region24: #{masked_vgg_forward.10} parent=0 // pred_region
    _
  $region25: #{masked_vgg_forward.10} parent=0 // pred_fallthru
    _

// kernel: masked_vgg_forward.12
$region0: #{masked_vgg_forward.12}
  #allocation0 [shape = 'u32[]', space=smem, size = 0x4, offset = 0x4, fixed_abs, tag = 'smem constant byte address 0x4 - core index']
  #allocation1 [shape = 'u32[72,128]{1,0:T(1,128)}', space=vmem, size = 0x9000, scoped, tag = 'internal scratch']
  %s0 = inlined_call_operand.vmem [shape: bf16[2,64,128], index: 0, kind: input, shape index: {}]
  %s1 = inlined_call_operand.vmem [shape: f32[1,2,128], index: 1, kind: input, shape index: {}]
  %s2 = inlined_call_operand.vmem [shape: f32[1,128], index: 2, kind: input, shape index: {}]
  %s3 = inlined_call_operand.vmem [shape: f32[1,128], index: 3, kind: input, shape index: {}]
  %s4 = inlined_call_operand.vmem [shape: bf16[2,32,128], index: 4, kind: output, shape index: {}]
  %s5 = sld [smem:[#allocation0]]
  $region26: #{masked_vgg_forward.12} parent=0
    _
  %s7 = ssub.s32 1, %s5
  %s8 = scalar_select 0, %s7, %s5
  // Predicated region
  $region2: #{masked_vgg_forward.12} parent=0 // pred_check
    _
  $region3: #{masked_vgg_forward.12} parent=0 // pred_check_branch
    %10 = sbr.rel (0) target = $region5
  $region4: #{masked_vgg_forward.12} parent=0 // pred_region
    _
  $region5: #{masked_vgg_forward.12} parent=0 // pred_fallthru
    _
  // Predicated region
  $region6: #{masked_vgg_forward.12} parent=0 // pred_check
    _
  $region7: #{masked_vgg_forward.12} parent=0 // pred_check_branch
    %12 = sbr.rel (0) target = $region9
  $region8: #{masked_vgg_forward.12} parent=0 // pred_region
    _
  $region9: #{masked_vgg_forward.12} parent=0 // pred_fallthru
    _
  // Predicated region
  $region10: #{masked_vgg_forward.12} parent=0 // pred_check
    _
  $region11: #{masked_vgg_forward.12} parent=0 // pred_check_branch
    %14 = sbr.rel (0) target = $region13
  $region12: #{masked_vgg_forward.12} parent=0 // pred_region
    _
  $region13: #{masked_vgg_forward.12} parent=0 // pred_fallthru
    _
  // Predicated region
  $region14: #{masked_vgg_forward.12} parent=0 // pred_check
    _
  $region15: #{masked_vgg_forward.12} parent=0 // pred_check_branch
    %16 = sbr.rel (0) target = $region17
  $region16: #{masked_vgg_forward.12} parent=0 // pred_region
    _
  $region17: #{masked_vgg_forward.12} parent=0 // pred_fallthru
    _
  %v18 = vld [vmem:[%s1] sm:$0x3]
  %v19 = vadd.f32 %v18, 0.0
  %v20 = vmul.f32 %v19, 0.0078125
  %v21 = vmul.f32 %v20, %v20
  %v23 = vrot.slane %v21, 7
  %v25 = vsub.f32 %v20, %v23
  %v26 = vmax.f32 %v25, 0.0
  %v27 = vld [vmem:[%s2] sm:$0x1]
  %v28 = vadd.f32 %v26, 1e-05
  %v29 = vrsqrt.pop %v28
  %v30 = vmul.f32 %v29, %v28
  %v31 = vmul.f32 %v30, %v29
  %v32 = vmul.f32 0.5, %v31
  %v33 = vsub.f32 1.5, %v32
  %v34 = vmul.f32 %v29, %v33
  %vm35 = vweird.f32 %v28
  %vm36 = vweird.f32 %v29
  %vm37 = vmor %vm35, %vm36
  %v38 = vsel %vm37, %v29, %v34
  %40 = vst [vmem:[#allocation1] sm:$0xff] %v38
  %s41 = scalar_lea.vmem [#allocation1], 1
  %v42 = vld [vmem:[%s41] ss:$9 sm:$0xff]
  %v44 = vmul.f32 %v27, %v42
  %v45 = vld [vmem:[%s3] sm:$0x1]
  %v46 = vmul.f32 %v20, %v44
  %v47 = vsub.f32 %v45, %v46
  %v48 = vld [vmem:[%s0] sm:$0xf]
  %v49 = vld [vmem:[%s0 + $0x4] sm:$0xf]
  %v50 = vld [vmem:[%s0 + $0x8] sm:$0xf]
  %v51 = vld [vmem:[%s0 + $0xc] sm:$0xf]
  %v52 = vld [vmem:[%s0 + $0x10] sm:$0xf]
  %v53 = vld [vmem:[%s0 + $0x14] sm:$0xf]
  %v54 = vld [vmem:[%s0 + $0x18] sm:$0xf]
  %v55 = vld [vmem:[%s0 + $0x1c] sm:$0xf]
  %v56 = vld [vmem:[%s0 + $0x20] sm:$0xf]
  %v57 = vld [vmem:[%s0 + $0x24] sm:$0xf]
  %v58 = vld [vmem:[%s0 + $0x28] sm:$0xf]
  %v59 = vld [vmem:[%s0 + $0x2c] sm:$0xf]
  %v60 = vld [vmem:[%s0 + $0x30] sm:$0xf]
  %v61 = vld [vmem:[%s0 + $0x34] sm:$0xf]
  %v62 = vld [vmem:[%s0 + $0x38] sm:$0xf]
  %v63 = vld [vmem:[%s0 + $0x3c] sm:$0xf]
  %v64 = vunpack.c.l.bf16 %v48
  %v65 = vunpack.c.l.bf16 %v49
  %v66 = vunpack.c.l.bf16 %v50
  %v67 = vunpack.c.l.bf16 %v51
  %v68 = vunpack.c.l.bf16 %v52
  %v69 = vunpack.c.l.bf16 %v53
  %v70 = vunpack.c.l.bf16 %v54
  %v71 = vunpack.c.l.bf16 %v55
  %v72 = vunpack.c.l.bf16 %v56
  %v73 = vunpack.c.l.bf16 %v57
  %v74 = vunpack.c.l.bf16 %v58
  %v75 = vunpack.c.l.bf16 %v59
  %v76 = vunpack.c.l.bf16 %v60
  %v77 = vunpack.c.l.bf16 %v61
  %v78 = vunpack.c.l.bf16 %v62
  %v79 = vunpack.c.l.bf16 %v63
  %v81 = vperm.slane %v44, 0
  %v83 = vmul.f32 %v64, %v81
  %v84 = vmul.f32 %v65, %v81
  %v85 = vmul.f32 %v66, %v81
  %v86 = vmul.f32 %v67, %v81
  %v87 = vmul.f32 %v68, %v81
  %v88 = vmul.f32 %v69, %v81
  %v89 = vmul.f32 %v70, %v81
  %v90 = vmul.f32 %v71, %v81
  %v91 = vmul.f32 %v72, %v81
  %v92 = vmul.f32 %v73, %v81
  %v93 = vmul.f32 %v74, %v81
  %v94 = vmul.f32 %v75, %v81
  %v95 = vmul.f32 %v76, %v81
  %v96 = vmul.f32 %v77, %v81
  %v97 = vmul.f32 %v78, %v81
  %v98 = vmul.f32 %v79, %v81
  %v100 = vperm.slane %v47, 0
  %v102 = vadd.f32 %v83, %v100
  %v103 = vadd.f32 %v84, %v100
  %v104 = vadd.f32 %v85, %v100
  %v105 = vadd.f32 %v86, %v100
  %v106 = vadd.f32 %v87, %v100
  %v107 = vadd.f32 %v88, %v100
  %v108 = vadd.f32 %v89, %v100
  %v109 = vadd.f32 %v90, %v100
  %v110 = vadd.f32 %v91, %v100
  %v111 = vadd.f32 %v92, %v100
  %v112 = vadd.f32 %v93, %v100
  %v113 = vadd.f32 %v94, %v100
  %v114 = vadd.f32 %v95, %v100
  %v115 = vadd.f32 %v96, %v100
  %v116 = vadd.f32 %v97, %v100
  %v117 = vadd.f32 %v98, %v100
  %v118 = vmax.f32 %v102, 0.0
  %v119 = vmax.f32 %v103, 0.0
  %v120 = vmax.f32 %v104, 0.0
  %v121 = vmax.f32 %v105, 0.0
  %v122 = vmax.f32 %v106, 0.0
  %v123 = vmax.f32 %v107, 0.0
  %v124 = vmax.f32 %v108, 0.0
  %v125 = vmax.f32 %v109, 0.0
  %v126 = vmax.f32 %v110, 0.0
  %v127 = vmax.f32 %v111, 0.0
  %v128 = vmax.f32 %v112, 0.0
  %v129 = vmax.f32 %v113, 0.0
  %v130 = vmax.f32 %v114, 0.0
  %v131 = vmax.f32 %v115, 0.0
  %v132 = vmax.f32 %v116, 0.0
  %v133 = vmax.f32 %v117, 0.0
  %v134 = vmax.f32 %v118, %v119
  %v135 = vmax.f32 %v120, %v121
  %v136 = vmax.f32 %v122, %v123
  %v137 = vmax.f32 %v124, %v125
  %v138 = vmax.f32 %v126, %v127
  %v139 = vmax.f32 %v128, %v129
  %v140 = vmax.f32 %v130, %v131
  %v141 = vmax.f32 %v132, %v133
  %v150 = vrot.slane %v134, 2
  %v151 = vrot.slane %v134, 4
  %v152 = vrot.slane %v134, 6
  %v153 = vrot.slane %v135, 2
  %v154 = vrot.slane %v135, 4
  %v155 = vrot.slane %v135, 6
  %v156 = vrot.slane %v136, 2
  %v157 = vrot.slane %v136, 4
  %v158 = vrot.slane %v136, 6
  %v159 = vrot.slane %v137, 2
  %v160 = vrot.slane %v137, 4
  %v161 = vrot.slane %v137, 6
  %v162 = vrot.slane %v138, 2
  %v163 = vrot.slane %v138, 4
  %v164 = vrot.slane %v138, 6
  %v165 = vrot.slane %v139, 2
  %v166 = vrot.slane %v139, 4
  %v167 = vrot.slane %v139, 6
  %v168 = vrot.slane %v140, 2
  %v169 = vrot.slane %v140, 4
  %v170 = vrot.slane %v140, 6
  %v171 = vrot.slane %v141, 2
  %v172 = vrot.slane %v141, 4
  %v173 = vrot.slane %v141, 6
  %v198 = vrot.slane %v134, 7
  %v199 = vrot.slane %v198, 2
  %v200 = vrot.slane %v150, 7
  %v201 = vrot.slane %v200, 2
  %v202 = vrot.slane %v151, 7
  %v203 = vrot.slane %v202, 2
  %v204 = vrot.slane %v152, 7
  %v205 = vrot.slane %v204, 2
  %v206 = vrot.slane %v135, 7
  %v207 = vrot.slane %v206, 2
  %v208 = vrot.slane %v153, 7
  %v209 = vrot.slane %v208, 2
  %v210 = vrot.slane %v154, 7
  %v211 = vrot.slane %v210, 2
  %v212 = vrot.slane %v155, 7
  %v213 = vrot.slane %v212, 2
  %v214 = vrot.slane %v136, 7
  %v215 = vrot.slane %v214, 2
  %v216 = vrot.slane %v156, 7
  %v217 = vrot.slane %v216, 2
  %v218 = vrot.slane %v157, 7
  %v219 = vrot.slane %v218, 2
  %v220 = vrot.slane %v158, 7
  %v221 = vrot.slane %v220, 2
  %v222 = vrot.slane %v137, 7
  %v223 = vrot.slane %v222, 2
  %v224 = vrot.slane %v159, 7
  %v225 = vrot.slane %v224, 2
  %v226 = vrot.slane %v160, 7
  %v227 = vrot.slane %v226, 2
  %v228 = vrot.slane %v161, 7
  %v229 = vrot.slane %v228, 2
  %v230 = vrot.slane %v138, 7
  %v231 = vrot.slane %v230, 2
  %v232 = vrot.slane %v162, 7
  %v233 = vrot.slane %v232, 2
  %v234 = vrot.slane %v163, 7
  %v235 = vrot.slane %v234, 2
  %v236 = vrot.slane %v164, 7
  %v237 = vrot.slane %v236, 2
  %v238 = vrot.slane %v139, 7
  %v239 = vrot.slane %v238, 2
  %v240 = vrot.slane %v165, 7
  %v241 = vrot.slane %v240, 2
  %v242 = vrot.slane %v166, 7
  %v243 = vrot.slane %v242, 2
  %v244 = vrot.slane %v167, 7
  %v245 = vrot.slane %v244, 2
  %v246 = vrot.slane %v140, 7
  %v247 = vrot.slane %v246, 2
  %v248 = vrot.slane %v168, 7
  %v249 = vrot.slane %v248, 2
  %v250 = vrot.slane %v169, 7
  %v251 = vrot.slane %v250, 2
  %v252 = vrot.slane %v170, 7
  %v253 = vrot.slane %v252, 2
  %v254 = vrot.slane %v141, 7
  %v255 = vrot.slane %v254, 2
  %v256 = vrot.slane %v171, 7
  %v257 = vrot.slane %v256, 2
  %v258 = vrot.slane %v172, 7
  %v259 = vrot.slane %v258, 2
  %v260 = vrot.slane %v173, 7
  %v261 = vrot.slane %v260, 2
  %v294 = vmax.f32 %v134, %v199
  %v295 = vmax.f32 %v150, %v201
  %v296 = vmax.f32 %v151, %v203
  %v297 = vmax.f32 %v152, %v205
  %v298 = vmax.f32 %v135, %v207
  %v299 = vmax.f32 %v153, %v209
  %v300 = vmax.f32 %v154, %v211
  %v301 = vmax.f32 %v155, %v213
  %v302 = vmax.f32 %v136, %v215
  %v303 = vmax.f32 %v156, %v217
  %v304 = vmax.f32 %v157, %v219
  %v305 = vmax.f32 %v158, %v221
  %v306 = vmax.f32 %v137, %v223
  %v307 = vmax.f32 %v159, %v225
  %v308 = vmax.f32 %v160, %v227
  %v309 = vmax.f32 %v161, %v229
  %v310 = vmax.f32 %v138, %v231
  %v311 = vmax.f32 %v162, %v233
  %v312 = vmax.f32 %v163, %v235
  %v313 = vmax.f32 %v164, %v237
  %v314 = vmax.f32 %v139, %v239
  %v315 = vmax.f32 %v165, %v241
  %v316 = vmax.f32 %v166, %v243
  %v317 = vmax.f32 %v167, %v245
  %v318 = vmax.f32 %v140, %v247
  %v319 = vmax.f32 %v168, %v249
  %v320 = vmax.f32 %v169, %v251
  %v321 = vmax.f32 %v170, %v253
  %v322 = vmax.f32 %v141, %v255
  %v323 = vmax.f32 %v171, %v257
  %v324 = vmax.f32 %v172, %v259
  %v325 = vmax.f32 %v173, %v261
  %v326 = vpack.c.bf16 %v294, %v294
  %v327 = vpack.c.bf16 %v295, %v295
  %v328 = vpack.c.bf16 %v296, %v296
  %v329 = vpack.c.bf16 %v297, %v297
  %v330 = vpack.c.bf16 %v298, %v298
  %v331 = vpack.c.bf16 %v299, %v299
  %v332 = vpack.c.bf16 %v300, %v300
  %v333 = vpack.c.bf16 %v301, %v301
  %v334 = vpack.c.bf16 %v302, %v302
  %v335 = vpack.c.bf16 %v303, %v303
  %v336 = vpack.c.bf16 %v304, %v304
  %v337 = vpack.c.bf16 %v305, %v305
  %v338 = vpack.c.bf16 %v306, %v306
  %v339 = vpack.c.bf16 %v307, %v307
  %v340 = vpack.c.bf16 %v308, %v308
  %v341 = vpack.c.bf16 %v309, %v309
  %v342 = vpack.c.bf16 %v310, %v310
  %v343 = vpack.c.bf16 %v311, %v311
  %v344 = vpack.c.bf16 %v312, %v312
  %v345 = vpack.c.bf16 %v313, %v313
  %v346 = vpack.c.bf16 %v314, %v314
  %v347 = vpack.c.bf16 %v315, %v315
  %v348 = vpack.c.bf16 %v316, %v316
  %v349 = vpack.c.bf16 %v317, %v317
  %v350 = vpack.c.bf16 %v318, %v318
  %v351 = vpack.c.bf16 %v319, %v319
  %v352 = vpack.c.bf16 %v320, %v320
  %v353 = vpack.c.bf16 %v321, %v321
  %v354 = vpack.c.bf16 %v322, %v322
  %v355 = vpack.c.bf16 %v323, %v323
  %v356 = vpack.c.bf16 %v324, %v324
  %v357 = vpack.c.bf16 %v325, %v325
  %358 = vst [vmem:[%s4] sm:$0xf] 0
  %359 = vst [vmem:[%s4 + $0x10] sm:$0xf] 0
  %v392 = vunpack.c.l.b16 %v326
  %v393 = vunpack.c.l.b16 %v327
  %v394 = vunpack.c.l.b16 %v328
  %v395 = vunpack.c.l.b16 %v329
  %v396 = vunpack.c.l.b16 %v330
  %v397 = vunpack.c.l.b16 %v331
  %v398 = vunpack.c.l.b16 %v332
  %v399 = vunpack.c.l.b16 %v333
  %v400 = vunpack.c.l.b16 %v334
  %v401 = vunpack.c.l.b16 %v335
  %v402 = vunpack.c.l.b16 %v336
  %v403 = vunpack.c.l.b16 %v337
  %v404 = vunpack.c.l.b16 %v338
  %v405 = vunpack.c.l.b16 %v339
  %v406 = vunpack.c.l.b16 %v340
  %v407 = vunpack.c.l.b16 %v341
  %v408 = vunpack.c.l.b16 %v342
  %v409 = vunpack.c.l.b16 %v343
  %v410 = vunpack.c.l.b16 %v344
  %v411 = vunpack.c.l.b16 %v345
  %v412 = vunpack.c.l.b16 %v346
  %v413 = vunpack.c.l.b16 %v347
  %v414 = vunpack.c.l.b16 %v348
  %v415 = vunpack.c.l.b16 %v349
  %v416 = vunpack.c.l.b16 %v350
  %v417 = vunpack.c.l.b16 %v351
  %v418 = vunpack.c.l.b16 %v352
  %v419 = vunpack.c.l.b16 %v353
  %v420 = vunpack.c.l.b16 %v354
  %v421 = vunpack.c.l.b16 %v355
  %v422 = vunpack.c.l.b16 %v356
  %v423 = vunpack.c.l.b16 %v357
  %v424 = vrot.slane %v393, 7
  %vm425 = vcmask 1041409
  %v426 = vsel %vm425, %v424, %v392
  %v427 = vrot.slane %v394, 6
  %vm428 = vcmask 1042434
  %v429 = vsel %vm428, %v427, %v426
  %v430 = vrot.slane %v395, 5
  %vm431 = vcmask 1043459
  %v432 = vsel %vm431, %v430, %v429
  %v433 = vrot.slane %v396, 4
  %vm434 = vcmask 1044484
  %v435 = vsel %vm434, %v433, %v432
  %v436 = vrot.slane %v397, 3
  %vm437 = vcmask 1045509
  %v438 = vsel %vm437, %v436, %v435
  %v439 = vrot.slane %v398, 2
  %vm440 = vcmask 1046534
  %v441 = vsel %vm440, %v439, %v438
  %v442 = vrot.slane %v399, 1
  %vm443 = vcmask 1047559
  %v444 = vsel %vm443, %v442, %v441
  %v445 = vrot.slane %v401, 7
  %v446 = vsel %vm425, %v445, %v400
  %v447 = vrot.slane %v402, 6
  %v448 = vsel %vm428, %v447, %v446
  %v449 = vrot.slane %v403, 5
  %v450 = vsel %vm431, %v449, %v448
  %v451 = vrot.slane %v404, 4
  %v452 = vsel %vm434, %v451, %v450
  %v453 = vrot.slane %v405, 3
  %v454 = vsel %vm437, %v453, %v452
  %v455 = vrot.slane %v406, 2
  %v456 = vsel %vm440, %v455, %v454
  %v457 = vrot.slane %v407, 1
  %v458 = vsel %vm443, %v457, %v456
  %v459 = vrot.slane %v409, 7
  %v460 = vsel %vm425, %v459, %v408
  %v461 = vrot.slane %v410, 6
  %v462 = vsel %vm428, %v461, %v460
  %v463 = vrot.slane %v411, 5
  %v464 = vsel %vm431, %v463, %v462
  %v465 = vrot.slane %v412, 4
  %v466 = vsel %vm434, %v465, %v464
  %v467 = vrot.slane %v413, 3
  %v468 = vsel %vm437, %v467, %v466
  %v469 = vrot.slane %v414, 2
  %v470 = vsel %vm440, %v469, %v468
  %v471 = vrot.slane %v415, 1
  %v472 = vsel %vm443, %v471, %v470
  %v473 = vrot.slane %v417, 7
  %v474 = vsel %vm425, %v473, %v416
  %v475 = vrot.slane %v418, 6
  %v476 = vsel %vm428, %v475, %v474
  %v477 = vrot.slane %v419, 5
  %v478 = vsel %vm431, %v477, %v476
  %v479 = vrot.slane %v420, 4
  %v480 = vsel %vm434, %v479, %v478
  %v481 = vrot.slane %v421, 3
  %v482 = vsel %vm437, %v481, %v480
  %v483 = vrot.slane %v422, 2
  %v484 = vsel %vm440, %v483, %v482
  %v485 = vrot.slane %v423, 1
  %v486 = vsel %vm443, %v485, %v484
  %v487 = vpack.c.b16 %v444, %v444
  %v488 = vpack.c.b16 %v458, %v458
  %v489 = vpack.c.b16 %v472, %v472
  %v490 = vpack.c.b16 %v486, %v486
  %495 = vst [vmem:[%s4 + $0x4] sm:$0xf] %v487
  %496 = vst [vmem:[%s4 + $0x8] sm:$0xf] %v488
  %497 = vst [vmem:[%s4 + $0x14] sm:$0xf] %v489
  %498 = vst [vmem:[%s4 + $0x18] sm:$0xf] %v490
  %499 = vst [vmem:[%s4 + $0xc] sm:$0xf] 0
  %500 = vst [vmem:[%s4 + $0x1c] sm:$0xf] 0
  // Predicated region
  $region18: #{masked_vgg_forward.12} parent=0 // pred_check
    _
  $region19: #{masked_vgg_forward.12} parent=0 // pred_check_branch
    %502 = sbr.rel (0) target = $region21
  $region20: #{masked_vgg_forward.12} parent=0 // pred_region
    _
  $region21: #{masked_vgg_forward.12} parent=0 // pred_fallthru
    _
  // Predicated region
  $region22: #{masked_vgg_forward.12} parent=0 // pred_check
    _
  $region23: #{masked_vgg_forward.12} parent=0 // pred_check_branch
    %504 = sbr.rel (0) target = $region25
  $region24: #{masked_vgg_forward.12} parent=0 // pred_region
    _
  $region25: #{masked_vgg_forward.12} parent=0 // pred_fallthru
    _

// kernel: masked_vgg_forward.14
$region0: #{masked_vgg_forward.14}
  #allocation0 [shape = 'u32[]', space=smem, size = 0x4, offset = 0x4, fixed_abs, tag = 'smem constant byte address 0x4 - core index']
  #allocation1 [shape = 'u32[72,128]{1,0:T(1,128)}', space=vmem, size = 0x9000, scoped, tag = 'internal scratch']
  %s0 = inlined_call_operand.vmem [shape: bf16[2,16,128], index: 0, kind: input, shape index: {}]
  %s1 = inlined_call_operand.vmem [shape: f32[1,2,128], index: 1, kind: input, shape index: {}]
  %s2 = inlined_call_operand.vmem [shape: f32[1,128], index: 2, kind: input, shape index: {}]
  %s3 = inlined_call_operand.vmem [shape: f32[1,128], index: 3, kind: input, shape index: {}]
  %s4 = inlined_call_operand.vmem [shape: bf16[2,12,128], index: 4, kind: output, shape index: {}]
  %s5 = sld [smem:[#allocation0]]
  $region26: #{masked_vgg_forward.14} parent=0
    _
  %s7 = ssub.s32 1, %s5
  %s8 = scalar_select 0, %s7, %s5
  // Predicated region
  $region2: #{masked_vgg_forward.14} parent=0 // pred_check
    _
  $region3: #{masked_vgg_forward.14} parent=0 // pred_check_branch
    %10 = sbr.rel (0) target = $region5
  $region4: #{masked_vgg_forward.14} parent=0 // pred_region
    _
  $region5: #{masked_vgg_forward.14} parent=0 // pred_fallthru
    _
  // Predicated region
  $region6: #{masked_vgg_forward.14} parent=0 // pred_check
    _
  $region7: #{masked_vgg_forward.14} parent=0 // pred_check_branch
    %12 = sbr.rel (0) target = $region9
  $region8: #{masked_vgg_forward.14} parent=0 // pred_region
    _
  $region9: #{masked_vgg_forward.14} parent=0 // pred_fallthru
    _
  // Predicated region
  $region10: #{masked_vgg_forward.14} parent=0 // pred_check
    _
  $region11: #{masked_vgg_forward.14} parent=0 // pred_check_branch
    %14 = sbr.rel (0) target = $region13
  $region12: #{masked_vgg_forward.14} parent=0 // pred_region
    _
  $region13: #{masked_vgg_forward.14} parent=0 // pred_fallthru
    _
  // Predicated region
  $region14: #{masked_vgg_forward.14} parent=0 // pred_check
    _
  $region15: #{masked_vgg_forward.14} parent=0 // pred_check_branch
    %16 = sbr.rel (0) target = $region17
  $region16: #{masked_vgg_forward.14} parent=0 // pred_region
    _
  $region17: #{masked_vgg_forward.14} parent=0 // pred_fallthru
    _
  %v18 = vld [vmem:[%s1] sm:$0x3]
  %v19 = vadd.f32 %v18, 0.0
  %v20 = vmul.f32 %v19, 0.03125
  %v21 = vmul.f32 %v20, %v20
  %v23 = vrot.slane %v21, 7
  %v25 = vsub.f32 %v20, %v23
  %v26 = vmax.f32 %v25, 0.0
  %v27 = vld [vmem:[%s2] sm:$0x1]
  %v28 = vadd.f32 %v26, 1e-05
  %v29 = vrsqrt.pop %v28
  %v30 = vmul.f32 %v29, %v28
  %v31 = vmul.f32 %v30, %v29
  %v32 = vmul.f32 0.5, %v31
  %v33 = vsub.f32 1.5, %v32
  %v34 = vmul.f32 %v29, %v33
  %vm35 = vweird.f32 %v28
  %vm36 = vweird.f32 %v29
  %vm37 = vmor %vm35, %vm36
  %v38 = vsel %vm37, %v29, %v34
  %40 = vst [vmem:[#allocation1] sm:$0xff] %v38
  %s41 = scalar_lea.vmem [#allocation1], 1
  %v42 = vld [vmem:[%s41] ss:$9 sm:$0xff]
  %v44 = vmul.f32 %v27, %v42
  %v45 = vld [vmem:[%s3] sm:$0x1]
  %v46 = vmul.f32 %v20, %v44
  %v47 = vsub.f32 %v45, %v46
  %v48 = vld [vmem:[%s0] sm:$0xf]
  %v49 = vld [vmem:[%s0 + $0x4] sm:$0xf]
  %v50 = vld [vmem:[%s0 + $0x8] sm:$0xf]
  %v51 = vld [vmem:[%s0 + $0xc] sm:$0xf]
  %v52 = vunpack.c.l.bf16 %v48
  %v53 = vunpack.c.l.bf16 %v49
  %v54 = vunpack.c.l.bf16 %v50
  %v55 = vunpack.c.l.bf16 %v51
  %v57 = vperm.slane %v44, 0
  %v59 = vmul.f32 %v52, %v57
  %v60 = vmul.f32 %v53, %v57
  %v61 = vmul.f32 %v54, %v57
  %v62 = vmul.f32 %v55, %v57
  %v64 = vperm.slane %v47, 0
  %v66 = vadd.f32 %v59, %v64
  %v67 = vadd.f32 %v60, %v64
  %v68 = vadd.f32 %v61, %v64
  %v69 = vadd.f32 %v62, %v64
  %v70 = vmax.f32 %v66, 0.0
  %v71 = vmax.f32 %v67, 0.0
  %v72 = vmax.f32 %v68, 0.0
  %v73 = vmax.f32 %v69, 0.0
  %v78 = vrot.slane %v70, 4
  %v79 = vrot.slane %v71, 4
  %v80 = vrot.slane %v72, 4
  %v81 = vrot.slane %v73, 4
  %v86 = vmax.f32 %v70, %v78
  %v87 = vmax.f32 %v71, %v79
  %v88 = vmax.f32 %v72, %v80
  %v89 = vmax.f32 %v73, %v81
  %v94 = vrot.slane %v86, 2
  %v95 = vrot.slane %v87, 2
  %v96 = vrot.slane %v88, 2
  %v97 = vrot.slane %v89, 2
  %v102 = vrot.slane %v86, 7
  %v103 = vrot.slane %v102, 2
  %v104 = vrot.slane %v94, 7
  %v105 = vrot.slane %v104, 2
  %v106 = vrot.slane %v87, 7
  %v107 = vrot.slane %v106, 2
  %v108 = vrot.slane %v95, 7
  %v109 = vrot.slane %v108, 2
  %v110 = vrot.slane %v88, 7
  %v111 = vrot.slane %v110, 2
  %v112 = vrot.slane %v96, 7
  %v113 = vrot.slane %v112, 2
  %v114 = vrot.slane %v89, 7
  %v115 = vrot.slane %v114, 2
  %v116 = vrot.slane %v97, 7
  %v117 = vrot.slane %v116, 2
  %v126 = vmax.f32 %v86, %v103
  %v127 = vmax.f32 %v94, %v105
  %v128 = vmax.f32 %v87, %v107
  %v129 = vmax.f32 %v95, %v109
  %v130 = vmax.f32 %v88, %v111
  %v131 = vmax.f32 %v96, %v113
  %v132 = vmax.f32 %v89, %v115
  %v133 = vmax.f32 %v97, %v117
  %v134 = vpack.c.bf16 %v126, %v126
  %v135 = vpack.c.bf16 %v127, %v127
  %v136 = vpack.c.bf16 %v128, %v128
  %v137 = vpack.c.bf16 %v129, %v129
  %v138 = vpack.c.bf16 %v130, %v130
  %v139 = vpack.c.bf16 %v131, %v131
  %v140 = vpack.c.bf16 %v132, %v132
  %v141 = vpack.c.bf16 %v133, %v133
  %142 = vst [vmem:[%s4] sm:$0x3] 0
  %143 = vst [vmem:[%s4 + $0x8] sm:$0x3] 0
  %v152 = vunpack.c.l.b16 %v134
  %v153 = vunpack.c.l.b16 %v135
  %v154 = vunpack.c.l.b16 %v136
  %v155 = vunpack.c.l.b16 %v137
  %v156 = vunpack.c.l.b16 %v138
  %v157 = vunpack.c.l.b16 %v139
  %v158 = vunpack.c.l.b16 %v140
  %v159 = vunpack.c.l.b16 %v141
  %v160 = vrot.slane %v152, 4
  %v161 = vrot.slane %v153, 3
  %vm162 = vcmask 1045509
  %v163 = vsel %vm162, %v161, %v160
  %v164 = vrot.slane %v154, 2
  %vm165 = vcmask 1046534
  %v166 = vsel %vm165, %v164, %v163
  %v167 = vrot.slane %v155, 1
  %vm168 = vcmask 1047559
  %v169 = vsel %vm168, %v167, %v166
  %v170 = vrot.slane %v156, 4
  %v171 = vrot.slane %v157, 3
  %v172 = vsel %vm162, %v171, %v170
  %v173 = vrot.slane %v158, 2
  %v174 = vsel %vm165, %v173, %v172
  %v175 = vrot.slane %v159, 1
  %v176 = vsel %vm168, %v175, %v174
  %v177 = vpack.c.b16 %v169, %v169
  %v178 = vpack.c.b16 %v176, %v176
  %181 = vst [vmem:[%s4] sm:$0xc] %v177
  %182 = vst [vmem:[%s4 + $0x8] sm:$0xc] %v178
  %183 = vst [vmem:[%s4 + $0x4] sm:$0x3] 0
  %184 = vst [vmem:[%s4 + $0xc] sm:$0x3] 0
  // Predicated region
  $region18: #{masked_vgg_forward.14} parent=0 // pred_check
    _
  $region19: #{masked_vgg_forward.14} parent=0 // pred_check_branch
    %186 = sbr.rel (0) target = $region21
  $region20: #{masked_vgg_forward.14} parent=0 // pred_region
    _
  $region21: #{masked_vgg_forward.14} parent=0 // pred_fallthru
    _
  // Predicated region
  $region22: #{masked_vgg_forward.14} parent=0 // pred_check
    _
  $region23: #{masked_vgg_forward.14} parent=0 // pred_check_branch
    %188 = sbr.rel (0) target = $region25
  $region24: #{masked_vgg_forward.14} parent=0 // pred_region
    _
  $region25: #{masked_vgg_forward.14} parent=0 // pred_fallthru
    _

// kernel: masked_vgg_forward.9
$region0: #{masked_vgg_forward.9}
  #allocation0 [shape = 'u32[]', space=smem, size = 0x4, offset = 0x4, fixed_abs, tag = 'smem constant byte address 0x4 - core index']
  #allocation1 [shape = 'u32[72,128]{1,0:T(1,128)}', space=vmem, size = 0x9000, scoped, tag = 'internal scratch']
  %s0 = inlined_call_operand.vmem [shape: bf16[2,96,3], index: 0, kind: input, shape index: {}]
  %s1 = inlined_call_operand.vmem [shape: bf16[9,3,128], index: 1, kind: input, shape index: {}]
  %s2 = inlined_call_operand.vmem [shape: bf16[2,64,128], index: 2, kind: output, shape index: {0}]
  %s3 = inlined_call_operand.vmem [shape: f32[2,128], index: 3, kind: output, shape index: {1}]
  %4 = xla_tuple %s2, %s3
  %s5 = sld [smem:[#allocation0]]
  $region26: #{masked_vgg_forward.9} parent=0
    _
  %s7 = ssub.s32 1, %s5
  %s8 = scalar_select 0, %s7, %s5
  // Predicated region
  $region2: #{masked_vgg_forward.9} parent=0 // pred_check
    _
  $region3: #{masked_vgg_forward.9} parent=0 // pred_check_branch
    %10 = sbr.rel (0) target = $region5
  $region4: #{masked_vgg_forward.9} parent=0 // pred_region
    _
  $region5: #{masked_vgg_forward.9} parent=0 // pred_fallthru
    _
  // Predicated region
  $region6: #{masked_vgg_forward.9} parent=0 // pred_check
    _
  $region7: #{masked_vgg_forward.9} parent=0 // pred_check_branch
    %12 = sbr.rel (0) target = $region9
  $region8: #{masked_vgg_forward.9} parent=0 // pred_region
    _
  $region9: #{masked_vgg_forward.9} parent=0 // pred_fallthru
    _
  %v14 = vlaneseq
  %v15 = vshrl.u32 %v14, 7
  %v16 = vadd.s32 %v15, 8
  %v17 = vadd.s32 %v15, 16
  %v18 = vadd.s32 %v15, 24
  %v19 = vadd.s32 %v15, 32
  %v20 = vadd.s32 %v15, 40
  %v21 = vadd.s32 %v15, 48
  %v22 = vadd.s32 %v15, 56
  %v23 = vadd.s32 %v15, 64
  %v24 = vadd.s32 %v15, 72
  %v25 = vadd.s32 %v15, 80
  %v26 = vadd.s32 %v15, 88
  %v27 = vadd.s32 %v15, 96
  %v28 = vadd.s32 %v15, 104
  %v29 = vadd.s32 %v15, 112
  %v30 = vadd.s32 %v15, 120
  %vm31 = vcmp.lt.s32.totalorder %v15, 0
  %v32 = vsub.s32 0, %v15
  %v33 = vsel %vm31, %v32, %v15
  %v34 = vshrl.u32 %v33, 3
  %v35 = vand.u32 %v33, 7
  %v36 = vsub.s32 0, %v35
  %v37 = vsel %vm31, %v36, %v35
  %vm38 = vcmp.lt.s32.totalorder %v16, 0
  %v39 = vsub.s32 0, %v16
  %v40 = vsel %vm38, %v39, %v16
  %v41 = vshrl.u32 %v40, 3
  %v42 = vand.u32 %v40, 7
  %v43 = vsub.s32 0, %v42
  %v44 = vsel %vm38, %v43, %v42
  %vm45 = vcmp.lt.s32.totalorder %v17, 0
  %v46 = vsub.s32 0, %v17
  %v47 = vsel %vm45, %v46, %v17
  %v48 = vshrl.u32 %v47, 3
  %v49 = vand.u32 %v47, 7
  %v50 = vsub.s32 0, %v49
  %v51 = vsel %vm45, %v50, %v49
  %vm52 = vcmp.lt.s32.totalorder %v18, 0
  %v53 = vsub.s32 0, %v18
  %v54 = vsel %vm52, %v53, %v18
  %v55 = vshrl.u32 %v54, 3
  %v56 = vand.u32 %v54, 7
  %v57 = vsub.s32 0, %v56
  %v58 = vsel %vm52, %v57, %v56
  %vm59 = vcmp.lt.s32.totalorder %v19, 0
  %v60 = vsub.s32 0, %v19
  %v61 = vsel %vm59, %v60, %v19
  %v62 = vshrl.u32 %v61, 3
  %v63 = vand.u32 %v61, 7
  %v64 = vsub.s32 0, %v63
  %v65 = vsel %vm59, %v64, %v63
  %vm66 = vcmp.lt.s32.totalorder %v20, 0
  %v67 = vsub.s32 0, %v20
  %v68 = vsel %vm66, %v67, %v20
  %v69 = vshrl.u32 %v68, 3
  %v70 = vand.u32 %v68, 7
  %v71 = vsub.s32 0, %v70
  %v72 = vsel %vm66, %v71, %v70
  %vm73 = vcmp.lt.s32.totalorder %v21, 0
  %v74 = vsub.s32 0, %v21
  %v75 = vsel %vm73, %v74, %v21
  %v76 = vshrl.u32 %v75, 3
  %v77 = vand.u32 %v75, 7
  %v78 = vsub.s32 0, %v77
  %v79 = vsel %vm73, %v78, %v77
  %vm80 = vcmp.lt.s32.totalorder %v22, 0
  %v81 = vsub.s32 0, %v22
  %v82 = vsel %vm80, %v81, %v22
  %v83 = vshrl.u32 %v82, 3
  %v84 = vand.u32 %v82, 7
  %v85 = vsub.s32 0, %v84
  %v86 = vsel %vm80, %v85, %v84
  %vm87 = vcmp.lt.s32.totalorder %v23, 0
  %v88 = vsub.s32 0, %v23
  %v89 = vsel %vm87, %v88, %v23
  %v90 = vshrl.u32 %v89, 3
  %v91 = vand.u32 %v89, 7
  %v92 = vsub.s32 0, %v91
  %v93 = vsel %vm87, %v92, %v91
  %vm94 = vcmp.lt.s32.totalorder %v24, 0
  %v95 = vsub.s32 0, %v24
  %v96 = vsel %vm94, %v95, %v24
  %v97 = vshrl.u32 %v96, 3
  %v98 = vand.u32 %v96, 7
  %v99 = vsub.s32 0, %v98
  %v100 = vsel %vm94, %v99, %v98
  %vm101 = vcmp.lt.s32.totalorder %v25, 0
  %v102 = vsub.s32 0, %v25
  %v103 = vsel %vm101, %v102, %v25
  %v104 = vshrl.u32 %v103, 3
  %v105 = vand.u32 %v103, 7
  %v106 = vsub.s32 0, %v105
  %v107 = vsel %vm101, %v106, %v105
  %vm108 = vcmp.lt.s32.totalorder %v26, 0
  %v109 = vsub.s32 0, %v26
  %v110 = vsel %vm108, %v109, %v26
  %v111 = vshrl.u32 %v110, 3
  %v112 = vand.u32 %v110, 7
  %v113 = vsub.s32 0, %v112
  %v114 = vsel %vm108, %v113, %v112
  %vm115 = vcmp.lt.s32.totalorder %v27, 0
  %v116 = vsub.s32 0, %v27
  %v117 = vsel %vm115, %v116, %v27
  %v118 = vshrl.u32 %v117, 3
  %v119 = vand.u32 %v117, 7
  %v120 = vsub.s32 0, %v119
  %v121 = vsel %vm115, %v120, %v119
  %vm122 = vcmp.lt.s32.totalorder %v28, 0
  %v123 = vsub.s32 0, %v28
  %v124 = vsel %vm122, %v123, %v28
  %v125 = vshrl.u32 %v124, 3
  %v126 = vand.u32 %v124, 7
  %v127 = vsub.s32 0, %v126
  %v128 = vsel %vm122, %v127, %v126
  %vm129 = vcmp.lt.s32.totalorder %v29, 0
  %v130 = vsub.s32 0, %v29
  %v131 = vsel %vm129, %v130, %v29
  %v132 = vshrl.u32 %v131, 3
  %v133 = vand.u32 %v131, 7
  %v134 = vsub.s32 0, %v133
  %v135 = vsel %vm129, %v134, %v133
  %vm136 = vcmp.lt.s32.totalorder %v30, 0
  %v137 = vsub.s32 0, %v30
  %v138 = vsel %vm136, %v137, %v30
  %v139 = vshrl.u32 %v138, 3
  %v140 = vand.u32 %v138, 7
  %v141 = vsub.s32 0, %v140
  %v142 = vsel %vm136, %v141, %v140
  %vm143 = vcmp.ne.s32.totalorder %v37, 0
  %vm144 = vcmp.ne.s32.totalorder %v44, 0
  %vm145 = vcmp.ne.s32.totalorder %v51, 0
  %vm146 = vcmp.ne.s32.totalorder %v58, 0
  %vm147 = vcmp.ne.s32.totalorder %v65, 0
  %vm148 = vcmp.ne.s32.totalorder %v72, 0
  %vm149 = vcmp.ne.s32.totalorder %v79, 0
  %vm150 = vcmp.ne.s32.totalorder %v86, 0
  %vm151 = vcmp.ne.s32.totalorder %v93, 0
  %vm152 = vcmp.ne.s32.totalorder %v100, 0
  %vm153 = vcmp.ne.s32.totalorder %v107, 0
  %vm154 = vcmp.ne.s32.totalorder %v114, 0
  %vm155 = vcmp.ne.s32.totalorder %v121, 0
  %vm156 = vcmp.ne.s32.totalorder %v128, 0
  %vm157 = vcmp.ne.s32.totalorder %v135, 0
  %vm158 = vcmp.ne.s32.totalorder %v142, 0
  %vm159 = vcmp.lt.s32.totalorder %v37, 0
  %vm160 = vcmp.lt.s32.totalorder %v44, 0
  %vm161 = vcmp.lt.s32.totalorder %v51, 0
  %vm162 = vcmp.lt.s32.totalorder %v58, 0
  %vm163 = vcmp.lt.s32.totalorder %v65, 0
  %vm164 = vcmp.lt.s32.totalorder %v72, 0
  %vm165 = vcmp.lt.s32.totalorder %v79, 0
  %vm166 = vcmp.lt.s32.totalorder %v86, 0
  %vm167 = vcmp.lt.s32.totalorder %v93, 0
  %vm168 = vcmp.lt.s32.totalorder %v100, 0
  %vm169 = vcmp.lt.s32.totalorder %v107, 0
  %vm170 = vcmp.lt.s32.totalorder %v114, 0
  %vm171 = vcmp.lt.s32.totalorder %v121, 0
  %vm172 = vcmp.lt.s32.totalorder %v128, 0
  %vm173 = vcmp.lt.s32.totalorder %v135, 0
  %vm174 = vcmp.lt.s32.totalorder %v142, 0
  %vm175 = vmand %vm159, %vm143
  %vm176 = vmand %vm160, %vm144
  %vm177 = vmand %vm161, %vm145
  %vm178 = vmand %vm162, %vm146
  %vm179 = vmand %vm163, %vm147
  %vm180 = vmand %vm164, %vm148
  %vm181 = vmand %vm165, %vm149
  %vm182 = vmand %vm166, %vm150
  %vm183 = vmand %vm167, %vm151
  %vm184 = vmand %vm168, %vm152
  %vm185 = vmand %vm169, %vm153
  %vm186 = vmand %vm170, %vm154
  %vm187 = vmand %vm171, %vm155
  %vm188 = vmand %vm172, %vm156
  %vm189 = vmand %vm173, %vm157
  %vm190 = vmand %vm174, %vm158
  %v191 = vadd.s32 %v37, 8
  %v192 = vadd.s32 %v44, 8
  %v193 = vadd.s32 %v51, 8
  %v194 = vadd.s32 %v58, 8
  %v195 = vadd.s32 %v65, 8
  %v196 = vadd.s32 %v72, 8
  %v197 = vadd.s32 %v79, 8
  %v198 = vadd.s32 %v86, 8
  %v199 = vadd.s32 %v93, 8
  %v200 = vadd.s32 %v100, 8
  %v201 = vadd.s32 %v107, 8
  %v202 = vadd.s32 %v114, 8
  %v203 = vadd.s32 %v121, 8
  %v204 = vadd.s32 %v128, 8
  %v205 = vadd.s32 %v135, 8
  %v206 = vadd.s32 %v142, 8
  %v207 = vsel %vm175, %v191, %v37
  %v208 = vsel %vm176, %v192, %v44
  %v209 = vsel %vm177, %v193, %v51
  %v210 = vsel %vm178, %v194, %v58
  %v211 = vsel %vm179, %v195, %v65
  %v212 = vsel %vm180, %v196, %v72
  %v213 = vsel %vm181, %v197, %v79
  %v214 = vsel %vm182, %v198, %v86
  %v215 = vsel %vm183, %v199, %v93
  %v216 = vsel %vm184, %v200, %v100
  %v217 = vsel %vm185, %v201, %v107
  %v218 = vsel %vm186, %v202, %v114
  %v219 = vsel %vm187, %v203, %v121
  %v220 = vsel %vm188, %v204, %v128
  %v221 = vsel %vm189, %v205, %v135
  %v222 = vsel %vm190, %v206, %v142
  %vm223 = vcmp.ne.s32.totalorder %v207, 0
  %vm224 = vcmp.ne.s32.totalorder %v208, 0
  %vm225 = vcmp.ne.s32.totalorder %v209, 0
  %vm226 = vcmp.ne.s32.totalorder %v210, 0
  %vm227 = vcmp.ne.s32.totalorder %v211, 0
  %vm228 = vcmp.ne.s32.totalorder %v212, 0
  %vm229 = vcmp.ne.s32.totalorder %v213, 0
  %vm230 = vcmp.ne.s32.totalorder %v214, 0
  %vm231 = vcmp.ne.s32.totalorder %v215, 0
  %vm232 = vcmp.ne.s32.totalorder %v216, 0
  %vm233 = vcmp.ne.s32.totalorder %v217, 0
  %vm234 = vcmp.ne.s32.totalorder %v218, 0
  %vm235 = vcmp.ne.s32.totalorder %v219, 0
  %vm236 = vcmp.ne.s32.totalorder %v220, 0
  %vm237 = vcmp.ne.s32.totalorder %v221, 0
  %vm238 = vcmp.ne.s32.totalorder %v222, 0
  %vm239 = vcmp.ne.s32.totalorder %v207, 7
  %vm240 = vcmp.ne.s32.totalorder %v208, 7
  %vm241 = vcmp.ne.s32.totalorder %v209, 7
  %vm242 = vcmp.ne.s32.totalorder %v210, 7
  %vm243 = vcmp.ne.s32.totalorder %v211, 7
  %vm244 = vcmp.ne.s32.totalorder %v212, 7
  %vm245 = vcmp.ne.s32.totalorder %v213, 7
  %vm246 = vcmp.ne.s32.totalorder %v214, 7
  %vm247 = vcmp.ne.s32.totalorder %v215, 7
  %vm248 = vcmp.ne.s32.totalorder %v216, 7
  %vm249 = vcmp.ne.s32.totalorder %v217, 7
  %vm250 = vcmp.ne.s32.totalorder %v218, 7
  %vm251 = vcmp.ne.s32.totalorder %v219, 7
  %vm252 = vcmp.ne.s32.totalorder %v220, 7
  %vm253 = vcmp.ne.s32.totalorder %v221, 7
  %vm254 = vcmp.ne.s32.totalorder %v222, 7
  %v255 = vld [vmem:[%s0] sm:$0x8]
  %v256 = vld [vmem:[%s0 + $0x4] sm:$0xf]
  %v257 = vld [vmem:[%s0 + $0x8] sm:$0xf]
  %v258 = vld [vmem:[%s0 + $0xc] sm:$0xf]
  %v259 = vld [vmem:[%s0 + $0x10] sm:$0xf]
  %v260 = vld [vmem:[%s0 + $0x14] sm:$0xf]
  %v261 = vld [vmem:[%s0 + $0x18] sm:$0xf]
  %v262 = vld [vmem:[%s0 + $0x1c] sm:$0xf]
  %v263 = vld [vmem:[%s0 + $0x20] sm:$0xf]
  %v264 = vld [vmem:[%s0 + $0x30] sm:$0x8]
  %v265 = vld [vmem:[%s0 + $0x34] sm:$0xf]
  %v266 = vld [vmem:[%s0 + $0x38] sm:$0xf]
  %v267 = vld [vmem:[%s0 + $0x3c] sm:$0xf]
  %v268 = vld [vmem:[%s0 + $0x40] sm:$0xf]
  %v269 = vld [vmem:[%s0 + $0x44] sm:$0xf]
  %v270 = vld [vmem:[%s0 + $0x48] sm:$0xf]
  %v271 = vld [vmem:[%s0 + $0x4c] sm:$0xf]
  %v272 = vld [vmem:[%s0 + $0x50] sm:$0xf]
  %vm273 = vsmask.f32 256
  %vm274 = vsmask.f32 4368
  %vm275 = vmor %vm273, %vm274
  %v277 = vshrl.u32 %v255, 16
  %v279 = vrot.slane %v277, 7
  %v280 = vrot.slane %v279, 4
  %v282 = vshrl.u32 %v256, 16
  %v284 = vrot.slane %v282, 7
  %v285 = vshll.u32 %v256, 16
  %v287 = vor.u32 %v284, %v285
  %v288 = vsel %vm275, %v280, %v287
  %v289 = vrot.slane %v284, 4
  %v291 = vshrl.u32 %v257, 16
  %v293 = vrot.slane %v291, 7
  %v294 = vshll.u32 %v257, 16
  %v296 = vor.u32 %v293, %v294
  %v297 = vsel %vm275, %v289, %v296
  %v298 = vrot.slane %v293, 4
  %v300 = vshrl.u32 %v258, 16
  %v302 = vrot.slane %v300, 7
  %v303 = vshll.u32 %v258, 16
  %v305 = vor.u32 %v302, %v303
  %v306 = vsel %vm275, %v298, %v305
  %v307 = vrot.slane %v302, 4
  %v309 = vshrl.u32 %v259, 16
  %v311 = vrot.slane %v309, 7
  %v312 = vshll.u32 %v259, 16
  %v314 = vor.u32 %v311, %v312
  %v315 = vsel %vm275, %v307, %v314
  %v316 = vrot.slane %v311, 4
  %v318 = vshrl.u32 %v260, 16
  %v320 = vrot.slane %v318, 7
  %v321 = vshll.u32 %v260, 16
  %v323 = vor.u32 %v320, %v321
  %v324 = vsel %vm275, %v316, %v323
  %v325 = vrot.slane %v320, 4
  %v327 = vshrl.u32 %v261, 16
  %v329 = vrot.slane %v327, 7
  %v330 = vshll.u32 %v261, 16
  %v332 = vor.u32 %v329, %v330
  %v333 = vsel %vm275, %v325, %v332
  %v334 = vrot.slane %v329, 4
  %v336 = vshrl.u32 %v262, 16
  %v338 = vrot.slane %v336, 7
  %v339 = vshll.u32 %v262, 16
  %v341 = vor.u32 %v338, %v339
  %v342 = vsel %vm275, %v334, %v341
  %v343 = vrot.slane %v338, 4
  %v345 = vshrl.u32 %v263, 16
  %v347 = vrot.slane %v345, 7
  %v348 = vshll.u32 %v263, 16
  %v350 = vor.u32 %v347, %v348
  %v351 = vsel %vm275, %v343, %v350
  %v353 = vshrl.u32 %v264, 16
  %v355 = vrot.slane %v353, 7
  %v356 = vrot.slane %v355, 4
  %v358 = vshrl.u32 %v265, 16
  %v360 = vrot.slane %v358, 7
  %v361 = vshll.u32 %v265, 16
  %v363 = vor.u32 %v360, %v361
  %v364 = vsel %vm275, %v356, %v363
  %v365 = vrot.slane %v360, 4
  %v367 = vshrl.u32 %v266, 16
  %v369 = vrot.slane %v367, 7
  %v370 = vshll.u32 %v266, 16
  %v372 = vor.u32 %v369, %v370
  %v373 = vsel %vm275, %v365, %v372
  %v374 = vrot.slane %v369, 4
  %v376 = vshrl.u32 %v267, 16
  %v378 = vrot.slane %v376, 7
  %v379 = vshll.u32 %v267, 16
  %v381 = vor.u32 %v378, %v379
  %v382 = vsel %vm275, %v374, %v381
  %v383 = vrot.slane %v378, 4
  %v385 = vshrl.u32 %v268, 16
  %v387 = vrot.slane %v385, 7
  %v388 = vshll.u32 %v268, 16
  %v390 = vor.u32 %v387, %v388
  %v391 = vsel %vm275, %v383, %v390
  %v392 = vrot.slane %v387, 4
  %v394 = vshrl.u32 %v269, 16
  %v396 = vrot.slane %v394, 7
  %v397 = vshll.u32 %v269, 16
  %v399 = vor.u32 %v396, %v397
  %v400 = vsel %vm275, %v392, %v399
  %v401 = vrot.slane %v396, 4
  %v403 = vshrl.u32 %v270, 16
  %v405 = vrot.slane %v403, 7
  %v406 = vshll.u32 %v270, 16
  %v408 = vor.u32 %v405, %v406
  %v409 = vsel %vm275, %v401, %v408
  %v410 = vrot.slane %v405, 4
  %v412 = vshrl.u32 %v271, 16
  %v414 = vrot.slane %v412, 7
  %v415 = vshll.u32 %v271, 16
  %v417 = vor.u32 %v414, %v415
  %v418 = vsel %vm275, %v410, %v417
  %v419 = vrot.slane %v414, 4
  %v421 = vshrl.u32 %v272, 16
  %v423 = vrot.slane %v421, 7
  %v424 = vshll.u32 %v272, 16
  %v426 = vor.u32 %v423, %v424
  %v427 = vsel %vm275, %v419, %v426
  %v444 = vsel %vm223, 1, 0
  %v445 = vsel %vm224, 1, 0
  %v446 = vsel %vm225, 1, 0
  %v447 = vsel %vm226, 1, 0
  %v448 = vsel %vm227, 1, 0
  %v449 = vsel %vm228, 1, 0
  %v450 = vsel %vm229, 1, 0
  %v451 = vsel %vm230, 1, 0
  %v452 = vsel %vm231, 1, 0
  %v453 = vsel %vm232, 1, 0
  %v454 = vsel %vm233, 1, 0
  %v455 = vsel %vm234, 1, 0
  %v456 = vsel %vm235, 1, 0
  %v457 = vsel %vm236, 1, 0
  %v458 = vsel %vm237, 1, 0
  %v459 = vsel %vm238, 1, 0
  %vm460 = vcmp.eq.s32.totalorder %v444, 1
  %vm461 = vcmp.eq.s32.totalorder %v445, 1
  %vm462 = vcmp.eq.s32.totalorder %v446, 1
  %vm463 = vcmp.eq.s32.totalorder %v447, 1
  %vm464 = vcmp.eq.s32.totalorder %v448, 1
  %vm465 = vcmp.eq.s32.totalorder %v449, 1
  %vm466 = vcmp.eq.s32.totalorder %v450, 1
  %vm467 = vcmp.eq.s32.totalorder %v451, 1
  %vm468 = vcmp.eq.s32.totalorder %v452, 1
  %vm469 = vcmp.eq.s32.totalorder %v453, 1
  %vm470 = vcmp.eq.s32.totalorder %v454, 1
  %vm471 = vcmp.eq.s32.totalorder %v455, 1
  %vm472 = vcmp.eq.s32.totalorder %v456, 1
  %vm473 = vcmp.eq.s32.totalorder %v457, 1
  %vm474 = vcmp.eq.s32.totalorder %v458, 1
  %vm475 = vcmp.eq.s32.totalorder %v459, 1
  %vm476 = vmpackc.low %vm460, %vm460
  %vm477 = vmpackc.low %vm461, %vm461
  %vm478 = vmpackc.low %vm462, %vm462
  %vm479 = vmpackc.low %vm463, %vm463
  %vm480 = vmpackc.low %vm464, %vm464
  %vm481 = vmpackc.low %vm465, %vm465
  %vm482 = vmpackc.low %vm466, %vm466
  %vm483 = vmpackc.low %vm467, %vm467
  %vm484 = vmpackc.low %vm468, %vm468
  %vm485 = vmpackc.low %vm469, %vm469
  %vm486 = vmpackc.low %vm470, %vm470
  %vm487 = vmpackc.low %vm471, %vm471
  %vm488 = vmpackc.low %vm472, %vm472
  %vm489 = vmpackc.low %vm473, %vm473
  %vm490 = vmpackc.low %vm474, %vm474
  %vm491 = vmpackc.low %vm475, %vm475
  %v492 = vsel %vm476, %v288, 0
  %v493 = vsel %vm477, %v297, 0
  %v494 = vsel %vm478, %v306, 0
  %v495 = vsel %vm479, %v315, 0
  %v496 = vsel %vm480, %v324, 0
  %v497 = vsel %vm481, %v333, 0
  %v498 = vsel %vm482, %v342, 0
  %v499 = vsel %vm483, %v351, 0
  %v500 = vsel %vm484, %v364, 0
  %v501 = vsel %vm485, %v373, 0
  %v502 = vsel %vm486, %v382, 0
  %v503 = vsel %vm487, %v391, 0
  %v504 = vsel %vm488, %v400, 0
  %v505 = vsel %vm489, %v409, 0
  %v506 = vsel %vm490, %v418, 0
  %v507 = vsel %vm491, %v427, 0
  %v508 = vld [vmem:[%s1] sm:$0x3]
  %s509 = scalar_lea.vmem %s1, 2
  %v510 = vld [vmem:[%s509] sm:$0x3]
  %v527 = vunpack.c.l.b16 %v256
  %v528 = vunpack.c.l.b16 %v257
  %v529 = vunpack.c.l.b16 %v258
  %v530 = vunpack.c.l.b16 %v259
  %v531 = vunpack.c.l.b16 %v260
  %v532 = vunpack.c.l.b16 %v261
  %v533 = vunpack.c.l.b16 %v262
  %v534 = vunpack.c.l.b16 %v263
  %v535 = vunpack.c.l.b16 %v265
  %v536 = vunpack.c.l.b16 %v266
  %v537 = vunpack.c.l.b16 %v267
  %v538 = vunpack.c.l.b16 %v268
  %v539 = vunpack.c.l.b16 %v269
  %v540 = vunpack.c.l.b16 %v270
  %v541 = vunpack.c.l.b16 %v271
  %v542 = vunpack.c.l.b16 %v272
  %v543 = vpack.c.b16 %v528, %v527
  %v544 = vpack.c.b16 %v530, %v529
  %v545 = vpack.c.b16 %v532, %v531
  %v546 = vpack.c.b16 %v534, %v533
  %v547 = vpack.c.b16 %v536, %v535
  %v548 = vpack.c.b16 %v538, %v537
  %v549 = vpack.c.b16 %v540, %v539
  %v550 = vpack.c.b16 %v542, %v541
  %vm551 = vcmask 23552
  %v553 = vsel %vm551, %v543, 0
  %v556 = vsel %vm551, %v544, 0
  %v559 = vsel %vm551, %v545, 0
  %v562 = vsel %vm551, %v546, 0
  %v565 = vsel %vm551, %v547, 0
  %v568 = vsel %vm551, %v548, 0
  %v571 = vsel %vm551, %v549, 0
  %v574 = vsel %vm551, %v550, 0
  %vm576 = vcmask 1040384
  %vm577 = vcmask 1041408
  %v578 = vsel %vm576, 4294967295, 65535
  %v579 = vsel %vm577, %v578, 0
  %v581 = vand.u32 %v510, %v579
  %583 = vmatpush.bf16.msra.mxu0 0
  %584 = vmatpush.bf16.msra.mxu0 0
  %585 = vmatpush.bf16.msra.mxu0 0
  %586 = vmatpush.bf16.msra.mxu0 0
  %587 = vmatpush.bf16.msra.mxu0 0
  %588 = vmatpush.bf16.msra.mxu0 0
  %589 = vmatpush.bf16.msra.mxu0 0
  %590 = vmatpush.bf16.msra.mxu0 %v581
  %591 = vmatmul.bf16.gmra.mxu0 %v553
  %v592 = vpop.f32.mrf.mxu0
  %v593 = vadd.f32 0.0, %v592
  %v594 = vpop.f32.mrf.mxu0
  %v595 = vadd.f32 0.0, %v594
  %596 = vmatmul.bf16.gmra.mxu0 %v556
  %v597 = vpop.f32.mrf.mxu0
  %v598 = vadd.f32 0.0, %v597
  %v599 = vpop.f32.mrf.mxu0
  %v600 = vadd.f32 0.0, %v599
  %601 = vmatmul.bf16.gmra.mxu0 %v559
  %v602 = vpop.f32.mrf.mxu0
  %v603 = vadd.f32 0.0, %v602
  %v604 = vpop.f32.mrf.mxu0
  %v605 = vadd.f32 0.0, %v604
  %606 = vmatmul.bf16.gmra.mxu0 %v562
  %v607 = vpop.f32.mrf.mxu0
  %v608 = vadd.f32 0.0, %v607
  %v609 = vpop.f32.mrf.mxu0
  %v610 = vadd.f32 0.0, %v609
  %611 = vmatmul.bf16.gmra.mxu0 %v565
  %v612 = vpop.f32.mrf.mxu0
  %v613 = vadd.f32 0.0, %v612
  %v614 = vpop.f32.mrf.mxu0
  %v615 = vadd.f32 0.0, %v614
  %616 = vmatmul.bf16.gmra.mxu0 %v568
  %v617 = vpop.f32.mrf.mxu0
  %v618 = vadd.f32 0.0, %v617
  %v619 = vpop.f32.mrf.mxu0
  %v620 = vadd.f32 0.0, %v619
  %621 = vmatmul.bf16.gmra.mxu0 %v571
  %v622 = vpop.f32.mrf.mxu0
  %v623 = vadd.f32 0.0, %v622
  %v624 = vpop.f32.mrf.mxu0
  %v625 = vadd.f32 0.0, %v624
  %626 = vmatmul.bf16.gmra.mxu0 %v574
  %v627 = vpop.f32.mrf.mxu0
  %v628 = vadd.f32 0.0, %v627
  %v629 = vpop.f32.mrf.mxu0
  %v630 = vadd.f32 0.0, %v629
  %631 = vdwg.mxu0
  %v648 = vunpack.c.l.b16 %v492
  %v649 = vunpack.c.l.b16 %v493
  %v650 = vunpack.c.l.b16 %v494
  %v651 = vunpack.c.l.b16 %v495
  %v652 = vunpack.c.l.b16 %v496
  %v653 = vunpack.c.l.b16 %v497
  %v654 = vunpack.c.l.b16 %v498
  %v655 = vunpack.c.l.b16 %v499
  %v656 = vunpack.c.l.b16 %v500
  %v657 = vunpack.c.l.b16 %v501
  %v658 = vunpack.c.l.b16 %v502
  %v659 = vunpack.c.l.b16 %v503
  %v660 = vunpack.c.l.b16 %v504
  %v661 = vunpack.c.l.b16 %v505
  %v662 = vunpack.c.l.b16 %v506
  %v663 = vunpack.c.l.b16 %v507
  %v664 = vpack.c.b16 %v649, %v648
  %v665 = vpack.c.b16 %v651, %v650
  %v666 = vpack.c.b16 %v653, %v652
  %v667 = vpack.c.b16 %v655, %v654
  %v668 = vpack.c.b16 %v657, %v656
  %v669 = vpack.c.b16 %v659, %v658
  %v670 = vpack.c.b16 %v661, %v660
  %v671 = vpack.c.b16 %v663, %v662
  %v673 = vsel %vm551, %v664, 0
  %v676 = vsel %vm551, %v665, 0
  %v679 = vsel %vm551, %v666, 0
  %v682 = vsel %vm551, %v667, 0
  %v685 = vsel %vm551, %v668, 0
  %v688 = vsel %vm551, %v669, 0
  %v691 = vsel %vm551, %v670, 0
  %v694 = vsel %vm551, %v671, 0
  %v697 = vand.u32 %v508, %v579
  %699 = vmatpush.bf16.msra.mxu0 0
  %700 = vmatpush.bf16.msra.mxu0 0
  %701 = vmatpush.bf16.msra.mxu0 0
  %702 = vmatpush.bf16.msra.mxu0 0
  %703 = vmatpush.bf16.msra.mxu0 0
  %704 = vmatpush.bf16.msra.mxu0 0
  %705 = vmatpush.bf16.msra.mxu0 0
  %706 = vmatpush.bf16.msra.mxu0 %v697
  %707 = vmatmul.bf16.gmra.mxu0 %v673
  %v708 = vpop.f32.mrf.mxu0
  %v709 = vadd.f32 %v593, %v708
  %v710 = vpop.f32.mrf.mxu0
  %v711 = vadd.f32 %v595, %v710
  %712 = vmatmul.bf16.gmra.mxu0 %v676
  %v713 = vpop.f32.mrf.mxu0
  %v714 = vadd.f32 %v598, %v713
  %v715 = vpop.f32.mrf.mxu0
  %v716 = vadd.f32 %v600, %v715
  %717 = vmatmul.bf16.gmra.mxu0 %v679
  %v718 = vpop.f32.mrf.mxu0
  %v719 = vadd.f32 %v603, %v718
  %v720 = vpop.f32.mrf.mxu0
  %v721 = vadd.f32 %v605, %v720
  %722 = vmatmul.bf16.gmra.mxu0 %v682
  %v723 = vpop.f32.mrf.mxu0
  %v724 = vadd.f32 %v608, %v723
  %v725 = vpop.f32.mrf.mxu0
  %v726 = vadd.f32 %v610, %v725
  %727 = vmatmul.bf16.gmra.mxu0 %v685
  %v728 = vpop.f32.mrf.mxu0
  %v729 = vadd.f32 %v613, %v728
  %v730 = vpop.f32.mrf.mxu0
  %v731 = vadd.f32 %v615, %v730
  %732 = vmatmul.bf16.gmra.mxu0 %v688
  %v733 = vpop.f32.mrf.mxu0
  %v734 = vadd.f32 %v618, %v733
  %v735 = vpop.f32.mrf.mxu0
  %v736 = vadd.f32 %v620, %v735
  %737 = vmatmul.bf16.gmra.mxu0 %v691
  %v738 = vpop.f32.mrf.mxu0
  %v739 = vadd.f32 %v623, %v738
  %v740 = vpop.f32.mrf.mxu0
  %v741 = vadd.f32 %v625, %v740
  %742 = vmatmul.bf16.gmra.mxu0 %v694
  %v743 = vpop.f32.mrf.mxu0
  %v744 = vadd.f32 %v628, %v743
  %v745 = vpop.f32.mrf.mxu0
  %v746 = vadd.f32 %v630, %v745
  %747 = vdwg.mxu0
  %v748 = vld [vmem:[%s0 + $0x4] sm:$0xf]
  %v749 = vld [vmem:[%s0 + $0x8] sm:$0xf]
  %v750 = vld [vmem:[%s0 + $0xc] sm:$0xf]
  %v751 = vld [vmem:[%s0 + $0x10] sm:$0xf]
  %v752 = vld [vmem:[%s0 + $0x14] sm:$0xf]
  %v753 = vld [vmem:[%s0 + $0x18] sm:$0xf]
  %v754 = vld [vmem:[%s0 + $0x1c] sm:$0xf]
  %v755 = vld [vmem:[%s0 + $0x20] sm:$0xf]
  %v756 = vld [vmem:[%s0 + $0x24] sm:$0x1]
  %v757 = vld [vmem:[%s0 + $0x34] sm:$0xf]
  %v758 = vld [vmem:[%s0 + $0x38] sm:$0xf]
  %v759 = vld [vmem:[%s0 + $0x3c] sm:$0xf]
  %v760 = vld [vmem:[%s0 + $0x40] sm:$0xf]
  %v761 = vld [vmem:[%s0 + $0x44] sm:$0xf]
  %v762 = vld [vmem:[%s0 + $0x48] sm:$0xf]
  %v763 = vld [vmem:[%s0 + $0x4c] sm:$0xf]
  %v764 = vld [vmem:[%s0 + $0x50] sm:$0xf]
  %v765 = vld [vmem:[%s0 + $0x54] sm:$0x1]
  %vm766 = vsmask.f32 3328
  %vm767 = vsmask.f32 7440
  %vm768 = vmor %vm766, %vm767
  %v770 = vshrl.u32 %v748, 16
  %v772 = vrot.slane %v770, 4
  %v773 = vshll.u32 %v748, 16
  %v775 = vrot.slane %v773, 5
  %v776 = vor.u32 %v772, %v775
  %v777 = vrot.slane %v776, 4
  %v779 = vshll.u32 %v749, 16
  %v781 = vrot.slane %v779, 5
  %v782 = vsel %vm768, %v777, %v781
  %v783 = vshrl.u32 %v749, 16
  %v785 = vrot.slane %v783, 4
  %v786 = vor.u32 %v785, %v781
  %v787 = vrot.slane %v786, 4
  %v789 = vshll.u32 %v750, 16
  %v791 = vrot.slane %v789, 5
  %v792 = vsel %vm768, %v787, %v791
  %v793 = vshrl.u32 %v750, 16
  %v795 = vrot.slane %v793, 4
  %v796 = vor.u32 %v795, %v791
  %v797 = vrot.slane %v796, 4
  %v799 = vshll.u32 %v751, 16
  %v801 = vrot.slane %v799, 5
  %v802 = vsel %vm768, %v797, %v801
  %v803 = vshrl.u32 %v751, 16
  %v805 = vrot.slane %v803, 4
  %v806 = vor.u32 %v805, %v801
  %v807 = vrot.slane %v806, 4
  %v809 = vshll.u32 %v752, 16
  %v811 = vrot.slane %v809, 5
  %v812 = vsel %vm768, %v807, %v811
  %v813 = vshrl.u32 %v752, 16
  %v815 = vrot.slane %v813, 4
  %v816 = vor.u32 %v815, %v811
  %v817 = vrot.slane %v816, 4
  %v819 = vshll.u32 %v753, 16
  %v821 = vrot.slane %v819, 5
  %v822 = vsel %vm768, %v817, %v821
  %v823 = vshrl.u32 %v753, 16
  %v825 = vrot.slane %v823, 4
  %v826 = vor.u32 %v825, %v821
  %v827 = vrot.slane %v826, 4
  %v829 = vshll.u32 %v754, 16
  %v831 = vrot.slane %v829, 5
  %v832 = vsel %vm768, %v827, %v831
  %v833 = vshrl.u32 %v754, 16
  %v835 = vrot.slane %v833, 4
  %v836 = vor.u32 %v835, %v831
  %v837 = vrot.slane %v836, 4
  %v839 = vshll.u32 %v755, 16
  %v841 = vrot.slane %v839, 5
  %v842 = vsel %vm768, %v837, %v841
  %v843 = vshrl.u32 %v755, 16
  %v845 = vrot.slane %v843, 4
  %v846 = vor.u32 %v845, %v841
  %v847 = vrot.slane %v846, 4
  %v849 = vshll.u32 %v756, 16
  %v851 = vrot.slane %v849, 5
  %v852 = vsel %vm768, %v847, %v851
  %v854 = vshrl.u32 %v757, 16
  %v856 = vrot.slane %v854, 4
  %v857 = vshll.u32 %v757, 16
  %v859 = vrot.slane %v857, 5
  %v860 = vor.u32 %v856, %v859
  %v861 = vrot.slane %v860, 4
  %v863 = vshll.u32 %v758, 16
  %v865 = vrot.slane %v863, 5
  %v866 = vsel %vm768, %v861, %v865
  %v867 = vshrl.u32 %v758, 16
  %v869 = vrot.slane %v867, 4
  %v870 = vor.u32 %v869, %v865
  %v871 = vrot.slane %v870, 4
  %v873 = vshll.u32 %v759, 16
  %v875 = vrot.slane %v873, 5
  %v876 = vsel %vm768, %v871, %v875
  %v877 = vshrl.u32 %v759, 16
  %v879 = vrot.slane %v877, 4
  %v880 = vor.u32 %v879, %v875
  %v881 = vrot.slane %v880, 4
  %v883 = vshll.u32 %v760, 16
  %v885 = vrot.slane %v883, 5
  %v886 = vsel %vm768, %v881, %v885
  %v887 = vshrl.u32 %v760, 16
  %v889 = vrot.slane %v887, 4
  %v890 = vor.u32 %v889, %v885
  %v891 = vrot.slane %v890, 4
  %v893 = vshll.u32 %v761, 16
  %v895 = vrot.slane %v893, 5
  %v896 = vsel %vm768, %v891, %v895
  %v897 = vshrl.u32 %v761, 16
  %v899 = vrot.slane %v897, 4
  %v900 = vor.u32 %v899, %v895
  %v901 = vrot.slane %v900, 4
  %v903 = vshll.u32 %v762, 16
  %v905 = vrot.slane %v903, 5
  %v906 = vsel %vm768, %v901, %v905
  %v907 = vshrl.u32 %v762, 16
  %v909 = vrot.slane %v907, 4
  %v910 = vor.u32 %v909, %v905
  %v911 = vrot.slane %v910, 4
  %v913 = vshll.u32 %v763, 16
  %v915 = vrot.slane %v913, 5
  %v916 = vsel %vm768, %v911, %v915
  %v917 = vshrl.u32 %v763, 16
  %v919 = vrot.slane %v917, 4
  %v920 = vor.u32 %v919, %v915
  %v921 = vrot.slane %v920, 4
  %v923 = vshll.u32 %v764, 16
  %v925 = vrot.slane %v923, 5
  %v926 = vsel %vm768, %v921, %v925
  %v927 = vshrl.u32 %v764, 16
  %v929 = vrot.slane %v927, 4
  %v930 = vor.u32 %v929, %v925
  %v931 = vrot.slane %v930, 4
  %v933 = vshll.u32 %v765, 16
  %v935 = vrot.slane %v933, 5
  %v936 = vsel %vm768, %v931, %v935
  %v953 = vsel %vm239, 1, 0
  %v954 = vsel %vm240, 1, 0
  %v955 = vsel %vm241, 1, 0
  %v956 = vsel %vm242, 1, 0
  %v957 = vsel %vm243, 1, 0
  %v958 = vsel %vm244, 1, 0
  %v959 = vsel %vm245, 1, 0
  %v960 = vsel %vm246, 1, 0
  %v961 = vsel %vm247, 1, 0
  %v962 = vsel %vm248, 1, 0
  %v963 = vsel %vm249, 1, 0
  %v964 = vsel %vm250, 1, 0
  %v965 = vsel %vm251, 1, 0
  %v966 = vsel %vm252, 1, 0
  %v967 = vsel %vm253, 1, 0
  %v968 = vsel %vm254, 1, 0
  %vm969 = vcmp.eq.s32.totalorder %v953, 1
  %vm970 = vcmp.eq.s32.totalorder %v954, 1
  %vm971 = vcmp.eq.s32.totalorder %v955, 1
  %vm972 = vcmp.eq.s32.totalorder %v956, 1
  %vm973 = vcmp.eq.s32.totalorder %v957, 1
  %vm974 = vcmp.eq.s32.totalorder %v958, 1
  %vm975 = vcmp.eq.s32.totalorder %v959, 1
  %vm976 = vcmp.eq.s32.totalorder %v960, 1
  %vm977 = vcmp.eq.s32.totalorder %v961, 1
  %vm978 = vcmp.eq.s32.totalorder %v962, 1
  %vm979 = vcmp.eq.s32.totalorder %v963, 1
  %vm980 = vcmp.eq.s32.totalorder %v964, 1
  %vm981 = vcmp.eq.s32.totalorder %v965, 1
  %vm982 = vcmp.eq.s32.totalorder %v966, 1
  %vm983 = vcmp.eq.s32.totalorder %v967, 1
  %vm984 = vcmp.eq.s32.totalorder %v968, 1
  %vm985 = vmpackc.low %vm969, %vm969
  %vm986 = vmpackc.low %vm970, %vm970
  %vm987 = vmpackc.low %vm971, %vm971
  %vm988 = vmpackc.low %vm972, %vm972
  %vm989 = vmpackc.low %vm973, %vm973
  %vm990 = vmpackc.low %vm974, %vm974
  %vm991 = vmpackc.low %vm975, %vm975
  %vm992 = vmpackc.low %vm976, %vm976
  %vm993 = vmpackc.low %vm977, %vm977
  %vm994 = vmpackc.low %vm978, %vm978
  %vm995 = vmpackc.low %vm979, %vm979
  %vm996 = vmpackc.low %vm980, %vm980
  %vm997 = vmpackc.low %vm981, %vm981
  %vm998 = vmpackc.low %vm982, %vm982
  %vm999 = vmpackc.low %vm983, %vm983
  %vm1000 = vmpackc.low %vm984, %vm984
  %v1001 = vsel %vm985, %v782, 0
  %v1002 = vsel %vm986, %v792, 0
  %v1003 = vsel %vm987, %v802, 0
  %v1004 = vsel %vm988, %v812, 0
  %v1005 = vsel %vm989, %v822, 0
  %v1006 = vsel %vm990, %v832, 0
  %v1007 = vsel %vm991, %v842, 0
  %v1008 = vsel %vm992, %v852, 0
  %v1009 = vsel %vm993, %v866, 0
  %v1010 = vsel %vm994, %v876, 0
  %v1011 = vsel %vm995, %v886, 0
  %v1012 = vsel %vm996, %v896, 0
  %v1013 = vsel %vm997, %v906, 0
  %v1014 = vsel %vm998, %v916, 0
  %v1015 = vsel %vm999, %v926, 0
  %v1016 = vsel %vm1000, %v936, 0
  %s1017 = scalar_lea.vmem %s1, 4
  %v1018 = vld [vmem:[%s1017] sm:$0x3]
  %v1035 = vunpack.c.l.b16 %v1001
  %v1036 = vunpack.c.l.b16 %v1002
  %v1037 = vunpack.c.l.b16 %v1003
  %v1038 = vunpack.c.l.b16 %v1004
  %v1039 = vunpack.c.l.b16 %v1005
  %v1040 = vunpack.c.l.b16 %v1006
  %v1041 = vunpack.c.l.b16 %v1007
  %v1042 = vunpack.c.l.b16 %v1008
  %v1043 = vunpack.c.l.b16 %v1009
  %v1044 = vunpack.c.l.b16 %v1010
  %v1045 = vunpack.c.l.b16 %v1011
  %v1046 = vunpack.c.l.b16 %v1012
  %v1047 = vunpack.c.l.b16 %v1013
  %v1048 = vunpack.c.l.b16 %v1014
  %v1049 = vunpack.c.l.b16 %v1015
  %v1050 = vunpack.c.l.b16 %v1016
  %v1051 = vpack.c.b16 %v1036, %v1035
  %v1052 = vpack.c.b16 %v1038, %v1037
  %v1053 = vpack.c.b16 %v1040, %v1039
  %v1054 = vpack.c.b16 %v1042, %v1041
  %v1055 = vpack.c.b16 %v1044, %v1043
  %v1056 = vpack.c.b16 %v1046, %v1045
  %v1057 = vpack.c.b16 %v1048, %v1047
  %v1058 = vpack.c.b16 %v1050, %v1049
  %v1060 = vsel %vm551, %v1051, 0
  %v1063 = vsel %vm551, %v1052, 0
  %v1066 = vsel %vm551, %v1053, 0
  %v1069 = vsel %vm551, %v1054, 0
  %v1072 = vsel %vm551, %v1055, 0
  %v1075 = vsel %vm551, %v1056, 0
  %v1078 = vsel %vm551, %v1057, 0
  %v1081 = vsel %vm551, %v1058, 0
  %v1084 = vand.u32 %v1018, %v579
  %1086 = vmatpush.bf16.msra.mxu0 0
  %1087 = vmatpush.bf16.msra.mxu0 0
  %1088 = vmatpush.bf16.msra.mxu0 0
  %1089 = vmatpush.bf16.msra.mxu0 0
  %1090 = vmatpush.bf16.msra.mxu0 0
  %1091 = vmatpush.bf16.msra.mxu0 0
  %1092 = vmatpush.bf16.msra.mxu0 0
  %1093 = vmatpush.bf16.msra.mxu0 %v1084
  %1094 = vmatmul.bf16.gmra.mxu0 %v1060
  %v1095 = vpop.f32.mrf.mxu0
  %v1096 = vadd.f32 0.0, %v1095
  %v1097 = vpop.f32.mrf.mxu0
  %v1098 = vadd.f32 0.0, %v1097
  %1099 = vmatmul.bf16.gmra.mxu0 %v1063
  %v1100 = vpop.f32.mrf.mxu0
  %v1101 = vadd.f32 0.0, %v1100
  %v1102 = vpop.f32.mrf.mxu0
  %v1103 = vadd.f32 0.0, %v1102
  %1104 = vmatmul.bf16.gmra.mxu0 %v1066
  %v1105 = vpop.f32.mrf.mxu0
  %v1106 = vadd.f32 0.0, %v1105
  %v1107 = vpop.f32.mrf.mxu0
  %v1108 = vadd.f32 0.0, %v1107
  %1109 = vmatmul.bf16.gmra.mxu0 %v1069
  %v1110 = vpop.f32.mrf.mxu0
  %v1111 = vadd.f32 0.0, %v1110
  %v1112 = vpop.f32.mrf.mxu0
  %v1113 = vadd.f32 0.0, %v1112
  %1114 = vmatmul.bf16.gmra.mxu0 %v1072
  %v1115 = vpop.f32.mrf.mxu0
  %v1116 = vadd.f32 0.0, %v1115
  %v1117 = vpop.f32.mrf.mxu0
  %v1118 = vadd.f32 0.0, %v1117
  %1119 = vmatmul.bf16.gmra.mxu0 %v1075
  %v1120 = vpop.f32.mrf.mxu0
  %v1121 = vadd.f32 0.0, %v1120
  %v1122 = vpop.f32.mrf.mxu0
  %v1123 = vadd.f32 0.0, %v1122
  %1124 = vmatmul.bf16.gmra.mxu0 %v1078
  %v1125 = vpop.f32.mrf.mxu0
  %v1126 = vadd.f32 0.0, %v1125
  %v1127 = vpop.f32.mrf.mxu0
  %v1128 = vadd.f32 0.0, %v1127
  %1129 = vmatmul.bf16.gmra.mxu0 %v1081
  %v1130 = vpop.f32.mrf.mxu0
  %v1131 = vadd.f32 0.0, %v1130
  %v1132 = vpop.f32.mrf.mxu0
  %v1133 = vadd.f32 0.0, %v1132
  %1134 = vdwg.mxu0
  %v1135 = vadd.f32 %v709, %v1096
  %v1136 = vadd.f32 %v711, %v1098
  %v1137 = vadd.f32 %v714, %v1101
  %v1138 = vadd.f32 %v716, %v1103
  %v1139 = vadd.f32 %v719, %v1106
  %v1140 = vadd.f32 %v721, %v1108
  %v1141 = vadd.f32 %v724, %v1111
  %v1142 = vadd.f32 %v726, %v1113
  %v1143 = vadd.f32 %v729, %v1116
  %v1144 = vadd.f32 %v731, %v1118
  %v1145 = vadd.f32 %v734, %v1121
  %v1146 = vadd.f32 %v736, %v1123
  %v1147 = vadd.f32 %v739, %v1126
  %v1148 = vadd.f32 %v741, %v1128
  %v1149 = vadd.f32 %v744, %v1131
  %v1150 = vadd.f32 %v746, %v1133
  %v1151 = vld [vmem:[%s0 + $0x4] sm:$0x8]
  %v1152 = vld [vmem:[%s0 + $0x24] sm:$0xf]
  %v1153 = vld [vmem:[%s0 + $0x34] sm:$0x8]
  %v1154 = vld [vmem:[%s0 + $0x54] sm:$0xf]
  %v1156 = vshrl.u32 %v1151, 16
  %v1158 = vrot.slane %v1156, 7
  %v1159 = vrot.slane %v1158, 4
  %v1160 = vrot.slane %v783, 7
  %v1161 = vor.u32 %v1160, %v779
  %v1162 = vsel %vm275, %v1159, %v1161
  %v1163 = vrot.slane %v1160, 4
  %v1164 = vrot.slane %v793, 7
  %v1165 = vor.u32 %v1164, %v789
  %v1166 = vsel %vm275, %v1163, %v1165
  %v1167 = vrot.slane %v1164, 4
  %v1168 = vrot.slane %v803, 7
  %v1169 = vor.u32 %v1168, %v799
  %v1170 = vsel %vm275, %v1167, %v1169
  %v1171 = vrot.slane %v1168, 4
  %v1172 = vrot.slane %v813, 7
  %v1173 = vor.u32 %v1172, %v809
  %v1174 = vsel %vm275, %v1171, %v1173
  %v1175 = vrot.slane %v1172, 4
  %v1176 = vrot.slane %v823, 7
  %v1177 = vor.u32 %v1176, %v819
  %v1178 = vsel %vm275, %v1175, %v1177
  %v1179 = vrot.slane %v1176, 4
  %v1180 = vrot.slane %v833, 7
  %v1181 = vor.u32 %v1180, %v829
  %v1182 = vsel %vm275, %v1179, %v1181
  %v1183 = vrot.slane %v1180, 4
  %v1184 = vrot.slane %v843, 7
  %v1185 = vor.u32 %v1184, %v839
  %v1186 = vsel %vm275, %v1183, %v1185
  %v1187 = vrot.slane %v1184, 4
  %v1189 = vshrl.u32 %v1152, 16
  %v1191 = vrot.slane %v1189, 7
  %v1192 = vshll.u32 %v1152, 16
  %v1194 = vor.u32 %v1191, %v1192
  %v1195 = vsel %vm275, %v1187, %v1194
  %v1197 = vshrl.u32 %v1153, 16
  %v1199 = vrot.slane %v1197, 7
  %v1200 = vrot.slane %v1199, 4
  %v1201 = vrot.slane %v867, 7
  %v1202 = vor.u32 %v1201, %v863
  %v1203 = vsel %vm275, %v1200, %v1202
  %v1204 = vrot.slane %v1201, 4
  %v1205 = vrot.slane %v877, 7
  %v1206 = vor.u32 %v1205, %v873
  %v1207 = vsel %vm275, %v1204, %v1206
  %v1208 = vrot.slane %v1205, 4
  %v1209 = vrot.slane %v887, 7
  %v1210 = vor.u32 %v1209, %v883
  %v1211 = vsel %vm275, %v1208, %v1210
  %v1212 = vrot.slane %v1209, 4
  %v1213 = vrot.slane %v897, 7
  %v1214 = vor.u32 %v1213, %v893
  %v1215 = vsel %vm275, %v1212, %v1214
  %v1216 = vrot.slane %v1213, 4
  %v1217 = vrot.slane %v907, 7
  %v1218 = vor.u32 %v1217, %v903
  %v1219 = vsel %vm275, %v1216, %v1218
  %v1220 = vrot.slane %v1217, 4
  %v1221 = vrot.slane %v917, 7
  %v1222 = vor.u32 %v1221, %v913
  %v1223 = vsel %vm275, %v1220, %v1222
  %v1224 = vrot.slane %v1221, 4
  %v1225 = vrot.slane %v927, 7
  %v1226 = vor.u32 %v1225, %v923
  %v1227 = vsel %vm275, %v1224, %v1226
  %v1228 = vrot.slane %v1225, 4
  %v1230 = vshrl.u32 %v1154, 16
  %v1232 = vrot.slane %v1230, 7
  %v1233 = vshll.u32 %v1154, 16
  %v1235 = vor.u32 %v1232, %v1233
  %v1236 = vsel %vm275, %v1228, %v1235
  %v1253 = vsel %vm476, %v1162, 0
  %v1254 = vsel %vm477, %v1166, 0
  %v1255 = vsel %vm478, %v1170, 0
  %v1256 = vsel %vm479, %v1174, 0
  %v1257 = vsel %vm480, %v1178, 0
  %v1258 = vsel %vm481, %v1182, 0
  %v1259 = vsel %vm482, %v1186, 0
  %v1260 = vsel %vm483, %v1195, 0
  %v1261 = vsel %vm484, %v1203, 0
  %v1262 = vsel %vm485, %v1207, 0
  %v1263 = vsel %vm486, %v1211, 0
  %v1264 = vsel %vm487, %v1215, 0
  %v1265 = vsel %vm488, %v1219, 0
  %v1266 = vsel %vm489, %v1223, 0
  %v1267 = vsel %vm490, %v1227, 0
  %v1268 = vsel %vm491, %v1236, 0
  %s1269 = scalar_lea.vmem %s1, 6
  %v1270 = vld [vmem:[%s1269] sm:$0x3]
  %v1287 = vunpack.c.l.b16 %v1253
  %v1288 = vunpack.c.l.b16 %v1254
  %v1289 = vunpack.c.l.b16 %v1255
  %v1290 = vunpack.c.l.b16 %v1256
  %v1291 = vunpack.c.l.b16 %v1257
  %v1292 = vunpack.c.l.b16 %v1258
  %v1293 = vunpack.c.l.b16 %v1259
  %v1294 = vunpack.c.l.b16 %v1260
  %v1295 = vunpack.c.l.b16 %v1261
  %v1296 = vunpack.c.l.b16 %v1262
  %v1297 = vunpack.c.l.b16 %v1263
  %v1298 = vunpack.c.l.b16 %v1264
  %v1299 = vunpack.c.l.b16 %v1265
  %v1300 = vunpack.c.l.b16 %v1266
  %v1301 = vunpack.c.l.b16 %v1267
  %v1302 = vunpack.c.l.b16 %v1268
  %v1303 = vpack.c.b16 %v1288, %v1287
  %v1304 = vpack.c.b16 %v1290, %v1289
  %v1305 = vpack.c.b16 %v1292, %v1291
  %v1306 = vpack.c.b16 %v1294, %v1293
  %v1307 = vpack.c.b16 %v1296, %v1295
  %v1308 = vpack.c.b16 %v1298, %v1297
  %v1309 = vpack.c.b16 %v1300, %v1299
  %v1310 = vpack.c.b16 %v1302, %v1301
  %v1312 = vsel %vm551, %v1303, 0
  %v1315 = vsel %vm551, %v1304, 0
  %v1318 = vsel %vm551, %v1305, 0
  %v1321 = vsel %vm551, %v1306, 0
  %v1324 = vsel %vm551, %v1307, 0
  %v1327 = vsel %vm551, %v1308, 0
  %v1330 = vsel %vm551, %v1309, 0
  %v1333 = vsel %vm551, %v1310, 0
  %v1336 = vand.u32 %v1270, %v579
  %1338 = vmatpush.bf16.msra.mxu0 0
  %1339 = vmatpush.bf16.msra.mxu0 0
  %1340 = vmatpush.bf16.msra.mxu0 0
  %1341 = vmatpush.bf16.msra.mxu0 0
  %1342 = vmatpush.bf16.msra.mxu0 0
  %1343 = vmatpush.bf16.msra.mxu0 0
  %1344 = vmatpush.bf16.msra.mxu0 0
  %1345 = vmatpush.bf16.msra.mxu0 %v1336
  %1346 = vmatmul.bf16.gmra.mxu0 %v1312
  %v1347 = vpop.f32.mrf.mxu0
  %v1348 = vadd.f32 0.0, %v1347
  %v1349 = vpop.f32.mrf.mxu0
  %v1350 = vadd.f32 0.0, %v1349
  %1351 = vmatmul.bf16.gmra.mxu0 %v1315
  %v1352 = vpop.f32.mrf.mxu0
  %v1353 = vadd.f32 0.0, %v1352
  %v1354 = vpop.f32.mrf.mxu0
  %v1355 = vadd.f32 0.0, %v1354
  %1356 = vmatmul.bf16.gmra.mxu0 %v1318
  %v1357 = vpop.f32.mrf.mxu0
  %v1358 = vadd.f32 0.0, %v1357
  %v1359 = vpop.f32.mrf.mxu0
  %v1360 = vadd.f32 0.0, %v1359
  %1361 = vmatmul.bf16.gmra.mxu0 %v1321
  %v1362 = vpop.f32.mrf.mxu0
  %v1363 = vadd.f32 0.0, %v1362
  %v1364 = vpop.f32.mrf.mxu0
  %v1365 = vadd.f32 0.0, %v1364
  %1366 = vmatmul.bf16.gmra.mxu0 %v1324
  %v1367 = vpop.f32.mrf.mxu0
  %v1368 = vadd.f32 0.0, %v1367
  %v1369 = vpop.f32.mrf.mxu0
  %v1370 = vadd.f32 0.0, %v1369
  %1371 = vmatmul.bf16.gmra.mxu0 %v1327
  %v1372 = vpop.f32.mrf.mxu0
  %v1373 = vadd.f32 0.0, %v1372
  %v1374 = vpop.f32.mrf.mxu0
  %v1375 = vadd.f32 0.0, %v1374
  %1376 = vmatmul.bf16.gmra.mxu0 %v1330
  %v1377 = vpop.f32.mrf.mxu0
  %v1378 = vadd.f32 0.0, %v1377
  %v1379 = vpop.f32.mrf.mxu0
  %v1380 = vadd.f32 0.0, %v1379
  %1381 = vmatmul.bf16.gmra.mxu0 %v1333
  %v1382 = vpop.f32.mrf.mxu0
  %v1383 = vadd.f32 0.0, %v1382
  %v1384 = vpop.f32.mrf.mxu0
  %v1385 = vadd.f32 0.0, %v1384
  %1386 = vdwg.mxu0
  %v1387 = vadd.f32 %v1135, %v1348
  %v1388 = vadd.f32 %v1136, %v1350
  %v1389 = vadd.f32 %v1137, %v1353
  %v1390 = vadd.f32 %v1138, %v1355
  %v1391 = vadd.f32 %v1139, %v1358
  %v1392 = vadd.f32 %v1140, %v1360
  %v1393 = vadd.f32 %v1141, %v1363
  %v1394 = vadd.f32 %v1142, %v1365
  %v1395 = vadd.f32 %v1143, %v1368
  %v1396 = vadd.f32 %v1144, %v1370
  %v1397 = vadd.f32 %v1145, %v1373
  %v1398 = vadd.f32 %v1146, %v1375
  %v1399 = vadd.f32 %v1147, %v1378
  %v1400 = vadd.f32 %v1148, %v1380
  %v1401 = vadd.f32 %v1149, %v1383
  %v1402 = vadd.f32 %v1150, %v1385
  %s1403 = scalar_lea.vmem %s1, 8
  %v1404 = vld [vmem:[%s1403] sm:$0x3]
  %v1421 = vunpack.c.l.b16 %v749
  %v1422 = vunpack.c.l.b16 %v750
  %v1423 = vunpack.c.l.b16 %v751
  %v1424 = vunpack.c.l.b16 %v752
  %v1425 = vunpack.c.l.b16 %v753
  %v1426 = vunpack.c.l.b16 %v754
  %v1427 = vunpack.c.l.b16 %v755
  %v1428 = vunpack.c.l.b16 %v1152
  %v1429 = vunpack.c.l.b16 %v758
  %v1430 = vunpack.c.l.b16 %v759
  %v1431 = vunpack.c.l.b16 %v760
  %v1432 = vunpack.c.l.b16 %v761
  %v1433 = vunpack.c.l.b16 %v762
  %v1434 = vunpack.c.l.b16 %v763
  %v1435 = vunpack.c.l.b16 %v764
  %v1436 = vunpack.c.l.b16 %v1154
  %v1437 = vpack.c.b16 %v1422, %v1421
  %v1438 = vpack.c.b16 %v1424, %v1423
  %v1439 = vpack.c.b16 %v1426, %v1425
  %v1440 = vpack.c.b16 %v1428, %v1427
  %v1441 = vpack.c.b16 %v1430, %v1429
  %v1442 = vpack.c.b16 %v1432, %v1431
  %v1443 = vpack.c.b16 %v1434, %v1433
  %v1444 = vpack.c.b16 %v1436, %v1435
  %v1446 = vsel %vm551, %v1437, 0
  %v1449 = vsel %vm551, %v1438, 0
  %v1452 = vsel %vm551, %v1439, 0
  %v1455 = vsel %vm551, %v1440, 0
  %v1458 = vsel %vm551, %v1441, 0
  %v1461 = vsel %vm551, %v1442, 0
  %v1464 = vsel %vm551, %v1443, 0
  %v1467 = vsel %vm551, %v1444, 0
  %v1470 = vand.u32 %v1404, %v579
  %1472 = vmatpush.bf16.msra.mxu0 0
  %1473 = vmatpush.bf16.msra.mxu0 0
  %1474 = vmatpush.bf16.msra.mxu0 0
  %1475 = vmatpush.bf16.msra.mxu0 0
  %1476 = vmatpush.bf16.msra.mxu0 0
  %1477 = vmatpush.bf16.msra.mxu0 0
  %1478 = vmatpush.bf16.msra.mxu0 0
  %1479 = vmatpush.bf16.msra.mxu0 %v1470
  %1480 = vmatmul.bf16.gmra.mxu0 %v1446
  %v1481 = vpop.f32.mrf.mxu0
  %v1482 = vadd.f32 0.0, %v1481
  %v1483 = vpop.f32.mrf.mxu0
  %v1484 = vadd.f32 0.0, %v1483
  %1485 = vmatmul.bf16.gmra.mxu0 %v1449
  %v1486 = vpop.f32.mrf.mxu0
  %v1487 = vadd.f32 0.0, %v1486
  %v1488 = vpop.f32.mrf.mxu0
  %v1489 = vadd.f32 0.0, %v1488
  %1490 = vmatmul.bf16.gmra.mxu0 %v1452
  %v1491 = vpop.f32.mrf.mxu0
  %v1492 = vadd.f32 0.0, %v1491
  %v1493 = vpop.f32.mrf.mxu0
  %v1494 = vadd.f32 0.0, %v1493
  %1495 = vmatmul.bf16.gmra.mxu0 %v1455
  %v1496 = vpop.f32.mrf.mxu0
  %v1497 = vadd.f32 0.0, %v1496
  %v1498 = vpop.f32.mrf.mxu0
  %v1499 = vadd.f32 0.0, %v1498
  %1500 = vmatmul.bf16.gmra.mxu0 %v1458
  %v1501 = vpop.f32.mrf.mxu0
  %v1502 = vadd.f32 0.0, %v1501
  %v1503 = vpop.f32.mrf.mxu0
  %v1504 = vadd.f32 0.0, %v1503
  %1505 = vmatmul.bf16.gmra.mxu0 %v1461
  %v1506 = vpop.f32.mrf.mxu0
  %v1507 = vadd.f32 0.0, %v1506
  %v1508 = vpop.f32.mrf.mxu0
  %v1509 = vadd.f32 0.0, %v1508
  %1510 = vmatmul.bf16.gmra.mxu0 %v1464
  %v1511 = vpop.f32.mrf.mxu0
  %v1512 = vadd.f32 0.0, %v1511
  %v1513 = vpop.f32.mrf.mxu0
  %v1514 = vadd.f32 0.0, %v1513
  %1515 = vmatmul.bf16.gmra.mxu0 %v1467
  %v1516 = vpop.f32.mrf.mxu0
  %v1517 = vadd.f32 0.0, %v1516
  %v1518 = vpop.f32.mrf.mxu0
  %v1519 = vadd.f32 0.0, %v1518
  %1520 = vdwg.mxu0
  %v1521 = vadd.f32 %v1387, %v1482
  %v1522 = vadd.f32 %v1388, %v1484
  %v1523 = vadd.f32 %v1389, %v1487
  %v1524 = vadd.f32 %v1390, %v1489
  %v1525 = vadd.f32 %v1391, %v1492
  %v1526 = vadd.f32 %v1392, %v1494
  %v1527 = vadd.f32 %v1393, %v1497
  %v1528 = vadd.f32 %v1394, %v1499
  %v1529 = vadd.f32 %v1395, %v1502
  %v1530 = vadd.f32 %v1396, %v1504
  %v1531 = vadd.f32 %v1397, %v1507
  %v1532 = vadd.f32 %v1398, %v1509
  %v1533 = vadd.f32 %v1399, %v1512
  %v1534 = vadd.f32 %v1400, %v1514
  %v1535 = vadd.f32 %v1401, %v1517
  %v1536 = vadd.f32 %v1402, %v1519
  %v1537 = vld [vmem:[%s0 + $0x8] sm:$0xf]
  %v1538 = vld [vmem:[%s0 + $0xc] sm:$0xf]
  %v1539 = vld [vmem:[%s0 + $0x10] sm:$0xf]
  %v1540 = vld [vmem:[%s0 + $0x14] sm:$0xf]
  %v1541 = vld [vmem:[%s0 + $0x18] sm:$0xf]
  %v1542 = vld [vmem:[%s0 + $0x1c] sm:$0xf]
  %v1543 = vld [vmem:[%s0 + $0x20] sm:$0xf]
  %v1544 = vld [vmem:[%s0 + $0x24] sm:$0xf]
  %v1545 = vld [vmem:[%s0 + $0x28] sm:$0x1]
  %v1546 = vld [vmem:[%s0 + $0x38] sm:$0xf]
  %v1547 = vld [vmem:[%s0 + $0x3c] sm:$0xf]
  %v1548 = vld [vmem:[%s0 + $0x40] sm:$0xf]
  %v1549 = vld [vmem:[%s0 + $0x44] sm:$0xf]
  %v1550 = vld [vmem:[%s0 + $0x48] sm:$0xf]
  %v1551 = vld [vmem:[%s0 + $0x4c] sm:$0xf]
  %v1552 = vld [vmem:[%s0 + $0x50] sm:$0xf]
  %v1553 = vld [vmem:[%s0 + $0x54] sm:$0xf]
  %v1554 = vld [vmem:[%s0 + $0x58] sm:$0x1]
  %v1556 = vshrl.u32 %v1537, 16
  %v1558 = vrot.slane %v1556, 4
  %v1559 = vshll.u32 %v1537, 16
  %v1561 = vrot.slane %v1559, 5
  %v1562 = vor.u32 %v1558, %v1561
  %v1563 = vrot.slane %v1562, 4
  %v1565 = vshll.u32 %v1538, 16
  %v1567 = vrot.slane %v1565, 5
  %v1568 = vsel %vm768, %v1563, %v1567
  %v1569 = vshrl.u32 %v1538, 16
  %v1571 = vrot.slane %v1569, 4
  %v1572 = vor.u32 %v1571, %v1567
  %v1573 = vrot.slane %v1572, 4
  %v1575 = vshll.u32 %v1539, 16
  %v1577 = vrot.slane %v1575, 5
  %v1578 = vsel %vm768, %v1573, %v1577
  %v1579 = vshrl.u32 %v1539, 16
  %v1581 = vrot.slane %v1579, 4
  %v1582 = vor.u32 %v1581, %v1577
  %v1583 = vrot.slane %v1582, 4
  %v1585 = vshll.u32 %v1540, 16
  %v1587 = vrot.slane %v1585, 5
  %v1588 = vsel %vm768, %v1583, %v1587
  %v1589 = vshrl.u32 %v1540, 16
  %v1591 = vrot.slane %v1589, 4
  %v1592 = vor.u32 %v1591, %v1587
  %v1593 = vrot.slane %v1592, 4
  %v1595 = vshll.u32 %v1541, 16
  %v1597 = vrot.slane %v1595, 5
  %v1598 = vsel %vm768, %v1593, %v1597
  %v1599 = vshrl.u32 %v1541, 16
  %v1601 = vrot.slane %v1599, 4
  %v1602 = vor.u32 %v1601, %v1597
  %v1603 = vrot.slane %v1602, 4
  %v1605 = vshll.u32 %v1542, 16
  %v1607 = vrot.slane %v1605, 5
  %v1608 = vsel %vm768, %v1603, %v1607
  %v1609 = vshrl.u32 %v1542, 16
  %v1611 = vrot.slane %v1609, 4
  %v1612 = vor.u32 %v1611, %v1607
  %v1613 = vrot.slane %v1612, 4
  %v1615 = vshll.u32 %v1543, 16
  %v1617 = vrot.slane %v1615, 5
  %v1618 = vsel %vm768, %v1613, %v1617
  %v1619 = vshrl.u32 %v1543, 16
  %v1621 = vrot.slane %v1619, 4
  %v1622 = vor.u32 %v1621, %v1617
  %v1623 = vrot.slane %v1622, 4
  %v1625 = vshll.u32 %v1544, 16
  %v1627 = vrot.slane %v1625, 5
  %v1628 = vsel %vm768, %v1623, %v1627
  %v1629 = vshrl.u32 %v1544, 16
  %v1631 = vrot.slane %v1629, 4
  %v1632 = vor.u32 %v1631, %v1627
  %v1633 = vrot.slane %v1632, 4
  %v1635 = vshll.u32 %v1545, 16
  %v1637 = vrot.slane %v1635, 5
  %v1638 = vsel %vm768, %v1633, %v1637
  %v1640 = vshrl.u32 %v1546, 16
  %v1642 = vrot.slane %v1640, 4
  %v1643 = vshll.u32 %v1546, 16
  %v1645 = vrot.slane %v1643, 5
  %v1646 = vor.u32 %v1642, %v1645
  %v1647 = vrot.slane %v1646, 4
  %v1649 = vshll.u32 %v1547, 16
  %v1651 = vrot.slane %v1649, 5
  %v1652 = vsel %vm768, %v1647, %v1651
  %v1653 = vshrl.u32 %v1547, 16
  %v1655 = vrot.slane %v1653, 4
  %v1656 = vor.u32 %v1655, %v1651
  %v1657 = vrot.slane %v1656, 4
  %v1659 = vshll.u32 %v1548, 16
  %v1661 = vrot.slane %v1659, 5
  %v1662 = vsel %vm768, %v1657, %v1661
  %v1663 = vshrl.u32 %v1548, 16
  %v1665 = vrot.slane %v1663, 4
  %v1666 = vor.u32 %v1665, %v1661
  %v1667 = vrot.slane %v1666, 4
  %v1669 = vshll.u32 %v1549, 16
  %v1671 = vrot.slane %v1669, 5
  %v1672 = vsel %vm768, %v1667, %v1671
  %v1673 = vshrl.u32 %v1549, 16
  %v1675 = vrot.slane %v1673, 4
  %v1676 = vor.u32 %v1675, %v1671
  %v1677 = vrot.slane %v1676, 4
  %v1679 = vshll.u32 %v1550, 16
  %v1681 = vrot.slane %v1679, 5
  %v1682 = vsel %vm768, %v1677, %v1681
  %v1683 = vshrl.u32 %v1550, 16
  %v1685 = vrot.slane %v1683, 4
  %v1686 = vor.u32 %v1685, %v1681
  %v1687 = vrot.slane %v1686, 4
  %v1689 = vshll.u32 %v1551, 16
  %v1691 = vrot.slane %v1689, 5
  %v1692 = vsel %vm768, %v1687, %v1691
  %v1693 = vshrl.u32 %v1551, 16
  %v1695 = vrot.slane %v1693, 4
  %v1696 = vor.u32 %v1695, %v1691
  %v1697 = vrot.slane %v1696, 4
  %v1699 = vshll.u32 %v1552, 16
  %v1701 = vrot.slane %v1699, 5
  %v1702 = vsel %vm768, %v1697, %v1701
  %v1703 = vshrl.u32 %v1552, 16
  %v1705 = vrot.slane %v1703, 4
  %v1706 = vor.u32 %v1705, %v1701
  %v1707 = vrot.slane %v1706, 4
  %v1709 = vshll.u32 %v1553, 16
  %v1711 = vrot.slane %v1709, 5
  %v1712 = vsel %vm768, %v1707, %v1711
  %v1713 = vshrl.u32 %v1553, 16
  %v1715 = vrot.slane %v1713, 4
  %v1716 = vor.u32 %v1715, %v1711
  %v1717 = vrot.slane %v1716, 4
  %v1719 = vshll.u32 %v1554, 16
  %v1721 = vrot.slane %v1719, 5
  %v1722 = vsel %vm768, %v1717, %v1721
  %v1739 = vsel %vm985, %v1568, 0
  %v1740 = vsel %vm986, %v1578, 0
  %v1741 = vsel %vm987, %v1588, 0
  %v1742 = vsel %vm988, %v1598, 0
  %v1743 = vsel %vm989, %v1608, 0
  %v1744 = vsel %vm990, %v1618, 0
  %v1745 = vsel %vm991, %v1628, 0
  %v1746 = vsel %vm992, %v1638, 0
  %v1747 = vsel %vm993, %v1652, 0
  %v1748 = vsel %vm994, %v1662, 0
  %v1749 = vsel %vm995, %v1672, 0
  %v1750 = vsel %vm996, %v1682, 0
  %v1751 = vsel %vm997, %v1692, 0
  %v1752 = vsel %vm998, %v1702, 0
  %v1753 = vsel %vm999, %v1712, 0
  %v1754 = vsel %vm1000, %v1722, 0
  %s1755 = scalar_lea.vmem %s1, 10
  %v1756 = vld [vmem:[%s1755] sm:$0x3]
  %v1773 = vunpack.c.l.b16 %v1739
  %v1774 = vunpack.c.l.b16 %v1740
  %v1775 = vunpack.c.l.b16 %v1741
  %v1776 = vunpack.c.l.b16 %v1742
  %v1777 = vunpack.c.l.b16 %v1743
  %v1778 = vunpack.c.l.b16 %v1744
  %v1779 = vunpack.c.l.b16 %v1745
  %v1780 = vunpack.c.l.b16 %v1746
  %v1781 = vunpack.c.l.b16 %v1747
  %v1782 = vunpack.c.l.b16 %v1748
  %v1783 = vunpack.c.l.b16 %v1749
  %v1784 = vunpack.c.l.b16 %v1750
  %v1785 = vunpack.c.l.b16 %v1751
  %v1786 = vunpack.c.l.b16 %v1752
  %v1787 = vunpack.c.l.b16 %v1753
  %v1788 = vunpack.c.l.b16 %v1754
  %v1789 = vpack.c.b16 %v1774, %v1773
  %v1790 = vpack.c.b16 %v1776, %v1775
  %v1791 = vpack.c.b16 %v1778, %v1777
  %v1792 = vpack.c.b16 %v1780, %v1779
  %v1793 = vpack.c.b16 %v1782, %v1781
  %v1794 = vpack.c.b16 %v1784, %v1783
  %v1795 = vpack.c.b16 %v1786, %v1785
  %v1796 = vpack.c.b16 %v1788, %v1787
  %v1798 = vsel %vm551, %v1789, 0
  %v1801 = vsel %vm551, %v1790, 0
  %v1804 = vsel %vm551, %v1791, 0
  %v1807 = vsel %vm551, %v1792, 0
  %v1810 = vsel %vm551, %v1793, 0
  %v1813 = vsel %vm551, %v1794, 0
  %v1816 = vsel %vm551, %v1795, 0
  %v1819 = vsel %vm551, %v1796, 0
  %v1822 = vand.u32 %v1756, %v579
  %1824 = vmatpush.bf16.msra.mxu0 0
  %1825 = vmatpush.bf16.msra.mxu0 0
  %1826 = vmatpush.bf16.msra.mxu0 0
  %1827 = vmatpush.bf16.msra.mxu0 0
  %1828 = vmatpush.bf16.msra.mxu0 0
  %1829 = vmatpush.bf16.msra.mxu0 0
  %1830 = vmatpush.bf16.msra.mxu0 0
  %1831 = vmatpush.bf16.msra.mxu0 %v1822
  %1832 = vmatmul.bf16.gmra.mxu0 %v1798
  %v1833 = vpop.f32.mrf.mxu0
  %v1834 = vadd.f32 0.0, %v1833
  %v1835 = vpop.f32.mrf.mxu0
  %v1836 = vadd.f32 0.0, %v1835
  %1837 = vmatmul.bf16.gmra.mxu0 %v1801
  %v1838 = vpop.f32.mrf.mxu0
  %v1839 = vadd.f32 0.0, %v1838
  %v1840 = vpop.f32.mrf.mxu0
  %v1841 = vadd.f32 0.0, %v1840
  %1842 = vmatmul.bf16.gmra.mxu0 %v1804
  %v1843 = vpop.f32.mrf.mxu0
  %v1844 = vadd.f32 0.0, %v1843
  %v1845 = vpop.f32.mrf.mxu0
  %v1846 = vadd.f32 0.0, %v1845
  %1847 = vmatmul.bf16.gmra.mxu0 %v1807
  %v1848 = vpop.f32.mrf.mxu0
  %v1849 = vadd.f32 0.0, %v1848
  %v1850 = vpop.f32.mrf.mxu0
  %v1851 = vadd.f32 0.0, %v1850
  %1852 = vmatmul.bf16.gmra.mxu0 %v1810
  %v1853 = vpop.f32.mrf.mxu0
  %v1854 = vadd.f32 0.0, %v1853
  %v1855 = vpop.f32.mrf.mxu0
  %v1856 = vadd.f32 0.0, %v1855
  %1857 = vmatmul.bf16.gmra.mxu0 %v1813
  %v1858 = vpop.f32.mrf.mxu0
  %v1859 = vadd.f32 0.0, %v1858
  %v1860 = vpop.f32.mrf.mxu0
  %v1861 = vadd.f32 0.0, %v1860
  %1862 = vmatmul.bf16.gmra.mxu0 %v1816
  %v1863 = vpop.f32.mrf.mxu0
  %v1864 = vadd.f32 0.0, %v1863
  %v1865 = vpop.f32.mrf.mxu0
  %v1866 = vadd.f32 0.0, %v1865
  %1867 = vmatmul.bf16.gmra.mxu0 %v1819
  %v1868 = vpop.f32.mrf.mxu0
  %v1869 = vadd.f32 0.0, %v1868
  %v1870 = vpop.f32.mrf.mxu0
  %v1871 = vadd.f32 0.0, %v1870
  %1872 = vdwg.mxu0
  %v1873 = vadd.f32 %v1521, %v1834
  %v1874 = vadd.f32 %v1522, %v1836
  %v1875 = vadd.f32 %v1523, %v1839
  %v1876 = vadd.f32 %v1524, %v1841
  %v1877 = vadd.f32 %v1525, %v1844
  %v1878 = vadd.f32 %v1526, %v1846
  %v1879 = vadd.f32 %v1527, %v1849
  %v1880 = vadd.f32 %v1528, %v1851
  %v1881 = vadd.f32 %v1529, %v1854
  %v1882 = vadd.f32 %v1530, %v1856
  %v1883 = vadd.f32 %v1531, %v1859
  %v1884 = vadd.f32 %v1532, %v1861
  %v1885 = vadd.f32 %v1533, %v1864
  %v1886 = vadd.f32 %v1534, %v1866
  %v1887 = vadd.f32 %v1535, %v1869
  %v1888 = vadd.f32 %v1536, %v1871
  %v1889 = vld [vmem:[%s0 + $0x8] sm:$0x8]
  %v1890 = vld [vmem:[%s0 + $0x28] sm:$0xf]
  %v1891 = vld [vmem:[%s0 + $0x38] sm:$0x8]
  %v1892 = vld [vmem:[%s0 + $0x58] sm:$0xf]
  %v1894 = vshrl.u32 %v1889, 16
  %v1896 = vrot.slane %v1894, 7
  %v1897 = vrot.slane %v1896, 4
  %v1898 = vrot.slane %v1569, 7
  %v1899 = vor.u32 %v1898, %v1565
  %v1900 = vsel %vm275, %v1897, %v1899
  %v1901 = vrot.slane %v1898, 4
  %v1902 = vrot.slane %v1579, 7
  %v1903 = vor.u32 %v1902, %v1575
  %v1904 = vsel %vm275, %v1901, %v1903
  %v1905 = vrot.slane %v1902, 4
  %v1906 = vrot.slane %v1589, 7
  %v1907 = vor.u32 %v1906, %v1585
  %v1908 = vsel %vm275, %v1905, %v1907
  %v1909 = vrot.slane %v1906, 4
  %v1910 = vrot.slane %v1599, 7
  %v1911 = vor.u32 %v1910, %v1595
  %v1912 = vsel %vm275, %v1909, %v1911
  %v1913 = vrot.slane %v1910, 4
  %v1914 = vrot.slane %v1609, 7
  %v1915 = vor.u32 %v1914, %v1605
  %v1916 = vsel %vm275, %v1913, %v1915
  %v1917 = vrot.slane %v1914, 4
  %v1918 = vrot.slane %v1619, 7
  %v1919 = vor.u32 %v1918, %v1615
  %v1920 = vsel %vm275, %v1917, %v1919
  %v1921 = vrot.slane %v1918, 4
  %v1922 = vrot.slane %v1629, 7
  %v1923 = vor.u32 %v1922, %v1625
  %v1924 = vsel %vm275, %v1921, %v1923
  %v1925 = vrot.slane %v1922, 4
  %v1927 = vshrl.u32 %v1890, 16
  %v1929 = vrot.slane %v1927, 7
  %v1930 = vshll.u32 %v1890, 16
  %v1932 = vor.u32 %v1929, %v1930
  %v1933 = vsel %vm275, %v1925, %v1932
  %v1935 = vshrl.u32 %v1891, 16
  %v1937 = vrot.slane %v1935, 7
  %v1938 = vrot.slane %v1937, 4
  %v1939 = vrot.slane %v1653, 7
  %v1940 = vor.u32 %v1939, %v1649
  %v1941 = vsel %vm275, %v1938, %v1940
  %v1942 = vrot.slane %v1939, 4
  %v1943 = vrot.slane %v1663, 7
  %v1944 = vor.u32 %v1943, %v1659
  %v1945 = vsel %vm275, %v1942, %v1944
  %v1946 = vrot.slane %v1943, 4
  %v1947 = vrot.slane %v1673, 7
  %v1948 = vor.u32 %v1947, %v1669
  %v1949 = vsel %vm275, %v1946, %v1948
  %v1950 = vrot.slane %v1947, 4
  %v1951 = vrot.slane %v1683, 7
  %v1952 = vor.u32 %v1951, %v1679
  %v1953 = vsel %vm275, %v1950, %v1952
  %v1954 = vrot.slane %v1951, 4
  %v1955 = vrot.slane %v1693, 7
  %v1956 = vor.u32 %v1955, %v1689
  %v1957 = vsel %vm275, %v1954, %v1956
  %v1958 = vrot.slane %v1955, 4
  %v1959 = vrot.slane %v1703, 7
  %v1960 = vor.u32 %v1959, %v1699
  %v1961 = vsel %vm275, %v1958, %v1960
  %v1962 = vrot.slane %v1959, 4
  %v1963 = vrot.slane %v1713, 7
  %v1964 = vor.u32 %v1963, %v1709
  %v1965 = vsel %vm275, %v1962, %v1964
  %v1966 = vrot.slane %v1963, 4
  %v1968 = vshrl.u32 %v1892, 16
  %v1970 = vrot.slane %v1968, 7
  %v1971 = vshll.u32 %v1892, 16
  %v1973 = vor.u32 %v1970, %v1971
  %v1974 = vsel %vm275, %v1966, %v1973
  %v1991 = vsel %vm476, %v1900, 0
  %v1992 = vsel %vm477, %v1904, 0
  %v1993 = vsel %vm478, %v1908, 0
  %v1994 = vsel %vm479, %v1912, 0
  %v1995 = vsel %vm480, %v1916, 0
  %v1996 = vsel %vm481, %v1920, 0
  %v1997 = vsel %vm482, %v1924, 0
  %v1998 = vsel %vm483, %v1933, 0
  %v1999 = vsel %vm484, %v1941, 0
  %v2000 = vsel %vm485, %v1945, 0
  %v2001 = vsel %vm486, %v1949, 0
  %v2002 = vsel %vm487, %v1953, 0
  %v2003 = vsel %vm488, %v1957, 0
  %v2004 = vsel %vm489, %v1961, 0
  %v2005 = vsel %vm490, %v1965, 0
  %v2006 = vsel %vm491, %v1974, 0
  %s2007 = scalar_lea.vmem %s1, 12
  %v2008 = vld [vmem:[%s2007] sm:$0x3]
  %v2025 = vunpack.c.l.b16 %v1991
  %v2026 = vunpack.c.l.b16 %v1992
  %v2027 = vunpack.c.l.b16 %v1993
  %v2028 = vunpack.c.l.b16 %v1994
  %v2029 = vunpack.c.l.b16 %v1995
  %v2030 = vunpack.c.l.b16 %v1996
  %v2031 = vunpack.c.l.b16 %v1997
  %v2032 = vunpack.c.l.b16 %v1998
  %v2033 = vunpack.c.l.b16 %v1999
  %v2034 = vunpack.c.l.b16 %v2000
  %v2035 = vunpack.c.l.b16 %v2001
  %v2036 = vunpack.c.l.b16 %v2002
  %v2037 = vunpack.c.l.b16 %v2003
  %v2038 = vunpack.c.l.b16 %v2004
  %v2039 = vunpack.c.l.b16 %v2005
  %v2040 = vunpack.c.l.b16 %v2006
  %v2041 = vpack.c.b16 %v2026, %v2025
  %v2042 = vpack.c.b16 %v2028, %v2027
  %v2043 = vpack.c.b16 %v2030, %v2029
  %v2044 = vpack.c.b16 %v2032, %v2031
  %v2045 = vpack.c.b16 %v2034, %v2033
  %v2046 = vpack.c.b16 %v2036, %v2035
  %v2047 = vpack.c.b16 %v2038, %v2037
  %v2048 = vpack.c.b16 %v2040, %v2039
  %v2050 = vsel %vm551, %v2041, 0
  %v2053 = vsel %vm551, %v2042, 0
  %v2056 = vsel %vm551, %v2043, 0
  %v2059 = vsel %vm551, %v2044, 0
  %v2062 = vsel %vm551, %v2045, 0
  %v2065 = vsel %vm551, %v2046, 0
  %v2068 = vsel %vm551, %v2047, 0
  %v2071 = vsel %vm551, %v2048, 0
  %v2074 = vand.u32 %v2008, %v579
  %2076 = vmatpush.bf16.msra.mxu0 0
  %2077 = vmatpush.bf16.msra.mxu0 0
  %2078 = vmatpush.bf16.msra.mxu0 0
  %2079 = vmatpush.bf16.msra.mxu0 0
  %2080 = vmatpush.bf16.msra.mxu0 0
  %2081 = vmatpush.bf16.msra.mxu0 0
  %2082 = vmatpush.bf16.msra.mxu0 0
  %2083 = vmatpush.bf16.msra.mxu0 %v2074
  %2084 = vmatmul.bf16.gmra.mxu0 %v2050
  %v2085 = vpop.f32.mrf.mxu0
  %v2086 = vadd.f32 0.0, %v2085
  %v2087 = vpop.f32.mrf.mxu0
  %v2088 = vadd.f32 0.0, %v2087
  %2089 = vmatmul.bf16.gmra.mxu0 %v2053
  %v2090 = vpop.f32.mrf.mxu0
  %v2091 = vadd.f32 0.0, %v2090
  %v2092 = vpop.f32.mrf.mxu0
  %v2093 = vadd.f32 0.0, %v2092
  %2094 = vmatmul.bf16.gmra.mxu0 %v2056
  %v2095 = vpop.f32.mrf.mxu0
  %v2096 = vadd.f32 0.0, %v2095
  %v2097 = vpop.f32.mrf.mxu0
  %v2098 = vadd.f32 0.0, %v2097
  %2099 = vmatmul.bf16.gmra.mxu0 %v2059
  %v2100 = vpop.f32.mrf.mxu0
  %v2101 = vadd.f32 0.0, %v2100
  %v2102 = vpop.f32.mrf.mxu0
  %v2103 = vadd.f32 0.0, %v2102
  %2104 = vmatmul.bf16.gmra.mxu0 %v2062
  %v2105 = vpop.f32.mrf.mxu0
  %v2106 = vadd.f32 0.0, %v2105
  %v2107 = vpop.f32.mrf.mxu0
  %v2108 = vadd.f32 0.0, %v2107
  %2109 = vmatmul.bf16.gmra.mxu0 %v2065
  %v2110 = vpop.f32.mrf.mxu0
  %v2111 = vadd.f32 0.0, %v2110
  %v2112 = vpop.f32.mrf.mxu0
  %v2113 = vadd.f32 0.0, %v2112
  %2114 = vmatmul.bf16.gmra.mxu0 %v2068
  %v2115 = vpop.f32.mrf.mxu0
  %v2116 = vadd.f32 0.0, %v2115
  %v2117 = vpop.f32.mrf.mxu0
  %v2118 = vadd.f32 0.0, %v2117
  %2119 = vmatmul.bf16.gmra.mxu0 %v2071
  %v2120 = vpop.f32.mrf.mxu0
  %v2121 = vadd.f32 0.0, %v2120
  %v2122 = vpop.f32.mrf.mxu0
  %v2123 = vadd.f32 0.0, %v2122
  %2124 = vdwg.mxu0
  %v2125 = vadd.f32 %v1873, %v2086
  %v2126 = vadd.f32 %v1874, %v2088
  %v2127 = vadd.f32 %v1875, %v2091
  %v2128 = vadd.f32 %v1876, %v2093
  %v2129 = vadd.f32 %v1877, %v2096
  %v2130 = vadd.f32 %v1878, %v2098
  %v2131 = vadd.f32 %v1879, %v2101
  %v2132 = vadd.f32 %v1880, %v2103
  %v2133 = vadd.f32 %v1881, %v2106
  %v2134 = vadd.f32 %v1882, %v2108
  %v2135 = vadd.f32 %v1883, %v2111
  %v2136 = vadd.f32 %v1884, %v2113
  %v2137 = vadd.f32 %v1885, %v2116
  %v2138 = vadd.f32 %v1886, %v2118
  %v2139 = vadd.f32 %v1887, %v2121
  %v2140 = vadd.f32 %v1888, %v2123
  %s2141 = scalar_lea.vmem %s1, 14
  %v2142 = vld [vmem:[%s2141] sm:$0x3]
  %v2159 = vunpack.c.l.b16 %v1538
  %v2160 = vunpack.c.l.b16 %v1539
  %v2161 = vunpack.c.l.b16 %v1540
  %v2162 = vunpack.c.l.b16 %v1541
  %v2163 = vunpack.c.l.b16 %v1542
  %v2164 = vunpack.c.l.b16 %v1543
  %v2165 = vunpack.c.l.b16 %v1544
  %v2166 = vunpack.c.l.b16 %v1890
  %v2167 = vunpack.c.l.b16 %v1547
  %v2168 = vunpack.c.l.b16 %v1548
  %v2169 = vunpack.c.l.b16 %v1549
  %v2170 = vunpack.c.l.b16 %v1550
  %v2171 = vunpack.c.l.b16 %v1551
  %v2172 = vunpack.c.l.b16 %v1552
  %v2173 = vunpack.c.l.b16 %v1553
  %v2174 = vunpack.c.l.b16 %v1892
  %v2175 = vpack.c.b16 %v2160, %v2159
  %v2176 = vpack.c.b16 %v2162, %v2161
  %v2177 = vpack.c.b16 %v2164, %v2163
  %v2178 = vpack.c.b16 %v2166, %v2165
  %v2179 = vpack.c.b16 %v2168, %v2167
  %v2180 = vpack.c.b16 %v2170, %v2169
  %v2181 = vpack.c.b16 %v2172, %v2171
  %v2182 = vpack.c.b16 %v2174, %v2173
  %v2184 = vsel %vm551, %v2175, 0
  %v2187 = vsel %vm551, %v2176, 0
  %v2190 = vsel %vm551, %v2177, 0
  %v2193 = vsel %vm551, %v2178, 0
  %v2196 = vsel %vm551, %v2179, 0
  %v2199 = vsel %vm551, %v2180, 0
  %v2202 = vsel %vm551, %v2181, 0
  %v2205 = vsel %vm551, %v2182, 0
  %v2208 = vand.u32 %v2142, %v579
  %2210 = vmatpush.bf16.msra.mxu0 0
  %2211 = vmatpush.bf16.msra.mxu0 0
  %2212 = vmatpush.bf16.msra.mxu0 0
  %2213 = vmatpush.bf16.msra.mxu0 0
  %2214 = vmatpush.bf16.msra.mxu0 0
  %2215 = vmatpush.bf16.msra.mxu0 0
  %2216 = vmatpush.bf16.msra.mxu0 0
  %2217 = vmatpush.bf16.msra.mxu0 %v2208
  %2218 = vmatmul.bf16.gmra.mxu0 %v2184
  %v2219 = vpop.f32.mrf.mxu0
  %v2220 = vadd.f32 0.0, %v2219
  %v2221 = vpop.f32.mrf.mxu0
  %v2222 = vadd.f32 0.0, %v2221
  %2223 = vmatmul.bf16.gmra.mxu0 %v2187
  %v2224 = vpop.f32.mrf.mxu0
  %v2225 = vadd.f32 0.0, %v2224
  %v2226 = vpop.f32.mrf.mxu0
  %v2227 = vadd.f32 0.0, %v2226
  %2228 = vmatmul.bf16.gmra.mxu0 %v2190
  %v2229 = vpop.f32.mrf.mxu0
  %v2230 = vadd.f32 0.0, %v2229
  %v2231 = vpop.f32.mrf.mxu0
  %v2232 = vadd.f32 0.0, %v2231
  %2233 = vmatmul.bf16.gmra.mxu0 %v2193
  %v2234 = vpop.f32.mrf.mxu0
  %v2235 = vadd.f32 0.0, %v2234
  %v2236 = vpop.f32.mrf.mxu0
  %v2237 = vadd.f32 0.0, %v2236
  %2238 = vmatmul.bf16.gmra.mxu0 %v2196
  %v2239 = vpop.f32.mrf.mxu0
  %v2240 = vadd.f32 0.0, %v2239
  %v2241 = vpop.f32.mrf.mxu0
  %v2242 = vadd.f32 0.0, %v2241
  %2243 = vmatmul.bf16.gmra.mxu0 %v2199
  %v2244 = vpop.f32.mrf.mxu0
  %v2245 = vadd.f32 0.0, %v2244
  %v2246 = vpop.f32.mrf.mxu0
  %v2247 = vadd.f32 0.0, %v2246
  %2248 = vmatmul.bf16.gmra.mxu0 %v2202
  %v2249 = vpop.f32.mrf.mxu0
  %v2250 = vadd.f32 0.0, %v2249
  %v2251 = vpop.f32.mrf.mxu0
  %v2252 = vadd.f32 0.0, %v2251
  %2253 = vmatmul.bf16.gmra.mxu0 %v2205
  %v2254 = vpop.f32.mrf.mxu0
  %v2255 = vadd.f32 0.0, %v2254
  %v2256 = vpop.f32.mrf.mxu0
  %v2257 = vadd.f32 0.0, %v2256
  %2258 = vdwg.mxu0
  %v2259 = vadd.f32 %v2125, %v2220
  %v2260 = vadd.f32 %v2126, %v2222
  %v2261 = vadd.f32 %v2127, %v2225
  %v2262 = vadd.f32 %v2128, %v2227
  %v2263 = vadd.f32 %v2129, %v2230
  %v2264 = vadd.f32 %v2130, %v2232
  %v2265 = vadd.f32 %v2131, %v2235
  %v2266 = vadd.f32 %v2132, %v2237
  %v2267 = vadd.f32 %v2133, %v2240
  %v2268 = vadd.f32 %v2134, %v2242
  %v2269 = vadd.f32 %v2135, %v2245
  %v2270 = vadd.f32 %v2136, %v2247
  %v2271 = vadd.f32 %v2137, %v2250
  %v2272 = vadd.f32 %v2138, %v2252
  %v2273 = vadd.f32 %v2139, %v2255
  %v2274 = vadd.f32 %v2140, %v2257
  %v2275 = vld [vmem:[%s0 + $0xc] sm:$0xf]
  %v2276 = vld [vmem:[%s0 + $0x10] sm:$0xf]
  %v2277 = vld [vmem:[%s0 + $0x14] sm:$0xf]
  %v2278 = vld [vmem:[%s0 + $0x18] sm:$0xf]
  %v2279 = vld [vmem:[%s0 + $0x1c] sm:$0xf]
  %v2280 = vld [vmem:[%s0 + $0x20] sm:$0xf]
  %v2281 = vld [vmem:[%s0 + $0x24] sm:$0xf]
  %v2282 = vld [vmem:[%s0 + $0x28] sm:$0xf]
  %v2283 = vld [vmem:[%s0 + $0x2c] sm:$0x1]
  %v2284 = vld [vmem:[%s0 + $0x3c] sm:$0xf]
  %v2285 = vld [vmem:[%s0 + $0x40] sm:$0xf]
  %v2286 = vld [vmem:[%s0 + $0x44] sm:$0xf]
  %v2287 = vld [vmem:[%s0 + $0x48] sm:$0xf]
  %v2288 = vld [vmem:[%s0 + $0x4c] sm:$0xf]
  %v2289 = vld [vmem:[%s0 + $0x50] sm:$0xf]
  %v2290 = vld [vmem:[%s0 + $0x54] sm:$0xf]
  %v2291 = vld [vmem:[%s0 + $0x58] sm:$0xf]
  %v2292 = vld [vmem:[%s0 + $0x5c] sm:$0x1]
  %v2294 = vshrl.u32 %v2275, 16
  %v2296 = vrot.slane %v2294, 4
  %v2297 = vshll.u32 %v2275, 16
  %v2299 = vrot.slane %v2297, 5
  %v2300 = vor.u32 %v2296, %v2299
  %v2301 = vrot.slane %v2300, 4
  %v2303 = vshll.u32 %v2276, 16
  %v2305 = vrot.slane %v2303, 5
  %v2306 = vsel %vm768, %v2301, %v2305
  %v2307 = vshrl.u32 %v2276, 16
  %v2309 = vrot.slane %v2307, 4
  %v2310 = vor.u32 %v2309, %v2305
  %v2311 = vrot.slane %v2310, 4
  %v2313 = vshll.u32 %v2277, 16
  %v2315 = vrot.slane %v2313, 5
  %v2316 = vsel %vm768, %v2311, %v2315
  %v2317 = vshrl.u32 %v2277, 16
  %v2319 = vrot.slane %v2317, 4
  %v2320 = vor.u32 %v2319, %v2315
  %v2321 = vrot.slane %v2320, 4
  %v2323 = vshll.u32 %v2278, 16
  %v2325 = vrot.slane %v2323, 5
  %v2326 = vsel %vm768, %v2321, %v2325
  %v2327 = vshrl.u32 %v2278, 16
  %v2329 = vrot.slane %v2327, 4
  %v2330 = vor.u32 %v2329, %v2325
  %v2331 = vrot.slane %v2330, 4
  %v2333 = vshll.u32 %v2279, 16
  %v2335 = vrot.slane %v2333, 5
  %v2336 = vsel %vm768, %v2331, %v2335
  %v2337 = vshrl.u32 %v2279, 16
  %v2339 = vrot.slane %v2337, 4
  %v2340 = vor.u32 %v2339, %v2335
  %v2341 = vrot.slane %v2340, 4
  %v2343 = vshll.u32 %v2280, 16
  %v2345 = vrot.slane %v2343, 5
  %v2346 = vsel %vm768, %v2341, %v2345
  %v2347 = vshrl.u32 %v2280, 16
  %v2349 = vrot.slane %v2347, 4
  %v2350 = vor.u32 %v2349, %v2345
  %v2351 = vrot.slane %v2350, 4
  %v2353 = vshll.u32 %v2281, 16
  %v2355 = vrot.slane %v2353, 5
  %v2356 = vsel %vm768, %v2351, %v2355
  %v2357 = vshrl.u32 %v2281, 16
  %v2359 = vrot.slane %v2357, 4
  %v2360 = vor.u32 %v2359, %v2355
  %v2361 = vrot.slane %v2360, 4
  %v2363 = vshll.u32 %v2282, 16
  %v2365 = vrot.slane %v2363, 5
  %v2366 = vsel %vm768, %v2361, %v2365
  %v2367 = vshrl.u32 %v2282, 16
  %v2369 = vrot.slane %v2367, 4
  %v2370 = vor.u32 %v2369, %v2365
  %v2371 = vrot.slane %v2370, 4
  %v2373 = vshll.u32 %v2283, 16
  %v2375 = vrot.slane %v2373, 5
  %v2376 = vsel %vm768, %v2371, %v2375
  %v2378 = vshrl.u32 %v2284, 16
  %v2380 = vrot.slane %v2378, 4
  %v2381 = vshll.u32 %v2284, 16
  %v2383 = vrot.slane %v2381, 5
  %v2384 = vor.u32 %v2380, %v2383
  %v2385 = vrot.slane %v2384, 4
  %v2387 = vshll.u32 %v2285, 16
  %v2389 = vrot.slane %v2387, 5
  %v2390 = vsel %vm768, %v2385, %v2389
  %v2391 = vshrl.u32 %v2285, 16
  %v2393 = vrot.slane %v2391, 4
  %v2394 = vor.u32 %v2393, %v2389
  %v2395 = vrot.slane %v2394, 4
  %v2397 = vshll.u32 %v2286, 16
  %v2399 = vrot.slane %v2397, 5
  %v2400 = vsel %vm768, %v2395, %v2399
  %v2401 = vshrl.u32 %v2286, 16
  %v2403 = vrot.slane %v2401, 4
  %v2404 = vor.u32 %v2403, %v2399
  %v2405 = vrot.slane %v2404, 4
  %v2407 = vshll.u32 %v2287, 16
  %v2409 = vrot.slane %v2407, 5
  %v2410 = vsel %vm768, %v2405, %v2409
  %v2411 = vshrl.u32 %v2287, 16
  %v2413 = vrot.slane %v2411, 4
  %v2414 = vor.u32 %v2413, %v2409
  %v2415 = vrot.slane %v2414, 4
  %v2417 = vshll.u32 %v2288, 16
  %v2419 = vrot.slane %v2417, 5
  %v2420 = vsel %vm768, %v2415, %v2419
  %v2421 = vshrl.u32 %v2288, 16
  %v2423 = vrot.slane %v2421, 4
  %v2424 = vor.u32 %v2423, %v2419
  %v2425 = vrot.slane %v2424, 4
  %v2427 = vshll.u32 %v2289, 16
  %v2429 = vrot.slane %v2427, 5
  %v2430 = vsel %vm768, %v2425, %v2429
  %v2431 = vshrl.u32 %v2289, 16
  %v2433 = vrot.slane %v2431, 4
  %v2434 = vor.u32 %v2433, %v2429
  %v2435 = vrot.slane %v2434, 4
  %v2437 = vshll.u32 %v2290, 16
  %v2439 = vrot.slane %v2437, 5
  %v2440 = vsel %vm768, %v2435, %v2439
  %v2441 = vshrl.u32 %v2290, 16
  %v2443 = vrot.slane %v2441, 4
  %v2444 = vor.u32 %v2443, %v2439
  %v2445 = vrot.slane %v2444, 4
  %v2447 = vshll.u32 %v2291, 16
  %v2449 = vrot.slane %v2447, 5
  %v2450 = vsel %vm768, %v2445, %v2449
  %v2451 = vshrl.u32 %v2291, 16
  %v2453 = vrot.slane %v2451, 4
  %v2454 = vor.u32 %v2453, %v2449
  %v2455 = vrot.slane %v2454, 4
  %v2457 = vshll.u32 %v2292, 16
  %v2459 = vrot.slane %v2457, 5
  %v2460 = vsel %vm768, %v2455, %v2459
  %v2477 = vsel %vm985, %v2306, 0
  %v2478 = vsel %vm986, %v2316, 0
  %v2479 = vsel %vm987, %v2326, 0
  %v2480 = vsel %vm988, %v2336, 0
  %v2481 = vsel %vm989, %v2346, 0
  %v2482 = vsel %vm990, %v2356, 0
  %v2483 = vsel %vm991, %v2366, 0
  %v2484 = vsel %vm992, %v2376, 0
  %v2485 = vsel %vm993, %v2390, 0
  %v2486 = vsel %vm994, %v2400, 0
  %v2487 = vsel %vm995, %v2410, 0
  %v2488 = vsel %vm996, %v2420, 0
  %v2489 = vsel %vm997, %v2430, 0
  %v2490 = vsel %vm998, %v2440, 0
  %v2491 = vsel %vm999, %v2450, 0
  %v2492 = vsel %vm1000, %v2460, 0
  %s2493 = scalar_lea.vmem %s1, 16
  %v2494 = vld [vmem:[%s2493] sm:$0x3]
  %v2511 = vunpack.c.l.b16 %v2477
  %v2512 = vunpack.c.l.b16 %v2478
  %v2513 = vunpack.c.l.b16 %v2479
  %v2514 = vunpack.c.l.b16 %v2480
  %v2515 = vunpack.c.l.b16 %v2481
  %v2516 = vunpack.c.l.b16 %v2482
  %v2517 = vunpack.c.l.b16 %v2483
  %v2518 = vunpack.c.l.b16 %v2484
  %v2519 = vunpack.c.l.b16 %v2485
  %v2520 = vunpack.c.l.b16 %v2486
  %v2521 = vunpack.c.l.b16 %v2487
  %v2522 = vunpack.c.l.b16 %v2488
  %v2523 = vunpack.c.l.b16 %v2489
  %v2524 = vunpack.c.l.b16 %v2490
  %v2525 = vunpack.c.l.b16 %v2491
  %v2526 = vunpack.c.l.b16 %v2492
  %v2527 = vpack.c.b16 %v2512, %v2511
  %v2528 = vpack.c.b16 %v2514, %v2513
  %v2529 = vpack.c.b16 %v2516, %v2515
  %v2530 = vpack.c.b16 %v2518, %v2517
  %v2531 = vpack.c.b16 %v2520, %v2519
  %v2532 = vpack.c.b16 %v2522, %v2521
  %v2533 = vpack.c.b16 %v2524, %v2523
  %v2534 = vpack.c.b16 %v2526, %v2525
  %v2536 = vsel %vm551, %v2527, 0
  %v2539 = vsel %vm551, %v2528, 0
  %v2542 = vsel %vm551, %v2529, 0
  %v2545 = vsel %vm551, %v2530, 0
  %v2548 = vsel %vm551, %v2531, 0
  %v2551 = vsel %vm551, %v2532, 0
  %v2554 = vsel %vm551, %v2533, 0
  %v2557 = vsel %vm551, %v2534, 0
  %v2560 = vand.u32 %v2494, %v579
  %2562 = vmatpush.bf16.msra.mxu0 0
  %2563 = vmatpush.bf16.msra.mxu0 0
  %2564 = vmatpush.bf16.msra.mxu0 0
  %2565 = vmatpush.bf16.msra.mxu0 0
  %2566 = vmatpush.bf16.msra.mxu0 0
  %2567 = vmatpush.bf16.msra.mxu0 0
  %2568 = vmatpush.bf16.msra.mxu0 0
  %2569 = vmatpush.bf16.msra.mxu0 %v2560
  %2570 = vmatmul.bf16.gmra.mxu0 %v2536
  %v2571 = vpop.f32.mrf.mxu0
  %v2572 = vadd.f32 0.0, %v2571
  %v2573 = vpop.f32.mrf.mxu0
  %v2574 = vadd.f32 0.0, %v2573
  %2575 = vmatmul.bf16.gmra.mxu0 %v2539
  %v2576 = vpop.f32.mrf.mxu0
  %v2577 = vadd.f32 0.0, %v2576
  %v2578 = vpop.f32.mrf.mxu0
  %v2579 = vadd.f32 0.0, %v2578
  %2580 = vmatmul.bf16.gmra.mxu0 %v2542
  %v2581 = vpop.f32.mrf.mxu0
  %v2582 = vadd.f32 0.0, %v2581
  %v2583 = vpop.f32.mrf.mxu0
  %v2584 = vadd.f32 0.0, %v2583
  %2585 = vmatmul.bf16.gmra.mxu0 %v2545
  %v2586 = vpop.f32.mrf.mxu0
  %v2587 = vadd.f32 0.0, %v2586
  %v2588 = vpop.f32.mrf.mxu0
  %v2589 = vadd.f32 0.0, %v2588
  %2590 = vmatmul.bf16.gmra.mxu0 %v2548
  %v2591 = vpop.f32.mrf.mxu0
  %v2592 = vadd.f32 0.0, %v2591
  %v2593 = vpop.f32.mrf.mxu0
  %v2594 = vadd.f32 0.0, %v2593
  %2595 = vmatmul.bf16.gmra.mxu0 %v2551
  %v2596 = vpop.f32.mrf.mxu0
  %v2597 = vadd.f32 0.0, %v2596
  %v2598 = vpop.f32.mrf.mxu0
  %v2599 = vadd.f32 0.0, %v2598
  %2600 = vmatmul.bf16.gmra.mxu0 %v2554
  %v2601 = vpop.f32.mrf.mxu0
  %v2602 = vadd.f32 0.0, %v2601
  %v2603 = vpop.f32.mrf.mxu0
  %v2604 = vadd.f32 0.0, %v2603
  %2605 = vmatmul.bf16.gmra.mxu0 %v2557
  %v2606 = vpop.f32.mrf.mxu0
  %v2607 = vadd.f32 0.0, %v2606
  %v2608 = vpop.f32.mrf.mxu0
  %v2609 = vadd.f32 0.0, %v2608
  %2610 = vdwg.mxu0
  %v2611 = vadd.f32 %v2259, %v2572
  %v2612 = vadd.f32 %v2260, %v2574
  %v2613 = vadd.f32 %v2261, %v2577
  %v2614 = vadd.f32 %v2262, %v2579
  %v2615 = vadd.f32 %v2263, %v2582
  %v2616 = vadd.f32 %v2264, %v2584
  %v2617 = vadd.f32 %v2265, %v2587
  %v2618 = vadd.f32 %v2266, %v2589
  %v2619 = vadd.f32 %v2267, %v2592
  %v2620 = vadd.f32 %v2268, %v2594
  %v2621 = vadd.f32 %v2269, %v2597
  %v2622 = vadd.f32 %v2270, %v2599
  %v2623 = vadd.f32 %v2271, %v2602
  %v2624 = vadd.f32 %v2272, %v2604
  %v2625 = vadd.f32 %v2273, %v2607
  %v2626 = vadd.f32 %v2274, %v2609
  %v2627 = vpack.c.bf16 %v2611, %v2611
  %v2628 = vpack.c.bf16 %v2612, %v2612
  %v2629 = vpack.c.bf16 %v2613, %v2613
  %v2630 = vpack.c.bf16 %v2614, %v2614
  %v2631 = vpack.c.bf16 %v2615, %v2615
  %v2632 = vpack.c.bf16 %v2616, %v2616
  %v2633 = vpack.c.bf16 %v2617, %v2617
  %v2634 = vpack.c.bf16 %v2618, %v2618
  %v2635 = vpack.c.bf16 %v2619, %v2619
  %v2636 = vpack.c.bf16 %v2620, %v2620
  %v2637 = vpack.c.bf16 %v2621, %v2621
  %v2638 = vpack.c.bf16 %v2622, %v2622
  %v2639 = vpack.c.bf16 %v2623, %v2623
  %v2640 = vpack.c.bf16 %v2624, %v2624
  %v2641 = vpack.c.bf16 %v2625, %v2625
  %v2642 = vpack.c.bf16 %v2626, %v2626
  %2643 = vst [vmem:[%s2] sm:$0xf] %v2627
  %2644 = vst [vmem:[%s2 + $0x4] sm:$0xf] %v2628
  %2645 = vst [vmem:[%s2 + $0x8] sm:$0xf] %v2629
  %2646 = vst [vmem:[%s2 + $0xc] sm:$0xf] %v2630
  %2647 = vst [vmem:[%s2 + $0x10] sm:$0xf] %v2631
  %2648 = vst [vmem:[%s2 + $0x14] sm:$0xf] %v2632
  %2649 = vst [vmem:[%s2 + $0x18] sm:$0xf] %v2633
  %2650 = vst [vmem:[%s2 + $0x1c] sm:$0xf] %v2634
  %2651 = vst [vmem:[%s2 + $0x20] sm:$0xf] %v2635
  %2652 = vst [vmem:[%s2 + $0x24] sm:$0xf] %v2636
  %2653 = vst [vmem:[%s2 + $0x28] sm:$0xf] %v2637
  %2654 = vst [vmem:[%s2 + $0x2c] sm:$0xf] %v2638
  %2655 = vst [vmem:[%s2 + $0x30] sm:$0xf] %v2639
  %2656 = vst [vmem:[%s2 + $0x34] sm:$0xf] %v2640
  %2657 = vst [vmem:[%s2 + $0x38] sm:$0xf] %v2641
  %2658 = vst [vmem:[%s2 + $0x3c] sm:$0xf] %v2642
  %v2659 = vadd.f32 %v2611, %v2612
  %v2660 = vadd.f32 %v2659, %v2613
  %v2661 = vadd.f32 %v2660, %v2614
  %v2662 = vadd.f32 %v2661, %v2615
  %v2663 = vadd.f32 %v2662, %v2616
  %v2664 = vadd.f32 %v2663, %v2617
  %v2665 = vadd.f32 %v2664, %v2618
  %v2666 = vadd.f32 %v2665, %v2619
  %v2667 = vadd.f32 %v2666, %v2620
  %v2668 = vadd.f32 %v2667, %v2621
  %v2669 = vadd.f32 %v2668, %v2622
  %v2670 = vadd.f32 %v2669, %v2623
  %v2671 = vadd.f32 %v2670, %v2624
  %v2672 = vadd.f32 %v2671, %v2625
  %v2673 = vadd.f32 %v2672, %v2626
  %v2674 = vrot.slane %v2673, 4
  %v2675 = vadd.f32 %v2673, %v2674
  %v2676 = vrot.slane %v2675, 2
  %v2677 = vadd.f32 %v2675, %v2676
  %v2678 = vrot.slane %v2677, 1
  %v2679 = vadd.f32 %v2677, %v2678
  %2680 = vst [vmem:[%s3] sm:$0x1] %v2679
  %v2681 = vmul.f32 %v2611, %v2611
  %v2682 = vmul.f32 %v2612, %v2612
  %v2683 = vmul.f32 %v2613, %v2613
  %v2684 = vmul.f32 %v2614, %v2614
  %v2685 = vmul.f32 %v2615, %v2615
  %v2686 = vmul.f32 %v2616, %v2616
  %v2687 = vmul.f32 %v2617, %v2617
  %v2688 = vmul.f32 %v2618, %v2618
  %v2689 = vmul.f32 %v2619, %v2619
  %v2690 = vmul.f32 %v2620, %v2620
  %v2691 = vmul.f32 %v2621, %v2621
  %v2692 = vmul.f32 %v2622, %v2622
  %v2693 = vmul.f32 %v2623, %v2623
  %v2694 = vmul.f32 %v2624, %v2624
  %v2695 = vmul.f32 %v2625, %v2625
  %v2696 = vmul.f32 %v2626, %v2626
  %v2697 = vadd.f32 %v2681, %v2682
  %v2698 = vadd.f32 %v2697, %v2683
  %v2699 = vadd.f32 %v2698, %v2684
  %v2700 = vadd.f32 %v2699, %v2685
  %v2701 = vadd.f32 %v2700, %v2686
  %v2702 = vadd.f32 %v2701, %v2687
  %v2703 = vadd.f32 %v2702, %v2688
  %v2704 = vadd.f32 %v2703, %v2689
  %v2705 = vadd.f32 %v2704, %v2690
  %v2706 = vadd.f32 %v2705, %v2691
  %v2707 = vadd.f32 %v2706, %v2692
  %v2708 = vadd.f32 %v2707, %v2693
  %v2709 = vadd.f32 %v2708, %v2694
  %v2710 = vadd.f32 %v2709, %v2695
  %v2711 = vadd.f32 %v2710, %v2696
  %v2712 = vrot.slane %v2711, 4
  %v2713 = vadd.f32 %v2711, %v2712
  %v2714 = vrot.slane %v2713, 2
  %v2715 = vadd.f32 %v2713, %v2714
  %v2716 = vrot.slane %v2715, 1
  %v2717 = vadd.f32 %v2715, %v2716
  %2718 = vst [vmem:[%s3 + $0x1] sm:$0x1] %v2717
  // Predicated region
  $region10: #{masked_vgg_forward.9} parent=0 // pred_check
    _
  $region11: #{masked_vgg_forward.9} parent=0 // pred_check_branch
    %2720 = sbr.rel (0) target = $region13
  $region12: #{masked_vgg_forward.9} parent=0 // pred_region
    _
  $region13: #{masked_vgg_forward.9} parent=0 // pred_fallthru
    _
  // Predicated region
  $region14: #{masked_vgg_forward.9} parent=0 // pred_check
    _
  $region15: #{masked_vgg_forward.9} parent=0 // pred_check_branch
    %2722 = sbr.rel (0) target = $region17
  $region16: #{masked_vgg_forward.9} parent=0 // pred_region
    _
  $region17: #{masked_vgg_forward.9} parent=0 // pred_fallthru
    _
  // Predicated region
  $region18: #{masked_vgg_forward.9} parent=0 // pred_check
    _
  $region19: #{masked_vgg_forward.9} parent=0 // pred_check_branch
    %2724 = sbr.rel (0) target = $region21
  $region20: #{masked_vgg_forward.9} parent=0 // pred_region
    _
  $region21: #{masked_vgg_forward.9} parent=0 // pred_fallthru
    _
  // Predicated region
  $region22: #{masked_vgg_forward.9} parent=0 // pred_check
    _
  $region23: #{masked_vgg_forward.9} parent=0 // pred_check_branch
    %2726 = sbr.rel (0) target = $region25
  $region24: #{masked_vgg_forward.9} parent=0 // pred_region
    _
  $region25: #{masked_vgg_forward.9} parent=0 // pred_fallthru
    _

// kernel: masked_vgg_forward.13
$region0: #{masked_vgg_forward.13}
  #allocation0 [shape = 'u32[]', space=smem, size = 0x4, offset = 0x4, fixed_abs, tag = 'smem constant byte address 0x4 - core index']
  #allocation1 [shape = 'u32[72,128]{1,0:T(1,128)}', space=vmem, size = 0x9000, scoped, tag = 'internal scratch']
  %s0 = inlined_call_operand.vmem [shape: bf16[2,32,128], index: 0, kind: input, shape index: {}]
  %s1 = inlined_call_operand.hbm [shape: bf16[9,128,128], index: 1, kind: input, shape index: {}]
  %s2 = inlined_call_operand.vmem [shape: bf16[2,16,128], index: 2, kind: output, shape index: {0}]
  %s3 = inlined_call_operand.vmem [shape: f32[2,128], index: 3, kind: output, shape index: {1}]
  %4 = xla_tuple %s2, %s3
  %s5 = sld [smem:[#allocation0]]
  $region30: #{masked_vgg_forward.13} parent=0
    _
  %s7 = ssub.s32 1, %s5
  %s8 = scalar_select 0, %s7, %s5
  $region1: #{masked_vgg_forward.13} parent=0
    #allocation2 [shape = 'u8[294912]{0}', space=vmem, size = 0x48000, scoped, tag = 'input window, operand 1, single buffered']
    #allocation3 [shape = 's32[1]{0}', space=sflag, size = 0x4, scoped, tag = 'scoped memory for masked_vgg_forward.13']
    %9 = vsyncpa [#allocation3], 0
    // Predicated region
    $region2: #{masked_vgg_forward.13} parent=1 // pred_check
      _
    $region3: #{masked_vgg_forward.13} parent=1 // pred_check_branch
      %11 = sbr.rel (0) target = $region5
    $region4: #{masked_vgg_forward.13} parent=1 // pred_region
      _
    $region5: #{masked_vgg_forward.13} parent=1 // pred_fallthru
      _
    // Predicated region
    $region6: #{masked_vgg_forward.13} parent=1 // pred_check
      _
    $region7: #{masked_vgg_forward.13} parent=1 // pred_check_branch
      %13 = sbr.rel (0) target = $region9
    $region8: #{masked_vgg_forward.13} parent=1 // pred_region
      %15 = vsyncadd [#allocation3], 0
      %s16 = sshll.u32 %s1, 4
      %s17 = int_to_ptr.hbm [resolvable:$true] %s16
      %s18 = sshll.u32 [#allocation2], 4
      %s19 = int_to_ptr.vmem [resolvable:$true] %s18
      %24 = dma.hbm_to_vmem [thread:$0]  %s17, 9216, %s19, [#allocation3], 64, 64, 4
    $region9: #{masked_vgg_forward.13} parent=1 // pred_fallthru
      _
    // Predicated region
    $region10: #{masked_vgg_forward.13} parent=1 // pred_check
      _
    $region11: #{masked_vgg_forward.13} parent=1 // pred_check_branch
      %26 = sbr.rel (0) target = $region13
    $region12: #{masked_vgg_forward.13} parent=1 // pred_region
      %28 = dma.done [#allocation3], 9216
    $region13: #{masked_vgg_forward.13} parent=1 // pred_fallthru
      _
    %v30 = vlaneseq
    %v31 = vshrl.u32 %v30, 7
    %v32 = vadd.s32 %v31, 8
    %v33 = vadd.s32 %v31, 16
    %v34 = vadd.s32 %v31, 24
    %vm35 = vcmp.lt.s32.totalorder %v31, 0
    %v36 = vsub.s32 0, %v31
    %v37 = vsel %vm35, %v36, %v31
    %v38 = vshrl.u32 %v37, 2
    %v39 = vand.u32 %v37, 3
    %v40 = vsub.s32 0, %v39
    %v41 = vsel %vm35, %v40, %v39
    %vm42 = vcmp.lt.s32.totalorder %v32, 0
    %v43 = vsub.s32 0, %v32
    %v44 = vsel %vm42, %v43, %v32
    %v45 = vshrl.u32 %v44, 2
    %v46 = vand.u32 %v44, 3
    %v47 = vsub.s32 0, %v46
    %v48 = vsel %vm42, %v47, %v46
    %vm49 = vcmp.lt.s32.totalorder %v33, 0
    %v50 = vsub.s32 0, %v33
    %v51 = vsel %vm49, %v50, %v33
    %v52 = vshrl.u32 %v51, 2
    %v53 = vand.u32 %v51, 3
    %v54 = vsub.s32 0, %v53
    %v55 = vsel %vm49, %v54, %v53
    %vm56 = vcmp.lt.s32.totalorder %v34, 0
    %v57 = vsub.s32 0, %v34
    %v58 = vsel %vm56, %v57, %v34
    %v59 = vshrl.u32 %v58, 2
    %v60 = vand.u32 %v58, 3
    %v61 = vsub.s32 0, %v60
    %v62 = vsel %vm56, %v61, %v60
    %vm63 = vcmp.ne.s32.totalorder %v41, 0
    %vm64 = vcmp.ne.s32.totalorder %v48, 0
    %vm65 = vcmp.ne.s32.totalorder %v55, 0
    %vm66 = vcmp.ne.s32.totalorder %v62, 0
    %vm67 = vcmp.lt.s32.totalorder %v41, 0
    %vm68 = vcmp.lt.s32.totalorder %v48, 0
    %vm69 = vcmp.lt.s32.totalorder %v55, 0
    %vm70 = vcmp.lt.s32.totalorder %v62, 0
    %vm71 = vmand %vm67, %vm63
    %vm72 = vmand %vm68, %vm64
    %vm73 = vmand %vm69, %vm65
    %vm74 = vmand %vm70, %vm66
    %v75 = vadd.s32 %v41, 4
    %v76 = vadd.s32 %v48, 4
    %v77 = vadd.s32 %v55, 4
    %v78 = vadd.s32 %v62, 4
    %v79 = vsel %vm71, %v75, %v41
    %v80 = vsel %vm72, %v76, %v48
    %v81 = vsel %vm73, %v77, %v55
    %v82 = vsel %vm74, %v78, %v62
    %vm83 = vcmp.ne.s32.totalorder %v79, 0
    %vm84 = vcmp.ne.s32.totalorder %v80, 0
    %vm85 = vcmp.ne.s32.totalorder %v81, 0
    %vm86 = vcmp.ne.s32.totalorder %v82, 0
    %vm87 = vcmp.ne.s32.totalorder %v79, 3
    %vm88 = vcmp.ne.s32.totalorder %v80, 3
    %vm89 = vcmp.ne.s32.totalorder %v81, 3
    %vm90 = vcmp.ne.s32.totalorder %v82, 3
    %v91 = vld [vmem:[%s0] sm:$0xe]
    %v92 = vld [vmem:[%s0 + $0x4] sm:$0xf]
    %v93 = vld [vmem:[%s0 + $0x8] sm:$0x3]
    %v94 = vld [vmem:[%s0 + $0x10] sm:$0xe]
    %v95 = vld [vmem:[%s0 + $0x14] sm:$0xf]
    %v96 = vld [vmem:[%s0 + $0x18] sm:$0x3]
    %vm97 = vsmask.f32 2304
    %vm98 = vsmask.f32 6416
    %vm99 = vmor %vm97, %vm98
    %v101 = vshrl.u32 %v91, 16
    %v103 = vrot.slane %v101, 5
    %v104 = vshll.u32 %v91, 16
    %v106 = vrot.slane %v104, 6
    %v107 = vor.u32 %v103, %v106
    %v108 = vrot.slane %v107, 4
    %v110 = vshrl.u32 %v92, 16
    %v112 = vrot.slane %v110, 5
    %v113 = vshll.u32 %v92, 16
    %v115 = vrot.slane %v113, 6
    %v116 = vor.u32 %v112, %v115
    %v117 = vsel %vm99, %v108, %v116
    %v118 = vrot.slane %v116, 4
    %v120 = vshrl.u32 %v93, 16
    %v122 = vrot.slane %v120, 5
    %v123 = vshll.u32 %v93, 16
    %v125 = vrot.slane %v123, 6
    %v126 = vor.u32 %v122, %v125
    %v127 = vsel %vm99, %v118, %v126
    %v129 = vshrl.u32 %v94, 16
    %v131 = vrot.slane %v129, 5
    %v132 = vshll.u32 %v94, 16
    %v134 = vrot.slane %v132, 6
    %v135 = vor.u32 %v131, %v134
    %v136 = vrot.slane %v135, 4
    %v138 = vshrl.u32 %v95, 16
    %v140 = vrot.slane %v138, 5
    %v141 = vshll.u32 %v95, 16
    %v143 = vrot.slane %v141, 6
    %v144 = vor.u32 %v140, %v143
    %v145 = vsel %vm99, %v136, %v144
    %v146 = vrot.slane %v144, 4
    %v148 = vshrl.u32 %v96, 16
    %v150 = vrot.slane %v148, 5
    %v151 = vshll.u32 %v96, 16
    %v153 = vrot.slane %v151, 6
    %v154 = vor.u32 %v150, %v153
    %v155 = vsel %vm99, %v146, %v154
    %v160 = vsel %vm83, 1, 0
    %v161 = vsel %vm84, 1, 0
    %v162 = vsel %vm85, 1, 0
    %v163 = vsel %vm86, 1, 0
    %vm164 = vcmp.eq.s32.totalorder %v160, 1
    %vm165 = vcmp.eq.s32.totalorder %v161, 1
    %vm166 = vcmp.eq.s32.totalorder %v162, 1
    %vm167 = vcmp.eq.s32.totalorder %v163, 1
    %vm168 = vmpackc.low %vm164, %vm164
    %vm169 = vmpackc.low %vm165, %vm165
    %vm170 = vmpackc.low %vm166, %vm166
    %vm171 = vmpackc.low %vm167, %vm167
    %v172 = vsel %vm168, %v117, 0
    %v173 = vsel %vm169, %v127, 0
    %v174 = vsel %vm170, %v145, 0
    %v175 = vsel %vm171, %v155, 0
    %v176 = vld [vmem:[#allocation2] sm:$0xf]
    %v177 = vld [vmem:[#allocation2 + $0x4] sm:$0xf]
    %v178 = vld [vmem:[#allocation2 + $0x8] sm:$0xf]
    %v179 = vld [vmem:[#allocation2 + $0xc] sm:$0xf]
    %v180 = vld [vmem:[#allocation2 + $0x10] sm:$0xf]
    %v181 = vld [vmem:[#allocation2 + $0x14] sm:$0xf]
    %v182 = vld [vmem:[#allocation2 + $0x18] sm:$0xf]
    %v183 = vld [vmem:[#allocation2 + $0x1c] sm:$0xf]
    %v184 = vld [vmem:[#allocation2 + $0x20] sm:$0xf]
    %v185 = vld [vmem:[#allocation2 + $0x24] sm:$0xf]
    %v186 = vld [vmem:[#allocation2 + $0x28] sm:$0xf]
    %v187 = vld [vmem:[#allocation2 + $0x2c] sm:$0xf]
    %v188 = vld [vmem:[#allocation2 + $0x30] sm:$0xf]
    %v189 = vld [vmem:[#allocation2 + $0x34] sm:$0xf]
    %v190 = vld [vmem:[#allocation2 + $0x38] sm:$0xf]
    %v191 = vld [vmem:[#allocation2 + $0x3c] sm:$0xf]
    %v192 = vld [vmem:[%s0] sm:$0xc]
    %v193 = vld [vmem:[%s0 + $0x10] sm:$0xc]
    %vm200 = vcmask 1041408
    %vm201 = vcmask 1045508
    %vm202 = vmor %vm200, %vm201
    %v203 = vrot.slane %v192, 6
    %v204 = vrot.slane %v203, 4
    %v205 = vrot.slane %v92, 6
    %v206 = vsel %vm202, %v204, %v205
    %v207 = vrot.slane %v205, 4
    %v208 = vrot.slane %v93, 6
    %v209 = vsel %vm202, %v207, %v208
    %v210 = vrot.slane %v193, 6
    %v211 = vrot.slane %v210, 4
    %v212 = vrot.slane %v95, 6
    %v213 = vsel %vm202, %v211, %v212
    %v214 = vrot.slane %v212, 4
    %v215 = vrot.slane %v96, 6
    %v216 = vsel %vm202, %v214, %v215
    %s217 = scalar_lea.vmem [#allocation2], 64
    %v218 = vld [vmem:[%s217] sm:$0xf]
    %v219 = vld [vmem:[%s217 + $0x4] sm:$0xf]
    %v220 = vld [vmem:[%s217 + $0x8] sm:$0xf]
    %v221 = vld [vmem:[%s217 + $0xc] sm:$0xf]
    %v222 = vld [vmem:[%s217 + $0x10] sm:$0xf]
    %v223 = vld [vmem:[%s217 + $0x14] sm:$0xf]
    %v224 = vld [vmem:[%s217 + $0x18] sm:$0xf]
    %v225 = vld [vmem:[%s217 + $0x1c] sm:$0xf]
    %v226 = vld [vmem:[%s217 + $0x20] sm:$0xf]
    %v227 = vld [vmem:[%s217 + $0x24] sm:$0xf]
    %v228 = vld [vmem:[%s217 + $0x28] sm:$0xf]
    %v229 = vld [vmem:[%s217 + $0x2c] sm:$0xf]
    %v230 = vld [vmem:[%s217 + $0x30] sm:$0xf]
    %v231 = vld [vmem:[%s217 + $0x34] sm:$0xf]
    %v232 = vld [vmem:[%s217 + $0x38] sm:$0xf]
    %v233 = vld [vmem:[%s217 + $0x3c] sm:$0xf]
    %v234 = vunpack.c.l.b16 %v206
    %v235 = vunpack.c.l.b16 %v209
    %v236 = vunpack.c.l.b16 %v213
    %v237 = vunpack.c.l.b16 %v216
    %v238 = vpack.c.b16 %v235, %v234
    %v239 = vpack.c.b16 %v237, %v236
    %v258 = vunpack.c.l.b16 %v218
    %v259 = vunpack.c.l.b16 %v219
    %v260 = vunpack.c.l.b16 %v220
    %v261 = vunpack.c.l.b16 %v221
    %v262 = vunpack.c.l.b16 %v222
    %v263 = vunpack.c.l.b16 %v223
    %v264 = vunpack.c.l.b16 %v224
    %v265 = vunpack.c.l.b16 %v225
    %v266 = vunpack.c.l.b16 %v226
    %v267 = vunpack.c.l.b16 %v227
    %v268 = vunpack.c.l.b16 %v228
    %v269 = vunpack.c.l.b16 %v229
    %v270 = vunpack.c.l.b16 %v230
    %v271 = vunpack.c.l.b16 %v231
    %v272 = vunpack.c.l.b16 %v232
    %v273 = vunpack.c.l.b16 %v233
    %v274 = vpack.c.b16 %v259, %v258
    %v275 = vpack.c.b16 %v261, %v260
    %v276 = vpack.c.b16 %v263, %v262
    %v277 = vpack.c.b16 %v265, %v264
    %v278 = vpack.c.b16 %v267, %v266
    %v279 = vpack.c.b16 %v269, %v268
    %v280 = vpack.c.b16 %v271, %v270
    %v281 = vpack.c.b16 %v273, %v272
    %290 = vmatpush.bf16.msra.mxu0 %v281
    %291 = vmatpush.bf16.msra.mxu0 %v280
    %292 = vmatpush.bf16.msra.mxu0 %v279
    %293 = vmatpush.bf16.msra.mxu0 %v278
    %294 = vmatpush.bf16.msra.mxu0 %v277
    %295 = vmatpush.bf16.msra.mxu0 %v276
    %296 = vmatpush.bf16.msra.mxu0 %v275
    %297 = vmatpush.bf16.msra.mxu0 %v274
    %298 = vmatmul.bf16.gmra.mxu0 %v238
    %v299 = vpop.f32.mrf.mxu0
    %v300 = vadd.f32 0.0, %v299
    %v301 = vpop.f32.mrf.mxu0
    %v302 = vadd.f32 0.0, %v301
    %303 = vmatmul.bf16.gmra.mxu0 %v239
    %v304 = vpop.f32.mrf.mxu0
    %v305 = vadd.f32 0.0, %v304
    %v306 = vpop.f32.mrf.mxu0
    %v307 = vadd.f32 0.0, %v306
    %308 = vdwg.mxu0
    %v313 = vunpack.c.l.b16 %v172
    %v314 = vunpack.c.l.b16 %v173
    %v315 = vunpack.c.l.b16 %v174
    %v316 = vunpack.c.l.b16 %v175
    %v317 = vpack.c.b16 %v314, %v313
    %v318 = vpack.c.b16 %v316, %v315
    %v337 = vunpack.c.l.b16 %v176
    %v338 = vunpack.c.l.b16 %v177
    %v339 = vunpack.c.l.b16 %v178
    %v340 = vunpack.c.l.b16 %v179
    %v341 = vunpack.c.l.b16 %v180
    %v342 = vunpack.c.l.b16 %v181
    %v343 = vunpack.c.l.b16 %v182
    %v344 = vunpack.c.l.b16 %v183
    %v345 = vunpack.c.l.b16 %v184
    %v346 = vunpack.c.l.b16 %v185
    %v347 = vunpack.c.l.b16 %v186
    %v348 = vunpack.c.l.b16 %v187
    %v349 = vunpack.c.l.b16 %v188
    %v350 = vunpack.c.l.b16 %v189
    %v351 = vunpack.c.l.b16 %v190
    %v352 = vunpack.c.l.b16 %v191
    %v353 = vpack.c.b16 %v338, %v337
    %v354 = vpack.c.b16 %v340, %v339
    %v355 = vpack.c.b16 %v342, %v341
    %v356 = vpack.c.b16 %v344, %v343
    %v357 = vpack.c.b16 %v346, %v345
    %v358 = vpack.c.b16 %v348, %v347
    %v359 = vpack.c.b16 %v350, %v349
    %v360 = vpack.c.b16 %v352, %v351
    %369 = vmatpush.bf16.msra.mxu0 %v360
    %370 = vmatpush.bf16.msra.mxu0 %v359
    %371 = vmatpush.bf16.msra.mxu0 %v358
    %372 = vmatpush.bf16.msra.mxu0 %v357
    %373 = vmatpush.bf16.msra.mxu0 %v356
    %374 = vmatpush.bf16.msra.mxu0 %v355
    %375 = vmatpush.bf16.msra.mxu0 %v354
    %376 = vmatpush.bf16.msra.mxu0 %v353
    %377 = vmatmul.bf16.gmra.mxu0 %v317
    %v378 = vpop.f32.mrf.mxu0
    %v379 = vadd.f32 %v300, %v378
    %v380 = vpop.f32.mrf.mxu0
    %v381 = vadd.f32 %v302, %v380
    %382 = vmatmul.bf16.gmra.mxu0 %v318
    %v383 = vpop.f32.mrf.mxu0
    %v384 = vadd.f32 %v305, %v383
    %v385 = vpop.f32.mrf.mxu0
    %v386 = vadd.f32 %v307, %v385
    %387 = vdwg.mxu0
    %v388 = vld [vmem:[%s0 + $0x8] sm:$0x7]
    %v389 = vld [vmem:[%s0 + $0x18] sm:$0x7]
    %vm390 = vsmask.f32 1280
    %vm391 = vsmask.f32 5392
    %vm392 = vmor %vm390, %vm391
    %v394 = vshrl.u32 %v192, 16
    %v396 = vrot.slane %v394, 6
    %v397 = vshll.u32 %v192, 16
    %v399 = vrot.slane %v397, 7
    %v400 = vor.u32 %v396, %v399
    %v401 = vrot.slane %v400, 4
    %v402 = vrot.slane %v110, 6
    %v403 = vrot.slane %v113, 7
    %v404 = vor.u32 %v402, %v403
    %v405 = vsel %vm392, %v401, %v404
    %v406 = vrot.slane %v404, 4
    %v408 = vshrl.u32 %v388, 16
    %v410 = vrot.slane %v408, 6
    %v411 = vshll.u32 %v388, 16
    %v413 = vrot.slane %v411, 7
    %v414 = vor.u32 %v410, %v413
    %v415 = vsel %vm392, %v406, %v414
    %v417 = vshrl.u32 %v193, 16
    %v419 = vrot.slane %v417, 6
    %v420 = vshll.u32 %v193, 16
    %v422 = vrot.slane %v420, 7
    %v423 = vor.u32 %v419, %v422
    %v424 = vrot.slane %v423, 4
    %v425 = vrot.slane %v138, 6
    %v426 = vrot.slane %v141, 7
    %v427 = vor.u32 %v425, %v426
    %v428 = vsel %vm392, %v424, %v427
    %v429 = vrot.slane %v427, 4
    %v431 = vshrl.u32 %v389, 16
    %v433 = vrot.slane %v431, 6
    %v434 = vshll.u32 %v389, 16
    %v436 = vrot.slane %v434, 7
    %v437 = vor.u32 %v433, %v436
    %v438 = vsel %vm392, %v429, %v437
    %v443 = vsel %vm87, 1, 0
    %v444 = vsel %vm88, 1, 0
    %v445 = vsel %vm89, 1, 0
    %v446 = vsel %vm90, 1, 0
    %vm447 = vcmp.eq.s32.totalorder %v443, 1
    %vm448 = vcmp.eq.s32.totalorder %v444, 1
    %vm449 = vcmp.eq.s32.totalorder %v445, 1
    %vm450 = vcmp.eq.s32.totalorder %v446, 1
    %vm451 = vmpackc.low %vm447, %vm447
    %vm452 = vmpackc.low %vm448, %vm448
    %vm453 = vmpackc.low %vm449, %vm449
    %vm454 = vmpackc.low %vm450, %vm450
    %v455 = vsel %vm451, %v405, 0
    %v456 = vsel %vm452, %v415, 0
    %v457 = vsel %vm453, %v428, 0
    %v458 = vsel %vm454, %v438, 0
    %s459 = scalar_lea.vmem [#allocation2], 128
    %v460 = vld [vmem:[%s459] sm:$0xf]
    %v461 = vld [vmem:[%s459 + $0x4] sm:$0xf]
    %v462 = vld [vmem:[%s459 + $0x8] sm:$0xf]
    %v463 = vld [vmem:[%s459 + $0xc] sm:$0xf]
    %v464 = vld [vmem:[%s459 + $0x10] sm:$0xf]
    %v465 = vld [vmem:[%s459 + $0x14] sm:$0xf]
    %v466 = vld [vmem:[%s459 + $0x18] sm:$0xf]
    %v467 = vld [vmem:[%s459 + $0x1c] sm:$0xf]
    %v468 = vld [vmem:[%s459 + $0x20] sm:$0xf]
    %v469 = vld [vmem:[%s459 + $0x24] sm:$0xf]
    %v470 = vld [vmem:[%s459 + $0x28] sm:$0xf]
    %v471 = vld [vmem:[%s459 + $0x2c] sm:$0xf]
    %v472 = vld [vmem:[%s459 + $0x30] sm:$0xf]
    %v473 = vld [vmem:[%s459 + $0x34] sm:$0xf]
    %v474 = vld [vmem:[%s459 + $0x38] sm:$0xf]
    %v475 = vld [vmem:[%s459 + $0x3c] sm:$0xf]
    %v480 = vunpack.c.l.b16 %v455
    %v481 = vunpack.c.l.b16 %v456
    %v482 = vunpack.c.l.b16 %v457
    %v483 = vunpack.c.l.b16 %v458
    %v484 = vpack.c.b16 %v481, %v480
    %v485 = vpack.c.b16 %v483, %v482
    %v504 = vunpack.c.l.b16 %v460
    %v505 = vunpack.c.l.b16 %v461
    %v506 = vunpack.c.l.b16 %v462
    %v507 = vunpack.c.l.b16 %v463
    %v508 = vunpack.c.l.b16 %v464
    %v509 = vunpack.c.l.b16 %v465
    %v510 = vunpack.c.l.b16 %v466
    %v511 = vunpack.c.l.b16 %v467
    %v512 = vunpack.c.l.b16 %v468
    %v513 = vunpack.c.l.b16 %v469
    %v514 = vunpack.c.l.b16 %v470
    %v515 = vunpack.c.l.b16 %v471
    %v516 = vunpack.c.l.b16 %v472
    %v517 = vunpack.c.l.b16 %v473
    %v518 = vunpack.c.l.b16 %v474
    %v519 = vunpack.c.l.b16 %v475
    %v520 = vpack.c.b16 %v505, %v504
    %v521 = vpack.c.b16 %v507, %v506
    %v522 = vpack.c.b16 %v509, %v508
    %v523 = vpack.c.b16 %v511, %v510
    %v524 = vpack.c.b16 %v513, %v512
    %v525 = vpack.c.b16 %v515, %v514
    %v526 = vpack.c.b16 %v517, %v516
    %v527 = vpack.c.b16 %v519, %v518
    %536 = vmatpush.bf16.msra.mxu0 %v527
    %537 = vmatpush.bf16.msra.mxu0 %v526
    %538 = vmatpush.bf16.msra.mxu0 %v525
    %539 = vmatpush.bf16.msra.mxu0 %v524
    %540 = vmatpush.bf16.msra.mxu0 %v523
    %541 = vmatpush.bf16.msra.mxu0 %v522
    %542 = vmatpush.bf16.msra.mxu0 %v521
    %543 = vmatpush.bf16.msra.mxu0 %v520
    %544 = vmatmul.bf16.gmra.mxu0 %v484
    %v545 = vpop.f32.mrf.mxu0
    %v546 = vadd.f32 0.0, %v545
    %v547 = vpop.f32.mrf.mxu0
    %v548 = vadd.f32 0.0, %v547
    %549 = vmatmul.bf16.gmra.mxu0 %v485
    %v550 = vpop.f32.mrf.mxu0
    %v551 = vadd.f32 0.0, %v550
    %v552 = vpop.f32.mrf.mxu0
    %v553 = vadd.f32 0.0, %v552
    %554 = vdwg.mxu0
    %v555 = vadd.f32 %v379, %v546
    %v556 = vadd.f32 %v381, %v548
    %v557 = vadd.f32 %v384, %v551
    %v558 = vadd.f32 %v386, %v553
    %v559 = vld [vmem:[%s0] sm:$0x8]
    %v560 = vld [vmem:[%s0 + $0x8] sm:$0xf]
    %v561 = vld [vmem:[%s0 + $0x10] sm:$0x8]
    %v562 = vld [vmem:[%s0 + $0x18] sm:$0xf]
    %vm563 = vsmask.f32 256
    %vm564 = vsmask.f32 4368
    %vm565 = vmor %vm563, %vm564
    %v567 = vshrl.u32 %v559, 16
    %v569 = vrot.slane %v567, 7
    %v570 = vrot.slane %v569, 4
    %v571 = vrot.slane %v110, 7
    %v572 = vor.u32 %v571, %v113
    %v573 = vsel %vm565, %v570, %v572
    %v574 = vrot.slane %v571, 4
    %v576 = vshrl.u32 %v560, 16
    %v578 = vrot.slane %v576, 7
    %v579 = vshll.u32 %v560, 16
    %v581 = vor.u32 %v578, %v579
    %v582 = vsel %vm565, %v574, %v581
    %v584 = vshrl.u32 %v561, 16
    %v586 = vrot.slane %v584, 7
    %v587 = vrot.slane %v586, 4
    %v588 = vrot.slane %v138, 7
    %v589 = vor.u32 %v588, %v141
    %v590 = vsel %vm565, %v587, %v589
    %v591 = vrot.slane %v588, 4
    %v593 = vshrl.u32 %v562, 16
    %v595 = vrot.slane %v593, 7
    %v596 = vshll.u32 %v562, 16
    %v598 = vor.u32 %v595, %v596
    %v599 = vsel %vm565, %v591, %v598
    %v604 = vsel %vm168, %v573, 0
    %v605 = vsel %vm169, %v582, 0
    %v606 = vsel %vm170, %v590, 0
    %v607 = vsel %vm171, %v599, 0
    %s608 = scalar_lea.vmem [#allocation2], 192
    %v609 = vld [vmem:[%s608] sm:$0xf]
    %v610 = vld [vmem:[%s608 + $0x4] sm:$0xf]
    %v611 = vld [vmem:[%s608 + $0x8] sm:$0xf]
    %v612 = vld [vmem:[%s608 + $0xc] sm:$0xf]
    %v613 = vld [vmem:[%s608 + $0x10] sm:$0xf]
    %v614 = vld [vmem:[%s608 + $0x14] sm:$0xf]
    %v615 = vld [vmem:[%s608 + $0x18] sm:$0xf]
    %v616 = vld [vmem:[%s608 + $0x1c] sm:$0xf]
    %v617 = vld [vmem:[%s608 + $0x20] sm:$0xf]
    %v618 = vld [vmem:[%s608 + $0x24] sm:$0xf]
    %v619 = vld [vmem:[%s608 + $0x28] sm:$0xf]
    %v620 = vld [vmem:[%s608 + $0x2c] sm:$0xf]
    %v621 = vld [vmem:[%s608 + $0x30] sm:$0xf]
    %v622 = vld [vmem:[%s608 + $0x34] sm:$0xf]
    %v623 = vld [vmem:[%s608 + $0x38] sm:$0xf]
    %v624 = vld [vmem:[%s608 + $0x3c] sm:$0xf]
    %v629 = vunpack.c.l.b16 %v604
    %v630 = vunpack.c.l.b16 %v605
    %v631 = vunpack.c.l.b16 %v606
    %v632 = vunpack.c.l.b16 %v607
    %v633 = vpack.c.b16 %v630, %v629
    %v634 = vpack.c.b16 %v632, %v631
    %v653 = vunpack.c.l.b16 %v609
    %v654 = vunpack.c.l.b16 %v610
    %v655 = vunpack.c.l.b16 %v611
    %v656 = vunpack.c.l.b16 %v612
    %v657 = vunpack.c.l.b16 %v613
    %v658 = vunpack.c.l.b16 %v614
    %v659 = vunpack.c.l.b16 %v615
    %v660 = vunpack.c.l.b16 %v616
    %v661 = vunpack.c.l.b16 %v617
    %v662 = vunpack.c.l.b16 %v618
    %v663 = vunpack.c.l.b16 %v619
    %v664 = vunpack.c.l.b16 %v620
    %v665 = vunpack.c.l.b16 %v621
    %v666 = vunpack.c.l.b16 %v622
    %v667 = vunpack.c.l.b16 %v623
    %v668 = vunpack.c.l.b16 %v624
    %v669 = vpack.c.b16 %v654, %v653
    %v670 = vpack.c.b16 %v656, %v655
    %v671 = vpack.c.b16 %v658, %v657
    %v672 = vpack.c.b16 %v660, %v659
    %v673 = vpack.c.b16 %v662, %v661
    %v674 = vpack.c.b16 %v664, %v663
    %v675 = vpack.c.b16 %v666, %v665
    %v676 = vpack.c.b16 %v668, %v667
    %685 = vmatpush.bf16.msra.mxu0 %v676
    %686 = vmatpush.bf16.msra.mxu0 %v675
    %687 = vmatpush.bf16.msra.mxu0 %v674
    %688 = vmatpush.bf16.msra.mxu0 %v673
    %689 = vmatpush.bf16.msra.mxu0 %v672
    %690 = vmatpush.bf16.msra.mxu0 %v671
    %691 = vmatpush.bf16.msra.mxu0 %v670
    %692 = vmatpush.bf16.msra.mxu0 %v669
    %693 = vmatmul.bf16.gmra.mxu0 %v633
    %v694 = vpop.f32.mrf.mxu0
    %v695 = vadd.f32 0.0, %v694
    %v696 = vpop.f32.mrf.mxu0
    %v697 = vadd.f32 0.0, %v696
    %698 = vmatmul.bf16.gmra.mxu0 %v634
    %v699 = vpop.f32.mrf.mxu0
    %v700 = vadd.f32 0.0, %v699
    %v701 = vpop.f32.mrf.mxu0
    %v702 = vadd.f32 0.0, %v701
    %703 = vdwg.mxu0
    %v704 = vadd.f32 %v555, %v695
    %v705 = vadd.f32 %v556, %v697
    %v706 = vadd.f32 %v557, %v700
    %v707 = vadd.f32 %v558, %v702
    %s708 = scalar_lea.vmem [#allocation2], 256
    %v709 = vld [vmem:[%s708] sm:$0xf]
    %v710 = vld [vmem:[%s708 + $0x4] sm:$0xf]
    %v711 = vld [vmem:[%s708 + $0x8] sm:$0xf]
    %v712 = vld [vmem:[%s708 + $0xc] sm:$0xf]
    %v713 = vld [vmem:[%s708 + $0x10] sm:$0xf]
    %v714 = vld [vmem:[%s708 + $0x14] sm:$0xf]
    %v715 = vld [vmem:[%s708 + $0x18] sm:$0xf]
    %v716 = vld [vmem:[%s708 + $0x1c] sm:$0xf]
    %v717 = vld [vmem:[%s708 + $0x20] sm:$0xf]
    %v718 = vld [vmem:[%s708 + $0x24] sm:$0xf]
    %v719 = vld [vmem:[%s708 + $0x28] sm:$0xf]
    %v720 = vld [vmem:[%s708 + $0x2c] sm:$0xf]
    %v721 = vld [vmem:[%s708 + $0x30] sm:$0xf]
    %v722 = vld [vmem:[%s708 + $0x34] sm:$0xf]
    %v723 = vld [vmem:[%s708 + $0x38] sm:$0xf]
    %v724 = vld [vmem:[%s708 + $0x3c] sm:$0xf]
    %v727 = vunpack.c.l.b16 %v92
    %v728 = vunpack.c.l.b16 %v560
    %v729 = vunpack.c.l.b16 %v95
    %v730 = vunpack.c.l.b16 %v562
    %v731 = vpack.c.b16 %v728, %v727
    %v732 = vpack.c.b16 %v730, %v729
    %v751 = vunpack.c.l.b16 %v709
    %v752 = vunpack.c.l.b16 %v710
    %v753 = vunpack.c.l.b16 %v711
    %v754 = vunpack.c.l.b16 %v712
    %v755 = vunpack.c.l.b16 %v713
    %v756 = vunpack.c.l.b16 %v714
    %v757 = vunpack.c.l.b16 %v715
    %v758 = vunpack.c.l.b16 %v716
    %v759 = vunpack.c.l.b16 %v717
    %v760 = vunpack.c.l.b16 %v718
    %v761 = vunpack.c.l.b16 %v719
    %v762 = vunpack.c.l.b16 %v720
    %v763 = vunpack.c.l.b16 %v721
    %v764 = vunpack.c.l.b16 %v722
    %v765 = vunpack.c.l.b16 %v723
    %v766 = vunpack.c.l.b16 %v724
    %v767 = vpack.c.b16 %v752, %v751
    %v768 = vpack.c.b16 %v754, %v753
    %v769 = vpack.c.b16 %v756, %v755
    %v770 = vpack.c.b16 %v758, %v757
    %v771 = vpack.c.b16 %v760, %v759
    %v772 = vpack.c.b16 %v762, %v761
    %v773 = vpack.c.b16 %v764, %v763
    %v774 = vpack.c.b16 %v766, %v765
    %783 = vmatpush.bf16.msra.mxu0 %v774
    %784 = vmatpush.bf16.msra.mxu0 %v773
    %785 = vmatpush.bf16.msra.mxu0 %v772
    %786 = vmatpush.bf16.msra.mxu0 %v771
    %787 = vmatpush.bf16.msra.mxu0 %v770
    %788 = vmatpush.bf16.msra.mxu0 %v769
    %789 = vmatpush.bf16.msra.mxu0 %v768
    %790 = vmatpush.bf16.msra.mxu0 %v767
    %791 = vmatmul.bf16.gmra.mxu0 %v731
    %v792 = vpop.f32.mrf.mxu0
    %v793 = vadd.f32 0.0, %v792
    %v794 = vpop.f32.mrf.mxu0
    %v795 = vadd.f32 0.0, %v794
    %796 = vmatmul.bf16.gmra.mxu0 %v732
    %v797 = vpop.f32.mrf.mxu0
    %v798 = vadd.f32 0.0, %v797
    %v799 = vpop.f32.mrf.mxu0
    %v800 = vadd.f32 0.0, %v799
    %801 = vdwg.mxu0
    %v802 = vadd.f32 %v704, %v793
    %v803 = vadd.f32 %v705, %v795
    %v804 = vadd.f32 %v706, %v798
    %v805 = vadd.f32 %v707, %v800
    %v806 = vld [vmem:[%s0 + $0x4] sm:$0xf]
    %v807 = vld [vmem:[%s0 + $0x8] sm:$0xf]
    %v808 = vld [vmem:[%s0 + $0xc] sm:$0x1]
    %v809 = vld [vmem:[%s0 + $0x14] sm:$0xf]
    %v810 = vld [vmem:[%s0 + $0x18] sm:$0xf]
    %v811 = vld [vmem:[%s0 + $0x1c] sm:$0x1]
    %vm812 = vsmask.f32 3328
    %vm813 = vsmask.f32 7440
    %vm814 = vmor %vm812, %vm813
    %v816 = vshrl.u32 %v806, 16
    %v818 = vrot.slane %v816, 4
    %v819 = vshll.u32 %v806, 16
    %v821 = vrot.slane %v819, 5
    %v822 = vor.u32 %v818, %v821
    %v823 = vrot.slane %v822, 4
    %v825 = vshll.u32 %v807, 16
    %v827 = vrot.slane %v825, 5
    %v828 = vsel %vm814, %v823, %v827
    %v829 = vshrl.u32 %v807, 16
    %v831 = vrot.slane %v829, 4
    %v832 = vor.u32 %v831, %v827
    %v833 = vrot.slane %v832, 4
    %v835 = vshll.u32 %v808, 16
    %v837 = vrot.slane %v835, 5
    %v838 = vsel %vm814, %v833, %v837
    %v840 = vshrl.u32 %v809, 16
    %v842 = vrot.slane %v840, 4
    %v843 = vshll.u32 %v809, 16
    %v845 = vrot.slane %v843, 5
    %v846 = vor.u32 %v842, %v845
    %v847 = vrot.slane %v846, 4
    %v849 = vshll.u32 %v810, 16
    %v851 = vrot.slane %v849, 5
    %v852 = vsel %vm814, %v847, %v851
    %v853 = vshrl.u32 %v810, 16
    %v855 = vrot.slane %v853, 4
    %v856 = vor.u32 %v855, %v851
    %v857 = vrot.slane %v856, 4
    %v859 = vshll.u32 %v811, 16
    %v861 = vrot.slane %v859, 5
    %v862 = vsel %vm814, %v857, %v861
    %v867 = vsel %vm451, %v828, 0
    %v868 = vsel %vm452, %v838, 0
    %v869 = vsel %vm453, %v852, 0
    %v870 = vsel %vm454, %v862, 0
    %s871 = scalar_lea.vmem [#allocation2], 320
    %v872 = vld [vmem:[%s871] sm:$0xf]
    %v873 = vld [vmem:[%s871 + $0x4] sm:$0xf]
    %v874 = vld [vmem:[%s871 + $0x8] sm:$0xf]
    %v875 = vld [vmem:[%s871 + $0xc] sm:$0xf]
    %v876 = vld [vmem:[%s871 + $0x10] sm:$0xf]
    %v877 = vld [vmem:[%s871 + $0x14] sm:$0xf]
    %v878 = vld [vmem:[%s871 + $0x18] sm:$0xf]
    %v879 = vld [vmem:[%s871 + $0x1c] sm:$0xf]
    %v880 = vld [vmem:[%s871 + $0x20] sm:$0xf]
    %v881 = vld [vmem:[%s871 + $0x24] sm:$0xf]
    %v882 = vld [vmem:[%s871 + $0x28] sm:$0xf]
    %v883 = vld [vmem:[%s871 + $0x2c] sm:$0xf]
    %v884 = vld [vmem:[%s871 + $0x30] sm:$0xf]
    %v885 = vld [vmem:[%s871 + $0x34] sm:$0xf]
    %v886 = vld [vmem:[%s871 + $0x38] sm:$0xf]
    %v887 = vld [vmem:[%s871 + $0x3c] sm:$0xf]
    %v892 = vunpack.c.l.b16 %v867
    %v893 = vunpack.c.l.b16 %v868
    %v894 = vunpack.c.l.b16 %v869
    %v895 = vunpack.c.l.b16 %v870
    %v896 = vpack.c.b16 %v893, %v892
    %v897 = vpack.c.b16 %v895, %v894
    %v916 = vunpack.c.l.b16 %v872
    %v917 = vunpack.c.l.b16 %v873
    %v918 = vunpack.c.l.b16 %v874
    %v919 = vunpack.c.l.b16 %v875
    %v920 = vunpack.c.l.b16 %v876
    %v921 = vunpack.c.l.b16 %v877
    %v922 = vunpack.c.l.b16 %v878
    %v923 = vunpack.c.l.b16 %v879
    %v924 = vunpack.c.l.b16 %v880
    %v925 = vunpack.c.l.b16 %v881
    %v926 = vunpack.c.l.b16 %v882
    %v927 = vunpack.c.l.b16 %v883
    %v928 = vunpack.c.l.b16 %v884
    %v929 = vunpack.c.l.b16 %v885
    %v930 = vunpack.c.l.b16 %v886
    %v931 = vunpack.c.l.b16 %v887
    %v932 = vpack.c.b16 %v917, %v916
    %v933 = vpack.c.b16 %v919, %v918
    %v934 = vpack.c.b16 %v921, %v920
    %v935 = vpack.c.b16 %v923, %v922
    %v936 = vpack.c.b16 %v925, %v924
    %v937 = vpack.c.b16 %v927, %v926
    %v938 = vpack.c.b16 %v929, %v928
    %v939 = vpack.c.b16 %v931, %v930
    %948 = vmatpush.bf16.msra.mxu0 %v939
    %949 = vmatpush.bf16.msra.mxu0 %v938
    %950 = vmatpush.bf16.msra.mxu0 %v937
    %951 = vmatpush.bf16.msra.mxu0 %v936
    %952 = vmatpush.bf16.msra.mxu0 %v935
    %953 = vmatpush.bf16.msra.mxu0 %v934
    %954 = vmatpush.bf16.msra.mxu0 %v933
    %955 = vmatpush.bf16.msra.mxu0 %v932
    %956 = vmatmul.bf16.gmra.mxu0 %v896
    %v957 = vpop.f32.mrf.mxu0
    %v958 = vadd.f32 0.0, %v957
    %v959 = vpop.f32.mrf.mxu0
    %v960 = vadd.f32 0.0, %v959
    %961 = vmatmul.bf16.gmra.mxu0 %v897
    %v962 = vpop.f32.mrf.mxu0
    %v963 = vadd.f32 0.0, %v962
    %v964 = vpop.f32.mrf.mxu0
    %v965 = vadd.f32 0.0, %v964
    %966 = vdwg.mxu0
    %v967 = vadd.f32 %v802, %v958
    %v968 = vadd.f32 %v803, %v960
    %v969 = vadd.f32 %v804, %v963
    %v970 = vadd.f32 %v805, %v965
    %v971 = vld [vmem:[%s0 + $0x4] sm:$0xe]
    %v972 = vld [vmem:[%s0 + $0xc] sm:$0x3]
    %v973 = vld [vmem:[%s0 + $0x14] sm:$0xe]
    %v974 = vld [vmem:[%s0 + $0x1c] sm:$0x3]
    %v976 = vshrl.u32 %v971, 16
    %v978 = vrot.slane %v976, 5
    %v979 = vshll.u32 %v971, 16
    %v981 = vrot.slane %v979, 6
    %v982 = vor.u32 %v978, %v981
    %v983 = vrot.slane %v982, 4
    %v984 = vrot.slane %v829, 5
    %v985 = vrot.slane %v825, 6
    %v986 = vor.u32 %v984, %v985
    %v987 = vsel %vm99, %v983, %v986
    %v988 = vrot.slane %v986, 4
    %v990 = vshrl.u32 %v972, 16
    %v992 = vrot.slane %v990, 5
    %v993 = vshll.u32 %v972, 16
    %v995 = vrot.slane %v993, 6
    %v996 = vor.u32 %v992, %v995
    %v997 = vsel %vm99, %v988, %v996
    %v999 = vshrl.u32 %v973, 16
    %v1001 = vrot.slane %v999, 5
    %v1002 = vshll.u32 %v973, 16
    %v1004 = vrot.slane %v1002, 6
    %v1005 = vor.u32 %v1001, %v1004
    %v1006 = vrot.slane %v1005, 4
    %v1007 = vrot.slane %v853, 5
    %v1008 = vrot.slane %v849, 6
    %v1009 = vor.u32 %v1007, %v1008
    %v1010 = vsel %vm99, %v1006, %v1009
    %v1011 = vrot.slane %v1009, 4
    %v1013 = vshrl.u32 %v974, 16
    %v1015 = vrot.slane %v1013, 5
    %v1016 = vshll.u32 %v974, 16
    %v1018 = vrot.slane %v1016, 6
    %v1019 = vor.u32 %v1015, %v1018
    %v1020 = vsel %vm99, %v1011, %v1019
    %v1025 = vsel %vm168, %v987, 0
    %v1026 = vsel %vm169, %v997, 0
    %v1027 = vsel %vm170, %v1010, 0
    %v1028 = vsel %vm171, %v1020, 0
    %s1029 = scalar_lea.vmem [#allocation2], 384
    %v1030 = vld [vmem:[%s1029] sm:$0xf]
    %v1031 = vld [vmem:[%s1029 + $0x4] sm:$0xf]
    %v1032 = vld [vmem:[%s1029 + $0x8] sm:$0xf]
    %v1033 = vld [vmem:[%s1029 + $0xc] sm:$0xf]
    %v1034 = vld [vmem:[%s1029 + $0x10] sm:$0xf]
    %v1035 = vld [vmem:[%s1029 + $0x14] sm:$0xf]
    %v1036 = vld [vmem:[%s1029 + $0x18] sm:$0xf]
    %v1037 = vld [vmem:[%s1029 + $0x1c] sm:$0xf]
    %v1038 = vld [vmem:[%s1029 + $0x20] sm:$0xf]
    %v1039 = vld [vmem:[%s1029 + $0x24] sm:$0xf]
    %v1040 = vld [vmem:[%s1029 + $0x28] sm:$0xf]
    %v1041 = vld [vmem:[%s1029 + $0x2c] sm:$0xf]
    %v1042 = vld [vmem:[%s1029 + $0x30] sm:$0xf]
    %v1043 = vld [vmem:[%s1029 + $0x34] sm:$0xf]
    %v1044 = vld [vmem:[%s1029 + $0x38] sm:$0xf]
    %v1045 = vld [vmem:[%s1029 + $0x3c] sm:$0xf]
    %v1050 = vunpack.c.l.b16 %v1025
    %v1051 = vunpack.c.l.b16 %v1026
    %v1052 = vunpack.c.l.b16 %v1027
    %v1053 = vunpack.c.l.b16 %v1028
    %v1054 = vpack.c.b16 %v1051, %v1050
    %v1055 = vpack.c.b16 %v1053, %v1052
    %v1074 = vunpack.c.l.b16 %v1030
    %v1075 = vunpack.c.l.b16 %v1031
    %v1076 = vunpack.c.l.b16 %v1032
    %v1077 = vunpack.c.l.b16 %v1033
    %v1078 = vunpack.c.l.b16 %v1034
    %v1079 = vunpack.c.l.b16 %v1035
    %v1080 = vunpack.c.l.b16 %v1036
    %v1081 = vunpack.c.l.b16 %v1037
    %v1082 = vunpack.c.l.b16 %v1038
    %v1083 = vunpack.c.l.b16 %v1039
    %v1084 = vunpack.c.l.b16 %v1040
    %v1085 = vunpack.c.l.b16 %v1041
    %v1086 = vunpack.c.l.b16 %v1042
    %v1087 = vunpack.c.l.b16 %v1043
    %v1088 = vunpack.c.l.b16 %v1044
    %v1089 = vunpack.c.l.b16 %v1045
    %v1090 = vpack.c.b16 %v1075, %v1074
    %v1091 = vpack.c.b16 %v1077, %v1076
    %v1092 = vpack.c.b16 %v1079, %v1078
    %v1093 = vpack.c.b16 %v1081, %v1080
    %v1094 = vpack.c.b16 %v1083, %v1082
    %v1095 = vpack.c.b16 %v1085, %v1084
    %v1096 = vpack.c.b16 %v1087, %v1086
    %v1097 = vpack.c.b16 %v1089, %v1088
    %1106 = vmatpush.bf16.msra.mxu0 %v1097
    %1107 = vmatpush.bf16.msra.mxu0 %v1096
    %1108 = vmatpush.bf16.msra.mxu0 %v1095
    %1109 = vmatpush.bf16.msra.mxu0 %v1094
    %1110 = vmatpush.bf16.msra.mxu0 %v1093
    %1111 = vmatpush.bf16.msra.mxu0 %v1092
    %1112 = vmatpush.bf16.msra.mxu0 %v1091
    %1113 = vmatpush.bf16.msra.mxu0 %v1090
    %1114 = vmatmul.bf16.gmra.mxu0 %v1054
    %v1115 = vpop.f32.mrf.mxu0
    %v1116 = vadd.f32 0.0, %v1115
    %v1117 = vpop.f32.mrf.mxu0
    %v1118 = vadd.f32 0.0, %v1117
    %1119 = vmatmul.bf16.gmra.mxu0 %v1055
    %v1120 = vpop.f32.mrf.mxu0
    %v1121 = vadd.f32 0.0, %v1120
    %v1122 = vpop.f32.mrf.mxu0
    %v1123 = vadd.f32 0.0, %v1122
    %1124 = vdwg.mxu0
    %v1125 = vadd.f32 %v967, %v1116
    %v1126 = vadd.f32 %v968, %v1118
    %v1127 = vadd.f32 %v969, %v1121
    %v1128 = vadd.f32 %v970, %v1123
    %v1129 = vld [vmem:[%s0 + $0x4] sm:$0xc]
    %v1130 = vld [vmem:[%s0 + $0x14] sm:$0xc]
    %v1137 = vrot.slane %v1129, 6
    %v1138 = vrot.slane %v1137, 4
    %v1139 = vrot.slane %v807, 6
    %v1140 = vsel %vm202, %v1138, %v1139
    %v1141 = vrot.slane %v1139, 4
    %v1142 = vrot.slane %v972, 6
    %v1143 = vsel %vm202, %v1141, %v1142
    %v1144 = vrot.slane %v1130, 6
    %v1145 = vrot.slane %v1144, 4
    %v1146 = vrot.slane %v810, 6
    %v1147 = vsel %vm202, %v1145, %v1146
    %v1148 = vrot.slane %v1146, 4
    %v1149 = vrot.slane %v974, 6
    %v1150 = vsel %vm202, %v1148, %v1149
    %s1151 = scalar_lea.vmem [#allocation2], 448
    %v1152 = vld [vmem:[%s1151] sm:$0xf]
    %v1153 = vld [vmem:[%s1151 + $0x4] sm:$0xf]
    %v1154 = vld [vmem:[%s1151 + $0x8] sm:$0xf]
    %v1155 = vld [vmem:[%s1151 + $0xc] sm:$0xf]
    %v1156 = vld [vmem:[%s1151 + $0x10] sm:$0xf]
    %v1157 = vld [vmem:[%s1151 + $0x14] sm:$0xf]
    %v1158 = vld [vmem:[%s1151 + $0x18] sm:$0xf]
    %v1159 = vld [vmem:[%s1151 + $0x1c] sm:$0xf]
    %v1160 = vld [vmem:[%s1151 + $0x20] sm:$0xf]
    %v1161 = vld [vmem:[%s1151 + $0x24] sm:$0xf]
    %v1162 = vld [vmem:[%s1151 + $0x28] sm:$0xf]
    %v1163 = vld [vmem:[%s1151 + $0x2c] sm:$0xf]
    %v1164 = vld [vmem:[%s1151 + $0x30] sm:$0xf]
    %v1165 = vld [vmem:[%s1151 + $0x34] sm:$0xf]
    %v1166 = vld [vmem:[%s1151 + $0x38] sm:$0xf]
    %v1167 = vld [vmem:[%s1151 + $0x3c] sm:$0xf]
    %v1168 = vunpack.c.l.b16 %v1140
    %v1169 = vunpack.c.l.b16 %v1143
    %v1170 = vunpack.c.l.b16 %v1147
    %v1171 = vunpack.c.l.b16 %v1150
    %v1172 = vpack.c.b16 %v1169, %v1168
    %v1173 = vpack.c.b16 %v1171, %v1170
    %v1192 = vunpack.c.l.b16 %v1152
    %v1193 = vunpack.c.l.b16 %v1153
    %v1194 = vunpack.c.l.b16 %v1154
    %v1195 = vunpack.c.l.b16 %v1155
    %v1196 = vunpack.c.l.b16 %v1156
    %v1197 = vunpack.c.l.b16 %v1157
    %v1198 = vunpack.c.l.b16 %v1158
    %v1199 = vunpack.c.l.b16 %v1159
    %v1200 = vunpack.c.l.b16 %v1160
    %v1201 = vunpack.c.l.b16 %v1161
    %v1202 = vunpack.c.l.b16 %v1162
    %v1203 = vunpack.c.l.b16 %v1163
    %v1204 = vunpack.c.l.b16 %v1164
    %v1205 = vunpack.c.l.b16 %v1165
    %v1206 = vunpack.c.l.b16 %v1166
    %v1207 = vunpack.c.l.b16 %v1167
    %v1208 = vpack.c.b16 %v1193, %v1192
    %v1209 = vpack.c.b16 %v1195, %v1194
    %v1210 = vpack.c.b16 %v1197, %v1196
    %v1211 = vpack.c.b16 %v1199, %v1198
    %v1212 = vpack.c.b16 %v1201, %v1200
    %v1213 = vpack.c.b16 %v1203, %v1202
    %v1214 = vpack.c.b16 %v1205, %v1204
    %v1215 = vpack.c.b16 %v1207, %v1206
    %1224 = vmatpush.bf16.msra.mxu0 %v1215
    %1225 = vmatpush.bf16.msra.mxu0 %v1214
    %1226 = vmatpush.bf16.msra.mxu0 %v1213
    %1227 = vmatpush.bf16.msra.mxu0 %v1212
    %1228 = vmatpush.bf16.msra.mxu0 %v1211
    %1229 = vmatpush.bf16.msra.mxu0 %v1210
    %1230 = vmatpush.bf16.msra.mxu0 %v1209
    %1231 = vmatpush.bf16.msra.mxu0 %v1208
    %1232 = vmatmul.bf16.gmra.mxu0 %v1172
    %v1233 = vpop.f32.mrf.mxu0
    %v1234 = vadd.f32 0.0, %v1233
    %v1235 = vpop.f32.mrf.mxu0
    %v1236 = vadd.f32 0.0, %v1235
    %1237 = vmatmul.bf16.gmra.mxu0 %v1173
    %v1238 = vpop.f32.mrf.mxu0
    %v1239 = vadd.f32 0.0, %v1238
    %v1240 = vpop.f32.mrf.mxu0
    %v1241 = vadd.f32 0.0, %v1240
    %1242 = vdwg.mxu0
    %v1243 = vadd.f32 %v1125, %v1234
    %v1244 = vadd.f32 %v1126, %v1236
    %v1245 = vadd.f32 %v1127, %v1239
    %v1246 = vadd.f32 %v1128, %v1241
    %v1247 = vld [vmem:[%s0 + $0xc] sm:$0x7]
    %v1248 = vld [vmem:[%s0 + $0x1c] sm:$0x7]
    %v1250 = vshrl.u32 %v1129, 16
    %v1252 = vrot.slane %v1250, 6
    %v1253 = vshll.u32 %v1129, 16
    %v1255 = vrot.slane %v1253, 7
    %v1256 = vor.u32 %v1252, %v1255
    %v1257 = vrot.slane %v1256, 4
    %v1258 = vrot.slane %v829, 6
    %v1259 = vrot.slane %v825, 7
    %v1260 = vor.u32 %v1258, %v1259
    %v1261 = vsel %vm392, %v1257, %v1260
    %v1262 = vrot.slane %v1260, 4
    %v1264 = vshrl.u32 %v1247, 16
    %v1266 = vrot.slane %v1264, 6
    %v1267 = vshll.u32 %v1247, 16
    %v1269 = vrot.slane %v1267, 7
    %v1270 = vor.u32 %v1266, %v1269
    %v1271 = vsel %vm392, %v1262, %v1270
    %v1273 = vshrl.u32 %v1130, 16
    %v1275 = vrot.slane %v1273, 6
    %v1276 = vshll.u32 %v1130, 16
    %v1278 = vrot.slane %v1276, 7
    %v1279 = vor.u32 %v1275, %v1278
    %v1280 = vrot.slane %v1279, 4
    %v1281 = vrot.slane %v853, 6
    %v1282 = vrot.slane %v849, 7
    %v1283 = vor.u32 %v1281, %v1282
    %v1284 = vsel %vm392, %v1280, %v1283
    %v1285 = vrot.slane %v1283, 4
    %v1287 = vshrl.u32 %v1248, 16
    %v1289 = vrot.slane %v1287, 6
    %v1290 = vshll.u32 %v1248, 16
    %v1292 = vrot.slane %v1290, 7
    %v1293 = vor.u32 %v1289, %v1292
    %v1294 = vsel %vm392, %v1285, %v1293
    %v1299 = vsel %vm451, %v1261, 0
    %v1300 = vsel %vm452, %v1271, 0
    %v1301 = vsel %vm453, %v1284, 0
    %v1302 = vsel %vm454, %v1294, 0
    %s1303 = scalar_lea.vmem [#allocation2], 512
    %v1304 = vld [vmem:[%s1303] sm:$0xf]
    %v1305 = vld [vmem:[%s1303 + $0x4] sm:$0xf]
    %v1306 = vld [vmem:[%s1303 + $0x8] sm:$0xf]
    %v1307 = vld [vmem:[%s1303 + $0xc] sm:$0xf]
    %v1308 = vld [vmem:[%s1303 + $0x10] sm:$0xf]
    %v1309 = vld [vmem:[%s1303 + $0x14] sm:$0xf]
    %v1310 = vld [vmem:[%s1303 + $0x18] sm:$0xf]
    %v1311 = vld [vmem:[%s1303 + $0x1c] sm:$0xf]
    %v1312 = vld [vmem:[%s1303 + $0x20] sm:$0xf]
    %v1313 = vld [vmem:[%s1303 + $0x24] sm:$0xf]
    %v1314 = vld [vmem:[%s1303 + $0x28] sm:$0xf]
    %v1315 = vld [vmem:[%s1303 + $0x2c] sm:$0xf]
    %v1316 = vld [vmem:[%s1303 + $0x30] sm:$0xf]
    %v1317 = vld [vmem:[%s1303 + $0x34] sm:$0xf]
    %v1318 = vld [vmem:[%s1303 + $0x38] sm:$0xf]
    %v1319 = vld [vmem:[%s1303 + $0x3c] sm:$0xf]
    %v1324 = vunpack.c.l.b16 %v1299
    %v1325 = vunpack.c.l.b16 %v1300
    %v1326 = vunpack.c.l.b16 %v1301
    %v1327 = vunpack.c.l.b16 %v1302
    %v1328 = vpack.c.b16 %v1325, %v1324
    %v1329 = vpack.c.b16 %v1327, %v1326
    %v1348 = vunpack.c.l.b16 %v1304
    %v1349 = vunpack.c.l.b16 %v1305
    %v1350 = vunpack.c.l.b16 %v1306
    %v1351 = vunpack.c.l.b16 %v1307
    %v1352 = vunpack.c.l.b16 %v1308
    %v1353 = vunpack.c.l.b16 %v1309
    %v1354 = vunpack.c.l.b16 %v1310
    %v1355 = vunpack.c.l.b16 %v1311
    %v1356 = vunpack.c.l.b16 %v1312
    %v1357 = vunpack.c.l.b16 %v1313
    %v1358 = vunpack.c.l.b16 %v1314
    %v1359 = vunpack.c.l.b16 %v1315
    %v1360 = vunpack.c.l.b16 %v1316
    %v1361 = vunpack.c.l.b16 %v1317
    %v1362 = vunpack.c.l.b16 %v1318
    %v1363 = vunpack.c.l.b16 %v1319
    %v1364 = vpack.c.b16 %v1349, %v1348
    %v1365 = vpack.c.b16 %v1351, %v1350
    %v1366 = vpack.c.b16 %v1353, %v1352
    %v1367 = vpack.c.b16 %v1355, %v1354
    %v1368 = vpack.c.b16 %v1357, %v1356
    %v1369 = vpack.c.b16 %v1359, %v1358
    %v1370 = vpack.c.b16 %v1361, %v1360
    %v1371 = vpack.c.b16 %v1363, %v1362
    %1380 = vmatpush.bf16.msra.mxu0 %v1371
    %1381 = vmatpush.bf16.msra.mxu0 %v1370
    %1382 = vmatpush.bf16.msra.mxu0 %v1369
    %1383 = vmatpush.bf16.msra.mxu0 %v1368
    %1384 = vmatpush.bf16.msra.mxu0 %v1367
    %1385 = vmatpush.bf16.msra.mxu0 %v1366
    %1386 = vmatpush.bf16.msra.mxu0 %v1365
    %1387 = vmatpush.bf16.msra.mxu0 %v1364
    %1388 = vmatmul.bf16.gmra.mxu0 %v1328
    %v1389 = vpop.f32.mrf.mxu0
    %v1390 = vadd.f32 0.0, %v1389
    %v1391 = vpop.f32.mrf.mxu0
    %v1392 = vadd.f32 0.0, %v1391
    %1393 = vmatmul.bf16.gmra.mxu0 %v1329
    %v1394 = vpop.f32.mrf.mxu0
    %v1395 = vadd.f32 0.0, %v1394
    %v1396 = vpop.f32.mrf.mxu0
    %v1397 = vadd.f32 0.0, %v1396
    %1398 = vdwg.mxu0
    %v1399 = vadd.f32 %v1243, %v1390
    %v1400 = vadd.f32 %v1244, %v1392
    %v1401 = vadd.f32 %v1245, %v1395
    %v1402 = vadd.f32 %v1246, %v1397
    %v1403 = vpack.c.bf16 %v1399, %v1399
    %v1404 = vpack.c.bf16 %v1400, %v1400
    %v1405 = vpack.c.bf16 %v1401, %v1401
    %v1406 = vpack.c.bf16 %v1402, %v1402
    %1407 = vst [vmem:[%s2] sm:$0xf] %v1403
    %1408 = vst [vmem:[%s2 + $0x4] sm:$0xf] %v1404
    %1409 = vst [vmem:[%s2 + $0x8] sm:$0xf] %v1405
    %1410 = vst [vmem:[%s2 + $0xc] sm:$0xf] %v1406
    %v1411 = vadd.f32 %v1399, %v1400
    %v1412 = vadd.f32 %v1411, %v1401
    %v1413 = vadd.f32 %v1412, %v1402
    %v1414 = vrot.slane %v1413, 4
    %v1415 = vadd.f32 %v1413, %v1414
    %v1416 = vrot.slane %v1415, 2
    %v1417 = vadd.f32 %v1415, %v1416
    %v1418 = vrot.slane %v1417, 1
    %v1419 = vadd.f32 %v1417, %v1418
    %1420 = vst [vmem:[%s3] sm:$0x1] %v1419
    %v1421 = vmul.f32 %v1399, %v1399
    %v1422 = vmul.f32 %v1400, %v1400
    %v1423 = vmul.f32 %v1401, %v1401
    %v1424 = vmul.f32 %v1402, %v1402
    %v1425 = vadd.f32 %v1421, %v1422
    %v1426 = vadd.f32 %v1425, %v1423
    %v1427 = vadd.f32 %v1426, %v1424
    %v1428 = vrot.slane %v1427, 4
    %v1429 = vadd.f32 %v1427, %v1428
    %v1430 = vrot.slane %v1429, 2
    %v1431 = vadd.f32 %v1429, %v1430
    %v1432 = vrot.slane %v1431, 1
    %v1433 = vadd.f32 %v1431, %v1432
    %1434 = vst [vmem:[%s3 + $0x1] sm:$0x1] %v1433
    // Predicated region
    $region14: #{masked_vgg_forward.13} parent=1 // pred_check
      _
    $region15: #{masked_vgg_forward.13} parent=1 // pred_check_branch
      %1436 = sbr.rel (0) target = $region17
    $region16: #{masked_vgg_forward.13} parent=1 // pred_region
      _
    $region17: #{masked_vgg_forward.13} parent=1 // pred_fallthru
      _
    // Predicated region
    $region18: #{masked_vgg_forward.13} parent=1 // pred_check
      _
    $region19: #{masked_vgg_forward.13} parent=1 // pred_check_branch
      %1438 = sbr.rel (0) target = $region21
    $region20: #{masked_vgg_forward.13} parent=1 // pred_region
      _
    $region21: #{masked_vgg_forward.13} parent=1 // pred_fallthru
      _
    // Predicated region
    $region22: #{masked_vgg_forward.13} parent=1 // pred_check
      _
    $region23: #{masked_vgg_forward.13} parent=1 // pred_check_branch
      %1440 = sbr.rel (0) target = $region25
    $region24: #{masked_vgg_forward.13} parent=1 // pred_region
      _
    $region25: #{masked_vgg_forward.13} parent=1 // pred_fallthru
      _
    // Predicated region
    $region26: #{masked_vgg_forward.13} parent=1 // pred_check
      _
    $region27: #{masked_vgg_forward.13} parent=1 // pred_check_branch
      %1442 = sbr.rel (0) target = $region29
    $region28: #{masked_vgg_forward.13} parent=1 // pred_region
      _
    $region29: #{masked_vgg_forward.13} parent=1 // pred_fallthru
      _
    %1443 = vsyncpa [#allocation3], 1

// kernel: masked_vgg_forward.11
$region0: #{masked_vgg_forward.11}
  #allocation0 [shape = 'u32[]', space=smem, size = 0x4, offset = 0x4, fixed_abs, tag = 'smem constant byte address 0x4 - core index']
  #allocation1 [shape = 'u32[72,128]{1,0:T(1,128)}', space=vmem, size = 0x9000, scoped, tag = 'internal scratch']
  %s0 = inlined_call_operand.vmem [shape: bf16[2,96,128], index: 0, kind: input, shape index: {}]
  %s1 = inlined_call_operand.hbm [shape: bf16[9,128,128], index: 1, kind: input, shape index: {}]
  %s2 = inlined_call_operand.vmem [shape: bf16[2,64,128], index: 2, kind: output, shape index: {0}]
  %s3 = inlined_call_operand.vmem [shape: f32[2,128], index: 3, kind: output, shape index: {1}]
  %4 = xla_tuple %s2, %s3
  %s5 = sld [smem:[#allocation0]]
  $region30: #{masked_vgg_forward.11} parent=0
    _
  %s7 = ssub.s32 1, %s5
  %s8 = scalar_select 0, %s7, %s5
  $region1: #{masked_vgg_forward.11} parent=0
    #allocation2 [shape = 'u8[294912]{0}', space=vmem, size = 0x48000, scoped, tag = 'input window, operand 1, single buffered']
    #allocation3 [shape = 's32[1]{0}', space=sflag, size = 0x4, scoped, tag = 'scoped memory for masked_vgg_forward.11']
    %9 = vsyncpa [#allocation3], 0
    // Predicated region
    $region2: #{masked_vgg_forward.11} parent=1 // pred_check
      _
    $region3: #{masked_vgg_forward.11} parent=1 // pred_check_branch
      %11 = sbr.rel (0) target = $region5
    $region4: #{masked_vgg_forward.11} parent=1 // pred_region
      _
    $region5: #{masked_vgg_forward.11} parent=1 // pred_fallthru
      _
    // Predicated region
    $region6: #{masked_vgg_forward.11} parent=1 // pred_check
      _
    $region7: #{masked_vgg_forward.11} parent=1 // pred_check_branch
      %13 = sbr.rel (0) target = $region9
    $region8: #{masked_vgg_forward.11} parent=1 // pred_region
      %15 = vsyncadd [#allocation3], 0
      %s16 = sshll.u32 %s1, 4
      %s17 = int_to_ptr.hbm [resolvable:$true] %s16
      %s18 = sshll.u32 [#allocation2], 4
      %s19 = int_to_ptr.vmem [resolvable:$true] %s18
      %24 = dma.hbm_to_vmem [thread:$0]  %s17, 9216, %s19, [#allocation3], 64, 64, 4
    $region9: #{masked_vgg_forward.11} parent=1 // pred_fallthru
      _
    // Predicated region
    $region10: #{masked_vgg_forward.11} parent=1 // pred_check
      _
    $region11: #{masked_vgg_forward.11} parent=1 // pred_check_branch
      %26 = sbr.rel (0) target = $region13
    $region12: #{masked_vgg_forward.11} parent=1 // pred_region
      %28 = dma.done [#allocation3], 9216
    $region13: #{masked_vgg_forward.11} parent=1 // pred_fallthru
      _
    %v30 = vlaneseq
    %v31 = vshrl.u32 %v30, 7
    %v32 = vadd.s32 %v31, 8
    %v33 = vadd.s32 %v31, 16
    %v34 = vadd.s32 %v31, 24
    %v35 = vadd.s32 %v31, 32
    %v36 = vadd.s32 %v31, 40
    %v37 = vadd.s32 %v31, 48
    %v38 = vadd.s32 %v31, 56
    %v39 = vadd.s32 %v31, 64
    %v40 = vadd.s32 %v31, 72
    %v41 = vadd.s32 %v31, 80
    %v42 = vadd.s32 %v31, 88
    %v43 = vadd.s32 %v31, 96
    %v44 = vadd.s32 %v31, 104
    %v45 = vadd.s32 %v31, 112
    %v46 = vadd.s32 %v31, 120
    %vm47 = vcmp.lt.s32.totalorder %v31, 0
    %v48 = vsub.s32 0, %v31
    %v49 = vsel %vm47, %v48, %v31
    %v50 = vshrl.u32 %v49, 3
    %v51 = vand.u32 %v49, 7
    %v52 = vsub.s32 0, %v51
    %v53 = vsel %vm47, %v52, %v51
    %vm54 = vcmp.lt.s32.totalorder %v32, 0
    %v55 = vsub.s32 0, %v32
    %v56 = vsel %vm54, %v55, %v32
    %v57 = vshrl.u32 %v56, 3
    %v58 = vand.u32 %v56, 7
    %v59 = vsub.s32 0, %v58
    %v60 = vsel %vm54, %v59, %v58
    %vm61 = vcmp.lt.s32.totalorder %v33, 0
    %v62 = vsub.s32 0, %v33
    %v63 = vsel %vm61, %v62, %v33
    %v64 = vshrl.u32 %v63, 3
    %v65 = vand.u32 %v63, 7
    %v66 = vsub.s32 0, %v65
    %v67 = vsel %vm61, %v66, %v65
    %vm68 = vcmp.lt.s32.totalorder %v34, 0
    %v69 = vsub.s32 0, %v34
    %v70 = vsel %vm68, %v69, %v34
    %v71 = vshrl.u32 %v70, 3
    %v72 = vand.u32 %v70, 7
    %v73 = vsub.s32 0, %v72
    %v74 = vsel %vm68, %v73, %v72
    %vm75 = vcmp.lt.s32.totalorder %v35, 0
    %v76 = vsub.s32 0, %v35
    %v77 = vsel %vm75, %v76, %v35
    %v78 = vshrl.u32 %v77, 3
    %v79 = vand.u32 %v77, 7
    %v80 = vsub.s32 0, %v79
    %v81 = vsel %vm75, %v80, %v79
    %vm82 = vcmp.lt.s32.totalorder %v36, 0
    %v83 = vsub.s32 0, %v36
    %v84 = vsel %vm82, %v83, %v36
    %v85 = vshrl.u32 %v84, 3
    %v86 = vand.u32 %v84, 7
    %v87 = vsub.s32 0, %v86
    %v88 = vsel %vm82, %v87, %v86
    %vm89 = vcmp.lt.s32.totalorder %v37, 0
    %v90 = vsub.s32 0, %v37
    %v91 = vsel %vm89, %v90, %v37
    %v92 = vshrl.u32 %v91, 3
    %v93 = vand.u32 %v91, 7
    %v94 = vsub.s32 0, %v93
    %v95 = vsel %vm89, %v94, %v93
    %vm96 = vcmp.lt.s32.totalorder %v38, 0
    %v97 = vsub.s32 0, %v38
    %v98 = vsel %vm96, %v97, %v38
    %v99 = vshrl.u32 %v98, 3
    %v100 = vand.u32 %v98, 7
    %v101 = vsub.s32 0, %v100
    %v102 = vsel %vm96, %v101, %v100
    %vm103 = vcmp.lt.s32.totalorder %v39, 0
    %v104 = vsub.s32 0, %v39
    %v105 = vsel %vm103, %v104, %v39
    %v106 = vshrl.u32 %v105, 3
    %v107 = vand.u32 %v105, 7
    %v108 = vsub.s32 0, %v107
    %v109 = vsel %vm103, %v108, %v107
    %vm110 = vcmp.lt.s32.totalorder %v40, 0
    %v111 = vsub.s32 0, %v40
    %v112 = vsel %vm110, %v111, %v40
    %v113 = vshrl.u32 %v112, 3
    %v114 = vand.u32 %v112, 7
    %v115 = vsub.s32 0, %v114
    %v116 = vsel %vm110, %v115, %v114
    %vm117 = vcmp.lt.s32.totalorder %v41, 0
    %v118 = vsub.s32 0, %v41
    %v119 = vsel %vm117, %v118, %v41
    %v120 = vshrl.u32 %v119, 3
    %v121 = vand.u32 %v119, 7
    %v122 = vsub.s32 0, %v121
    %v123 = vsel %vm117, %v122, %v121
    %vm124 = vcmp.lt.s32.totalorder %v42, 0
    %v125 = vsub.s32 0, %v42
    %v126 = vsel %vm124, %v125, %v42
    %v127 = vshrl.u32 %v126, 3
    %v128 = vand.u32 %v126, 7
    %v129 = vsub.s32 0, %v128
    %v130 = vsel %vm124, %v129, %v128
    %vm131 = vcmp.lt.s32.totalorder %v43, 0
    %v132 = vsub.s32 0, %v43
    %v133 = vsel %vm131, %v132, %v43
    %v134 = vshrl.u32 %v133, 3
    %v135 = vand.u32 %v133, 7
    %v136 = vsub.s32 0, %v135
    %v137 = vsel %vm131, %v136, %v135
    %vm138 = vcmp.lt.s32.totalorder %v44, 0
    %v139 = vsub.s32 0, %v44
    %v140 = vsel %vm138, %v139, %v44
    %v141 = vshrl.u32 %v140, 3
    %v142 = vand.u32 %v140, 7
    %v143 = vsub.s32 0, %v142
    %v144 = vsel %vm138, %v143, %v142
    %vm145 = vcmp.lt.s32.totalorder %v45, 0
    %v146 = vsub.s32 0, %v45
    %v147 = vsel %vm145, %v146, %v45
    %v148 = vshrl.u32 %v147, 3
    %v149 = vand.u32 %v147, 7
    %v150 = vsub.s32 0, %v149
    %v151 = vsel %vm145, %v150, %v149
    %vm152 = vcmp.lt.s32.totalorder %v46, 0
    %v153 = vsub.s32 0, %v46
    %v154 = vsel %vm152, %v153, %v46
    %v155 = vshrl.u32 %v154, 3
    %v156 = vand.u32 %v154, 7
    %v157 = vsub.s32 0, %v156
    %v158 = vsel %vm152, %v157, %v156
    %vm159 = vcmp.ne.s32.totalorder %v53, 0
    %vm160 = vcmp.ne.s32.totalorder %v60, 0
    %vm161 = vcmp.ne.s32.totalorder %v67, 0
    %vm162 = vcmp.ne.s32.totalorder %v74, 0
    %vm163 = vcmp.ne.s32.totalorder %v81, 0
    %vm164 = vcmp.ne.s32.totalorder %v88, 0
    %vm165 = vcmp.ne.s32.totalorder %v95, 0
    %vm166 = vcmp.ne.s32.totalorder %v102, 0
    %vm167 = vcmp.ne.s32.totalorder %v109, 0
    %vm168 = vcmp.ne.s32.totalorder %v116, 0
    %vm169 = vcmp.ne.s32.totalorder %v123, 0
    %vm170 = vcmp.ne.s32.totalorder %v130, 0
    %vm171 = vcmp.ne.s32.totalorder %v137, 0
    %vm172 = vcmp.ne.s32.totalorder %v144, 0
    %vm173 = vcmp.ne.s32.totalorder %v151, 0
    %vm174 = vcmp.ne.s32.totalorder %v158, 0
    %vm175 = vcmp.lt.s32.totalorder %v53, 0
    %vm176 = vcmp.lt.s32.totalorder %v60, 0
    %vm177 = vcmp.lt.s32.totalorder %v67, 0
    %vm178 = vcmp.lt.s32.totalorder %v74, 0
    %vm179 = vcmp.lt.s32.totalorder %v81, 0
    %vm180 = vcmp.lt.s32.totalorder %v88, 0
    %vm181 = vcmp.lt.s32.totalorder %v95, 0
    %vm182 = vcmp.lt.s32.totalorder %v102, 0
    %vm183 = vcmp.lt.s32.totalorder %v109, 0
    %vm184 = vcmp.lt.s32.totalorder %v116, 0
    %vm185 = vcmp.lt.s32.totalorder %v123, 0
    %vm186 = vcmp.lt.s32.totalorder %v130, 0
    %vm187 = vcmp.lt.s32.totalorder %v137, 0
    %vm188 = vcmp.lt.s32.totalorder %v144, 0
    %vm189 = vcmp.lt.s32.totalorder %v151, 0
    %vm190 = vcmp.lt.s32.totalorder %v158, 0
    %vm191 = vmand %vm175, %vm159
    %vm192 = vmand %vm176, %vm160
    %vm193 = vmand %vm177, %vm161
    %vm194 = vmand %vm178, %vm162
    %vm195 = vmand %vm179, %vm163
    %vm196 = vmand %vm180, %vm164
    %vm197 = vmand %vm181, %vm165
    %vm198 = vmand %vm182, %vm166
    %vm199 = vmand %vm183, %vm167
    %vm200 = vmand %vm184, %vm168
    %vm201 = vmand %vm185, %vm169
    %vm202 = vmand %vm186, %vm170
    %vm203 = vmand %vm187, %vm171
    %vm204 = vmand %vm188, %vm172
    %vm205 = vmand %vm189, %vm173
    %vm206 = vmand %vm190, %vm174
    %v207 = vadd.s32 %v53, 8
    %v208 = vadd.s32 %v60, 8
    %v209 = vadd.s32 %v67, 8
    %v210 = vadd.s32 %v74, 8
    %v211 = vadd.s32 %v81, 8
    %v212 = vadd.s32 %v88, 8
    %v213 = vadd.s32 %v95, 8
    %v214 = vadd.s32 %v102, 8
    %v215 = vadd.s32 %v109, 8
    %v216 = vadd.s32 %v116, 8
    %v217 = vadd.s32 %v123, 8
    %v218 = vadd.s32 %v130, 8
    %v219 = vadd.s32 %v137, 8
    %v220 = vadd.s32 %v144, 8
    %v221 = vadd.s32 %v151, 8
    %v222 = vadd.s32 %v158, 8
    %v223 = vsel %vm191, %v207, %v53
    %v224 = vsel %vm192, %v208, %v60
    %v225 = vsel %vm193, %v209, %v67
    %v226 = vsel %vm194, %v210, %v74
    %v227 = vsel %vm195, %v211, %v81
    %v228 = vsel %vm196, %v212, %v88
    %v229 = vsel %vm197, %v213, %v95
    %v230 = vsel %vm198, %v214, %v102
    %v231 = vsel %vm199, %v215, %v109
    %v232 = vsel %vm200, %v216, %v116
    %v233 = vsel %vm201, %v217, %v123
    %v234 = vsel %vm202, %v218, %v130
    %v235 = vsel %vm203, %v219, %v137
    %v236 = vsel %vm204, %v220, %v144
    %v237 = vsel %vm205, %v221, %v151
    %v238 = vsel %vm206, %v222, %v158
    %vm239 = vcmp.ne.s32.totalorder %v223, 0
    %vm240 = vcmp.ne.s32.totalorder %v224, 0
    %vm241 = vcmp.ne.s32.totalorder %v225, 0
    %vm242 = vcmp.ne.s32.totalorder %v226, 0
    %vm243 = vcmp.ne.s32.totalorder %v227, 0
    %vm244 = vcmp.ne.s32.totalorder %v228, 0
    %vm245 = vcmp.ne.s32.totalorder %v229, 0
    %vm246 = vcmp.ne.s32.totalorder %v230, 0
    %vm247 = vcmp.ne.s32.totalorder %v231, 0
    %vm248 = vcmp.ne.s32.totalorder %v232, 0
    %vm249 = vcmp.ne.s32.totalorder %v233, 0
    %vm250 = vcmp.ne.s32.totalorder %v234, 0
    %vm251 = vcmp.ne.s32.totalorder %v235, 0
    %vm252 = vcmp.ne.s32.totalorder %v236, 0
    %vm253 = vcmp.ne.s32.totalorder %v237, 0
    %vm254 = vcmp.ne.s32.totalorder %v238, 0
    %vm255 = vcmp.ne.s32.totalorder %v223, 7
    %vm256 = vcmp.ne.s32.totalorder %v224, 7
    %vm257 = vcmp.ne.s32.totalorder %v225, 7
    %vm258 = vcmp.ne.s32.totalorder %v226, 7
    %vm259 = vcmp.ne.s32.totalorder %v227, 7
    %vm260 = vcmp.ne.s32.totalorder %v228, 7
    %vm261 = vcmp.ne.s32.totalorder %v229, 7
    %vm262 = vcmp.ne.s32.totalorder %v230, 7
    %vm263 = vcmp.ne.s32.totalorder %v231, 7
    %vm264 = vcmp.ne.s32.totalorder %v232, 7
    %vm265 = vcmp.ne.s32.totalorder %v233, 7
    %vm266 = vcmp.ne.s32.totalorder %v234, 7
    %vm267 = vcmp.ne.s32.totalorder %v235, 7
    %vm268 = vcmp.ne.s32.totalorder %v236, 7
    %vm269 = vcmp.ne.s32.totalorder %v237, 7
    %vm270 = vcmp.ne.s32.totalorder %v238, 7
    %v271 = vld [vmem:[%s0] sm:$0x8]
    %v272 = vld [vmem:[%s0 + $0x4] sm:$0xf]
    %v273 = vld [vmem:[%s0 + $0x8] sm:$0xf]
    %v274 = vld [vmem:[%s0 + $0xc] sm:$0xf]
    %v275 = vld [vmem:[%s0 + $0x10] sm:$0xf]
    %v276 = vld [vmem:[%s0 + $0x14] sm:$0xf]
    %v277 = vld [vmem:[%s0 + $0x18] sm:$0xf]
    %v278 = vld [vmem:[%s0 + $0x1c] sm:$0xf]
    %v279 = vld [vmem:[%s0 + $0x20] sm:$0xf]
    %v280 = vld [vmem:[%s0 + $0x30] sm:$0x8]
    %v281 = vld [vmem:[%s0 + $0x34] sm:$0xf]
    %v282 = vld [vmem:[%s0 + $0x38] sm:$0xf]
    %v283 = vld [vmem:[%s0 + $0x3c] sm:$0xf]
    %v284 = vld [vmem:[%s0 + $0x40] sm:$0xf]
    %v285 = vld [vmem:[%s0 + $0x44] sm:$0xf]
    %v286 = vld [vmem:[%s0 + $0x48] sm:$0xf]
    %v287 = vld [vmem:[%s0 + $0x4c] sm:$0xf]
    %v288 = vld [vmem:[%s0 + $0x50] sm:$0xf]
    %vm289 = vsmask.f32 256
    %vm290 = vsmask.f32 4368
    %vm291 = vmor %vm289, %vm290
    %v293 = vshrl.u32 %v271, 16
    %v295 = vrot.slane %v293, 7
    %v296 = vrot.slane %v295, 4
    %v298 = vshrl.u32 %v272, 16
    %v300 = vrot.slane %v298, 7
    %v301 = vshll.u32 %v272, 16
    %v303 = vor.u32 %v300, %v301
    %v304 = vsel %vm291, %v296, %v303
    %v305 = vrot.slane %v300, 4
    %v307 = vshrl.u32 %v273, 16
    %v309 = vrot.slane %v307, 7
    %v310 = vshll.u32 %v273, 16
    %v312 = vor.u32 %v309, %v310
    %v313 = vsel %vm291, %v305, %v312
    %v314 = vrot.slane %v309, 4
    %v316 = vshrl.u32 %v274, 16
    %v318 = vrot.slane %v316, 7
    %v319 = vshll.u32 %v274, 16
    %v321 = vor.u32 %v318, %v319
    %v322 = vsel %vm291, %v314, %v321
    %v323 = vrot.slane %v318, 4
    %v325 = vshrl.u32 %v275, 16
    %v327 = vrot.slane %v325, 7
    %v328 = vshll.u32 %v275, 16
    %v330 = vor.u32 %v327, %v328
    %v331 = vsel %vm291, %v323, %v330
    %v332 = vrot.slane %v327, 4
    %v334 = vshrl.u32 %v276, 16
    %v336 = vrot.slane %v334, 7
    %v337 = vshll.u32 %v276, 16
    %v339 = vor.u32 %v336, %v337
    %v340 = vsel %vm291, %v332, %v339
    %v341 = vrot.slane %v336, 4
    %v343 = vshrl.u32 %v277, 16
    %v345 = vrot.slane %v343, 7
    %v346 = vshll.u32 %v277, 16
    %v348 = vor.u32 %v345, %v346
    %v349 = vsel %vm291, %v341, %v348
    %v350 = vrot.slane %v345, 4
    %v352 = vshrl.u32 %v278, 16
    %v354 = vrot.slane %v352, 7
    %v355 = vshll.u32 %v278, 16
    %v357 = vor.u32 %v354, %v355
    %v358 = vsel %vm291, %v350, %v357
    %v359 = vrot.slane %v354, 4
    %v361 = vshrl.u32 %v279, 16
    %v363 = vrot.slane %v361, 7
    %v364 = vshll.u32 %v279, 16
    %v366 = vor.u32 %v363, %v364
    %v367 = vsel %vm291, %v359, %v366
    %v369 = vshrl.u32 %v280, 16
    %v371 = vrot.slane %v369, 7
    %v372 = vrot.slane %v371, 4
    %v374 = vshrl.u32 %v281, 16
    %v376 = vrot.slane %v374, 7
    %v377 = vshll.u32 %v281, 16
    %v379 = vor.u32 %v376, %v377
    %v380 = vsel %vm291, %v372, %v379
    %v381 = vrot.slane %v376, 4
    %v383 = vshrl.u32 %v282, 16
    %v385 = vrot.slane %v383, 7
    %v386 = vshll.u32 %v282, 16
    %v388 = vor.u32 %v385, %v386
    %v389 = vsel %vm291, %v381, %v388
    %v390 = vrot.slane %v385, 4
    %v392 = vshrl.u32 %v283, 16
    %v394 = vrot.slane %v392, 7
    %v395 = vshll.u32 %v283, 16
    %v397 = vor.u32 %v394, %v395
    %v398 = vsel %vm291, %v390, %v397
    %v399 = vrot.slane %v394, 4
    %v401 = vshrl.u32 %v284, 16
    %v403 = vrot.slane %v401, 7
    %v404 = vshll.u32 %v284, 16
    %v406 = vor.u32 %v403, %v404
    %v407 = vsel %vm291, %v399, %v406
    %v408 = vrot.slane %v403, 4
    %v410 = vshrl.u32 %v285, 16
    %v412 = vrot.slane %v410, 7
    %v413 = vshll.u32 %v285, 16
    %v415 = vor.u32 %v412, %v413
    %v416 = vsel %vm291, %v408, %v415
    %v417 = vrot.slane %v412, 4
    %v419 = vshrl.u32 %v286, 16
    %v421 = vrot.slane %v419, 7
    %v422 = vshll.u32 %v286, 16
    %v424 = vor.u32 %v421, %v422
    %v425 = vsel %vm291, %v417, %v424
    %v426 = vrot.slane %v421, 4
    %v428 = vshrl.u32 %v287, 16
    %v430 = vrot.slane %v428, 7
    %v431 = vshll.u32 %v287, 16
    %v433 = vor.u32 %v430, %v431
    %v434 = vsel %vm291, %v426, %v433
    %v435 = vrot.slane %v430, 4
    %v437 = vshrl.u32 %v288, 16
    %v439 = vrot.slane %v437, 7
    %v440 = vshll.u32 %v288, 16
    %v442 = vor.u32 %v439, %v440
    %v443 = vsel %vm291, %v435, %v442
    %v460 = vsel %vm239, 1, 0
    %v461 = vsel %vm240, 1, 0
    %v462 = vsel %vm241, 1, 0
    %v463 = vsel %vm242, 1, 0
    %v464 = vsel %vm243, 1, 0
    %v465 = vsel %vm244, 1, 0
    %v466 = vsel %vm245, 1, 0
    %v467 = vsel %vm246, 1, 0
    %v468 = vsel %vm247, 1, 0
    %v469 = vsel %vm248, 1, 0
    %v470 = vsel %vm249, 1, 0
    %v471 = vsel %vm250, 1, 0
    %v472 = vsel %vm251, 1, 0
    %v473 = vsel %vm252, 1, 0
    %v474 = vsel %vm253, 1, 0
    %v475 = vsel %vm254, 1, 0
    %vm476 = vcmp.eq.s32.totalorder %v460, 1
    %vm477 = vcmp.eq.s32.totalorder %v461, 1
    %vm478 = vcmp.eq.s32.totalorder %v462, 1
    %vm479 = vcmp.eq.s32.totalorder %v463, 1
    %vm480 = vcmp.eq.s32.totalorder %v464, 1
    %vm481 = vcmp.eq.s32.totalorder %v465, 1
    %vm482 = vcmp.eq.s32.totalorder %v466, 1
    %vm483 = vcmp.eq.s32.totalorder %v467, 1
    %vm484 = vcmp.eq.s32.totalorder %v468, 1
    %vm485 = vcmp.eq.s32.totalorder %v469, 1
    %vm486 = vcmp.eq.s32.totalorder %v470, 1
    %vm487 = vcmp.eq.s32.totalorder %v471, 1
    %vm488 = vcmp.eq.s32.totalorder %v472, 1
    %vm489 = vcmp.eq.s32.totalorder %v473, 1
    %vm490 = vcmp.eq.s32.totalorder %v474, 1
    %vm491 = vcmp.eq.s32.totalorder %v475, 1
    %vm492 = vmpackc.low %vm476, %vm476
    %vm493 = vmpackc.low %vm477, %vm477
    %vm494 = vmpackc.low %vm478, %vm478
    %vm495 = vmpackc.low %vm479, %vm479
    %vm496 = vmpackc.low %vm480, %vm480
    %vm497 = vmpackc.low %vm481, %vm481
    %vm498 = vmpackc.low %vm482, %vm482
    %vm499 = vmpackc.low %vm483, %vm483
    %vm500 = vmpackc.low %vm484, %vm484
    %vm501 = vmpackc.low %vm485, %vm485
    %vm502 = vmpackc.low %vm486, %vm486
    %vm503 = vmpackc.low %vm487, %vm487
    %vm504 = vmpackc.low %vm488, %vm488
    %vm505 = vmpackc.low %vm489, %vm489
    %vm506 = vmpackc.low %vm490, %vm490
    %vm507 = vmpackc.low %vm491, %vm491
    %v508 = vsel %vm492, %v304, 0
    %v509 = vsel %vm493, %v313, 0
    %v510 = vsel %vm494, %v322, 0
    %v511 = vsel %vm495, %v331, 0
    %v512 = vsel %vm496, %v340, 0
    %v513 = vsel %vm497, %v349, 0
    %v514 = vsel %vm498, %v358, 0
    %v515 = vsel %vm499, %v367, 0
    %v516 = vsel %vm500, %v380, 0
    %v517 = vsel %vm501, %v389, 0
    %v518 = vsel %vm502, %v398, 0
    %v519 = vsel %vm503, %v407, 0
    %v520 = vsel %vm504, %v416, 0
    %v521 = vsel %vm505, %v425, 0
    %v522 = vsel %vm506, %v434, 0
    %v523 = vsel %vm507, %v443, 0
    %v524 = vld [vmem:[#allocation2] sm:$0xf]
    %v525 = vld [vmem:[#allocation2 + $0x4] sm:$0xf]
    %v526 = vld [vmem:[#allocation2 + $0x8] sm:$0xf]
    %v527 = vld [vmem:[#allocation2 + $0xc] sm:$0xf]
    %v528 = vld [vmem:[#allocation2 + $0x10] sm:$0xf]
    %v529 = vld [vmem:[#allocation2 + $0x14] sm:$0xf]
    %v530 = vld [vmem:[#allocation2 + $0x18] sm:$0xf]
    %v531 = vld [vmem:[#allocation2 + $0x1c] sm:$0xf]
    %v532 = vld [vmem:[#allocation2 + $0x20] sm:$0xf]
    %v533 = vld [vmem:[#allocation2 + $0x24] sm:$0xf]
    %v534 = vld [vmem:[#allocation2 + $0x28] sm:$0xf]
    %v535 = vld [vmem:[#allocation2 + $0x2c] sm:$0xf]
    %v536 = vld [vmem:[#allocation2 + $0x30] sm:$0xf]
    %v537 = vld [vmem:[#allocation2 + $0x34] sm:$0xf]
    %v538 = vld [vmem:[#allocation2 + $0x38] sm:$0xf]
    %v539 = vld [vmem:[#allocation2 + $0x3c] sm:$0xf]
    %s540 = scalar_lea.vmem [#allocation2], 64
    %v541 = vld [vmem:[%s540] sm:$0xf]
    %v542 = vld [vmem:[%s540 + $0x4] sm:$0xf]
    %v543 = vld [vmem:[%s540 + $0x8] sm:$0xf]
    %v544 = vld [vmem:[%s540 + $0xc] sm:$0xf]
    %v545 = vld [vmem:[%s540 + $0x10] sm:$0xf]
    %v546 = vld [vmem:[%s540 + $0x14] sm:$0xf]
    %v547 = vld [vmem:[%s540 + $0x18] sm:$0xf]
    %v548 = vld [vmem:[%s540 + $0x1c] sm:$0xf]
    %v549 = vld [vmem:[%s540 + $0x20] sm:$0xf]
    %v550 = vld [vmem:[%s540 + $0x24] sm:$0xf]
    %v551 = vld [vmem:[%s540 + $0x28] sm:$0xf]
    %v552 = vld [vmem:[%s540 + $0x2c] sm:$0xf]
    %v553 = vld [vmem:[%s540 + $0x30] sm:$0xf]
    %v554 = vld [vmem:[%s540 + $0x34] sm:$0xf]
    %v555 = vld [vmem:[%s540 + $0x38] sm:$0xf]
    %v556 = vld [vmem:[%s540 + $0x3c] sm:$0xf]
    %v573 = vunpack.c.l.b16 %v272
    %v574 = vunpack.c.l.b16 %v273
    %v575 = vunpack.c.l.b16 %v274
    %v576 = vunpack.c.l.b16 %v275
    %v577 = vunpack.c.l.b16 %v276
    %v578 = vunpack.c.l.b16 %v277
    %v579 = vunpack.c.l.b16 %v278
    %v580 = vunpack.c.l.b16 %v279
    %v581 = vunpack.c.l.b16 %v281
    %v582 = vunpack.c.l.b16 %v282
    %v583 = vunpack.c.l.b16 %v283
    %v584 = vunpack.c.l.b16 %v284
    %v585 = vunpack.c.l.b16 %v285
    %v586 = vunpack.c.l.b16 %v286
    %v587 = vunpack.c.l.b16 %v287
    %v588 = vunpack.c.l.b16 %v288
    %v589 = vpack.c.b16 %v574, %v573
    %v590 = vpack.c.b16 %v576, %v575
    %v591 = vpack.c.b16 %v578, %v577
    %v592 = vpack.c.b16 %v580, %v579
    %v593 = vpack.c.b16 %v582, %v581
    %v594 = vpack.c.b16 %v584, %v583
    %v595 = vpack.c.b16 %v586, %v585
    %v596 = vpack.c.b16 %v588, %v587
    %v621 = vunpack.c.l.b16 %v541
    %v622 = vunpack.c.l.b16 %v542
    %v623 = vunpack.c.l.b16 %v543
    %v624 = vunpack.c.l.b16 %v544
    %v625 = vunpack.c.l.b16 %v545
    %v626 = vunpack.c.l.b16 %v546
    %v627 = vunpack.c.l.b16 %v547
    %v628 = vunpack.c.l.b16 %v548
    %v629 = vunpack.c.l.b16 %v549
    %v630 = vunpack.c.l.b16 %v550
    %v631 = vunpack.c.l.b16 %v551
    %v632 = vunpack.c.l.b16 %v552
    %v633 = vunpack.c.l.b16 %v553
    %v634 = vunpack.c.l.b16 %v554
    %v635 = vunpack.c.l.b16 %v555
    %v636 = vunpack.c.l.b16 %v556
    %v637 = vpack.c.b16 %v622, %v621
    %v638 = vpack.c.b16 %v624, %v623
    %v639 = vpack.c.b16 %v626, %v625
    %v640 = vpack.c.b16 %v628, %v627
    %v641 = vpack.c.b16 %v630, %v629
    %v642 = vpack.c.b16 %v632, %v631
    %v643 = vpack.c.b16 %v634, %v633
    %v644 = vpack.c.b16 %v636, %v635
    %653 = vmatpush.bf16.msra.mxu0 %v644
    %654 = vmatpush.bf16.msra.mxu0 %v643
    %655 = vmatpush.bf16.msra.mxu0 %v642
    %656 = vmatpush.bf16.msra.mxu0 %v641
    %657 = vmatpush.bf16.msra.mxu0 %v640
    %658 = vmatpush.bf16.msra.mxu0 %v639
    %659 = vmatpush.bf16.msra.mxu0 %v638
    %660 = vmatpush.bf16.msra.mxu0 %v637
    %661 = vmatmul.bf16.gmra.mxu0 %v589
    %v662 = vpop.f32.mrf.mxu0
    %v663 = vadd.f32 0.0, %v662
    %v664 = vpop.f32.mrf.mxu0
    %v665 = vadd.f32 0.0, %v664
    %666 = vmatmul.bf16.gmra.mxu0 %v590
    %v667 = vpop.f32.mrf.mxu0
    %v668 = vadd.f32 0.0, %v667
    %v669 = vpop.f32.mrf.mxu0
    %v670 = vadd.f32 0.0, %v669
    %671 = vmatmul.bf16.gmra.mxu0 %v591
    %v672 = vpop.f32.mrf.mxu0
    %v673 = vadd.f32 0.0, %v672
    %v674 = vpop.f32.mrf.mxu0
    %v675 = vadd.f32 0.0, %v674
    %676 = vmatmul.bf16.gmra.mxu0 %v592
    %v677 = vpop.f32.mrf.mxu0
    %v678 = vadd.f32 0.0, %v677
    %v679 = vpop.f32.mrf.mxu0
    %v680 = vadd.f32 0.0, %v679
    %681 = vmatmul.bf16.gmra.mxu0 %v593
    %v682 = vpop.f32.mrf.mxu0
    %v683 = vadd.f32 0.0, %v682
    %v684 = vpop.f32.mrf.mxu0
    %v685 = vadd.f32 0.0, %v684
    %686 = vmatmul.bf16.gmra.mxu0 %v594
    %v687 = vpop.f32.mrf.mxu0
    %v688 = vadd.f32 0.0, %v687
    %v689 = vpop.f32.mrf.mxu0
    %v690 = vadd.f32 0.0, %v689
    %691 = vmatmul.bf16.gmra.mxu0 %v595
    %v692 = vpop.f32.mrf.mxu0
    %v693 = vadd.f32 0.0, %v692
    %v694 = vpop.f32.mrf.mxu0
    %v695 = vadd.f32 0.0, %v694
    %696 = vmatmul.bf16.gmra.mxu0 %v596
    %v697 = vpop.f32.mrf.mxu0
    %v698 = vadd.f32 0.0, %v697
    %v699 = vpop.f32.mrf.mxu0
    %v700 = vadd.f32 0.0, %v699
    %701 = vdwg.mxu0
    %v718 = vunpack.c.l.b16 %v508
    %v719 = vunpack.c.l.b16 %v509
    %v720 = vunpack.c.l.b16 %v510
    %v721 = vunpack.c.l.b16 %v511
    %v722 = vunpack.c.l.b16 %v512
    %v723 = vunpack.c.l.b16 %v513
    %v724 = vunpack.c.l.b16 %v514
    %v725 = vunpack.c.l.b16 %v515
    %v726 = vunpack.c.l.b16 %v516
    %v727 = vunpack.c.l.b16 %v517
    %v728 = vunpack.c.l.b16 %v518
    %v729 = vunpack.c.l.b16 %v519
    %v730 = vunpack.c.l.b16 %v520
    %v731 = vunpack.c.l.b16 %v521
    %v732 = vunpack.c.l.b16 %v522
    %v733 = vunpack.c.l.b16 %v523
    %v734 = vpack.c.b16 %v719, %v718
    %v735 = vpack.c.b16 %v721, %v720
    %v736 = vpack.c.b16 %v723, %v722
    %v737 = vpack.c.b16 %v725, %v724
    %v738 = vpack.c.b16 %v727, %v726
    %v739 = vpack.c.b16 %v729, %v728
    %v740 = vpack.c.b16 %v731, %v730
    %v741 = vpack.c.b16 %v733, %v732
    %v766 = vunpack.c.l.b16 %v524
    %v767 = vunpack.c.l.b16 %v525
    %v768 = vunpack.c.l.b16 %v526
    %v769 = vunpack.c.l.b16 %v527
    %v770 = vunpack.c.l.b16 %v528
    %v771 = vunpack.c.l.b16 %v529
    %v772 = vunpack.c.l.b16 %v530
    %v773 = vunpack.c.l.b16 %v531
    %v774 = vunpack.c.l.b16 %v532
    %v775 = vunpack.c.l.b16 %v533
    %v776 = vunpack.c.l.b16 %v534
    %v777 = vunpack.c.l.b16 %v535
    %v778 = vunpack.c.l.b16 %v536
    %v779 = vunpack.c.l.b16 %v537
    %v780 = vunpack.c.l.b16 %v538
    %v781 = vunpack.c.l.b16 %v539
    %v782 = vpack.c.b16 %v767, %v766
    %v783 = vpack.c.b16 %v769, %v768
    %v784 = vpack.c.b16 %v771, %v770
    %v785 = vpack.c.b16 %v773, %v772
    %v786 = vpack.c.b16 %v775, %v774
    %v787 = vpack.c.b16 %v777, %v776
    %v788 = vpack.c.b16 %v779, %v778
    %v789 = vpack.c.b16 %v781, %v780
    %798 = vmatpush.bf16.msra.mxu0 %v789
    %799 = vmatpush.bf16.msra.mxu0 %v788
    %800 = vmatpush.bf16.msra.mxu0 %v787
    %801 = vmatpush.bf16.msra.mxu0 %v786
    %802 = vmatpush.bf16.msra.mxu0 %v785
    %803 = vmatpush.bf16.msra.mxu0 %v784
    %804 = vmatpush.bf16.msra.mxu0 %v783
    %805 = vmatpush.bf16.msra.mxu0 %v782
    %806 = vmatmul.bf16.gmra.mxu0 %v734
    %v807 = vpop.f32.mrf.mxu0
    %v808 = vadd.f32 %v663, %v807
    %v809 = vpop.f32.mrf.mxu0
    %v810 = vadd.f32 %v665, %v809
    %811 = vmatmul.bf16.gmra.mxu0 %v735
    %v812 = vpop.f32.mrf.mxu0
    %v813 = vadd.f32 %v668, %v812
    %v814 = vpop.f32.mrf.mxu0
    %v815 = vadd.f32 %v670, %v814
    %816 = vmatmul.bf16.gmra.mxu0 %v736
    %v817 = vpop.f32.mrf.mxu0
    %v818 = vadd.f32 %v673, %v817
    %v819 = vpop.f32.mrf.mxu0
    %v820 = vadd.f32 %v675, %v819
    %821 = vmatmul.bf16.gmra.mxu0 %v737
    %v822 = vpop.f32.mrf.mxu0
    %v823 = vadd.f32 %v678, %v822
    %v824 = vpop.f32.mrf.mxu0
    %v825 = vadd.f32 %v680, %v824
    %826 = vmatmul.bf16.gmra.mxu0 %v738
    %v827 = vpop.f32.mrf.mxu0
    %v828 = vadd.f32 %v683, %v827
    %v829 = vpop.f32.mrf.mxu0
    %v830 = vadd.f32 %v685, %v829
    %831 = vmatmul.bf16.gmra.mxu0 %v739
    %v832 = vpop.f32.mrf.mxu0
    %v833 = vadd.f32 %v688, %v832
    %v834 = vpop.f32.mrf.mxu0
    %v835 = vadd.f32 %v690, %v834
    %836 = vmatmul.bf16.gmra.mxu0 %v740
    %v837 = vpop.f32.mrf.mxu0
    %v838 = vadd.f32 %v693, %v837
    %v839 = vpop.f32.mrf.mxu0
    %v840 = vadd.f32 %v695, %v839
    %841 = vmatmul.bf16.gmra.mxu0 %v741
    %v842 = vpop.f32.mrf.mxu0
    %v843 = vadd.f32 %v698, %v842
    %v844 = vpop.f32.mrf.mxu0
    %v845 = vadd.f32 %v700, %v844
    %846 = vdwg.mxu0
    %v847 = vld [vmem:[%s0 + $0x4] sm:$0xf]
    %v848 = vld [vmem:[%s0 + $0x8] sm:$0xf]
    %v849 = vld [vmem:[%s0 + $0xc] sm:$0xf]
    %v850 = vld [vmem:[%s0 + $0x10] sm:$0xf]
    %v851 = vld [vmem:[%s0 + $0x14] sm:$0xf]
    %v852 = vld [vmem:[%s0 + $0x18] sm:$0xf]
    %v853 = vld [vmem:[%s0 + $0x1c] sm:$0xf]
    %v854 = vld [vmem:[%s0 + $0x20] sm:$0xf]
    %v855 = vld [vmem:[%s0 + $0x24] sm:$0x1]
    %v856 = vld [vmem:[%s0 + $0x34] sm:$0xf]
    %v857 = vld [vmem:[%s0 + $0x38] sm:$0xf]
    %v858 = vld [vmem:[%s0 + $0x3c] sm:$0xf]
    %v859 = vld [vmem:[%s0 + $0x40] sm:$0xf]
    %v860 = vld [vmem:[%s0 + $0x44] sm:$0xf]
    %v861 = vld [vmem:[%s0 + $0x48] sm:$0xf]
    %v862 = vld [vmem:[%s0 + $0x4c] sm:$0xf]
    %v863 = vld [vmem:[%s0 + $0x50] sm:$0xf]
    %v864 = vld [vmem:[%s0 + $0x54] sm:$0x1]
    %vm865 = vsmask.f32 3328
    %vm866 = vsmask.f32 7440
    %vm867 = vmor %vm865, %vm866
    %v869 = vshrl.u32 %v847, 16
    %v871 = vrot.slane %v869, 4
    %v872 = vshll.u32 %v847, 16
    %v874 = vrot.slane %v872, 5
    %v875 = vor.u32 %v871, %v874
    %v876 = vrot.slane %v875, 4
    %v878 = vshll.u32 %v848, 16
    %v880 = vrot.slane %v878, 5
    %v881 = vsel %vm867, %v876, %v880
    %v882 = vshrl.u32 %v848, 16
    %v884 = vrot.slane %v882, 4
    %v885 = vor.u32 %v884, %v880
    %v886 = vrot.slane %v885, 4
    %v888 = vshll.u32 %v849, 16
    %v890 = vrot.slane %v888, 5
    %v891 = vsel %vm867, %v886, %v890
    %v892 = vshrl.u32 %v849, 16
    %v894 = vrot.slane %v892, 4
    %v895 = vor.u32 %v894, %v890
    %v896 = vrot.slane %v895, 4
    %v898 = vshll.u32 %v850, 16
    %v900 = vrot.slane %v898, 5
    %v901 = vsel %vm867, %v896, %v900
    %v902 = vshrl.u32 %v850, 16
    %v904 = vrot.slane %v902, 4
    %v905 = vor.u32 %v904, %v900
    %v906 = vrot.slane %v905, 4
    %v908 = vshll.u32 %v851, 16
    %v910 = vrot.slane %v908, 5
    %v911 = vsel %vm867, %v906, %v910
    %v912 = vshrl.u32 %v851, 16
    %v914 = vrot.slane %v912, 4
    %v915 = vor.u32 %v914, %v910
    %v916 = vrot.slane %v915, 4
    %v918 = vshll.u32 %v852, 16
    %v920 = vrot.slane %v918, 5
    %v921 = vsel %vm867, %v916, %v920
    %v922 = vshrl.u32 %v852, 16
    %v924 = vrot.slane %v922, 4
    %v925 = vor.u32 %v924, %v920
    %v926 = vrot.slane %v925, 4
    %v928 = vshll.u32 %v853, 16
    %v930 = vrot.slane %v928, 5
    %v931 = vsel %vm867, %v926, %v930
    %v932 = vshrl.u32 %v853, 16
    %v934 = vrot.slane %v932, 4
    %v935 = vor.u32 %v934, %v930
    %v936 = vrot.slane %v935, 4
    %v938 = vshll.u32 %v854, 16
    %v940 = vrot.slane %v938, 5
    %v941 = vsel %vm867, %v936, %v940
    %v942 = vshrl.u32 %v854, 16
    %v944 = vrot.slane %v942, 4
    %v945 = vor.u32 %v944, %v940
    %v946 = vrot.slane %v945, 4
    %v948 = vshll.u32 %v855, 16
    %v950 = vrot.slane %v948, 5
    %v951 = vsel %vm867, %v946, %v950
    %v953 = vshrl.u32 %v856, 16
    %v955 = vrot.slane %v953, 4
    %v956 = vshll.u32 %v856, 16
    %v958 = vrot.slane %v956, 5
    %v959 = vor.u32 %v955, %v958
    %v960 = vrot.slane %v959, 4
    %v962 = vshll.u32 %v857, 16
    %v964 = vrot.slane %v962, 5
    %v965 = vsel %vm867, %v960, %v964
    %v966 = vshrl.u32 %v857, 16
    %v968 = vrot.slane %v966, 4
    %v969 = vor.u32 %v968, %v964
    %v970 = vrot.slane %v969, 4
    %v972 = vshll.u32 %v858, 16
    %v974 = vrot.slane %v972, 5
    %v975 = vsel %vm867, %v970, %v974
    %v976 = vshrl.u32 %v858, 16
    %v978 = vrot.slane %v976, 4
    %v979 = vor.u32 %v978, %v974
    %v980 = vrot.slane %v979, 4
    %v982 = vshll.u32 %v859, 16
    %v984 = vrot.slane %v982, 5
    %v985 = vsel %vm867, %v980, %v984
    %v986 = vshrl.u32 %v859, 16
    %v988 = vrot.slane %v986, 4
    %v989 = vor.u32 %v988, %v984
    %v990 = vrot.slane %v989, 4
    %v992 = vshll.u32 %v860, 16
    %v994 = vrot.slane %v992, 5
    %v995 = vsel %vm867, %v990, %v994
    %v996 = vshrl.u32 %v860, 16
    %v998 = vrot.slane %v996, 4
    %v999 = vor.u32 %v998, %v994
    %v1000 = vrot.slane %v999, 4
    %v1002 = vshll.u32 %v861, 16
    %v1004 = vrot.slane %v1002, 5
    %v1005 = vsel %vm867, %v1000, %v1004
    %v1006 = vshrl.u32 %v861, 16
    %v1008 = vrot.slane %v1006, 4
    %v1009 = vor.u32 %v1008, %v1004
    %v1010 = vrot.slane %v1009, 4
    %v1012 = vshll.u32 %v862, 16
    %v1014 = vrot.slane %v1012, 5
    %v1015 = vsel %vm867, %v1010, %v1014
    %v1016 = vshrl.u32 %v862, 16
    %v1018 = vrot.slane %v1016, 4
    %v1019 = vor.u32 %v1018, %v1014
    %v1020 = vrot.slane %v1019, 4
    %v1022 = vshll.u32 %v863, 16
    %v1024 = vrot.slane %v1022, 5
    %v1025 = vsel %vm867, %v1020, %v1024
    %v1026 = vshrl.u32 %v863, 16
    %v1028 = vrot.slane %v1026, 4
    %v1029 = vor.u32 %v1028, %v1024
    %v1030 = vrot.slane %v1029, 4
    %v1032 = vshll.u32 %v864, 16
    %v1034 = vrot.slane %v1032, 5
    %v1035 = vsel %vm867, %v1030, %v1034
    %v1052 = vsel %vm255, 1, 0
    %v1053 = vsel %vm256, 1, 0
    %v1054 = vsel %vm257, 1, 0
    %v1055 = vsel %vm258, 1, 0
    %v1056 = vsel %vm259, 1, 0
    %v1057 = vsel %vm260, 1, 0
    %v1058 = vsel %vm261, 1, 0
    %v1059 = vsel %vm262, 1, 0
    %v1060 = vsel %vm263, 1, 0
    %v1061 = vsel %vm264, 1, 0
    %v1062 = vsel %vm265, 1, 0
    %v1063 = vsel %vm266, 1, 0
    %v1064 = vsel %vm267, 1, 0
    %v1065 = vsel %vm268, 1, 0
    %v1066 = vsel %vm269, 1, 0
    %v1067 = vsel %vm270, 1, 0
    %vm1068 = vcmp.eq.s32.totalorder %v1052, 1
    %vm1069 = vcmp.eq.s32.totalorder %v1053, 1
    %vm1070 = vcmp.eq.s32.totalorder %v1054, 1
    %vm1071 = vcmp.eq.s32.totalorder %v1055, 1
    %vm1072 = vcmp.eq.s32.totalorder %v1056, 1
    %vm1073 = vcmp.eq.s32.totalorder %v1057, 1
    %vm1074 = vcmp.eq.s32.totalorder %v1058, 1
    %vm1075 = vcmp.eq.s32.totalorder %v1059, 1
    %vm1076 = vcmp.eq.s32.totalorder %v1060, 1
    %vm1077 = vcmp.eq.s32.totalorder %v1061, 1
    %vm1078 = vcmp.eq.s32.totalorder %v1062, 1
    %vm1079 = vcmp.eq.s32.totalorder %v1063, 1
    %vm1080 = vcmp.eq.s32.totalorder %v1064, 1
    %vm1081 = vcmp.eq.s32.totalorder %v1065, 1
    %vm1082 = vcmp.eq.s32.totalorder %v1066, 1
    %vm1083 = vcmp.eq.s32.totalorder %v1067, 1
    %vm1084 = vmpackc.low %vm1068, %vm1068
    %vm1085 = vmpackc.low %vm1069, %vm1069
    %vm1086 = vmpackc.low %vm1070, %vm1070
    %vm1087 = vmpackc.low %vm1071, %vm1071
    %vm1088 = vmpackc.low %vm1072, %vm1072
    %vm1089 = vmpackc.low %vm1073, %vm1073
    %vm1090 = vmpackc.low %vm1074, %vm1074
    %vm1091 = vmpackc.low %vm1075, %vm1075
    %vm1092 = vmpackc.low %vm1076, %vm1076
    %vm1093 = vmpackc.low %vm1077, %vm1077
    %vm1094 = vmpackc.low %vm1078, %vm1078
    %vm1095 = vmpackc.low %vm1079, %vm1079
    %vm1096 = vmpackc.low %vm1080, %vm1080
    %vm1097 = vmpackc.low %vm1081, %vm1081
    %vm1098 = vmpackc.low %vm1082, %vm1082
    %vm1099 = vmpackc.low %vm1083, %vm1083
    %v1100 = vsel %vm1084, %v881, 0
    %v1101 = vsel %vm1085, %v891, 0
    %v1102 = vsel %vm1086, %v901, 0
    %v1103 = vsel %vm1087, %v911, 0
    %v1104 = vsel %vm1088, %v921, 0
    %v1105 = vsel %vm1089, %v931, 0
    %v1106 = vsel %vm1090, %v941, 0
    %v1107 = vsel %vm1091, %v951, 0
    %v1108 = vsel %vm1092, %v965, 0
    %v1109 = vsel %vm1093, %v975, 0
    %v1110 = vsel %vm1094, %v985, 0
    %v1111 = vsel %vm1095, %v995, 0
    %v1112 = vsel %vm1096, %v1005, 0
    %v1113 = vsel %vm1097, %v1015, 0
    %v1114 = vsel %vm1098, %v1025, 0
    %v1115 = vsel %vm1099, %v1035, 0
    %s1116 = scalar_lea.vmem [#allocation2], 128
    %v1117 = vld [vmem:[%s1116] sm:$0xf]
    %v1118 = vld [vmem:[%s1116 + $0x4] sm:$0xf]
    %v1119 = vld [vmem:[%s1116 + $0x8] sm:$0xf]
    %v1120 = vld [vmem:[%s1116 + $0xc] sm:$0xf]
    %v1121 = vld [vmem:[%s1116 + $0x10] sm:$0xf]
    %v1122 = vld [vmem:[%s1116 + $0x14] sm:$0xf]
    %v1123 = vld [vmem:[%s1116 + $0x18] sm:$0xf]
    %v1124 = vld [vmem:[%s1116 + $0x1c] sm:$0xf]
    %v1125 = vld [vmem:[%s1116 + $0x20] sm:$0xf]
    %v1126 = vld [vmem:[%s1116 + $0x24] sm:$0xf]
    %v1127 = vld [vmem:[%s1116 + $0x28] sm:$0xf]
    %v1128 = vld [vmem:[%s1116 + $0x2c] sm:$0xf]
    %v1129 = vld [vmem:[%s1116 + $0x30] sm:$0xf]
    %v1130 = vld [vmem:[%s1116 + $0x34] sm:$0xf]
    %v1131 = vld [vmem:[%s1116 + $0x38] sm:$0xf]
    %v1132 = vld [vmem:[%s1116 + $0x3c] sm:$0xf]
    %v1149 = vunpack.c.l.b16 %v1100
    %v1150 = vunpack.c.l.b16 %v1101
    %v1151 = vunpack.c.l.b16 %v1102
    %v1152 = vunpack.c.l.b16 %v1103
    %v1153 = vunpack.c.l.b16 %v1104
    %v1154 = vunpack.c.l.b16 %v1105
    %v1155 = vunpack.c.l.b16 %v1106
    %v1156 = vunpack.c.l.b16 %v1107
    %v1157 = vunpack.c.l.b16 %v1108
    %v1158 = vunpack.c.l.b16 %v1109
    %v1159 = vunpack.c.l.b16 %v1110
    %v1160 = vunpack.c.l.b16 %v1111
    %v1161 = vunpack.c.l.b16 %v1112
    %v1162 = vunpack.c.l.b16 %v1113
    %v1163 = vunpack.c.l.b16 %v1114
    %v1164 = vunpack.c.l.b16 %v1115
    %v1165 = vpack.c.b16 %v1150, %v1149
    %v1166 = vpack.c.b16 %v1152, %v1151
    %v1167 = vpack.c.b16 %v1154, %v1153
    %v1168 = vpack.c.b16 %v1156, %v1155
    %v1169 = vpack.c.b16 %v1158, %v1157
    %v1170 = vpack.c.b16 %v1160, %v1159
    %v1171 = vpack.c.b16 %v1162, %v1161
    %v1172 = vpack.c.b16 %v1164, %v1163
    %v1197 = vunpack.c.l.b16 %v1117
    %v1198 = vunpack.c.l.b16 %v1118
    %v1199 = vunpack.c.l.b16 %v1119
    %v1200 = vunpack.c.l.b16 %v1120
    %v1201 = vunpack.c.l.b16 %v1121
    %v1202 = vunpack.c.l.b16 %v1122
    %v1203 = vunpack.c.l.b16 %v1123
    %v1204 = vunpack.c.l.b16 %v1124
    %v1205 = vunpack.c.l.b16 %v1125
    %v1206 = vunpack.c.l.b16 %v1126
    %v1207 = vunpack.c.l.b16 %v1127
    %v1208 = vunpack.c.l.b16 %v1128
    %v1209 = vunpack.c.l.b16 %v1129
    %v1210 = vunpack.c.l.b16 %v1130
    %v1211 = vunpack.c.l.b16 %v1131
    %v1212 = vunpack.c.l.b16 %v1132
    %v1213 = vpack.c.b16 %v1198, %v1197
    %v1214 = vpack.c.b16 %v1200, %v1199
    %v1215 = vpack.c.b16 %v1202, %v1201
    %v1216 = vpack.c.b16 %v1204, %v1203
    %v1217 = vpack.c.b16 %v1206, %v1205
    %v1218 = vpack.c.b16 %v1208, %v1207
    %v1219 = vpack.c.b16 %v1210, %v1209
    %v1220 = vpack.c.b16 %v1212, %v1211
    %1229 = vmatpush.bf16.msra.mxu0 %v1220
    %1230 = vmatpush.bf16.msra.mxu0 %v1219
    %1231 = vmatpush.bf16.msra.mxu0 %v1218
    %1232 = vmatpush.bf16.msra.mxu0 %v1217
    %1233 = vmatpush.bf16.msra.mxu0 %v1216
    %1234 = vmatpush.bf16.msra.mxu0 %v1215
    %1235 = vmatpush.bf16.msra.mxu0 %v1214
    %1236 = vmatpush.bf16.msra.mxu0 %v1213
    %1237 = vmatmul.bf16.gmra.mxu0 %v1165
    %v1238 = vpop.f32.mrf.mxu0
    %v1239 = vadd.f32 0.0, %v1238
    %v1240 = vpop.f32.mrf.mxu0
    %v1241 = vadd.f32 0.0, %v1240
    %1242 = vmatmul.bf16.gmra.mxu0 %v1166
    %v1243 = vpop.f32.mrf.mxu0
    %v1244 = vadd.f32 0.0, %v1243
    %v1245 = vpop.f32.mrf.mxu0
    %v1246 = vadd.f32 0.0, %v1245
    %1247 = vmatmul.bf16.gmra.mxu0 %v1167
    %v1248 = vpop.f32.mrf.mxu0
    %v1249 = vadd.f32 0.0, %v1248
    %v1250 = vpop.f32.mrf.mxu0
    %v1251 = vadd.f32 0.0, %v1250
    %1252 = vmatmul.bf16.gmra.mxu0 %v1168
    %v1253 = vpop.f32.mrf.mxu0
    %v1254 = vadd.f32 0.0, %v1253
    %v1255 = vpop.f32.mrf.mxu0
    %v1256 = vadd.f32 0.0, %v1255
    %1257 = vmatmul.bf16.gmra.mxu0 %v1169
    %v1258 = vpop.f32.mrf.mxu0
    %v1259 = vadd.f32 0.0, %v1258
    %v1260 = vpop.f32.mrf.mxu0
    %v1261 = vadd.f32 0.0, %v1260
    %1262 = vmatmul.bf16.gmra.mxu0 %v1170
    %v1263 = vpop.f32.mrf.mxu0
    %v1264 = vadd.f32 0.0, %v1263
    %v1265 = vpop.f32.mrf.mxu0
    %v1266 = vadd.f32 0.0, %v1265
    %1267 = vmatmul.bf16.gmra.mxu0 %v1171
    %v1268 = vpop.f32.mrf.mxu0
    %v1269 = vadd.f32 0.0, %v1268
    %v1270 = vpop.f32.mrf.mxu0
    %v1271 = vadd.f32 0.0, %v1270
    %1272 = vmatmul.bf16.gmra.mxu0 %v1172
    %v1273 = vpop.f32.mrf.mxu0
    %v1274 = vadd.f32 0.0, %v1273
    %v1275 = vpop.f32.mrf.mxu0
    %v1276 = vadd.f32 0.0, %v1275
    %1277 = vdwg.mxu0
    %v1278 = vadd.f32 %v808, %v1239
    %v1279 = vadd.f32 %v810, %v1241
    %v1280 = vadd.f32 %v813, %v1244
    %v1281 = vadd.f32 %v815, %v1246
    %v1282 = vadd.f32 %v818, %v1249
    %v1283 = vadd.f32 %v820, %v1251
    %v1284 = vadd.f32 %v823, %v1254
    %v1285 = vadd.f32 %v825, %v1256
    %v1286 = vadd.f32 %v828, %v1259
    %v1287 = vadd.f32 %v830, %v1261
    %v1288 = vadd.f32 %v833, %v1264
    %v1289 = vadd.f32 %v835, %v1266
    %v1290 = vadd.f32 %v838, %v1269
    %v1291 = vadd.f32 %v840, %v1271
    %v1292 = vadd.f32 %v843, %v1274
    %v1293 = vadd.f32 %v845, %v1276
    %v1294 = vld [vmem:[%s0 + $0x4] sm:$0x8]
    %v1295 = vld [vmem:[%s0 + $0x24] sm:$0xf]
    %v1296 = vld [vmem:[%s0 + $0x34] sm:$0x8]
    %v1297 = vld [vmem:[%s0 + $0x54] sm:$0xf]
    %v1299 = vshrl.u32 %v1294, 16
    %v1301 = vrot.slane %v1299, 7
    %v1302 = vrot.slane %v1301, 4
    %v1303 = vrot.slane %v882, 7
    %v1304 = vor.u32 %v1303, %v878
    %v1305 = vsel %vm291, %v1302, %v1304
    %v1306 = vrot.slane %v1303, 4
    %v1307 = vrot.slane %v892, 7
    %v1308 = vor.u32 %v1307, %v888
    %v1309 = vsel %vm291, %v1306, %v1308
    %v1310 = vrot.slane %v1307, 4
    %v1311 = vrot.slane %v902, 7
    %v1312 = vor.u32 %v1311, %v898
    %v1313 = vsel %vm291, %v1310, %v1312
    %v1314 = vrot.slane %v1311, 4
    %v1315 = vrot.slane %v912, 7
    %v1316 = vor.u32 %v1315, %v908
    %v1317 = vsel %vm291, %v1314, %v1316
    %v1318 = vrot.slane %v1315, 4
    %v1319 = vrot.slane %v922, 7
    %v1320 = vor.u32 %v1319, %v918
    %v1321 = vsel %vm291, %v1318, %v1320
    %v1322 = vrot.slane %v1319, 4
    %v1323 = vrot.slane %v932, 7
    %v1324 = vor.u32 %v1323, %v928
    %v1325 = vsel %vm291, %v1322, %v1324
    %v1326 = vrot.slane %v1323, 4
    %v1327 = vrot.slane %v942, 7
    %v1328 = vor.u32 %v1327, %v938
    %v1329 = vsel %vm291, %v1326, %v1328
    %v1330 = vrot.slane %v1327, 4
    %v1332 = vshrl.u32 %v1295, 16
    %v1334 = vrot.slane %v1332, 7
    %v1335 = vshll.u32 %v1295, 16
    %v1337 = vor.u32 %v1334, %v1335
    %v1338 = vsel %vm291, %v1330, %v1337
    %v1340 = vshrl.u32 %v1296, 16
    %v1342 = vrot.slane %v1340, 7
    %v1343 = vrot.slane %v1342, 4
    %v1344 = vrot.slane %v966, 7
    %v1345 = vor.u32 %v1344, %v962
    %v1346 = vsel %vm291, %v1343, %v1345
    %v1347 = vrot.slane %v1344, 4
    %v1348 = vrot.slane %v976, 7
    %v1349 = vor.u32 %v1348, %v972
    %v1350 = vsel %vm291, %v1347, %v1349
    %v1351 = vrot.slane %v1348, 4
    %v1352 = vrot.slane %v986, 7
    %v1353 = vor.u32 %v1352, %v982
    %v1354 = vsel %vm291, %v1351, %v1353
    %v1355 = vrot.slane %v1352, 4
    %v1356 = vrot.slane %v996, 7
    %v1357 = vor.u32 %v1356, %v992
    %v1358 = vsel %vm291, %v1355, %v1357
    %v1359 = vrot.slane %v1356, 4
    %v1360 = vrot.slane %v1006, 7
    %v1361 = vor.u32 %v1360, %v1002
    %v1362 = vsel %vm291, %v1359, %v1361
    %v1363 = vrot.slane %v1360, 4
    %v1364 = vrot.slane %v1016, 7
    %v1365 = vor.u32 %v1364, %v1012
    %v1366 = vsel %vm291, %v1363, %v1365
    %v1367 = vrot.slane %v1364, 4
    %v1368 = vrot.slane %v1026, 7
    %v1369 = vor.u32 %v1368, %v1022
    %v1370 = vsel %vm291, %v1367, %v1369
    %v1371 = vrot.slane %v1368, 4
    %v1373 = vshrl.u32 %v1297, 16
    %v1375 = vrot.slane %v1373, 7
    %v1376 = vshll.u32 %v1297, 16
    %v1378 = vor.u32 %v1375, %v1376
    %v1379 = vsel %vm291, %v1371, %v1378
    %v1396 = vsel %vm492, %v1305, 0
    %v1397 = vsel %vm493, %v1309, 0
    %v1398 = vsel %vm494, %v1313, 0
    %v1399 = vsel %vm495, %v1317, 0
    %v1400 = vsel %vm496, %v1321, 0
    %v1401 = vsel %vm497, %v1325, 0
    %v1402 = vsel %vm498, %v1329, 0
    %v1403 = vsel %vm499, %v1338, 0
    %v1404 = vsel %vm500, %v1346, 0
    %v1405 = vsel %vm501, %v1350, 0
    %v1406 = vsel %vm502, %v1354, 0
    %v1407 = vsel %vm503, %v1358, 0
    %v1408 = vsel %vm504, %v1362, 0
    %v1409 = vsel %vm505, %v1366, 0
    %v1410 = vsel %vm506, %v1370, 0
    %v1411 = vsel %vm507, %v1379, 0
    %s1412 = scalar_lea.vmem [#allocation2], 192
    %v1413 = vld [vmem:[%s1412] sm:$0xf]
    %v1414 = vld [vmem:[%s1412 + $0x4] sm:$0xf]
    %v1415 = vld [vmem:[%s1412 + $0x8] sm:$0xf]
    %v1416 = vld [vmem:[%s1412 + $0xc] sm:$0xf]
    %v1417 = vld [vmem:[%s1412 + $0x10] sm:$0xf]
    %v1418 = vld [vmem:[%s1412 + $0x14] sm:$0xf]
    %v1419 = vld [vmem:[%s1412 + $0x18] sm:$0xf]
    %v1420 = vld [vmem:[%s1412 + $0x1c] sm:$0xf]
    %v1421 = vld [vmem:[%s1412 + $0x20] sm:$0xf]
    %v1422 = vld [vmem:[%s1412 + $0x24] sm:$0xf]
    %v1423 = vld [vmem:[%s1412 + $0x28] sm:$0xf]
    %v1424 = vld [vmem:[%s1412 + $0x2c] sm:$0xf]
    %v1425 = vld [vmem:[%s1412 + $0x30] sm:$0xf]
    %v1426 = vld [vmem:[%s1412 + $0x34] sm:$0xf]
    %v1427 = vld [vmem:[%s1412 + $0x38] sm:$0xf]
    %v1428 = vld [vmem:[%s1412 + $0x3c] sm:$0xf]
    %v1445 = vunpack.c.l.b16 %v1396
    %v1446 = vunpack.c.l.b16 %v1397
    %v1447 = vunpack.c.l.b16 %v1398
    %v1448 = vunpack.c.l.b16 %v1399
    %v1449 = vunpack.c.l.b16 %v1400
    %v1450 = vunpack.c.l.b16 %v1401
    %v1451 = vunpack.c.l.b16 %v1402
    %v1452 = vunpack.c.l.b16 %v1403
    %v1453 = vunpack.c.l.b16 %v1404
    %v1454 = vunpack.c.l.b16 %v1405
    %v1455 = vunpack.c.l.b16 %v1406
    %v1456 = vunpack.c.l.b16 %v1407
    %v1457 = vunpack.c.l.b16 %v1408
    %v1458 = vunpack.c.l.b16 %v1409
    %v1459 = vunpack.c.l.b16 %v1410
    %v1460 = vunpack.c.l.b16 %v1411
    %v1461 = vpack.c.b16 %v1446, %v1445
    %v1462 = vpack.c.b16 %v1448, %v1447
    %v1463 = vpack.c.b16 %v1450, %v1449
    %v1464 = vpack.c.b16 %v1452, %v1451
    %v1465 = vpack.c.b16 %v1454, %v1453
    %v1466 = vpack.c.b16 %v1456, %v1455
    %v1467 = vpack.c.b16 %v1458, %v1457
    %v1468 = vpack.c.b16 %v1460, %v1459
    %v1493 = vunpack.c.l.b16 %v1413
    %v1494 = vunpack.c.l.b16 %v1414
    %v1495 = vunpack.c.l.b16 %v1415
    %v1496 = vunpack.c.l.b16 %v1416
    %v1497 = vunpack.c.l.b16 %v1417
    %v1498 = vunpack.c.l.b16 %v1418
    %v1499 = vunpack.c.l.b16 %v1419
    %v1500 = vunpack.c.l.b16 %v1420
    %v1501 = vunpack.c.l.b16 %v1421
    %v1502 = vunpack.c.l.b16 %v1422
    %v1503 = vunpack.c.l.b16 %v1423
    %v1504 = vunpack.c.l.b16 %v1424
    %v1505 = vunpack.c.l.b16 %v1425
    %v1506 = vunpack.c.l.b16 %v1426
    %v1507 = vunpack.c.l.b16 %v1427
    %v1508 = vunpack.c.l.b16 %v1428
    %v1509 = vpack.c.b16 %v1494, %v1493
    %v1510 = vpack.c.b16 %v1496, %v1495
    %v1511 = vpack.c.b16 %v1498, %v1497
    %v1512 = vpack.c.b16 %v1500, %v1499
    %v1513 = vpack.c.b16 %v1502, %v1501
    %v1514 = vpack.c.b16 %v1504, %v1503
    %v1515 = vpack.c.b16 %v1506, %v1505
    %v1516 = vpack.c.b16 %v1508, %v1507
    %1525 = vmatpush.bf16.msra.mxu0 %v1516
    %1526 = vmatpush.bf16.msra.mxu0 %v1515
    %1527 = vmatpush.bf16.msra.mxu0 %v1514
    %1528 = vmatpush.bf16.msra.mxu0 %v1513
    %1529 = vmatpush.bf16.msra.mxu0 %v1512
    %1530 = vmatpush.bf16.msra.mxu0 %v1511
    %1531 = vmatpush.bf16.msra.mxu0 %v1510
    %1532 = vmatpush.bf16.msra.mxu0 %v1509
    %1533 = vmatmul.bf16.gmra.mxu0 %v1461
    %v1534 = vpop.f32.mrf.mxu0
    %v1535 = vadd.f32 0.0, %v1534
    %v1536 = vpop.f32.mrf.mxu0
    %v1537 = vadd.f32 0.0, %v1536
    %1538 = vmatmul.bf16.gmra.mxu0 %v1462
    %v1539 = vpop.f32.mrf.mxu0
    %v1540 = vadd.f32 0.0, %v1539
    %v1541 = vpop.f32.mrf.mxu0
    %v1542 = vadd.f32 0.0, %v1541
    %1543 = vmatmul.bf16.gmra.mxu0 %v1463
    %v1544 = vpop.f32.mrf.mxu0
    %v1545 = vadd.f32 0.0, %v1544
    %v1546 = vpop.f32.mrf.mxu0
    %v1547 = vadd.f32 0.0, %v1546
    %1548 = vmatmul.bf16.gmra.mxu0 %v1464
    %v1549 = vpop.f32.mrf.mxu0
    %v1550 = vadd.f32 0.0, %v1549
    %v1551 = vpop.f32.mrf.mxu0
    %v1552 = vadd.f32 0.0, %v1551
    %1553 = vmatmul.bf16.gmra.mxu0 %v1465
    %v1554 = vpop.f32.mrf.mxu0
    %v1555 = vadd.f32 0.0, %v1554
    %v1556 = vpop.f32.mrf.mxu0
    %v1557 = vadd.f32 0.0, %v1556
    %1558 = vmatmul.bf16.gmra.mxu0 %v1466
    %v1559 = vpop.f32.mrf.mxu0
    %v1560 = vadd.f32 0.0, %v1559
    %v1561 = vpop.f32.mrf.mxu0
    %v1562 = vadd.f32 0.0, %v1561
    %1563 = vmatmul.bf16.gmra.mxu0 %v1467
    %v1564 = vpop.f32.mrf.mxu0
    %v1565 = vadd.f32 0.0, %v1564
    %v1566 = vpop.f32.mrf.mxu0
    %v1567 = vadd.f32 0.0, %v1566
    %1568 = vmatmul.bf16.gmra.mxu0 %v1468
    %v1569 = vpop.f32.mrf.mxu0
    %v1570 = vadd.f32 0.0, %v1569
    %v1571 = vpop.f32.mrf.mxu0
    %v1572 = vadd.f32 0.0, %v1571
    %1573 = vdwg.mxu0
    %v1574 = vadd.f32 %v1278, %v1535
    %v1575 = vadd.f32 %v1279, %v1537
    %v1576 = vadd.f32 %v1280, %v1540
    %v1577 = vadd.f32 %v1281, %v1542
    %v1578 = vadd.f32 %v1282, %v1545
    %v1579 = vadd.f32 %v1283, %v1547
    %v1580 = vadd.f32 %v1284, %v1550
    %v1581 = vadd.f32 %v1285, %v1552
    %v1582 = vadd.f32 %v1286, %v1555
    %v1583 = vadd.f32 %v1287, %v1557
    %v1584 = vadd.f32 %v1288, %v1560
    %v1585 = vadd.f32 %v1289, %v1562
    %v1586 = vadd.f32 %v1290, %v1565
    %v1587 = vadd.f32 %v1291, %v1567
    %v1588 = vadd.f32 %v1292, %v1570
    %v1589 = vadd.f32 %v1293, %v1572
    %s1590 = scalar_lea.vmem [#allocation2], 256
    %v1591 = vld [vmem:[%s1590] sm:$0xf]
    %v1592 = vld [vmem:[%s1590 + $0x4] sm:$0xf]
    %v1593 = vld [vmem:[%s1590 + $0x8] sm:$0xf]
    %v1594 = vld [vmem:[%s1590 + $0xc] sm:$0xf]
    %v1595 = vld [vmem:[%s1590 + $0x10] sm:$0xf]
    %v1596 = vld [vmem:[%s1590 + $0x14] sm:$0xf]
    %v1597 = vld [vmem:[%s1590 + $0x18] sm:$0xf]
    %v1598 = vld [vmem:[%s1590 + $0x1c] sm:$0xf]
    %v1599 = vld [vmem:[%s1590 + $0x20] sm:$0xf]
    %v1600 = vld [vmem:[%s1590 + $0x24] sm:$0xf]
    %v1601 = vld [vmem:[%s1590 + $0x28] sm:$0xf]
    %v1602 = vld [vmem:[%s1590 + $0x2c] sm:$0xf]
    %v1603 = vld [vmem:[%s1590 + $0x30] sm:$0xf]
    %v1604 = vld [vmem:[%s1590 + $0x34] sm:$0xf]
    %v1605 = vld [vmem:[%s1590 + $0x38] sm:$0xf]
    %v1606 = vld [vmem:[%s1590 + $0x3c] sm:$0xf]
    %v1623 = vunpack.c.l.b16 %v848
    %v1624 = vunpack.c.l.b16 %v849
    %v1625 = vunpack.c.l.b16 %v850
    %v1626 = vunpack.c.l.b16 %v851
    %v1627 = vunpack.c.l.b16 %v852
    %v1628 = vunpack.c.l.b16 %v853
    %v1629 = vunpack.c.l.b16 %v854
    %v1630 = vunpack.c.l.b16 %v1295
    %v1631 = vunpack.c.l.b16 %v857
    %v1632 = vunpack.c.l.b16 %v858
    %v1633 = vunpack.c.l.b16 %v859
    %v1634 = vunpack.c.l.b16 %v860
    %v1635 = vunpack.c.l.b16 %v861
    %v1636 = vunpack.c.l.b16 %v862
    %v1637 = vunpack.c.l.b16 %v863
    %v1638 = vunpack.c.l.b16 %v1297
    %v1639 = vpack.c.b16 %v1624, %v1623
    %v1640 = vpack.c.b16 %v1626, %v1625
    %v1641 = vpack.c.b16 %v1628, %v1627
    %v1642 = vpack.c.b16 %v1630, %v1629
    %v1643 = vpack.c.b16 %v1632, %v1631
    %v1644 = vpack.c.b16 %v1634, %v1633
    %v1645 = vpack.c.b16 %v1636, %v1635
    %v1646 = vpack.c.b16 %v1638, %v1637
    %v1671 = vunpack.c.l.b16 %v1591
    %v1672 = vunpack.c.l.b16 %v1592
    %v1673 = vunpack.c.l.b16 %v1593
    %v1674 = vunpack.c.l.b16 %v1594
    %v1675 = vunpack.c.l.b16 %v1595
    %v1676 = vunpack.c.l.b16 %v1596
    %v1677 = vunpack.c.l.b16 %v1597
    %v1678 = vunpack.c.l.b16 %v1598
    %v1679 = vunpack.c.l.b16 %v1599
    %v1680 = vunpack.c.l.b16 %v1600
    %v1681 = vunpack.c.l.b16 %v1601
    %v1682 = vunpack.c.l.b16 %v1602
    %v1683 = vunpack.c.l.b16 %v1603
    %v1684 = vunpack.c.l.b16 %v1604
    %v1685 = vunpack.c.l.b16 %v1605
    %v1686 = vunpack.c.l.b16 %v1606
    %v1687 = vpack.c.b16 %v1672, %v1671
    %v1688 = vpack.c.b16 %v1674, %v1673
    %v1689 = vpack.c.b16 %v1676, %v1675
    %v1690 = vpack.c.b16 %v1678, %v1677
    %v1691 = vpack.c.b16 %v1680, %v1679
    %v1692 = vpack.c.b16 %v1682, %v1681
    %v1693 = vpack.c.b16 %v1684, %v1683
    %v1694 = vpack.c.b16 %v1686, %v1685
    %1703 = vmatpush.bf16.msra.mxu0 %v1694
    %1704 = vmatpush.bf16.msra.mxu0 %v1693
    %1705 = vmatpush.bf16.msra.mxu0 %v1692
    %1706 = vmatpush.bf16.msra.mxu0 %v1691
    %1707 = vmatpush.bf16.msra.mxu0 %v1690
    %1708 = vmatpush.bf16.msra.mxu0 %v1689
    %1709 = vmatpush.bf16.msra.mxu0 %v1688
    %1710 = vmatpush.bf16.msra.mxu0 %v1687
    %1711 = vmatmul.bf16.gmra.mxu0 %v1639
    %v1712 = vpop.f32.mrf.mxu0
    %v1713 = vadd.f32 0.0, %v1712
    %v1714 = vpop.f32.mrf.mxu0
    %v1715 = vadd.f32 0.0, %v1714
    %1716 = vmatmul.bf16.gmra.mxu0 %v1640
    %v1717 = vpop.f32.mrf.mxu0
    %v1718 = vadd.f32 0.0, %v1717
    %v1719 = vpop.f32.mrf.mxu0
    %v1720 = vadd.f32 0.0, %v1719
    %1721 = vmatmul.bf16.gmra.mxu0 %v1641
    %v1722 = vpop.f32.mrf.mxu0
    %v1723 = vadd.f32 0.0, %v1722
    %v1724 = vpop.f32.mrf.mxu0
    %v1725 = vadd.f32 0.0, %v1724
    %1726 = vmatmul.bf16.gmra.mxu0 %v1642
    %v1727 = vpop.f32.mrf.mxu0
    %v1728 = vadd.f32 0.0, %v1727
    %v1729 = vpop.f32.mrf.mxu0
    %v1730 = vadd.f32 0.0, %v1729
    %1731 = vmatmul.bf16.gmra.mxu0 %v1643
    %v1732 = vpop.f32.mrf.mxu0
    %v1733 = vadd.f32 0.0, %v1732
    %v1734 = vpop.f32.mrf.mxu0
    %v1735 = vadd.f32 0.0, %v1734
    %1736 = vmatmul.bf16.gmra.mxu0 %v1644
    %v1737 = vpop.f32.mrf.mxu0
    %v1738 = vadd.f32 0.0, %v1737
    %v1739 = vpop.f32.mrf.mxu0
    %v1740 = vadd.f32 0.0, %v1739
    %1741 = vmatmul.bf16.gmra.mxu0 %v1645
    %v1742 = vpop.f32.mrf.mxu0
    %v1743 = vadd.f32 0.0, %v1742
    %v1744 = vpop.f32.mrf.mxu0
    %v1745 = vadd.f32 0.0, %v1744
    %1746 = vmatmul.bf16.gmra.mxu0 %v1646
    %v1747 = vpop.f32.mrf.mxu0
    %v1748 = vadd.f32 0.0, %v1747
    %v1749 = vpop.f32.mrf.mxu0
    %v1750 = vadd.f32 0.0, %v1749
    %1751 = vdwg.mxu0
    %v1752 = vadd.f32 %v1574, %v1713
    %v1753 = vadd.f32 %v1575, %v1715
    %v1754 = vadd.f32 %v1576, %v1718
    %v1755 = vadd.f32 %v1577, %v1720
    %v1756 = vadd.f32 %v1578, %v1723
    %v1757 = vadd.f32 %v1579, %v1725
    %v1758 = vadd.f32 %v1580, %v1728
    %v1759 = vadd.f32 %v1581, %v1730
    %v1760 = vadd.f32 %v1582, %v1733
    %v1761 = vadd.f32 %v1583, %v1735
    %v1762 = vadd.f32 %v1584, %v1738
    %v1763 = vadd.f32 %v1585, %v1740
    %v1764 = vadd.f32 %v1586, %v1743
    %v1765 = vadd.f32 %v1587, %v1745
    %v1766 = vadd.f32 %v1588, %v1748
    %v1767 = vadd.f32 %v1589, %v1750
    %v1768 = vld [vmem:[%s0 + $0x8] sm:$0xf]
    %v1769 = vld [vmem:[%s0 + $0xc] sm:$0xf]
    %v1770 = vld [vmem:[%s0 + $0x10] sm:$0xf]
    %v1771 = vld [vmem:[%s0 + $0x14] sm:$0xf]
    %v1772 = vld [vmem:[%s0 + $0x18] sm:$0xf]
    %v1773 = vld [vmem:[%s0 + $0x1c] sm:$0xf]
    %v1774 = vld [vmem:[%s0 + $0x20] sm:$0xf]
    %v1775 = vld [vmem:[%s0 + $0x24] sm:$0xf]
    %v1776 = vld [vmem:[%s0 + $0x28] sm:$0x1]
    %v1777 = vld [vmem:[%s0 + $0x38] sm:$0xf]
    %v1778 = vld [vmem:[%s0 + $0x3c] sm:$0xf]
    %v1779 = vld [vmem:[%s0 + $0x40] sm:$0xf]
    %v1780 = vld [vmem:[%s0 + $0x44] sm:$0xf]
    %v1781 = vld [vmem:[%s0 + $0x48] sm:$0xf]
    %v1782 = vld [vmem:[%s0 + $0x4c] sm:$0xf]
    %v1783 = vld [vmem:[%s0 + $0x50] sm:$0xf]
    %v1784 = vld [vmem:[%s0 + $0x54] sm:$0xf]
    %v1785 = vld [vmem:[%s0 + $0x58] sm:$0x1]
    %v1787 = vshrl.u32 %v1768, 16
    %v1789 = vrot.slane %v1787, 4
    %v1790 = vshll.u32 %v1768, 16
    %v1792 = vrot.slane %v1790, 5
    %v1793 = vor.u32 %v1789, %v1792
    %v1794 = vrot.slane %v1793, 4
    %v1796 = vshll.u32 %v1769, 16
    %v1798 = vrot.slane %v1796, 5
    %v1799 = vsel %vm867, %v1794, %v1798
    %v1800 = vshrl.u32 %v1769, 16
    %v1802 = vrot.slane %v1800, 4
    %v1803 = vor.u32 %v1802, %v1798
    %v1804 = vrot.slane %v1803, 4
    %v1806 = vshll.u32 %v1770, 16
    %v1808 = vrot.slane %v1806, 5
    %v1809 = vsel %vm867, %v1804, %v1808
    %v1810 = vshrl.u32 %v1770, 16
    %v1812 = vrot.slane %v1810, 4
    %v1813 = vor.u32 %v1812, %v1808
    %v1814 = vrot.slane %v1813, 4
    %v1816 = vshll.u32 %v1771, 16
    %v1818 = vrot.slane %v1816, 5
    %v1819 = vsel %vm867, %v1814, %v1818
    %v1820 = vshrl.u32 %v1771, 16
    %v1822 = vrot.slane %v1820, 4
    %v1823 = vor.u32 %v1822, %v1818
    %v1824 = vrot.slane %v1823, 4
    %v1826 = vshll.u32 %v1772, 16
    %v1828 = vrot.slane %v1826, 5
    %v1829 = vsel %vm867, %v1824, %v1828
    %v1830 = vshrl.u32 %v1772, 16
    %v1832 = vrot.slane %v1830, 4
    %v1833 = vor.u32 %v1832, %v1828
    %v1834 = vrot.slane %v1833, 4
    %v1836 = vshll.u32 %v1773, 16
    %v1838 = vrot.slane %v1836, 5
    %v1839 = vsel %vm867, %v1834, %v1838
    %v1840 = vshrl.u32 %v1773, 16
    %v1842 = vrot.slane %v1840, 4
    %v1843 = vor.u32 %v1842, %v1838
    %v1844 = vrot.slane %v1843, 4
    %v1846 = vshll.u32 %v1774, 16
    %v1848 = vrot.slane %v1846, 5
    %v1849 = vsel %vm867, %v1844, %v1848
    %v1850 = vshrl.u32 %v1774, 16
    %v1852 = vrot.slane %v1850, 4
    %v1853 = vor.u32 %v1852, %v1848
    %v1854 = vrot.slane %v1853, 4
    %v1856 = vshll.u32 %v1775, 16
    %v1858 = vrot.slane %v1856, 5
    %v1859 = vsel %vm867, %v1854, %v1858
    %v1860 = vshrl.u32 %v1775, 16
    %v1862 = vrot.slane %v1860, 4
    %v1863 = vor.u32 %v1862, %v1858
    %v1864 = vrot.slane %v1863, 4
    %v1866 = vshll.u32 %v1776, 16
    %v1868 = vrot.slane %v1866, 5
    %v1869 = vsel %vm867, %v1864, %v1868
    %v1871 = vshrl.u32 %v1777, 16
    %v1873 = vrot.slane %v1871, 4
    %v1874 = vshll.u32 %v1777, 16
    %v1876 = vrot.slane %v1874, 5
    %v1877 = vor.u32 %v1873, %v1876
    %v1878 = vrot.slane %v1877, 4
    %v1880 = vshll.u32 %v1778, 16
    %v1882 = vrot.slane %v1880, 5
    %v1883 = vsel %vm867, %v1878, %v1882
    %v1884 = vshrl.u32 %v1778, 16
    %v1886 = vrot.slane %v1884, 4
    %v1887 = vor.u32 %v1886, %v1882
    %v1888 = vrot.slane %v1887, 4
    %v1890 = vshll.u32 %v1779, 16
    %v1892 = vrot.slane %v1890, 5
    %v1893 = vsel %vm867, %v1888, %v1892
    %v1894 = vshrl.u32 %v1779, 16
    %v1896 = vrot.slane %v1894, 4
    %v1897 = vor.u32 %v1896, %v1892
    %v1898 = vrot.slane %v1897, 4
    %v1900 = vshll.u32 %v1780, 16
    %v1902 = vrot.slane %v1900, 5
    %v1903 = vsel %vm867, %v1898, %v1902
    %v1904 = vshrl.u32 %v1780, 16
    %v1906 = vrot.slane %v1904, 4
    %v1907 = vor.u32 %v1906, %v1902
    %v1908 = vrot.slane %v1907, 4
    %v1910 = vshll.u32 %v1781, 16
    %v1912 = vrot.slane %v1910, 5
    %v1913 = vsel %vm867, %v1908, %v1912
    %v1914 = vshrl.u32 %v1781, 16
    %v1916 = vrot.slane %v1914, 4
    %v1917 = vor.u32 %v1916, %v1912
    %v1918 = vrot.slane %v1917, 4
    %v1920 = vshll.u32 %v1782, 16
    %v1922 = vrot.slane %v1920, 5
    %v1923 = vsel %vm867, %v1918, %v1922
    %v1924 = vshrl.u32 %v1782, 16
    %v1926 = vrot.slane %v1924, 4
    %v1927 = vor.u32 %v1926, %v1922
    %v1928 = vrot.slane %v1927, 4
    %v1930 = vshll.u32 %v1783, 16
    %v1932 = vrot.slane %v1930, 5
    %v1933 = vsel %vm867, %v1928, %v1932
    %v1934 = vshrl.u32 %v1783, 16
    %v1936 = vrot.slane %v1934, 4
    %v1937 = vor.u32 %v1936, %v1932
    %v1938 = vrot.slane %v1937, 4
    %v1940 = vshll.u32 %v1784, 16
    %v1942 = vrot.slane %v1940, 5
    %v1943 = vsel %vm867, %v1938, %v1942
    %v1944 = vshrl.u32 %v1784, 16
    %v1946 = vrot.slane %v1944, 4
    %v1947 = vor.u32 %v1946, %v1942
    %v1948 = vrot.slane %v1947, 4
    %v1950 = vshll.u32 %v1785, 16
    %v1952 = vrot.slane %v1950, 5
    %v1953 = vsel %vm867, %v1948, %v1952
    %v1970 = vsel %vm1084, %v1799, 0
    %v1971 = vsel %vm1085, %v1809, 0
    %v1972 = vsel %vm1086, %v1819, 0
    %v1973 = vsel %vm1087, %v1829, 0
    %v1974 = vsel %vm1088, %v1839, 0
    %v1975 = vsel %vm1089, %v1849, 0
    %v1976 = vsel %vm1090, %v1859, 0
    %v1977 = vsel %vm1091, %v1869, 0
    %v1978 = vsel %vm1092, %v1883, 0
    %v1979 = vsel %vm1093, %v1893, 0
    %v1980 = vsel %vm1094, %v1903, 0
    %v1981 = vsel %vm1095, %v1913, 0
    %v1982 = vsel %vm1096, %v1923, 0
    %v1983 = vsel %vm1097, %v1933, 0
    %v1984 = vsel %vm1098, %v1943, 0
    %v1985 = vsel %vm1099, %v1953, 0
    %s1986 = scalar_lea.vmem [#allocation2], 320
    %v1987 = vld [vmem:[%s1986] sm:$0xf]
    %v1988 = vld [vmem:[%s1986 + $0x4] sm:$0xf]
    %v1989 = vld [vmem:[%s1986 + $0x8] sm:$0xf]
    %v1990 = vld [vmem:[%s1986 + $0xc] sm:$0xf]
    %v1991 = vld [vmem:[%s1986 + $0x10] sm:$0xf]
    %v1992 = vld [vmem:[%s1986 + $0x14] sm:$0xf]
    %v1993 = vld [vmem:[%s1986 + $0x18] sm:$0xf]
    %v1994 = vld [vmem:[%s1986 + $0x1c] sm:$0xf]
    %v1995 = vld [vmem:[%s1986 + $0x20] sm:$0xf]
    %v1996 = vld [vmem:[%s1986 + $0x24] sm:$0xf]
    %v1997 = vld [vmem:[%s1986 + $0x28] sm:$0xf]
    %v1998 = vld [vmem:[%s1986 + $0x2c] sm:$0xf]
    %v1999 = vld [vmem:[%s1986 + $0x30] sm:$0xf]
    %v2000 = vld [vmem:[%s1986 + $0x34] sm:$0xf]
    %v2001 = vld [vmem:[%s1986 + $0x38] sm:$0xf]
    %v2002 = vld [vmem:[%s1986 + $0x3c] sm:$0xf]
    %v2019 = vunpack.c.l.b16 %v1970
    %v2020 = vunpack.c.l.b16 %v1971
    %v2021 = vunpack.c.l.b16 %v1972
    %v2022 = vunpack.c.l.b16 %v1973
    %v2023 = vunpack.c.l.b16 %v1974
    %v2024 = vunpack.c.l.b16 %v1975
    %v2025 = vunpack.c.l.b16 %v1976
    %v2026 = vunpack.c.l.b16 %v1977
    %v2027 = vunpack.c.l.b16 %v1978
    %v2028 = vunpack.c.l.b16 %v1979
    %v2029 = vunpack.c.l.b16 %v1980
    %v2030 = vunpack.c.l.b16 %v1981
    %v2031 = vunpack.c.l.b16 %v1982
    %v2032 = vunpack.c.l.b16 %v1983
    %v2033 = vunpack.c.l.b16 %v1984
    %v2034 = vunpack.c.l.b16 %v1985
    %v2035 = vpack.c.b16 %v2020, %v2019
    %v2036 = vpack.c.b16 %v2022, %v2021
    %v2037 = vpack.c.b16 %v2024, %v2023
    %v2038 = vpack.c.b16 %v2026, %v2025
    %v2039 = vpack.c.b16 %v2028, %v2027
    %v2040 = vpack.c.b16 %v2030, %v2029
    %v2041 = vpack.c.b16 %v2032, %v2031
    %v2042 = vpack.c.b16 %v2034, %v2033
    %v2067 = vunpack.c.l.b16 %v1987
    %v2068 = vunpack.c.l.b16 %v1988
    %v2069 = vunpack.c.l.b16 %v1989
    %v2070 = vunpack.c.l.b16 %v1990
    %v2071 = vunpack.c.l.b16 %v1991
    %v2072 = vunpack.c.l.b16 %v1992
    %v2073 = vunpack.c.l.b16 %v1993
    %v2074 = vunpack.c.l.b16 %v1994
    %v2075 = vunpack.c.l.b16 %v1995
    %v2076 = vunpack.c.l.b16 %v1996
    %v2077 = vunpack.c.l.b16 %v1997
    %v2078 = vunpack.c.l.b16 %v1998
    %v2079 = vunpack.c.l.b16 %v1999
    %v2080 = vunpack.c.l.b16 %v2000
    %v2081 = vunpack.c.l.b16 %v2001
    %v2082 = vunpack.c.l.b16 %v2002
    %v2083 = vpack.c.b16 %v2068, %v2067
    %v2084 = vpack.c.b16 %v2070, %v2069
    %v2085 = vpack.c.b16 %v2072, %v2071
    %v2086 = vpack.c.b16 %v2074, %v2073
    %v2087 = vpack.c.b16 %v2076, %v2075
    %v2088 = vpack.c.b16 %v2078, %v2077
    %v2089 = vpack.c.b16 %v2080, %v2079
    %v2090 = vpack.c.b16 %v2082, %v2081
    %2099 = vmatpush.bf16.msra.mxu0 %v2090
    %2100 = vmatpush.bf16.msra.mxu0 %v2089
    %2101 = vmatpush.bf16.msra.mxu0 %v2088
    %2102 = vmatpush.bf16.msra.mxu0 %v2087
    %2103 = vmatpush.bf16.msra.mxu0 %v2086
    %2104 = vmatpush.bf16.msra.mxu0 %v2085
    %2105 = vmatpush.bf16.msra.mxu0 %v2084
    %2106 = vmatpush.bf16.msra.mxu0 %v2083
    %2107 = vmatmul.bf16.gmra.mxu0 %v2035
    %v2108 = vpop.f32.mrf.mxu0
    %v2109 = vadd.f32 0.0, %v2108
    %v2110 = vpop.f32.mrf.mxu0
    %v2111 = vadd.f32 0.0, %v2110
    %2112 = vmatmul.bf16.gmra.mxu0 %v2036
    %v2113 = vpop.f32.mrf.mxu0
    %v2114 = vadd.f32 0.0, %v2113
    %v2115 = vpop.f32.mrf.mxu0
    %v2116 = vadd.f32 0.0, %v2115
    %2117 = vmatmul.bf16.gmra.mxu0 %v2037
    %v2118 = vpop.f32.mrf.mxu0
    %v2119 = vadd.f32 0.0, %v2118
    %v2120 = vpop.f32.mrf.mxu0
    %v2121 = vadd.f32 0.0, %v2120
    %2122 = vmatmul.bf16.gmra.mxu0 %v2038
    %v2123 = vpop.f32.mrf.mxu0
    %v2124 = vadd.f32 0.0, %v2123
    %v2125 = vpop.f32.mrf.mxu0
    %v2126 = vadd.f32 0.0, %v2125
    %2127 = vmatmul.bf16.gmra.mxu0 %v2039
    %v2128 = vpop.f32.mrf.mxu0
    %v2129 = vadd.f32 0.0, %v2128
    %v2130 = vpop.f32.mrf.mxu0
    %v2131 = vadd.f32 0.0, %v2130
    %2132 = vmatmul.bf16.gmra.mxu0 %v2040
    %v2133 = vpop.f32.mrf.mxu0
    %v2134 = vadd.f32 0.0, %v2133
    %v2135 = vpop.f32.mrf.mxu0
    %v2136 = vadd.f32 0.0, %v2135
    %2137 = vmatmul.bf16.gmra.mxu0 %v2041
    %v2138 = vpop.f32.mrf.mxu0
    %v2139 = vadd.f32 0.0, %v2138
    %v2140 = vpop.f32.mrf.mxu0
    %v2141 = vadd.f32 0.0, %v2140
    %2142 = vmatmul.bf16.gmra.mxu0 %v2042
    %v2143 = vpop.f32.mrf.mxu0
    %v2144 = vadd.f32 0.0, %v2143
    %v2145 = vpop.f32.mrf.mxu0
    %v2146 = vadd.f32 0.0, %v2145
    %2147 = vdwg.mxu0
    %v2148 = vadd.f32 %v1752, %v2109
    %v2149 = vadd.f32 %v1753, %v2111
    %v2150 = vadd.f32 %v1754, %v2114
    %v2151 = vadd.f32 %v1755, %v2116
    %v2152 = vadd.f32 %v1756, %v2119
    %v2153 = vadd.f32 %v1757, %v2121
    %v2154 = vadd.f32 %v1758, %v2124
    %v2155 = vadd.f32 %v1759, %v2126
    %v2156 = vadd.f32 %v1760, %v2129
    %v2157 = vadd.f32 %v1761, %v2131
    %v2158 = vadd.f32 %v1762, %v2134
    %v2159 = vadd.f32 %v1763, %v2136
    %v2160 = vadd.f32 %v1764, %v2139
    %v2161 = vadd.f32 %v1765, %v2141
    %v2162 = vadd.f32 %v1766, %v2144
    %v2163 = vadd.f32 %v1767, %v2146
    %v2164 = vld [vmem:[%s0 + $0x8] sm:$0x8]
    %v2165 = vld [vmem:[%s0 + $0x28] sm:$0xf]
    %v2166 = vld [vmem:[%s0 + $0x38] sm:$0x8]
    %v2167 = vld [vmem:[%s0 + $0x58] sm:$0xf]
    %v2169 = vshrl.u32 %v2164, 16
    %v2171 = vrot.slane %v2169, 7
    %v2172 = vrot.slane %v2171, 4
    %v2173 = vrot.slane %v1800, 7
    %v2174 = vor.u32 %v2173, %v1796
    %v2175 = vsel %vm291, %v2172, %v2174
    %v2176 = vrot.slane %v2173, 4
    %v2177 = vrot.slane %v1810, 7
    %v2178 = vor.u32 %v2177, %v1806
    %v2179 = vsel %vm291, %v2176, %v2178
    %v2180 = vrot.slane %v2177, 4
    %v2181 = vrot.slane %v1820, 7
    %v2182 = vor.u32 %v2181, %v1816
    %v2183 = vsel %vm291, %v2180, %v2182
    %v2184 = vrot.slane %v2181, 4
    %v2185 = vrot.slane %v1830, 7
    %v2186 = vor.u32 %v2185, %v1826
    %v2187 = vsel %vm291, %v2184, %v2186
    %v2188 = vrot.slane %v2185, 4
    %v2189 = vrot.slane %v1840, 7
    %v2190 = vor.u32 %v2189, %v1836
    %v2191 = vsel %vm291, %v2188, %v2190
    %v2192 = vrot.slane %v2189, 4
    %v2193 = vrot.slane %v1850, 7
    %v2194 = vor.u32 %v2193, %v1846
    %v2195 = vsel %vm291, %v2192, %v2194
    %v2196 = vrot.slane %v2193, 4
    %v2197 = vrot.slane %v1860, 7
    %v2198 = vor.u32 %v2197, %v1856
    %v2199 = vsel %vm291, %v2196, %v2198
    %v2200 = vrot.slane %v2197, 4
    %v2202 = vshrl.u32 %v2165, 16
    %v2204 = vrot.slane %v2202, 7
    %v2205 = vshll.u32 %v2165, 16
    %v2207 = vor.u32 %v2204, %v2205
    %v2208 = vsel %vm291, %v2200, %v2207
    %v2210 = vshrl.u32 %v2166, 16
    %v2212 = vrot.slane %v2210, 7
    %v2213 = vrot.slane %v2212, 4
    %v2214 = vrot.slane %v1884, 7
    %v2215 = vor.u32 %v2214, %v1880
    %v2216 = vsel %vm291, %v2213, %v2215
    %v2217 = vrot.slane %v2214, 4
    %v2218 = vrot.slane %v1894, 7
    %v2219 = vor.u32 %v2218, %v1890
    %v2220 = vsel %vm291, %v2217, %v2219
    %v2221 = vrot.slane %v2218, 4
    %v2222 = vrot.slane %v1904, 7
    %v2223 = vor.u32 %v2222, %v1900
    %v2224 = vsel %vm291, %v2221, %v2223
    %v2225 = vrot.slane %v2222, 4
    %v2226 = vrot.slane %v1914, 7
    %v2227 = vor.u32 %v2226, %v1910
    %v2228 = vsel %vm291, %v2225, %v2227
    %v2229 = vrot.slane %v2226, 4
    %v2230 = vrot.slane %v1924, 7
    %v2231 = vor.u32 %v2230, %v1920
    %v2232 = vsel %vm291, %v2229, %v2231
    %v2233 = vrot.slane %v2230, 4
    %v2234 = vrot.slane %v1934, 7
    %v2235 = vor.u32 %v2234, %v1930
    %v2236 = vsel %vm291, %v2233, %v2235
    %v2237 = vrot.slane %v2234, 4
    %v2238 = vrot.slane %v1944, 7
    %v2239 = vor.u32 %v2238, %v1940
    %v2240 = vsel %vm291, %v2237, %v2239
    %v2241 = vrot.slane %v2238, 4
    %v2243 = vshrl.u32 %v2167, 16
    %v2245 = vrot.slane %v2243, 7
    %v2246 = vshll.u32 %v2167, 16
    %v2248 = vor.u32 %v2245, %v2246
    %v2249 = vsel %vm291, %v2241, %v2248
    %v2266 = vsel %vm492, %v2175, 0
    %v2267 = vsel %vm493, %v2179, 0
    %v2268 = vsel %vm494, %v2183, 0
    %v2269 = vsel %vm495, %v2187, 0
    %v2270 = vsel %vm496, %v2191, 0
    %v2271 = vsel %vm497, %v2195, 0
    %v2272 = vsel %vm498, %v2199, 0
    %v2273 = vsel %vm499, %v2208, 0
    %v2274 = vsel %vm500, %v2216, 0
    %v2275 = vsel %vm501, %v2220, 0
    %v2276 = vsel %vm502, %v2224, 0
    %v2277 = vsel %vm503, %v2228, 0
    %v2278 = vsel %vm504, %v2232, 0
    %v2279 = vsel %vm505, %v2236, 0
    %v2280 = vsel %vm506, %v2240, 0
    %v2281 = vsel %vm507, %v2249, 0
    %s2282 = scalar_lea.vmem [#allocation2], 384
    %v2283 = vld [vmem:[%s2282] sm:$0xf]
    %v2284 = vld [vmem:[%s2282 + $0x4] sm:$0xf]
    %v2285 = vld [vmem:[%s2282 + $0x8] sm:$0xf]
    %v2286 = vld [vmem:[%s2282 + $0xc] sm:$0xf]
    %v2287 = vld [vmem:[%s2282 + $0x10] sm:$0xf]
    %v2288 = vld [vmem:[%s2282 + $0x14] sm:$0xf]
    %v2289 = vld [vmem:[%s2282 + $0x18] sm:$0xf]
    %v2290 = vld [vmem:[%s2282 + $0x1c] sm:$0xf]
    %v2291 = vld [vmem:[%s2282 + $0x20] sm:$0xf]
    %v2292 = vld [vmem:[%s2282 + $0x24] sm:$0xf]
    %v2293 = vld [vmem:[%s2282 + $0x28] sm:$0xf]
    %v2294 = vld [vmem:[%s2282 + $0x2c] sm:$0xf]
    %v2295 = vld [vmem:[%s2282 + $0x30] sm:$0xf]
    %v2296 = vld [vmem:[%s2282 + $0x34] sm:$0xf]
    %v2297 = vld [vmem:[%s2282 + $0x38] sm:$0xf]
    %v2298 = vld [vmem:[%s2282 + $0x3c] sm:$0xf]
    %v2315 = vunpack.c.l.b16 %v2266
    %v2316 = vunpack.c.l.b16 %v2267
    %v2317 = vunpack.c.l.b16 %v2268
    %v2318 = vunpack.c.l.b16 %v2269
    %v2319 = vunpack.c.l.b16 %v2270
    %v2320 = vunpack.c.l.b16 %v2271
    %v2321 = vunpack.c.l.b16 %v2272
    %v2322 = vunpack.c.l.b16 %v2273
    %v2323 = vunpack.c.l.b16 %v2274
    %v2324 = vunpack.c.l.b16 %v2275
    %v2325 = vunpack.c.l.b16 %v2276
    %v2326 = vunpack.c.l.b16 %v2277
    %v2327 = vunpack.c.l.b16 %v2278
    %v2328 = vunpack.c.l.b16 %v2279
    %v2329 = vunpack.c.l.b16 %v2280
    %v2330 = vunpack.c.l.b16 %v2281
    %v2331 = vpack.c.b16 %v2316, %v2315
    %v2332 = vpack.c.b16 %v2318, %v2317
    %v2333 = vpack.c.b16 %v2320, %v2319
    %v2334 = vpack.c.b16 %v2322, %v2321
    %v2335 = vpack.c.b16 %v2324, %v2323
    %v2336 = vpack.c.b16 %v2326, %v2325
    %v2337 = vpack.c.b16 %v2328, %v2327
    %v2338 = vpack.c.b16 %v2330, %v2329
    %v2363 = vunpack.c.l.b16 %v2283
    %v2364 = vunpack.c.l.b16 %v2284
    %v2365 = vunpack.c.l.b16 %v2285
    %v2366 = vunpack.c.l.b16 %v2286
    %v2367 = vunpack.c.l.b16 %v2287
    %v2368 = vunpack.c.l.b16 %v2288
    %v2369 = vunpack.c.l.b16 %v2289
    %v2370 = vunpack.c.l.b16 %v2290
    %v2371 = vunpack.c.l.b16 %v2291
    %v2372 = vunpack.c.l.b16 %v2292
    %v2373 = vunpack.c.l.b16 %v2293
    %v2374 = vunpack.c.l.b16 %v2294
    %v2375 = vunpack.c.l.b16 %v2295
    %v2376 = vunpack.c.l.b16 %v2296
    %v2377 = vunpack.c.l.b16 %v2297
    %v2378 = vunpack.c.l.b16 %v2298
    %v2379 = vpack.c.b16 %v2364, %v2363
    %v2380 = vpack.c.b16 %v2366, %v2365
    %v2381 = vpack.c.b16 %v2368, %v2367
    %v2382 = vpack.c.b16 %v2370, %v2369
    %v2383 = vpack.c.b16 %v2372, %v2371
    %v2384 = vpack.c.b16 %v2374, %v2373
    %v2385 = vpack.c.b16 %v2376, %v2375
    %v2386 = vpack.c.b16 %v2378, %v2377
    %2395 = vmatpush.bf16.msra.mxu0 %v2386
    %2396 = vmatpush.bf16.msra.mxu0 %v2385
    %2397 = vmatpush.bf16.msra.mxu0 %v2384
    %2398 = vmatpush.bf16.msra.mxu0 %v2383
    %2399 = vmatpush.bf16.msra.mxu0 %v2382
    %2400 = vmatpush.bf16.msra.mxu0 %v2381
    %2401 = vmatpush.bf16.msra.mxu0 %v2380
    %2402 = vmatpush.bf16.msra.mxu0 %v2379
    %2403 = vmatmul.bf16.gmra.mxu0 %v2331
    %v2404 = vpop.f32.mrf.mxu0
    %v2405 = vadd.f32 0.0, %v2404
    %v2406 = vpop.f32.mrf.mxu0
    %v2407 = vadd.f32 0.0, %v2406
    %2408 = vmatmul.bf16.gmra.mxu0 %v2332
    %v2409 = vpop.f32.mrf.mxu0
    %v2410 = vadd.f32 0.0, %v2409
    %v2411 = vpop.f32.mrf.mxu0
    %v2412 = vadd.f32 0.0, %v2411
    %2413 = vmatmul.bf16.gmra.mxu0 %v2333
    %v2414 = vpop.f32.mrf.mxu0
    %v2415 = vadd.f32 0.0, %v2414
    %v2416 = vpop.f32.mrf.mxu0
    %v2417 = vadd.f32 0.0, %v2416
    %2418 = vmatmul.bf16.gmra.mxu0 %v2334
    %v2419 = vpop.f32.mrf.mxu0
    %v2420 = vadd.f32 0.0, %v2419
    %v2421 = vpop.f32.mrf.mxu0
    %v2422 = vadd.f32 0.0, %v2421
    %2423 = vmatmul.bf16.gmra.mxu0 %v2335
    %v2424 = vpop.f32.mrf.mxu0
    %v2425 = vadd.f32 0.0, %v2424
    %v2426 = vpop.f32.mrf.mxu0
    %v2427 = vadd.f32 0.0, %v2426
    %2428 = vmatmul.bf16.gmra.mxu0 %v2336
    %v2429 = vpop.f32.mrf.mxu0
    %v2430 = vadd.f32 0.0, %v2429
    %v2431 = vpop.f32.mrf.mxu0
    %v2432 = vadd.f32 0.0, %v2431
    %2433 = vmatmul.bf16.gmra.mxu0 %v2337
    %v2434 = vpop.f32.mrf.mxu0
    %v2435 = vadd.f32 0.0, %v2434
    %v2436 = vpop.f32.mrf.mxu0
    %v2437 = vadd.f32 0.0, %v2436
    %2438 = vmatmul.bf16.gmra.mxu0 %v2338
    %v2439 = vpop.f32.mrf.mxu0
    %v2440 = vadd.f32 0.0, %v2439
    %v2441 = vpop.f32.mrf.mxu0
    %v2442 = vadd.f32 0.0, %v2441
    %2443 = vdwg.mxu0
    %v2444 = vadd.f32 %v2148, %v2405
    %v2445 = vadd.f32 %v2149, %v2407
    %v2446 = vadd.f32 %v2150, %v2410
    %v2447 = vadd.f32 %v2151, %v2412
    %v2448 = vadd.f32 %v2152, %v2415
    %v2449 = vadd.f32 %v2153, %v2417
    %v2450 = vadd.f32 %v2154, %v2420
    %v2451 = vadd.f32 %v2155, %v2422
    %v2452 = vadd.f32 %v2156, %v2425
    %v2453 = vadd.f32 %v2157, %v2427
    %v2454 = vadd.f32 %v2158, %v2430
    %v2455 = vadd.f32 %v2159, %v2432
    %v2456 = vadd.f32 %v2160, %v2435
    %v2457 = vadd.f32 %v2161, %v2437
    %v2458 = vadd.f32 %v2162, %v2440
    %v2459 = vadd.f32 %v2163, %v2442
    %s2460 = scalar_lea.vmem [#allocation2], 448
    %v2461 = vld [vmem:[%s2460] sm:$0xf]
    %v2462 = vld [vmem:[%s2460 + $0x4] sm:$0xf]
    %v2463 = vld [vmem:[%s2460 + $0x8] sm:$0xf]
    %v2464 = vld [vmem:[%s2460 + $0xc] sm:$0xf]
    %v2465 = vld [vmem:[%s2460 + $0x10] sm:$0xf]
    %v2466 = vld [vmem:[%s2460 + $0x14] sm:$0xf]
    %v2467 = vld [vmem:[%s2460 + $0x18] sm:$0xf]
    %v2468 = vld [vmem:[%s2460 + $0x1c] sm:$0xf]
    %v2469 = vld [vmem:[%s2460 + $0x20] sm:$0xf]
    %v2470 = vld [vmem:[%s2460 + $0x24] sm:$0xf]
    %v2471 = vld [vmem:[%s2460 + $0x28] sm:$0xf]
    %v2472 = vld [vmem:[%s2460 + $0x2c] sm:$0xf]
    %v2473 = vld [vmem:[%s2460 + $0x30] sm:$0xf]
    %v2474 = vld [vmem:[%s2460 + $0x34] sm:$0xf]
    %v2475 = vld [vmem:[%s2460 + $0x38] sm:$0xf]
    %v2476 = vld [vmem:[%s2460 + $0x3c] sm:$0xf]
    %v2493 = vunpack.c.l.b16 %v1769
    %v2494 = vunpack.c.l.b16 %v1770
    %v2495 = vunpack.c.l.b16 %v1771
    %v2496 = vunpack.c.l.b16 %v1772
    %v2497 = vunpack.c.l.b16 %v1773
    %v2498 = vunpack.c.l.b16 %v1774
    %v2499 = vunpack.c.l.b16 %v1775
    %v2500 = vunpack.c.l.b16 %v2165
    %v2501 = vunpack.c.l.b16 %v1778
    %v2502 = vunpack.c.l.b16 %v1779
    %v2503 = vunpack.c.l.b16 %v1780
    %v2504 = vunpack.c.l.b16 %v1781
    %v2505 = vunpack.c.l.b16 %v1782
    %v2506 = vunpack.c.l.b16 %v1783
    %v2507 = vunpack.c.l.b16 %v1784
    %v2508 = vunpack.c.l.b16 %v2167
    %v2509 = vpack.c.b16 %v2494, %v2493
    %v2510 = vpack.c.b16 %v2496, %v2495
    %v2511 = vpack.c.b16 %v2498, %v2497
    %v2512 = vpack.c.b16 %v2500, %v2499
    %v2513 = vpack.c.b16 %v2502, %v2501
    %v2514 = vpack.c.b16 %v2504, %v2503
    %v2515 = vpack.c.b16 %v2506, %v2505
    %v2516 = vpack.c.b16 %v2508, %v2507
    %v2541 = vunpack.c.l.b16 %v2461
    %v2542 = vunpack.c.l.b16 %v2462
    %v2543 = vunpack.c.l.b16 %v2463
    %v2544 = vunpack.c.l.b16 %v2464
    %v2545 = vunpack.c.l.b16 %v2465
    %v2546 = vunpack.c.l.b16 %v2466
    %v2547 = vunpack.c.l.b16 %v2467
    %v2548 = vunpack.c.l.b16 %v2468
    %v2549 = vunpack.c.l.b16 %v2469
    %v2550 = vunpack.c.l.b16 %v2470
    %v2551 = vunpack.c.l.b16 %v2471
    %v2552 = vunpack.c.l.b16 %v2472
    %v2553 = vunpack.c.l.b16 %v2473
    %v2554 = vunpack.c.l.b16 %v2474
    %v2555 = vunpack.c.l.b16 %v2475
    %v2556 = vunpack.c.l.b16 %v2476
    %v2557 = vpack.c.b16 %v2542, %v2541
    %v2558 = vpack.c.b16 %v2544, %v2543
    %v2559 = vpack.c.b16 %v2546, %v2545
    %v2560 = vpack.c.b16 %v2548, %v2547
    %v2561 = vpack.c.b16 %v2550, %v2549
    %v2562 = vpack.c.b16 %v2552, %v2551
    %v2563 = vpack.c.b16 %v2554, %v2553
    %v2564 = vpack.c.b16 %v2556, %v2555
    %2573 = vmatpush.bf16.msra.mxu0 %v2564
    %2574 = vmatpush.bf16.msra.mxu0 %v2563
    %2575 = vmatpush.bf16.msra.mxu0 %v2562
    %2576 = vmatpush.bf16.msra.mxu0 %v2561
    %2577 = vmatpush.bf16.msra.mxu0 %v2560
    %2578 = vmatpush.bf16.msra.mxu0 %v2559
    %2579 = vmatpush.bf16.msra.mxu0 %v2558
    %2580 = vmatpush.bf16.msra.mxu0 %v2557
    %2581 = vmatmul.bf16.gmra.mxu0 %v2509
    %v2582 = vpop.f32.mrf.mxu0
    %v2583 = vadd.f32 0.0, %v2582
    %v2584 = vpop.f32.mrf.mxu0
    %v2585 = vadd.f32 0.0, %v2584
    %2586 = vmatmul.bf16.gmra.mxu0 %v2510
    %v2587 = vpop.f32.mrf.mxu0
    %v2588 = vadd.f32 0.0, %v2587
    %v2589 = vpop.f32.mrf.mxu0
    %v2590 = vadd.f32 0.0, %v2589
    %2591 = vmatmul.bf16.gmra.mxu0 %v2511
    %v2592 = vpop.f32.mrf.mxu0
    %v2593 = vadd.f32 0.0, %v2592
    %v2594 = vpop.f32.mrf.mxu0
    %v2595 = vadd.f32 0.0, %v2594
    %2596 = vmatmul.bf16.gmra.mxu0 %v2512
    %v2597 = vpop.f32.mrf.mxu0
    %v2598 = vadd.f32 0.0, %v2597
    %v2599 = vpop.f32.mrf.mxu0
    %v2600 = vadd.f32 0.0, %v2599
    %2601 = vmatmul.bf16.gmra.mxu0 %v2513
    %v2602 = vpop.f32.mrf.mxu0
    %v2603 = vadd.f32 0.0, %v2602
    %v2604 = vpop.f32.mrf.mxu0
    %v2605 = vadd.f32 0.0, %v2604
    %2606 = vmatmul.bf16.gmra.mxu0 %v2514
    %v2607 = vpop.f32.mrf.mxu0
    %v2608 = vadd.f32 0.0, %v2607
    %v2609 = vpop.f32.mrf.mxu0
    %v2610 = vadd.f32 0.0, %v2609
    %2611 = vmatmul.bf16.gmra.mxu0 %v2515
    %v2612 = vpop.f32.mrf.mxu0
    %v2613 = vadd.f32 0.0, %v2612
    %v2614 = vpop.f32.mrf.mxu0
    %v2615 = vadd.f32 0.0, %v2614
    %2616 = vmatmul.bf16.gmra.mxu0 %v2516
    %v2617 = vpop.f32.mrf.mxu0
    %v2618 = vadd.f32 0.0, %v2617
    %v2619 = vpop.f32.mrf.mxu0
    %v2620 = vadd.f32 0.0, %v2619
    %2621 = vdwg.mxu0
    %v2622 = vadd.f32 %v2444, %v2583
    %v2623 = vadd.f32 %v2445, %v2585
    %v2624 = vadd.f32 %v2446, %v2588
    %v2625 = vadd.f32 %v2447, %v2590
    %v2626 = vadd.f32 %v2448, %v2593
    %v2627 = vadd.f32 %v2449, %v2595
    %v2628 = vadd.f32 %v2450, %v2598
    %v2629 = vadd.f32 %v2451, %v2600
    %v2630 = vadd.f32 %v2452, %v2603
    %v2631 = vadd.f32 %v2453, %v2605
    %v2632 = vadd.f32 %v2454, %v2608
    %v2633 = vadd.f32 %v2455, %v2610
    %v2634 = vadd.f32 %v2456, %v2613
    %v2635 = vadd.f32 %v2457, %v2615
    %v2636 = vadd.f32 %v2458, %v2618
    %v2637 = vadd.f32 %v2459, %v2620
    %v2638 = vld [vmem:[%s0 + $0xc] sm:$0xf]
    %v2639 = vld [vmem:[%s0 + $0x10] sm:$0xf]
    %v2640 = vld [vmem:[%s0 + $0x14] sm:$0xf]
    %v2641 = vld [vmem:[%s0 + $0x18] sm:$0xf]
    %v2642 = vld [vmem:[%s0 + $0x1c] sm:$0xf]
    %v2643 = vld [vmem:[%s0 + $0x20] sm:$0xf]
    %v2644 = vld [vmem:[%s0 + $0x24] sm:$0xf]
    %v2645 = vld [vmem:[%s0 + $0x28] sm:$0xf]
    %v2646 = vld [vmem:[%s0 + $0x2c] sm:$0x1]
    %v2647 = vld [vmem:[%s0 + $0x3c] sm:$0xf]
    %v2648 = vld [vmem:[%s0 + $0x40] sm:$0xf]
    %v2649 = vld [vmem:[%s0 + $0x44] sm:$0xf]
    %v2650 = vld [vmem:[%s0 + $0x48] sm:$0xf]
    %v2651 = vld [vmem:[%s0 + $0x4c] sm:$0xf]
    %v2652 = vld [vmem:[%s0 + $0x50] sm:$0xf]
    %v2653 = vld [vmem:[%s0 + $0x54] sm:$0xf]
    %v2654 = vld [vmem:[%s0 + $0x58] sm:$0xf]
    %v2655 = vld [vmem:[%s0 + $0x5c] sm:$0x1]
    %v2657 = vshrl.u32 %v2638, 16
    %v2659 = vrot.slane %v2657, 4
    %v2660 = vshll.u32 %v2638, 16
    %v2662 = vrot.slane %v2660, 5
    %v2663 = vor.u32 %v2659, %v2662
    %v2664 = vrot.slane %v2663, 4
    %v2666 = vshll.u32 %v2639, 16
    %v2668 = vrot.slane %v2666, 5
    %v2669 = vsel %vm867, %v2664, %v2668
    %v2670 = vshrl.u32 %v2639, 16
    %v2672 = vrot.slane %v2670, 4
    %v2673 = vor.u32 %v2672, %v2668
    %v2674 = vrot.slane %v2673, 4
    %v2676 = vshll.u32 %v2640, 16
    %v2678 = vrot.slane %v2676, 5
    %v2679 = vsel %vm867, %v2674, %v2678
    %v2680 = vshrl.u32 %v2640, 16
    %v2682 = vrot.slane %v2680, 4
    %v2683 = vor.u32 %v2682, %v2678
    %v2684 = vrot.slane %v2683, 4
    %v2686 = vshll.u32 %v2641, 16
    %v2688 = vrot.slane %v2686, 5
    %v2689 = vsel %vm867, %v2684, %v2688
    %v2690 = vshrl.u32 %v2641, 16
    %v2692 = vrot.slane %v2690, 4
    %v2693 = vor.u32 %v2692, %v2688
    %v2694 = vrot.slane %v2693, 4
    %v2696 = vshll.u32 %v2642, 16
    %v2698 = vrot.slane %v2696, 5
    %v2699 = vsel %vm867, %v2694, %v2698
    %v2700 = vshrl.u32 %v2642, 16
    %v2702 = vrot.slane %v2700, 4
    %v2703 = vor.u32 %v2702, %v2698
    %v2704 = vrot.slane %v2703, 4
    %v2706 = vshll.u32 %v2643, 16
    %v2708 = vrot.slane %v2706, 5
    %v2709 = vsel %vm867, %v2704, %v2708
    %v2710 = vshrl.u32 %v2643, 16
    %v2712 = vrot.slane %v2710, 4
    %v2713 = vor.u32 %v2712, %v2708
    %v2714 = vrot.slane %v2713, 4
    %v2716 = vshll.u32 %v2644, 16
    %v2718 = vrot.slane %v2716, 5
    %v2719 = vsel %vm867, %v2714, %v2718
    %v2720 = vshrl.u32 %v2644, 16
    %v2722 = vrot.slane %v2720, 4
    %v2723 = vor.u32 %v2722, %v2718
    %v2724 = vrot.slane %v2723, 4
    %v2726 = vshll.u32 %v2645, 16
    %v2728 = vrot.slane %v2726, 5
    %v2729 = vsel %vm867, %v2724, %v2728
    %v2730 = vshrl.u32 %v2645, 16
    %v2732 = vrot.slane %v2730, 4
    %v2733 = vor.u32 %v2732, %v2728
    %v2734 = vrot.slane %v2733, 4
    %v2736 = vshll.u32 %v2646, 16
    %v2738 = vrot.slane %v2736, 5
    %v2739 = vsel %vm867, %v2734, %v2738
    %v2741 = vshrl.u32 %v2647, 16
    %v2743 = vrot.slane %v2741, 4
    %v2744 = vshll.u32 %v2647, 16
    %v2746 = vrot.slane %v2744, 5
    %v2747 = vor.u32 %v2743, %v2746
    %v2748 = vrot.slane %v2747, 4
    %v2750 = vshll.u32 %v2648, 16
    %v2752 = vrot.slane %v2750, 5
    %v2753 = vsel %vm867, %v2748, %v2752
    %v2754 = vshrl.u32 %v2648, 16
    %v2756 = vrot.slane %v2754, 4
    %v2757 = vor.u32 %v2756, %v2752
    %v2758 = vrot.slane %v2757, 4
    %v2760 = vshll.u32 %v2649, 16
    %v2762 = vrot.slane %v2760, 5
    %v2763 = vsel %vm867, %v2758, %v2762
    %v2764 = vshrl.u32 %v2649, 16
    %v2766 = vrot.slane %v2764, 4
    %v2767 = vor.u32 %v2766, %v2762
    %v2768 = vrot.slane %v2767, 4
    %v2770 = vshll.u32 %v2650, 16
    %v2772 = vrot.slane %v2770, 5
    %v2773 = vsel %vm867, %v2768, %v2772
    %v2774 = vshrl.u32 %v2650, 16
    %v2776 = vrot.slane %v2774, 4
    %v2777 = vor.u32 %v2776, %v2772
    %v2778 = vrot.slane %v2777, 4
    %v2780 = vshll.u32 %v2651, 16
    %v2782 = vrot.slane %v2780, 5
    %v2783 = vsel %vm867, %v2778, %v2782
    %v2784 = vshrl.u32 %v2651, 16
    %v2786 = vrot.slane %v2784, 4
    %v2787 = vor.u32 %v2786, %v2782
    %v2788 = vrot.slane %v2787, 4
    %v2790 = vshll.u32 %v2652, 16
    %v2792 = vrot.slane %v2790, 5
    %v2793 = vsel %vm867, %v2788, %v2792
    %v2794 = vshrl.u32 %v2652, 16
    %v2796 = vrot.slane %v2794, 4
    %v2797 = vor.u32 %v2796, %v2792
    %v2798 = vrot.slane %v2797, 4
    %v2800 = vshll.u32 %v2653, 16
    %v2802 = vrot.slane %v2800, 5
    %v2803 = vsel %vm867, %v2798, %v2802
    %v2804 = vshrl.u32 %v2653, 16
    %v2806 = vrot.slane %v2804, 4
    %v2807 = vor.u32 %v2806, %v2802
    %v2808 = vrot.slane %v2807, 4
    %v2810 = vshll.u32 %v2654, 16
    %v2812 = vrot.slane %v2810, 5
    %v2813 = vsel %vm867, %v2808, %v2812
    %v2814 = vshrl.u32 %v2654, 16
    %v2816 = vrot.slane %v2814, 4
    %v2817 = vor.u32 %v2816, %v2812
    %v2818 = vrot.slane %v2817, 4
    %v2820 = vshll.u32 %v2655, 16
    %v2822 = vrot.slane %v2820, 5
    %v2823 = vsel %vm867, %v2818, %v2822
    %v2840 = vsel %vm1084, %v2669, 0
    %v2841 = vsel %vm1085, %v2679, 0
    %v2842 = vsel %vm1086, %v2689, 0
    %v2843 = vsel %vm1087, %v2699, 0
    %v2844 = vsel %vm1088, %v2709, 0
    %v2845 = vsel %vm1089, %v2719, 0
    %v2846 = vsel %vm1090, %v2729, 0
    %v2847 = vsel %vm1091, %v2739, 0
    %v2848 = vsel %vm1092, %v2753, 0
    %v2849 = vsel %vm1093, %v2763, 0
    %v2850 = vsel %vm1094, %v2773, 0
    %v2851 = vsel %vm1095, %v2783, 0
    %v2852 = vsel %vm1096, %v2793, 0
    %v2853 = vsel %vm1097, %v2803, 0
    %v2854 = vsel %vm1098, %v2813, 0
    %v2855 = vsel %vm1099, %v2823, 0
    %s2856 = scalar_lea.vmem [#allocation2], 512
    %v2857 = vld [vmem:[%s2856] sm:$0xf]
    %v2858 = vld [vmem:[%s2856 + $0x4] sm:$0xf]
    %v2859 = vld [vmem:[%s2856 + $0x8] sm:$0xf]
    %v2860 = vld [vmem:[%s2856 + $0xc] sm:$0xf]
    %v2861 = vld [vmem:[%s2856 + $0x10] sm:$0xf]
    %v2862 = vld [vmem:[%s2856 + $0x14] sm:$0xf]
    %v2863 = vld [vmem:[%s2856 + $0x18] sm:$0xf]
    %v2864 = vld [vmem:[%s2856 + $0x1c] sm:$0xf]
    %v2865 = vld [vmem:[%s2856 + $0x20] sm:$0xf]
    %v2866 = vld [vmem:[%s2856 + $0x24] sm:$0xf]
    %v2867 = vld [vmem:[%s2856 + $0x28] sm:$0xf]
    %v2868 = vld [vmem:[%s2856 + $0x2c] sm:$0xf]
    %v2869 = vld [vmem:[%s2856 + $0x30] sm:$0xf]
    %v2870 = vld [vmem:[%s2856 + $0x34] sm:$0xf]
    %v2871 = vld [vmem:[%s2856 + $0x38] sm:$0xf]
    %v2872 = vld [vmem:[%s2856 + $0x3c] sm:$0xf]
    %v2889 = vunpack.c.l.b16 %v2840
    %v2890 = vunpack.c.l.b16 %v2841
    %v2891 = vunpack.c.l.b16 %v2842
    %v2892 = vunpack.c.l.b16 %v2843
    %v2893 = vunpack.c.l.b16 %v2844
    %v2894 = vunpack.c.l.b16 %v2845
    %v2895 = vunpack.c.l.b16 %v2846
    %v2896 = vunpack.c.l.b16 %v2847
    %v2897 = vunpack.c.l.b16 %v2848
    %v2898 = vunpack.c.l.b16 %v2849
    %v2899 = vunpack.c.l.b16 %v2850
    %v2900 = vunpack.c.l.b16 %v2851
    %v2901 = vunpack.c.l.b16 %v2852
    %v2902 = vunpack.c.l.b16 %v2853
    %v2903 = vunpack.c.l.b16 %v2854
    %v2904 = vunpack.c.l.b16 %v2855
    %v2905 = vpack.c.b16 %v2890, %v2889
    %v2906 = vpack.c.b16 %v2892, %v2891
    %v2907 = vpack.c.b16 %v2894, %v2893
    %v2908 = vpack.c.b16 %v2896, %v2895
    %v2909 = vpack.c.b16 %v2898, %v2897
    %v2910 = vpack.c.b16 %v2900, %v2899
    %v2911 = vpack.c.b16 %v2902, %v2901
    %v2912 = vpack.c.b16 %v2904, %v2903
    %v2937 = vunpack.c.l.b16 %v2857
    %v2938 = vunpack.c.l.b16 %v2858
    %v2939 = vunpack.c.l.b16 %v2859
    %v2940 = vunpack.c.l.b16 %v2860
    %v2941 = vunpack.c.l.b16 %v2861
    %v2942 = vunpack.c.l.b16 %v2862
    %v2943 = vunpack.c.l.b16 %v2863
    %v2944 = vunpack.c.l.b16 %v2864
    %v2945 = vunpack.c.l.b16 %v2865
    %v2946 = vunpack.c.l.b16 %v2866
    %v2947 = vunpack.c.l.b16 %v2867
    %v2948 = vunpack.c.l.b16 %v2868
    %v2949 = vunpack.c.l.b16 %v2869
    %v2950 = vunpack.c.l.b16 %v2870
    %v2951 = vunpack.c.l.b16 %v2871
    %v2952 = vunpack.c.l.b16 %v2872
    %v2953 = vpack.c.b16 %v2938, %v2937
    %v2954 = vpack.c.b16 %v2940, %v2939
    %v2955 = vpack.c.b16 %v2942, %v2941
    %v2956 = vpack.c.b16 %v2944, %v2943
    %v2957 = vpack.c.b16 %v2946, %v2945
    %v2958 = vpack.c.b16 %v2948, %v2947
    %v2959 = vpack.c.b16 %v2950, %v2949
    %v2960 = vpack.c.b16 %v2952, %v2951
    %2969 = vmatpush.bf16.msra.mxu0 %v2960
    %2970 = vmatpush.bf16.msra.mxu0 %v2959
    %2971 = vmatpush.bf16.msra.mxu0 %v2958
    %2972 = vmatpush.bf16.msra.mxu0 %v2957
    %2973 = vmatpush.bf16.msra.mxu0 %v2956
    %2974 = vmatpush.bf16.msra.mxu0 %v2955
    %2975 = vmatpush.bf16.msra.mxu0 %v2954
    %2976 = vmatpush.bf16.msra.mxu0 %v2953
    %2977 = vmatmul.bf16.gmra.mxu0 %v2905
    %v2978 = vpop.f32.mrf.mxu0
    %v2979 = vadd.f32 0.0, %v2978
    %v2980 = vpop.f32.mrf.mxu0
    %v2981 = vadd.f32 0.0, %v2980
    %2982 = vmatmul.bf16.gmra.mxu0 %v2906
    %v2983 = vpop.f32.mrf.mxu0
    %v2984 = vadd.f32 0.0, %v2983
    %v2985 = vpop.f32.mrf.mxu0
    %v2986 = vadd.f32 0.0, %v2985
    %2987 = vmatmul.bf16.gmra.mxu0 %v2907
    %v2988 = vpop.f32.mrf.mxu0
    %v2989 = vadd.f32 0.0, %v2988
    %v2990 = vpop.f32.mrf.mxu0
    %v2991 = vadd.f32 0.0, %v2990
    %2992 = vmatmul.bf16.gmra.mxu0 %v2908
    %v2993 = vpop.f32.mrf.mxu0
    %v2994 = vadd.f32 0.0, %v2993
    %v2995 = vpop.f32.mrf.mxu0
    %v2996 = vadd.f32 0.0, %v2995
    %2997 = vmatmul.bf16.gmra.mxu0 %v2909
    %v2998 = vpop.f32.mrf.mxu0
    %v2999 = vadd.f32 0.0, %v2998
    %v3000 = vpop.f32.mrf.mxu0
    %v3001 = vadd.f32 0.0, %v3000
    %3002 = vmatmul.bf16.gmra.mxu0 %v2910
    %v3003 = vpop.f32.mrf.mxu0
    %v3004 = vadd.f32 0.0, %v3003
    %v3005 = vpop.f32.mrf.mxu0
    %v3006 = vadd.f32 0.0, %v3005
    %3007 = vmatmul.bf16.gmra.mxu0 %v2911
    %v3008 = vpop.f32.mrf.mxu0
    %v3009 = vadd.f32 0.0, %v3008
    %v3010 = vpop.f32.mrf.mxu0
    %v3011 = vadd.f32 0.0, %v3010
    %3012 = vmatmul.bf16.gmra.mxu0 %v2912
    %v3013 = vpop.f32.mrf.mxu0
    %v3014 = vadd.f32 0.0, %v3013
    %v3015 = vpop.f32.mrf.mxu0
    %v3016 = vadd.f32 0.0, %v3015
    %3017 = vdwg.mxu0
    %v3018 = vadd.f32 %v2622, %v2979
    %v3019 = vadd.f32 %v2623, %v2981
    %v3020 = vadd.f32 %v2624, %v2984
    %v3021 = vadd.f32 %v2625, %v2986
    %v3022 = vadd.f32 %v2626, %v2989
    %v3023 = vadd.f32 %v2627, %v2991
    %v3024 = vadd.f32 %v2628, %v2994
    %v3025 = vadd.f32 %v2629, %v2996
    %v3026 = vadd.f32 %v2630, %v2999
    %v3027 = vadd.f32 %v2631, %v3001
    %v3028 = vadd.f32 %v2632, %v3004
    %v3029 = vadd.f32 %v2633, %v3006
    %v3030 = vadd.f32 %v2634, %v3009
    %v3031 = vadd.f32 %v2635, %v3011
    %v3032 = vadd.f32 %v2636, %v3014
    %v3033 = vadd.f32 %v2637, %v3016
    %v3034 = vpack.c.bf16 %v3018, %v3018
    %v3035 = vpack.c.bf16 %v3019, %v3019
    %v3036 = vpack.c.bf16 %v3020, %v3020
    %v3037 = vpack.c.bf16 %v3021, %v3021
    %v3038 = vpack.c.bf16 %v3022, %v3022
    %v3039 = vpack.c.bf16 %v3023, %v3023
    %v3040 = vpack.c.bf16 %v3024, %v3024
    %v3041 = vpack.c.bf16 %v3025, %v3025
    %v3042 = vpack.c.bf16 %v3026, %v3026
    %v3043 = vpack.c.bf16 %v3027, %v3027
    %v3044 = vpack.c.bf16 %v3028, %v3028
    %v3045 = vpack.c.bf16 %v3029, %v3029
    %v3046 = vpack.c.bf16 %v3030, %v3030
    %v3047 = vpack.c.bf16 %v3031, %v3031
    %v3048 = vpack.c.bf16 %v3032, %v3032
    %v3049 = vpack.c.bf16 %v3033, %v3033
    %3050 = vst [vmem:[%s2] sm:$0xf] %v3034
    %3051 = vst [vmem:[%s2 + $0x4] sm:$0xf] %v3035
    %3052 = vst [vmem:[%s2 + $0x8] sm:$0xf] %v3036
    %3053 = vst [vmem:[%s2 + $0xc] sm:$0xf] %v3037
    %3054 = vst [vmem:[%s2 + $0x10] sm:$0xf] %v3038
    %3055 = vst [vmem:[%s2 + $0x14] sm:$0xf] %v3039
    %3056 = vst [vmem:[%s2 + $0x18] sm:$0xf] %v3040
    %3057 = vst [vmem:[%s2 + $0x1c] sm:$0xf] %v3041
    %3058 = vst [vmem:[%s2 + $0x20] sm:$0xf] %v3042
    %3059 = vst [vmem:[%s2 + $0x24] sm:$0xf] %v3043
    %3060 = vst [vmem:[%s2 + $0x28] sm:$0xf] %v3044
    %3061 = vst [vmem:[%s2 + $0x2c] sm:$0xf] %v3045
    %3062 = vst [vmem:[%s2 + $0x30] sm:$0xf] %v3046
    %3063 = vst [vmem:[%s2 + $0x34] sm:$0xf] %v3047
    %3064 = vst [vmem:[%s2 + $0x38] sm:$0xf] %v3048
    %3065 = vst [vmem:[%s2 + $0x3c] sm:$0xf] %v3049
    %v3066 = vadd.f32 %v3018, %v3019
    %v3067 = vadd.f32 %v3066, %v3020
    %v3068 = vadd.f32 %v3067, %v3021
    %v3069 = vadd.f32 %v3068, %v3022
    %v3070 = vadd.f32 %v3069, %v3023
    %v3071 = vadd.f32 %v3070, %v3024
    %v3072 = vadd.f32 %v3071, %v3025
    %v3073 = vadd.f32 %v3072, %v3026
    %v3074 = vadd.f32 %v3073, %v3027
    %v3075 = vadd.f32 %v3074, %v3028
    %v3076 = vadd.f32 %v3075, %v3029
    %v3077 = vadd.f32 %v3076, %v3030
    %v3078 = vadd.f32 %v3077, %v3031
    %v3079 = vadd.f32 %v3078, %v3032
    %v3080 = vadd.f32 %v3079, %v3033
    %v3081 = vrot.slane %v3080, 4
    %v3082 = vadd.f32 %v3080, %v3081
    %v3083 = vrot.slane %v3082, 2
    %v3084 = vadd.f32 %v3082, %v3083
    %v3085 = vrot.slane %v3084, 1
    %v3086 = vadd.f32 %v3084, %v3085
    %3087 = vst [vmem:[%s3] sm:$0x1] %v3086
    %v3088 = vmul.f32 %v3018, %v3018
    %v3089 = vmul.f32 %v3019, %v3019
    %v3090 = vmul.f32 %v3020, %v3020
    %v3091 = vmul.f32 %v3021, %v3021
    %v3092 = vmul.f32 %v3022, %v3022
    %v3093 = vmul.f32 %v3023, %v3023
    %v3094 = vmul.f32 %v3024, %v3024
    %v3095 = vmul.f32 %v3025, %v3025
    %v3096 = vmul.f32 %v3026, %v3026
    %v3097 = vmul.f32 %v3027, %v3027
    %v3098 = vmul.f32 %v3028, %v3028
    %v3099 = vmul.f32 %v3029, %v3029
    %v3100 = vmul.f32 %v3030, %v3030
    %v3101 = vmul.f32 %v3031, %v3031
    %v3102 = vmul.f32 %v3032, %v3032
    %v3103 = vmul.f32 %v3033, %v3033
    %v3104 = vadd.f32 %v3088, %v3089
    %v3105 = vadd.f32 %v3104, %v3090
    %v3106 = vadd.f32 %v3105, %v3091
    %v3107 = vadd.f32 %v3106, %v3092
    %v3108 = vadd.f32 %v3107, %v3093
    %v3109 = vadd.f32 %v3108, %v3094
    %v3110 = vadd.f32 %v3109, %v3095
    %v3111 = vadd.f32 %v3110, %v3096
    %v3112 = vadd.f32 %v3111, %v3097
    %v3113 = vadd.f32 %v3112, %v3098
    %v3114 = vadd.f32 %v3113, %v3099
    %v3115 = vadd.f32 %v3114, %v3100
    %v3116 = vadd.f32 %v3115, %v3101
    %v3117 = vadd.f32 %v3116, %v3102
    %v3118 = vadd.f32 %v3117, %v3103
    %v3119 = vrot.slane %v3118, 4
    %v3120 = vadd.f32 %v3118, %v3119
    %v3121 = vrot.slane %v3120, 2
    %v3122 = vadd.f32 %v3120, %v3121
    %v3123 = vrot.slane %v3122, 1
    %v3124 = vadd.f32 %v3122, %v3123
    %3125 = vst [vmem:[%s3 + $0x1] sm:$0x1] %v3124
    // Predicated region
    $region14: #{masked_vgg_forward.11} parent=1 // pred_check
      _
    $region15: #{masked_vgg_forward.11} parent=1 // pred_check_branch
      %3127 = sbr.rel (0) target = $region17
    $region16: #{masked_vgg_forward.11} parent=1 // pred_region
      _
    $region17: #{masked_vgg_forward.11} parent=1 // pred_fallthru
      _
    // Predicated region
    $region18: #{masked_vgg_forward.11} parent=1 // pred_check
      _
    $region19: #{masked_vgg_forward.11} parent=1 // pred_check_branch
      %3129 = sbr.rel (0) target = $region21
    $region20: #{masked_vgg_forward.11} parent=1 // pred_region
      _
    $region21: #{masked_vgg_forward.11} parent=1 // pred_fallthru
      _
    // Predicated region
    $region22: #{masked_vgg_forward.11} parent=1 // pred_check
      _
    $region23: #{masked_vgg_forward.11} parent=1 // pred_check_branch
      %3131 = sbr.rel (0) target = $region25
    $region24: #{masked_vgg_forward.11} parent=1 // pred_region
      _
    $region25: #{masked_vgg_forward.11} parent=1 // pred_fallthru
      _
    // Predicated region
    $region26: #{masked_vgg_forward.11} parent=1 // pred_check
      _
    $region27: #{masked_vgg_forward.11} parent=1 // pred_check_branch
      %3133 = sbr.rel (0) target = $region29
    $region28: #{masked_vgg_forward.11} parent=1 // pred_region
      _
    $region29: #{masked_vgg_forward.11} parent=1 // pred_fallthru
      _
    %3134 = vsyncpa [#allocation3], 1

// kernel: masked_vgg_forward.15
$region0: #{masked_vgg_forward.15}
  #allocation0 [shape = 'u32[]', space=smem, size = 0x4, offset = 0x4, fixed_abs, tag = 'smem constant byte address 0x4 - core index']
  #allocation1 [shape = 'u32[72,128]{1,0:T(1,128)}', space=vmem, size = 0x9000, scoped, tag = 'internal scratch']
  %s0 = inlined_call_operand.vmem [shape: bf16[2,12,128], index: 0, kind: input, shape index: {}]
  %s1 = inlined_call_operand.hbm [shape: bf16[9,128,128], index: 1, kind: input, shape index: {}]
  %s2 = inlined_call_operand.vmem [shape: bf16[2,4,128], index: 2, kind: output, shape index: {0}]
  %s3 = inlined_call_operand.vmem [shape: f32[2,128], index: 3, kind: output, shape index: {1}]
  %4 = xla_tuple %s2, %s3
  %s5 = sld [smem:[#allocation0]]
  $region30: #{masked_vgg_forward.15} parent=0
    _
  %s7 = ssub.s32 1, %s5
  %s8 = scalar_select 0, %s7, %s5
  $region1: #{masked_vgg_forward.15} parent=0
    #allocation2 [shape = 'u8[294912]{0}', space=vmem, size = 0x48000, scoped, tag = 'input window, operand 1, single buffered']
    #allocation3 [shape = 's32[1]{0}', space=sflag, size = 0x4, scoped, tag = 'scoped memory for masked_vgg_forward.15']
    %9 = vsyncpa [#allocation3], 0
    // Predicated region
    $region2: #{masked_vgg_forward.15} parent=1 // pred_check
      _
    $region3: #{masked_vgg_forward.15} parent=1 // pred_check_branch
      %11 = sbr.rel (0) target = $region5
    $region4: #{masked_vgg_forward.15} parent=1 // pred_region
      _
    $region5: #{masked_vgg_forward.15} parent=1 // pred_fallthru
      _
    // Predicated region
    $region6: #{masked_vgg_forward.15} parent=1 // pred_check
      _
    $region7: #{masked_vgg_forward.15} parent=1 // pred_check_branch
      %13 = sbr.rel (0) target = $region9
    $region8: #{masked_vgg_forward.15} parent=1 // pred_region
      %15 = vsyncadd [#allocation3], 0
      %s16 = sshll.u32 %s1, 4
      %s17 = int_to_ptr.hbm [resolvable:$true] %s16
      %s18 = sshll.u32 [#allocation2], 4
      %s19 = int_to_ptr.vmem [resolvable:$true] %s18
      %24 = dma.hbm_to_vmem [thread:$0]  %s17, 9216, %s19, [#allocation3], 64, 64, 4
    $region9: #{masked_vgg_forward.15} parent=1 // pred_fallthru
      _
    // Predicated region
    $region10: #{masked_vgg_forward.15} parent=1 // pred_check
      _
    $region11: #{masked_vgg_forward.15} parent=1 // pred_check_branch
      %26 = sbr.rel (0) target = $region13
    $region12: #{masked_vgg_forward.15} parent=1 // pred_region
      %28 = dma.done [#allocation3], 9216
    $region13: #{masked_vgg_forward.15} parent=1 // pred_fallthru
      _
    %v31 = vlaneseq
    %v32 = vshrl.u32 %v31, 7
    %vm33 = vcmp.lt.s32.totalorder %v32, 0
    %v34 = vsub.s32 0, %v32
    %v35 = vsel %vm33, %v34, %v32
    %v36 = vshrl.u32 %v35, 1
    %v37 = vand.u32 %v35, 1
    %v38 = vsub.s32 0, %v37
    %v39 = vsel %vm33, %v38, %v37
    %vm40 = vcmp.ne.s32.totalorder %v39, 0
    %vm41 = vcmp.lt.s32.totalorder %v39, 0
    %vm42 = vmand %vm41, %vm40
    %v43 = vadd.s32 %v39, 2
    %v44 = vsel %vm42, %v43, %v39
    %vm45 = vcmp.ne.s32.totalorder %v44, 0
    %vm46 = vcmp.ne.s32.totalorder %v44, 1
    %v47 = vld [vmem:[%s0] sm:$0x7]
    %v48 = vld [vmem:[%s0 + $0x8] sm:$0x7]
    %v51 = vrot.slane %v47, 2
    %v52 = vrot.slane %v48, 2
    %vm53 = vcmask 1041408
    %v56 = vsel %vm53, %v47, %v51
    %vm57 = vcmask 1043458
    %v58 = vsel %vm57, %v47, %v51
    %v60 = vrot.slane %v58, 2
    %v63 = vsel %vm53, %v48, %v52
    %v64 = vsel %vm57, %v48, %v52
    %v66 = vrot.slane %v64, 2
    %vm67 = vsmask.f32 1280
    %vm68 = vsmask.f32 3336
    %vm69 = vmor %vm67, %vm68
    %vm70 = vsmask.f32 5392
    %vm71 = vmor %vm69, %vm70
    %vm72 = vsmask.f32 7448
    %vm73 = vmor %vm71, %vm72
    %v74 = vshrl.u32 %v56, 16
    %v76 = vrot.slane %v74, 6
    %v77 = vshll.u32 %v56, 16
    %v79 = vrot.slane %v77, 7
    %v80 = vor.u32 %v76, %v79
    %v81 = vrot.slane %v80, 2
    %v83 = vshll.u32 %v60, 16
    %v85 = vrot.slane %v83, 7
    %v86 = vsel %vm73, %v81, %v85
    %v87 = vshrl.u32 %v63, 16
    %v89 = vrot.slane %v87, 6
    %v90 = vshll.u32 %v63, 16
    %v92 = vrot.slane %v90, 7
    %v93 = vor.u32 %v89, %v92
    %v94 = vrot.slane %v93, 2
    %v96 = vshll.u32 %v66, 16
    %v98 = vrot.slane %v96, 7
    %v99 = vsel %vm73, %v94, %v98
    %v102 = vsel %vm45, 1, 0
    %vm103 = vcmp.eq.s32.totalorder %v102, 1
    %v104 = vsel %vm103, 1, 0
    %v106 = vunpack.c.l.s4 839922192
    %v107 = vunpack.c.0.s8 %v106
    %v108 = vperm.slane %v104, %v107
    %v110 = vunpack.c.l.s4 1985246804
    %v111 = vunpack.c.0.s8 %v110
    %v112 = vperm.slane %v104, %v111
    %vm113 = vcmp.ne.s32.totalorder %v108, 0
    %vm114 = vcmp.ne.s32.totalorder %v112, 0
    %v115 = vsel %vm113, 1, 0
    %v116 = vsel %vm114, 1, 0
    %v117 = vpack.c.b16 %v115, %v115
    %v118 = vpack.c.b16 %v116, %v116
    %v119 = vunpack.c.l.b16 %v117
    %v120 = vunpack.c.h.b16 %v117
    %v121 = vunpack.c.l.b16 0
    %v122 = vunpack.c.h.b16 0
    %vm123 = vcmp.ne.s32.totalorder %v119, %v121
    %vm124 = vcmp.ne.s32.totalorder %v120, %v122
    %vm125 = vmpackc.low %vm124, %vm123
    %v126 = vunpack.c.l.b16 %v118
    %v127 = vunpack.c.h.b16 %v118
    %v128 = vunpack.c.l.b16 0
    %v129 = vunpack.c.h.b16 0
    %vm130 = vcmp.ne.s32.totalorder %v126, %v128
    %vm131 = vcmp.ne.s32.totalorder %v127, %v129
    %vm132 = vmpackc.low %vm131, %vm130
    %v133 = vsel %vm125, %v86, 0
    %v134 = vsel %vm132, %v99, 0
    %v135 = vld [vmem:[#allocation2] sm:$0xf]
    %v136 = vld [vmem:[#allocation2 + $0x4] sm:$0xf]
    %v137 = vld [vmem:[#allocation2 + $0x8] sm:$0xf]
    %v138 = vld [vmem:[#allocation2 + $0xc] sm:$0xf]
    %v139 = vld [vmem:[#allocation2 + $0x10] sm:$0xf]
    %v140 = vld [vmem:[#allocation2 + $0x14] sm:$0xf]
    %v141 = vld [vmem:[#allocation2 + $0x18] sm:$0xf]
    %v142 = vld [vmem:[#allocation2 + $0x1c] sm:$0xf]
    %v143 = vld [vmem:[#allocation2 + $0x20] sm:$0xf]
    %v144 = vld [vmem:[#allocation2 + $0x24] sm:$0xf]
    %v145 = vld [vmem:[#allocation2 + $0x28] sm:$0xf]
    %v146 = vld [vmem:[#allocation2 + $0x2c] sm:$0xf]
    %v147 = vld [vmem:[#allocation2 + $0x30] sm:$0xf]
    %v148 = vld [vmem:[#allocation2 + $0x34] sm:$0xf]
    %v149 = vld [vmem:[#allocation2 + $0x38] sm:$0xf]
    %v150 = vld [vmem:[#allocation2 + $0x3c] sm:$0xf]
    %v151 = vld [vmem:[%s0] sm:$0x6]
    %v152 = vld [vmem:[%s0 + $0x8] sm:$0x6]
    %v155 = vrot.slane %v151, 2
    %v156 = vrot.slane %v152, 2
    %v159 = vsel %vm53, %v151, %v155
    %v161 = vsel %vm57, %v151, %v155
    %v163 = vrot.slane %v161, 2
    %v166 = vsel %vm53, %v152, %v156
    %v168 = vsel %vm57, %v152, %v156
    %v170 = vrot.slane %v168, 2
    %vm171 = vcmask 1040384
    %vm172 = vcmask 1042434
    %vm173 = vmor %vm171, %vm172
    %vm174 = vcmask 1044484
    %vm175 = vmor %vm173, %vm174
    %vm176 = vcmask 1046534
    %vm177 = vmor %vm175, %vm176
    %v178 = vrot.slane %v159, 7
    %v179 = vrot.slane %v178, 2
    %v180 = vrot.slane %v163, 7
    %v181 = vsel %vm177, %v179, %v180
    %v182 = vrot.slane %v166, 7
    %v183 = vrot.slane %v182, 2
    %v184 = vrot.slane %v170, 7
    %v185 = vsel %vm177, %v183, %v184
    %s186 = scalar_lea.vmem [#allocation2], 64
    %v187 = vld [vmem:[%s186] sm:$0xf]
    %v188 = vld [vmem:[%s186 + $0x4] sm:$0xf]
    %v189 = vld [vmem:[%s186 + $0x8] sm:$0xf]
    %v190 = vld [vmem:[%s186 + $0xc] sm:$0xf]
    %v191 = vld [vmem:[%s186 + $0x10] sm:$0xf]
    %v192 = vld [vmem:[%s186 + $0x14] sm:$0xf]
    %v193 = vld [vmem:[%s186 + $0x18] sm:$0xf]
    %v194 = vld [vmem:[%s186 + $0x1c] sm:$0xf]
    %v195 = vld [vmem:[%s186 + $0x20] sm:$0xf]
    %v196 = vld [vmem:[%s186 + $0x24] sm:$0xf]
    %v197 = vld [vmem:[%s186 + $0x28] sm:$0xf]
    %v198 = vld [vmem:[%s186 + $0x2c] sm:$0xf]
    %v199 = vld [vmem:[%s186 + $0x30] sm:$0xf]
    %v200 = vld [vmem:[%s186 + $0x34] sm:$0xf]
    %v201 = vld [vmem:[%s186 + $0x38] sm:$0xf]
    %v202 = vld [vmem:[%s186 + $0x3c] sm:$0xf]
    %204 = vst [vmem:[#allocation1] ss:$4 sm:$0xff] %v181
    %s206 = scalar_lea.vmem [#allocation1], 1
    %207 = vst [vmem:[%s206] ss:$4 sm:$0xff] %v185
    %v208 = vld.sshfl [vmem:[#allocation1] sm:$0xff pattern:$0x73625140]
    %v226 = vunpack.c.l.b16 %v187
    %v227 = vunpack.c.l.b16 %v188
    %v228 = vunpack.c.l.b16 %v189
    %v229 = vunpack.c.l.b16 %v190
    %v230 = vunpack.c.l.b16 %v191
    %v231 = vunpack.c.l.b16 %v192
    %v232 = vunpack.c.l.b16 %v193
    %v233 = vunpack.c.l.b16 %v194
    %v234 = vunpack.c.l.b16 %v195
    %v235 = vunpack.c.l.b16 %v196
    %v236 = vunpack.c.l.b16 %v197
    %v237 = vunpack.c.l.b16 %v198
    %v238 = vunpack.c.l.b16 %v199
    %v239 = vunpack.c.l.b16 %v200
    %v240 = vunpack.c.l.b16 %v201
    %v241 = vunpack.c.l.b16 %v202
    %v242 = vpack.c.b16 %v227, %v226
    %v243 = vpack.c.b16 %v229, %v228
    %v244 = vpack.c.b16 %v231, %v230
    %v245 = vpack.c.b16 %v233, %v232
    %v246 = vpack.c.b16 %v235, %v234
    %v247 = vpack.c.b16 %v237, %v236
    %v248 = vpack.c.b16 %v239, %v238
    %v249 = vpack.c.b16 %v241, %v240
    %258 = vmatpush.bf16.msra.mxu0 %v249
    %259 = vmatpush.bf16.msra.mxu0 %v248
    %260 = vmatpush.bf16.msra.mxu0 %v247
    %261 = vmatpush.bf16.msra.mxu0 %v246
    %262 = vmatpush.bf16.msra.mxu0 %v245
    %263 = vmatpush.bf16.msra.mxu0 %v244
    %264 = vmatpush.bf16.msra.mxu0 %v243
    %265 = vmatpush.bf16.msra.mxu0 %v242
    %266 = vmatmul.bf16.gmra.mxu0 %v208
    %v267 = vpop.f32.mrf.mxu0
    %v268 = vadd.f32 0.0, %v267
    %v269 = vpop.f32.mrf.mxu0
    %270 = vdwg.mxu0
    %272 = vst [vmem:[#allocation1] ss:$4 sm:$0xff] %v133
    %s274 = scalar_lea.vmem [#allocation1], 1
    %275 = vst [vmem:[%s274] ss:$4 sm:$0xff] %v134
    %v276 = vld.sshfl [vmem:[#allocation1] sm:$0xff pattern:$0x73625140]
    %v294 = vunpack.c.l.b16 %v135
    %v295 = vunpack.c.l.b16 %v136
    %v296 = vunpack.c.l.b16 %v137
    %v297 = vunpack.c.l.b16 %v138
    %v298 = vunpack.c.l.b16 %v139
    %v299 = vunpack.c.l.b16 %v140
    %v300 = vunpack.c.l.b16 %v141
    %v301 = vunpack.c.l.b16 %v142
    %v302 = vunpack.c.l.b16 %v143
    %v303 = vunpack.c.l.b16 %v144
    %v304 = vunpack.c.l.b16 %v145
    %v305 = vunpack.c.l.b16 %v146
    %v306 = vunpack.c.l.b16 %v147
    %v307 = vunpack.c.l.b16 %v148
    %v308 = vunpack.c.l.b16 %v149
    %v309 = vunpack.c.l.b16 %v150
    %v310 = vpack.c.b16 %v295, %v294
    %v311 = vpack.c.b16 %v297, %v296
    %v312 = vpack.c.b16 %v299, %v298
    %v313 = vpack.c.b16 %v301, %v300
    %v314 = vpack.c.b16 %v303, %v302
    %v315 = vpack.c.b16 %v305, %v304
    %v316 = vpack.c.b16 %v307, %v306
    %v317 = vpack.c.b16 %v309, %v308
    %326 = vmatpush.bf16.msra.mxu0 %v317
    %327 = vmatpush.bf16.msra.mxu0 %v316
    %328 = vmatpush.bf16.msra.mxu0 %v315
    %329 = vmatpush.bf16.msra.mxu0 %v314
    %330 = vmatpush.bf16.msra.mxu0 %v313
    %331 = vmatpush.bf16.msra.mxu0 %v312
    %332 = vmatpush.bf16.msra.mxu0 %v311
    %333 = vmatpush.bf16.msra.mxu0 %v310
    %334 = vmatmul.bf16.gmra.mxu0 %v276
    %v335 = vpop.f32.mrf.mxu0
    %v336 = vadd.f32 %v268, %v335
    %v337 = vpop.f32.mrf.mxu0
    %338 = vdwg.mxu0
    %v339 = vld [vmem:[%s0] sm:$0xe]
    %v340 = vld [vmem:[%s0 + $0x8] sm:$0xe]
    %v343 = vrot.slane %v339, 2
    %v344 = vrot.slane %v340, 2
    %v347 = vsel %vm53, %v339, %v343
    %v348 = vsel %vm57, %v339, %v343
    %v350 = vrot.slane %v348, 2
    %v353 = vsel %vm53, %v340, %v344
    %v354 = vsel %vm57, %v340, %v344
    %v356 = vrot.slane %v354, 2
    %vm357 = vsmask.f32 256
    %vm358 = vsmask.f32 2312
    %vm359 = vmor %vm357, %vm358
    %vm360 = vsmask.f32 4368
    %vm361 = vmor %vm359, %vm360
    %vm362 = vsmask.f32 6424
    %vm363 = vmor %vm361, %vm362
    %v364 = vshrl.u32 %v347, 16
    %v366 = vrot.slane %v364, 7
    %v367 = vrot.slane %v366, 2
    %v369 = vshrl.u32 %v350, 16
    %v371 = vrot.slane %v369, 7
    %v372 = vshll.u32 %v350, 16
    %v374 = vor.u32 %v371, %v372
    %v375 = vsel %vm363, %v367, %v374
    %v376 = vshrl.u32 %v353, 16
    %v378 = vrot.slane %v376, 7
    %v379 = vrot.slane %v378, 2
    %v381 = vshrl.u32 %v356, 16
    %v383 = vrot.slane %v381, 7
    %v384 = vshll.u32 %v356, 16
    %v386 = vor.u32 %v383, %v384
    %v387 = vsel %vm363, %v379, %v386
    %v390 = vsel %vm46, 1, 0
    %vm391 = vcmp.eq.s32.totalorder %v390, 1
    %v392 = vsel %vm391, 1, 0
    %v394 = vunpack.c.l.s4 839922192
    %v395 = vunpack.c.0.s8 %v394
    %v396 = vperm.slane %v392, %v395
    %v398 = vunpack.c.l.s4 1985246804
    %v399 = vunpack.c.0.s8 %v398
    %v400 = vperm.slane %v392, %v399
    %vm401 = vcmp.ne.s32.totalorder %v396, 0
    %vm402 = vcmp.ne.s32.totalorder %v400, 0
    %v403 = vsel %vm401, 1, 0
    %v404 = vsel %vm402, 1, 0
    %v405 = vpack.c.b16 %v403, %v403
    %v406 = vpack.c.b16 %v404, %v404
    %v407 = vunpack.c.l.b16 %v405
    %v408 = vunpack.c.h.b16 %v405
    %v409 = vunpack.c.l.b16 0
    %v410 = vunpack.c.h.b16 0
    %vm411 = vcmp.ne.s32.totalorder %v407, %v409
    %vm412 = vcmp.ne.s32.totalorder %v408, %v410
    %vm413 = vmpackc.low %vm412, %vm411
    %v414 = vunpack.c.l.b16 %v406
    %v415 = vunpack.c.h.b16 %v406
    %v416 = vunpack.c.l.b16 0
    %v417 = vunpack.c.h.b16 0
    %vm418 = vcmp.ne.s32.totalorder %v414, %v416
    %vm419 = vcmp.ne.s32.totalorder %v415, %v417
    %vm420 = vmpackc.low %vm419, %vm418
    %v421 = vsel %vm413, %v375, 0
    %v422 = vsel %vm420, %v387, 0
    %s423 = scalar_lea.vmem [#allocation2], 128
    %v424 = vld [vmem:[%s423] sm:$0xf]
    %v425 = vld [vmem:[%s423 + $0x4] sm:$0xf]
    %v426 = vld [vmem:[%s423 + $0x8] sm:$0xf]
    %v427 = vld [vmem:[%s423 + $0xc] sm:$0xf]
    %v428 = vld [vmem:[%s423 + $0x10] sm:$0xf]
    %v429 = vld [vmem:[%s423 + $0x14] sm:$0xf]
    %v430 = vld [vmem:[%s423 + $0x18] sm:$0xf]
    %v431 = vld [vmem:[%s423 + $0x1c] sm:$0xf]
    %v432 = vld [vmem:[%s423 + $0x20] sm:$0xf]
    %v433 = vld [vmem:[%s423 + $0x24] sm:$0xf]
    %v434 = vld [vmem:[%s423 + $0x28] sm:$0xf]
    %v435 = vld [vmem:[%s423 + $0x2c] sm:$0xf]
    %v436 = vld [vmem:[%s423 + $0x30] sm:$0xf]
    %v437 = vld [vmem:[%s423 + $0x34] sm:$0xf]
    %v438 = vld [vmem:[%s423 + $0x38] sm:$0xf]
    %v439 = vld [vmem:[%s423 + $0x3c] sm:$0xf]
    %441 = vst [vmem:[#allocation1] ss:$4 sm:$0xff] %v421
    %s443 = scalar_lea.vmem [#allocation1], 1
    %444 = vst [vmem:[%s443] ss:$4 sm:$0xff] %v422
    %v445 = vld.sshfl [vmem:[#allocation1] sm:$0xff pattern:$0x73625140]
    %v463 = vunpack.c.l.b16 %v424
    %v464 = vunpack.c.l.b16 %v425
    %v465 = vunpack.c.l.b16 %v426
    %v466 = vunpack.c.l.b16 %v427
    %v467 = vunpack.c.l.b16 %v428
    %v468 = vunpack.c.l.b16 %v429
    %v469 = vunpack.c.l.b16 %v430
    %v470 = vunpack.c.l.b16 %v431
    %v471 = vunpack.c.l.b16 %v432
    %v472 = vunpack.c.l.b16 %v433
    %v473 = vunpack.c.l.b16 %v434
    %v474 = vunpack.c.l.b16 %v435
    %v475 = vunpack.c.l.b16 %v436
    %v476 = vunpack.c.l.b16 %v437
    %v477 = vunpack.c.l.b16 %v438
    %v478 = vunpack.c.l.b16 %v439
    %v479 = vpack.c.b16 %v464, %v463
    %v480 = vpack.c.b16 %v466, %v465
    %v481 = vpack.c.b16 %v468, %v467
    %v482 = vpack.c.b16 %v470, %v469
    %v483 = vpack.c.b16 %v472, %v471
    %v484 = vpack.c.b16 %v474, %v473
    %v485 = vpack.c.b16 %v476, %v475
    %v486 = vpack.c.b16 %v478, %v477
    %495 = vmatpush.bf16.msra.mxu0 %v486
    %496 = vmatpush.bf16.msra.mxu0 %v485
    %497 = vmatpush.bf16.msra.mxu0 %v484
    %498 = vmatpush.bf16.msra.mxu0 %v483
    %499 = vmatpush.bf16.msra.mxu0 %v482
    %500 = vmatpush.bf16.msra.mxu0 %v481
    %501 = vmatpush.bf16.msra.mxu0 %v480
    %502 = vmatpush.bf16.msra.mxu0 %v479
    %503 = vmatmul.bf16.gmra.mxu0 %v445
    %v504 = vpop.f32.mrf.mxu0
    %v505 = vadd.f32 0.0, %v504
    %v506 = vpop.f32.mrf.mxu0
    %507 = vdwg.mxu0
    %v508 = vadd.f32 %v336, %v505
    %v509 = vsel %vm125, %v375, 0
    %v510 = vsel %vm132, %v387, 0
    %s511 = scalar_lea.vmem [#allocation2], 192
    %v512 = vld [vmem:[%s511] sm:$0xf]
    %v513 = vld [vmem:[%s511 + $0x4] sm:$0xf]
    %v514 = vld [vmem:[%s511 + $0x8] sm:$0xf]
    %v515 = vld [vmem:[%s511 + $0xc] sm:$0xf]
    %v516 = vld [vmem:[%s511 + $0x10] sm:$0xf]
    %v517 = vld [vmem:[%s511 + $0x14] sm:$0xf]
    %v518 = vld [vmem:[%s511 + $0x18] sm:$0xf]
    %v519 = vld [vmem:[%s511 + $0x1c] sm:$0xf]
    %v520 = vld [vmem:[%s511 + $0x20] sm:$0xf]
    %v521 = vld [vmem:[%s511 + $0x24] sm:$0xf]
    %v522 = vld [vmem:[%s511 + $0x28] sm:$0xf]
    %v523 = vld [vmem:[%s511 + $0x2c] sm:$0xf]
    %v524 = vld [vmem:[%s511 + $0x30] sm:$0xf]
    %v525 = vld [vmem:[%s511 + $0x34] sm:$0xf]
    %v526 = vld [vmem:[%s511 + $0x38] sm:$0xf]
    %v527 = vld [vmem:[%s511 + $0x3c] sm:$0xf]
    %529 = vst [vmem:[#allocation1] ss:$4 sm:$0xff] %v509
    %s531 = scalar_lea.vmem [#allocation1], 1
    %532 = vst [vmem:[%s531] ss:$4 sm:$0xff] %v510
    %v533 = vld.sshfl [vmem:[#allocation1] sm:$0xff pattern:$0x73625140]
    %v551 = vunpack.c.l.b16 %v512
    %v552 = vunpack.c.l.b16 %v513
    %v553 = vunpack.c.l.b16 %v514
    %v554 = vunpack.c.l.b16 %v515
    %v555 = vunpack.c.l.b16 %v516
    %v556 = vunpack.c.l.b16 %v517
    %v557 = vunpack.c.l.b16 %v518
    %v558 = vunpack.c.l.b16 %v519
    %v559 = vunpack.c.l.b16 %v520
    %v560 = vunpack.c.l.b16 %v521
    %v561 = vunpack.c.l.b16 %v522
    %v562 = vunpack.c.l.b16 %v523
    %v563 = vunpack.c.l.b16 %v524
    %v564 = vunpack.c.l.b16 %v525
    %v565 = vunpack.c.l.b16 %v526
    %v566 = vunpack.c.l.b16 %v527
    %v567 = vpack.c.b16 %v552, %v551
    %v568 = vpack.c.b16 %v554, %v553
    %v569 = vpack.c.b16 %v556, %v555
    %v570 = vpack.c.b16 %v558, %v557
    %v571 = vpack.c.b16 %v560, %v559
    %v572 = vpack.c.b16 %v562, %v561
    %v573 = vpack.c.b16 %v564, %v563
    %v574 = vpack.c.b16 %v566, %v565
    %583 = vmatpush.bf16.msra.mxu0 %v574
    %584 = vmatpush.bf16.msra.mxu0 %v573
    %585 = vmatpush.bf16.msra.mxu0 %v572
    %586 = vmatpush.bf16.msra.mxu0 %v571
    %587 = vmatpush.bf16.msra.mxu0 %v570
    %588 = vmatpush.bf16.msra.mxu0 %v569
    %589 = vmatpush.bf16.msra.mxu0 %v568
    %590 = vmatpush.bf16.msra.mxu0 %v567
    %591 = vmatmul.bf16.gmra.mxu0 %v533
    %v592 = vpop.f32.mrf.mxu0
    %v593 = vadd.f32 0.0, %v592
    %v594 = vpop.f32.mrf.mxu0
    %595 = vdwg.mxu0
    %v596 = vadd.f32 %v508, %v593
    %v597 = vld [vmem:[%s0] sm:$0xc]
    %v598 = vld [vmem:[%s0 + $0x8] sm:$0xc]
    %600 = vst.sshfl [vmem:[#allocation1] sm:$0xff pattern:$0x75643120] %v597
    %s601 = scalar_lea.vmem [#allocation1], 1
    %v602 = vld [vmem:[%s601] ss:$2 sm:$0xff]
    %604 = vst.sshfl [vmem:[#allocation1 + $0x10] sm:$0xff pattern:$0x75643120] %v598
    %s605 = scalar_lea.vmem [#allocation1], 17
    %v606 = vld [vmem:[%s605] ss:$2 sm:$0xff]
    %s607 = scalar_lea.vmem [#allocation2], 256
    %v608 = vld [vmem:[%s607] sm:$0xf]
    %v609 = vld [vmem:[%s607 + $0x4] sm:$0xf]
    %v610 = vld [vmem:[%s607 + $0x8] sm:$0xf]
    %v611 = vld [vmem:[%s607 + $0xc] sm:$0xf]
    %v612 = vld [vmem:[%s607 + $0x10] sm:$0xf]
    %v613 = vld [vmem:[%s607 + $0x14] sm:$0xf]
    %v614 = vld [vmem:[%s607 + $0x18] sm:$0xf]
    %v615 = vld [vmem:[%s607 + $0x1c] sm:$0xf]
    %v616 = vld [vmem:[%s607 + $0x20] sm:$0xf]
    %v617 = vld [vmem:[%s607 + $0x24] sm:$0xf]
    %v618 = vld [vmem:[%s607 + $0x28] sm:$0xf]
    %v619 = vld [vmem:[%s607 + $0x2c] sm:$0xf]
    %v620 = vld [vmem:[%s607 + $0x30] sm:$0xf]
    %v621 = vld [vmem:[%s607 + $0x34] sm:$0xf]
    %v622 = vld [vmem:[%s607 + $0x38] sm:$0xf]
    %v623 = vld [vmem:[%s607 + $0x3c] sm:$0xf]
    %624 = vst [vmem:[#allocation1] ss:$4 sm:$0xff] %v602
    %s625 = scalar_lea.vmem [#allocation1], 1
    %626 = vst [vmem:[%s625] ss:$4 sm:$0xff] %v606
    %v627 = vld.sshfl [vmem:[#allocation1] sm:$0xff pattern:$0x73625140]
    %v645 = vunpack.c.l.b16 %v608
    %v646 = vunpack.c.l.b16 %v609
    %v647 = vunpack.c.l.b16 %v610
    %v648 = vunpack.c.l.b16 %v611
    %v649 = vunpack.c.l.b16 %v612
    %v650 = vunpack.c.l.b16 %v613
    %v651 = vunpack.c.l.b16 %v614
    %v652 = vunpack.c.l.b16 %v615
    %v653 = vunpack.c.l.b16 %v616
    %v654 = vunpack.c.l.b16 %v617
    %v655 = vunpack.c.l.b16 %v618
    %v656 = vunpack.c.l.b16 %v619
    %v657 = vunpack.c.l.b16 %v620
    %v658 = vunpack.c.l.b16 %v621
    %v659 = vunpack.c.l.b16 %v622
    %v660 = vunpack.c.l.b16 %v623
    %v661 = vpack.c.b16 %v646, %v645
    %v662 = vpack.c.b16 %v648, %v647
    %v663 = vpack.c.b16 %v650, %v649
    %v664 = vpack.c.b16 %v652, %v651
    %v665 = vpack.c.b16 %v654, %v653
    %v666 = vpack.c.b16 %v656, %v655
    %v667 = vpack.c.b16 %v658, %v657
    %v668 = vpack.c.b16 %v660, %v659
    %677 = vmatpush.bf16.msra.mxu0 %v668
    %678 = vmatpush.bf16.msra.mxu0 %v667
    %679 = vmatpush.bf16.msra.mxu0 %v666
    %680 = vmatpush.bf16.msra.mxu0 %v665
    %681 = vmatpush.bf16.msra.mxu0 %v664
    %682 = vmatpush.bf16.msra.mxu0 %v663
    %683 = vmatpush.bf16.msra.mxu0 %v662
    %684 = vmatpush.bf16.msra.mxu0 %v661
    %685 = vmatmul.bf16.gmra.mxu0 %v627
    %v686 = vpop.f32.mrf.mxu0
    %v687 = vadd.f32 0.0, %v686
    %v688 = vpop.f32.mrf.mxu0
    %689 = vdwg.mxu0
    %v690 = vadd.f32 %v596, %v687
    %v691 = vld [vmem:[%s0] sm:$0xc]
    %v692 = vld [vmem:[%s0 + $0x4] sm:$0x1]
    %v693 = vld [vmem:[%s0 + $0x8] sm:$0xc]
    %v694 = vld [vmem:[%s0 + $0xc] sm:$0x1]
    %696 = vst.sshfl [vmem:[#allocation1] sm:$0xff pattern:$0x75643120] %v691
    %698 = vst.sshfl [vmem:[#allocation1 + $0x10] sm:$0xff pattern:$0x75643120] %v692
    %s699 = scalar_lea.vmem [#allocation1], 1
    %v700 = vld [vmem:[%s699] ss:$2 sm:$0xff]
    %s701 = scalar_lea.vmem [#allocation1], 16
    %v702 = vld [vmem:[%s701] ss:$2 sm:$0xff]
    %704 = vst.sshfl [vmem:[#allocation1 + $0x20] sm:$0xff pattern:$0x75643120] %v693
    %706 = vst.sshfl [vmem:[#allocation1 + $0x30] sm:$0xff pattern:$0x75643120] %v694
    %s707 = scalar_lea.vmem [#allocation1], 33
    %v708 = vld [vmem:[%s707] ss:$2 sm:$0xff]
    %s709 = scalar_lea.vmem [#allocation1], 48
    %v710 = vld [vmem:[%s709] ss:$2 sm:$0xff]
    %v711 = vshrl.u32 %v700, 16
    %v713 = vrot.slane %v711, 6
    %v714 = vshll.u32 %v700, 16
    %v716 = vrot.slane %v714, 7
    %v717 = vor.u32 %v713, %v716
    %v718 = vrot.slane %v717, 2
    %v719 = vshll.u32 %v702, 16
    %v721 = vrot.slane %v719, 7
    %v722 = vsel %vm73, %v718, %v721
    %v723 = vshrl.u32 %v708, 16
    %v725 = vrot.slane %v723, 6
    %v726 = vshll.u32 %v708, 16
    %v728 = vrot.slane %v726, 7
    %v729 = vor.u32 %v725, %v728
    %v730 = vrot.slane %v729, 2
    %v731 = vshll.u32 %v710, 16
    %v733 = vrot.slane %v731, 7
    %v734 = vsel %vm73, %v730, %v733
    %v737 = vsel %vm413, %v722, 0
    %v738 = vsel %vm420, %v734, 0
    %s739 = scalar_lea.vmem [#allocation2], 320
    %v740 = vld [vmem:[%s739] sm:$0xf]
    %v741 = vld [vmem:[%s739 + $0x4] sm:$0xf]
    %v742 = vld [vmem:[%s739 + $0x8] sm:$0xf]
    %v743 = vld [vmem:[%s739 + $0xc] sm:$0xf]
    %v744 = vld [vmem:[%s739 + $0x10] sm:$0xf]
    %v745 = vld [vmem:[%s739 + $0x14] sm:$0xf]
    %v746 = vld [vmem:[%s739 + $0x18] sm:$0xf]
    %v747 = vld [vmem:[%s739 + $0x1c] sm:$0xf]
    %v748 = vld [vmem:[%s739 + $0x20] sm:$0xf]
    %v749 = vld [vmem:[%s739 + $0x24] sm:$0xf]
    %v750 = vld [vmem:[%s739 + $0x28] sm:$0xf]
    %v751 = vld [vmem:[%s739 + $0x2c] sm:$0xf]
    %v752 = vld [vmem:[%s739 + $0x30] sm:$0xf]
    %v753 = vld [vmem:[%s739 + $0x34] sm:$0xf]
    %v754 = vld [vmem:[%s739 + $0x38] sm:$0xf]
    %v755 = vld [vmem:[%s739 + $0x3c] sm:$0xf]
    %757 = vst [vmem:[#allocation1] ss:$4 sm:$0xff] %v737
    %s759 = scalar_lea.vmem [#allocation1], 1
    %760 = vst [vmem:[%s759] ss:$4 sm:$0xff] %v738
    %v761 = vld.sshfl [vmem:[#allocation1] sm:$0xff pattern:$0x73625140]
    %v779 = vunpack.c.l.b16 %v740
    %v780 = vunpack.c.l.b16 %v741
    %v781 = vunpack.c.l.b16 %v742
    %v782 = vunpack.c.l.b16 %v743
    %v783 = vunpack.c.l.b16 %v744
    %v784 = vunpack.c.l.b16 %v745
    %v785 = vunpack.c.l.b16 %v746
    %v786 = vunpack.c.l.b16 %v747
    %v787 = vunpack.c.l.b16 %v748
    %v788 = vunpack.c.l.b16 %v749
    %v789 = vunpack.c.l.b16 %v750
    %v790 = vunpack.c.l.b16 %v751
    %v791 = vunpack.c.l.b16 %v752
    %v792 = vunpack.c.l.b16 %v753
    %v793 = vunpack.c.l.b16 %v754
    %v794 = vunpack.c.l.b16 %v755
    %v795 = vpack.c.b16 %v780, %v779
    %v796 = vpack.c.b16 %v782, %v781
    %v797 = vpack.c.b16 %v784, %v783
    %v798 = vpack.c.b16 %v786, %v785
    %v799 = vpack.c.b16 %v788, %v787
    %v800 = vpack.c.b16 %v790, %v789
    %v801 = vpack.c.b16 %v792, %v791
    %v802 = vpack.c.b16 %v794, %v793
    %811 = vmatpush.bf16.msra.mxu0 %v802
    %812 = vmatpush.bf16.msra.mxu0 %v801
    %813 = vmatpush.bf16.msra.mxu0 %v800
    %814 = vmatpush.bf16.msra.mxu0 %v799
    %815 = vmatpush.bf16.msra.mxu0 %v798
    %816 = vmatpush.bf16.msra.mxu0 %v797
    %817 = vmatpush.bf16.msra.mxu0 %v796
    %818 = vmatpush.bf16.msra.mxu0 %v795
    %819 = vmatmul.bf16.gmra.mxu0 %v761
    %v820 = vpop.f32.mrf.mxu0
    %v821 = vadd.f32 0.0, %v820
    %v822 = vpop.f32.mrf.mxu0
    %823 = vdwg.mxu0
    %v824 = vadd.f32 %v690, %v821
    %v825 = vsel %vm125, %v722, 0
    %v826 = vsel %vm132, %v734, 0
    %s827 = scalar_lea.vmem [#allocation2], 384
    %v828 = vld [vmem:[%s827] sm:$0xf]
    %v829 = vld [vmem:[%s827 + $0x4] sm:$0xf]
    %v830 = vld [vmem:[%s827 + $0x8] sm:$0xf]
    %v831 = vld [vmem:[%s827 + $0xc] sm:$0xf]
    %v832 = vld [vmem:[%s827 + $0x10] sm:$0xf]
    %v833 = vld [vmem:[%s827 + $0x14] sm:$0xf]
    %v834 = vld [vmem:[%s827 + $0x18] sm:$0xf]
    %v835 = vld [vmem:[%s827 + $0x1c] sm:$0xf]
    %v836 = vld [vmem:[%s827 + $0x20] sm:$0xf]
    %v837 = vld [vmem:[%s827 + $0x24] sm:$0xf]
    %v838 = vld [vmem:[%s827 + $0x28] sm:$0xf]
    %v839 = vld [vmem:[%s827 + $0x2c] sm:$0xf]
    %v840 = vld [vmem:[%s827 + $0x30] sm:$0xf]
    %v841 = vld [vmem:[%s827 + $0x34] sm:$0xf]
    %v842 = vld [vmem:[%s827 + $0x38] sm:$0xf]
    %v843 = vld [vmem:[%s827 + $0x3c] sm:$0xf]
    %845 = vst [vmem:[#allocation1] ss:$4 sm:$0xff] %v825
    %s847 = scalar_lea.vmem [#allocation1], 1
    %848 = vst [vmem:[%s847] ss:$4 sm:$0xff] %v826
    %v849 = vld.sshfl [vmem:[#allocation1] sm:$0xff pattern:$0x73625140]
    %v867 = vunpack.c.l.b16 %v828
    %v868 = vunpack.c.l.b16 %v829
    %v869 = vunpack.c.l.b16 %v830
    %v870 = vunpack.c.l.b16 %v831
    %v871 = vunpack.c.l.b16 %v832
    %v872 = vunpack.c.l.b16 %v833
    %v873 = vunpack.c.l.b16 %v834
    %v874 = vunpack.c.l.b16 %v835
    %v875 = vunpack.c.l.b16 %v836
    %v876 = vunpack.c.l.b16 %v837
    %v877 = vunpack.c.l.b16 %v838
    %v878 = vunpack.c.l.b16 %v839
    %v879 = vunpack.c.l.b16 %v840
    %v880 = vunpack.c.l.b16 %v841
    %v881 = vunpack.c.l.b16 %v842
    %v882 = vunpack.c.l.b16 %v843
    %v883 = vpack.c.b16 %v868, %v867
    %v884 = vpack.c.b16 %v870, %v869
    %v885 = vpack.c.b16 %v872, %v871
    %v886 = vpack.c.b16 %v874, %v873
    %v887 = vpack.c.b16 %v876, %v875
    %v888 = vpack.c.b16 %v878, %v877
    %v889 = vpack.c.b16 %v880, %v879
    %v890 = vpack.c.b16 %v882, %v881
    %899 = vmatpush.bf16.msra.mxu0 %v890
    %900 = vmatpush.bf16.msra.mxu0 %v889
    %901 = vmatpush.bf16.msra.mxu0 %v888
    %902 = vmatpush.bf16.msra.mxu0 %v887
    %903 = vmatpush.bf16.msra.mxu0 %v886
    %904 = vmatpush.bf16.msra.mxu0 %v885
    %905 = vmatpush.bf16.msra.mxu0 %v884
    %906 = vmatpush.bf16.msra.mxu0 %v883
    %907 = vmatmul.bf16.gmra.mxu0 %v849
    %v908 = vpop.f32.mrf.mxu0
    %v909 = vadd.f32 0.0, %v908
    %v910 = vpop.f32.mrf.mxu0
    %911 = vdwg.mxu0
    %v912 = vadd.f32 %v824, %v909
    %v913 = vld [vmem:[%s0] sm:$0x8]
    %v914 = vld [vmem:[%s0 + $0x4] sm:$0x1]
    %v915 = vld [vmem:[%s0 + $0x8] sm:$0x8]
    %v916 = vld [vmem:[%s0 + $0xc] sm:$0x1]
    %918 = vst.sshfl [vmem:[#allocation1] sm:$0xff pattern:$0x75643120] %v913
    %920 = vst.sshfl [vmem:[#allocation1 + $0x10] sm:$0xff pattern:$0x75643120] %v914
    %s921 = scalar_lea.vmem [#allocation1], 1
    %v922 = vld [vmem:[%s921] ss:$2 sm:$0xff]
    %s924 = scalar_lea.vmem [#allocation1], 16
    %v925 = vld [vmem:[%s924] ss:$2 sm:$0xff]
    %928 = vst.sshfl [vmem:[#allocation1 + $0x20] sm:$0xff pattern:$0x75643120] %v915
    %930 = vst.sshfl [vmem:[#allocation1 + $0x30] sm:$0xff pattern:$0x75643120] %v916
    %s931 = scalar_lea.vmem [#allocation1], 33
    %v932 = vld [vmem:[%s931] ss:$2 sm:$0xff]
    %s934 = scalar_lea.vmem [#allocation1], 48
    %v935 = vld [vmem:[%s934] ss:$2 sm:$0xff]
    %v937 = vrot.slane %v922, 7
    %v938 = vrot.slane %v937, 2
    %v939 = vrot.slane %v925, 7
    %v940 = vsel %vm177, %v938, %v939
    %v941 = vrot.slane %v932, 7
    %v942 = vrot.slane %v941, 2
    %v943 = vrot.slane %v935, 7
    %v944 = vsel %vm177, %v942, %v943
    %s945 = scalar_lea.vmem [#allocation2], 448
    %v946 = vld [vmem:[%s945] sm:$0xf]
    %v947 = vld [vmem:[%s945 + $0x4] sm:$0xf]
    %v948 = vld [vmem:[%s945 + $0x8] sm:$0xf]
    %v949 = vld [vmem:[%s945 + $0xc] sm:$0xf]
    %v950 = vld [vmem:[%s945 + $0x10] sm:$0xf]
    %v951 = vld [vmem:[%s945 + $0x14] sm:$0xf]
    %v952 = vld [vmem:[%s945 + $0x18] sm:$0xf]
    %v953 = vld [vmem:[%s945 + $0x1c] sm:$0xf]
    %v954 = vld [vmem:[%s945 + $0x20] sm:$0xf]
    %v955 = vld [vmem:[%s945 + $0x24] sm:$0xf]
    %v956 = vld [vmem:[%s945 + $0x28] sm:$0xf]
    %v957 = vld [vmem:[%s945 + $0x2c] sm:$0xf]
    %v958 = vld [vmem:[%s945 + $0x30] sm:$0xf]
    %v959 = vld [vmem:[%s945 + $0x34] sm:$0xf]
    %v960 = vld [vmem:[%s945 + $0x38] sm:$0xf]
    %v961 = vld [vmem:[%s945 + $0x3c] sm:$0xf]
    %963 = vst [vmem:[#allocation1] ss:$4 sm:$0xff] %v940
    %s965 = scalar_lea.vmem [#allocation1], 1
    %966 = vst [vmem:[%s965] ss:$4 sm:$0xff] %v944
    %v967 = vld.sshfl [vmem:[#allocation1] sm:$0xff pattern:$0x73625140]
    %v985 = vunpack.c.l.b16 %v946
    %v986 = vunpack.c.l.b16 %v947
    %v987 = vunpack.c.l.b16 %v948
    %v988 = vunpack.c.l.b16 %v949
    %v989 = vunpack.c.l.b16 %v950
    %v990 = vunpack.c.l.b16 %v951
    %v991 = vunpack.c.l.b16 %v952
    %v992 = vunpack.c.l.b16 %v953
    %v993 = vunpack.c.l.b16 %v954
    %v994 = vunpack.c.l.b16 %v955
    %v995 = vunpack.c.l.b16 %v956
    %v996 = vunpack.c.l.b16 %v957
    %v997 = vunpack.c.l.b16 %v958
    %v998 = vunpack.c.l.b16 %v959
    %v999 = vunpack.c.l.b16 %v960
    %v1000 = vunpack.c.l.b16 %v961
    %v1001 = vpack.c.b16 %v986, %v985
    %v1002 = vpack.c.b16 %v988, %v987
    %v1003 = vpack.c.b16 %v990, %v989
    %v1004 = vpack.c.b16 %v992, %v991
    %v1005 = vpack.c.b16 %v994, %v993
    %v1006 = vpack.c.b16 %v996, %v995
    %v1007 = vpack.c.b16 %v998, %v997
    %v1008 = vpack.c.b16 %v1000, %v999
    %1017 = vmatpush.bf16.msra.mxu0 %v1008
    %1018 = vmatpush.bf16.msra.mxu0 %v1007
    %1019 = vmatpush.bf16.msra.mxu0 %v1006
    %1020 = vmatpush.bf16.msra.mxu0 %v1005
    %1021 = vmatpush.bf16.msra.mxu0 %v1004
    %1022 = vmatpush.bf16.msra.mxu0 %v1003
    %1023 = vmatpush.bf16.msra.mxu0 %v1002
    %1024 = vmatpush.bf16.msra.mxu0 %v1001
    %1025 = vmatmul.bf16.gmra.mxu0 %v967
    %v1026 = vpop.f32.mrf.mxu0
    %v1027 = vadd.f32 0.0, %v1026
    %v1028 = vpop.f32.mrf.mxu0
    %1029 = vdwg.mxu0
    %v1030 = vadd.f32 %v912, %v1027
    %v1031 = vld [vmem:[%s0] sm:$0x8]
    %v1032 = vld [vmem:[%s0 + $0x4] sm:$0x3]
    %v1033 = vld [vmem:[%s0 + $0x8] sm:$0x8]
    %v1034 = vld [vmem:[%s0 + $0xc] sm:$0x3]
    %1036 = vst.sshfl [vmem:[#allocation1] sm:$0xff pattern:$0x75643120] %v1031
    %1038 = vst.sshfl [vmem:[#allocation1 + $0x10] sm:$0xff pattern:$0x75643120] %v1032
    %s1039 = scalar_lea.vmem [#allocation1], 1
    %v1040 = vld [vmem:[%s1039] ss:$2 sm:$0xff]
    %s1041 = scalar_lea.vmem [#allocation1], 16
    %v1042 = vld [vmem:[%s1041] ss:$2 sm:$0xff]
    %1044 = vst.sshfl [vmem:[#allocation1 + $0x20] sm:$0xff pattern:$0x75643120] %v1033
    %1046 = vst.sshfl [vmem:[#allocation1 + $0x30] sm:$0xff pattern:$0x75643120] %v1034
    %s1047 = scalar_lea.vmem [#allocation1], 33
    %v1048 = vld [vmem:[%s1047] ss:$2 sm:$0xff]
    %s1049 = scalar_lea.vmem [#allocation1], 48
    %v1050 = vld [vmem:[%s1049] ss:$2 sm:$0xff]
    %v1051 = vshrl.u32 %v1040, 16
    %v1053 = vrot.slane %v1051, 7
    %v1054 = vrot.slane %v1053, 2
    %v1055 = vshrl.u32 %v1042, 16
    %v1057 = vrot.slane %v1055, 7
    %v1058 = vshll.u32 %v1042, 16
    %v1060 = vor.u32 %v1057, %v1058
    %v1061 = vsel %vm363, %v1054, %v1060
    %v1062 = vshrl.u32 %v1048, 16
    %v1064 = vrot.slane %v1062, 7
    %v1065 = vrot.slane %v1064, 2
    %v1066 = vshrl.u32 %v1050, 16
    %v1068 = vrot.slane %v1066, 7
    %v1069 = vshll.u32 %v1050, 16
    %v1071 = vor.u32 %v1068, %v1069
    %v1072 = vsel %vm363, %v1065, %v1071
    %v1075 = vsel %vm413, %v1061, 0
    %v1076 = vsel %vm420, %v1072, 0
    %s1077 = scalar_lea.vmem [#allocation2], 512
    %v1078 = vld [vmem:[%s1077] sm:$0xf]
    %v1079 = vld [vmem:[%s1077 + $0x4] sm:$0xf]
    %v1080 = vld [vmem:[%s1077 + $0x8] sm:$0xf]
    %v1081 = vld [vmem:[%s1077 + $0xc] sm:$0xf]
    %v1082 = vld [vmem:[%s1077 + $0x10] sm:$0xf]
    %v1083 = vld [vmem:[%s1077 + $0x14] sm:$0xf]
    %v1084 = vld [vmem:[%s1077 + $0x18] sm:$0xf]
    %v1085 = vld [vmem:[%s1077 + $0x1c] sm:$0xf]
    %v1086 = vld [vmem:[%s1077 + $0x20] sm:$0xf]
    %v1087 = vld [vmem:[%s1077 + $0x24] sm:$0xf]
    %v1088 = vld [vmem:[%s1077 + $0x28] sm:$0xf]
    %v1089 = vld [vmem:[%s1077 + $0x2c] sm:$0xf]
    %v1090 = vld [vmem:[%s1077 + $0x30] sm:$0xf]
    %v1091 = vld [vmem:[%s1077 + $0x34] sm:$0xf]
    %v1092 = vld [vmem:[%s1077 + $0x38] sm:$0xf]
    %v1093 = vld [vmem:[%s1077 + $0x3c] sm:$0xf]
    %1095 = vst [vmem:[#allocation1] ss:$4 sm:$0xff] %v1075
    %s1097 = scalar_lea.vmem [#allocation1], 1
    %1098 = vst [vmem:[%s1097] ss:$4 sm:$0xff] %v1076
    %v1099 = vld.sshfl [vmem:[#allocation1] sm:$0xff pattern:$0x73625140]
    %v1117 = vunpack.c.l.b16 %v1078
    %v1118 = vunpack.c.l.b16 %v1079
    %v1119 = vunpack.c.l.b16 %v1080
    %v1120 = vunpack.c.l.b16 %v1081
    %v1121 = vunpack.c.l.b16 %v1082
    %v1122 = vunpack.c.l.b16 %v1083
    %v1123 = vunpack.c.l.b16 %v1084
    %v1124 = vunpack.c.l.b16 %v1085
    %v1125 = vunpack.c.l.b16 %v1086
    %v1126 = vunpack.c.l.b16 %v1087
    %v1127 = vunpack.c.l.b16 %v1088
    %v1128 = vunpack.c.l.b16 %v1089
    %v1129 = vunpack.c.l.b16 %v1090
    %v1130 = vunpack.c.l.b16 %v1091
    %v1131 = vunpack.c.l.b16 %v1092
    %v1132 = vunpack.c.l.b16 %v1093
    %v1133 = vpack.c.b16 %v1118, %v1117
    %v1134 = vpack.c.b16 %v1120, %v1119
    %v1135 = vpack.c.b16 %v1122, %v1121
    %v1136 = vpack.c.b16 %v1124, %v1123
    %v1137 = vpack.c.b16 %v1126, %v1125
    %v1138 = vpack.c.b16 %v1128, %v1127
    %v1139 = vpack.c.b16 %v1130, %v1129
    %v1140 = vpack.c.b16 %v1132, %v1131
    %1149 = vmatpush.bf16.msra.mxu0 %v1140
    %1150 = vmatpush.bf16.msra.mxu0 %v1139
    %1151 = vmatpush.bf16.msra.mxu0 %v1138
    %1152 = vmatpush.bf16.msra.mxu0 %v1137
    %1153 = vmatpush.bf16.msra.mxu0 %v1136
    %1154 = vmatpush.bf16.msra.mxu0 %v1135
    %1155 = vmatpush.bf16.msra.mxu0 %v1134
    %1156 = vmatpush.bf16.msra.mxu0 %v1133
    %1157 = vmatmul.bf16.gmra.mxu0 %v1099
    %v1158 = vpop.f32.mrf.mxu0
    %v1159 = vadd.f32 0.0, %v1158
    %v1160 = vpop.f32.mrf.mxu0
    %1161 = vdwg.mxu0
    %v1162 = vadd.f32 %v1030, %v1159
    %v1164 = vrot.slane %v1162, 4
    %v1166 = vpack.c.bf16 %v1162, %v1162
    %v1167 = vpack.c.bf16 %v1164, %v1164
    %1168 = vst [vmem:[%s2] sm:$0x3] %v1166
    %1169 = vst [vmem:[%s2 + $0x2] sm:$0x3] %v1167
    %v1170 = vrot.slane %v1162, 4
    %v1171 = vadd.f32 %v1162, %v1170
    %v1172 = vrot.slane %v1171, 2
    %v1173 = vadd.f32 %v1171, %v1172
    %v1174 = vrot.slane %v1173, 1
    %v1175 = vadd.f32 %v1173, %v1174
    %1176 = vst [vmem:[%s3] sm:$0x1] %v1175
    %v1177 = vmul.f32 %v1162, %v1162
    %v1178 = vrot.slane %v1177, 4
    %v1179 = vadd.f32 %v1177, %v1178
    %v1180 = vrot.slane %v1179, 2
    %v1181 = vadd.f32 %v1179, %v1180
    %v1182 = vrot.slane %v1181, 1
    %v1183 = vadd.f32 %v1181, %v1182
    %1184 = vst [vmem:[%s3 + $0x1] sm:$0x1] %v1183
    // Predicated region
    $region14: #{masked_vgg_forward.15} parent=1 // pred_check
      _
    $region15: #{masked_vgg_forward.15} parent=1 // pred_check_branch
      %1186 = sbr.rel (0) target = $region17
    $region16: #{masked_vgg_forward.15} parent=1 // pred_region
      _
    $region17: #{masked_vgg_forward.15} parent=1 // pred_fallthru
      _
    // Predicated region
    $region18: #{masked_vgg_forward.15} parent=1 // pred_check
      _
    $region19: #{masked_vgg_forward.15} parent=1 // pred_check_branch
      %1188 = sbr.rel (0) target = $region21
    $region20: #{masked_vgg_forward.15} parent=1 // pred_region
      _
    $region21: #{masked_vgg_forward.15} parent=1 // pred_fallthru
      _
    // Predicated region
    $region22: #{masked_vgg_forward.15} parent=1 // pred_check
      _
    $region23: #{masked_vgg_forward.15} parent=1 // pred_check_branch
      %1190 = sbr.rel (0) target = $region25
    $region24: #{masked_vgg_forward.15} parent=1 // pred_region
      _
    $region25: #{masked_vgg_forward.15} parent=1 // pred_fallthru
      _
    // Predicated region
    $region26: #{masked_vgg_forward.15} parent=1 // pred_check
      _
    $region27: #{masked_vgg_forward.15} parent=1 // pred_check_branch
      %1192 = sbr.rel (0) target = $region29
    $region28: #{masked_vgg_forward.15} parent=1 // pred_region
      _
    $region29: #{masked_vgg_forward.15} parent=1 // pred_fallthru
      _
    %1193 = vsyncpa [#allocation3], 1

// kernel: masked_vgg_forward.16
$region0: #{masked_vgg_forward.16}
  #allocation0 [shape = 'u32[]', space=smem, size = 0x4, offset = 0x4, fixed_abs, tag = 'smem constant byte address 0x4 - core index']
  #allocation1 [shape = 'u32[72,128]{1,0:T(1,128)}', space=vmem, size = 0x9000, scoped, tag = 'internal scratch']
  %s0 = inlined_call_operand.vmem [shape: bf16[2,4,128], index: 0, kind: input, shape index: {}]
  %s1 = inlined_call_operand.vmem [shape: f32[1,2,128], index: 1, kind: input, shape index: {}]
  %s2 = inlined_call_operand.vmem [shape: f32[1,128], index: 2, kind: input, shape index: {}]
  %s3 = inlined_call_operand.vmem [shape: f32[1,128], index: 3, kind: input, shape index: {}]
  %s4 = inlined_call_operand.vmem [shape: bf16[2,1,128], index: 4, kind: output, shape index: {}]
  %s5 = sld [smem:[#allocation0]]
  $region26: #{masked_vgg_forward.16} parent=0
    _
  %s7 = ssub.s32 1, %s5
  %s8 = scalar_select 0, %s7, %s5
  // Predicated region
  $region2: #{masked_vgg_forward.16} parent=0 // pred_check
    _
  $region3: #{masked_vgg_forward.16} parent=0 // pred_check_branch
    %10 = sbr.rel (0) target = $region5
  $region4: #{masked_vgg_forward.16} parent=0 // pred_region
    _
  $region5: #{masked_vgg_forward.16} parent=0 // pred_fallthru
    _
  // Predicated region
  $region6: #{masked_vgg_forward.16} parent=0 // pred_check
    _
  $region7: #{masked_vgg_forward.16} parent=0 // pred_check_branch
    %12 = sbr.rel (0) target = $region9
  $region8: #{masked_vgg_forward.16} parent=0 // pred_region
    _
  $region9: #{masked_vgg_forward.16} parent=0 // pred_fallthru
    _
  // Predicated region
  $region10: #{masked_vgg_forward.16} parent=0 // pred_check
    _
  $region11: #{masked_vgg_forward.16} parent=0 // pred_check_branch
    %14 = sbr.rel (0) target = $region13
  $region12: #{masked_vgg_forward.16} parent=0 // pred_region
    _
  $region13: #{masked_vgg_forward.16} parent=0 // pred_fallthru
    _
  // Predicated region
  $region14: #{masked_vgg_forward.16} parent=0 // pred_check
    _
  $region15: #{masked_vgg_forward.16} parent=0 // pred_check_branch
    %16 = sbr.rel (0) target = $region17
  $region16: #{masked_vgg_forward.16} parent=0 // pred_region
    _
  $region17: #{masked_vgg_forward.16} parent=0 // pred_fallthru
    _
  %v17 = vld [vmem:[%s1] sm:$0x3]
  %v18 = vadd.f32 %v17, 0.0
  %v19 = vmul.f32 %v18, 0.125
  %v20 = vmul.f32 %v19, %v19
  %v22 = vrot.slane %v20, 7
  %v24 = vsub.f32 %v19, %v22
  %v25 = vmax.f32 %v24, 0.0
  %v26 = vld [vmem:[%s2] sm:$0x1]
  %v27 = vadd.f32 %v25, 1e-05
  %v28 = vrsqrt.pop %v27
  %v29 = vmul.f32 %v28, %v27
  %v30 = vmul.f32 %v29, %v28
  %v31 = vmul.f32 0.5, %v30
  %v32 = vsub.f32 1.5, %v31
  %v33 = vmul.f32 %v28, %v32
  %vm34 = vweird.f32 %v27
  %vm35 = vweird.f32 %v28
  %vm36 = vmor %vm34, %vm35
  %v37 = vsel %vm36, %v28, %v33
  %39 = vst [vmem:[#allocation1] sm:$0xff] %v37
  %s40 = scalar_lea.vmem [#allocation1], 1
  %v41 = vld [vmem:[%s40] ss:$9 sm:$0xff]
  %v43 = vmul.f32 %v26, %v41
  %v44 = vld [vmem:[%s3] sm:$0x1]
  %v45 = vmul.f32 %v19, %v43
  %v46 = vsub.f32 %v44, %v45
  %v47 = vld [vmem:[%s0] sm:$0x3]
  %v48 = vld [vmem:[%s0 + $0x2] sm:$0x3]
  %v49 = vunpack.c.l.bf16 %v47
  %v50 = vunpack.c.l.bf16 %v48
  %v52 = vperm.slane %v43, 0
  %v54 = vmul.f32 %v49, %v52
  %v55 = vmul.f32 %v50, %v52
  %v57 = vperm.slane %v46, 0
  %v59 = vadd.f32 %v54, %v57
  %v60 = vadd.f32 %v55, %v57
  %v61 = vmax.f32 %v59, 0.0
  %v62 = vmax.f32 %v60, 0.0
  %v65 = vrot.slane %v61, 6
  %v66 = vrot.slane %v65, 4
  %v67 = vrot.slane %v62, 6
  %v68 = vrot.slane %v67, 4
  %v71 = vadd.f32 %v61, %v66
  %v72 = vadd.f32 %v62, %v68
  %v75 = vrot.slane %v71, 5
  %v76 = vrot.slane %v75, 4
  %v77 = vrot.slane %v72, 5
  %v78 = vrot.slane %v77, 4
  %v81 = vadd.f32 %v71, %v76
  %v82 = vadd.f32 %v72, %v78
  %v83 = vmul.f32 %v81, 0.25
  %v84 = vmul.f32 %v82, 0.25
  %v85 = vpack.c.bf16 %v83, %v83
  %v86 = vpack.c.bf16 %v84, %v84
  %vm87 = vcmask 1040384
  %vm88 = vsmask.f32 256
  %vm89 = vmand %vm87, %vm88
  %v90 = vld [vmem:[%s4] sm:$0x1]
  %v91 = vsel %vm89, %v85, %v90
  %92 = vst [vmem:[%s4] sm:$0x1] %v91
  %v93 = vld [vmem:[%s4 + $0x1] sm:$0x1]
  %v94 = vsel %vm89, %v86, %v93
  %95 = vst [vmem:[%s4 + $0x1] sm:$0x1] %v94
  // Predicated region
  $region18: #{masked_vgg_forward.16} parent=0 // pred_check
    _
  $region19: #{masked_vgg_forward.16} parent=0 // pred_check_branch
    %97 = sbr.rel (0) target = $region21
  $region20: #{masked_vgg_forward.16} parent=0 // pred_region
    _
  $region21: #{masked_vgg_forward.16} parent=0 // pred_fallthru
    _
  // Predicated region
  $region22: #{masked_vgg_forward.16} parent=0 // pred_check
    _
  $region23: #{masked_vgg_forward.16} parent=0 // pred_check_branch
    %99 = sbr.rel (0) target = $region25
  $region24: #{masked_vgg_forward.16} parent=0 // pred_region
    _
  $region25: #{masked_vgg_forward.16} parent=0 // pred_fallthru
    _

// kernel: masked_vgg_forward.17
$region0: #{masked_vgg_forward.17}
  #allocation0 [shape = 'u32[]', space=smem, size = 0x4, offset = 0x4, fixed_abs, tag = 'smem constant byte address 0x4 - core index']
  #allocation1 [shape = 'u32[72,128]{1,0:T(1,128)}', space=vmem, size = 0x9000, scoped, tag = 'internal scratch']
  %s0 = inlined_call_operand.vmem [shape: bf16[2,128], index: 0, kind: input, shape index: {}]
  %s1 = inlined_call_operand.vmem [shape: bf16[128,512], index: 1, kind: input, shape index: {}]
  %s2 = inlined_call_operand.vmem [shape: f32[1,512], index: 2, kind: input, shape index: {}]
  %s3 = inlined_call_operand.vmem [shape: f32[1,512], index: 3, kind: input, shape index: {}]
  %s4 = inlined_call_operand.vmem [shape: f32[1,512], index: 4, kind: input, shape index: {}]
  %s5 = inlined_call_operand.hbm [shape: bf16[512,128], index: 5, kind: input, shape index: {}]
  %s6 = inlined_call_operand.vmem [shape: f32[1,128], index: 6, kind: input, shape index: {}]
  %s7 = inlined_call_operand.hbm [shape: f32[2,128], index: 7, kind: output, shape index: {}]
  %s8 = sld [smem:[#allocation0]]
  $region42: #{masked_vgg_forward.17} parent=0
    _
  %s10 = ssub.s32 1, %s8
  %s11 = scalar_select 0, %s10, %s8
  $region1: #{masked_vgg_forward.17} parent=0
    #allocation2 [shape = 'u8[131072]{0}', space=vmem, size = 0x20000, scoped, tag = 'input window, operand 5, single buffered']
    #allocation3 [shape = 's32[1]{0}', space=sflag, size = 0x4, scoped, tag = 'scoped memory for masked_vgg_forward.17']
    #allocation4 [shape = 's32[1]{0}', space=sflag, size = 0x4, scoped, tag = 'scoped memory for masked_vgg_forward.17']
    #allocation5 [shape = 'u8[1024]{0}', space=vmem, size = 0x400, scoped, tag = 'output window, operand 0, single buffered']
    %12 = vsyncpa [#allocation3], 0
    %13 = vsyncpa [#allocation4], 0
    // Predicated region
    $region2: #{masked_vgg_forward.17} parent=1 // pred_check
      _
    $region3: #{masked_vgg_forward.17} parent=1 // pred_check_branch
      %15 = sbr.rel (0) target = $region5
    $region4: #{masked_vgg_forward.17} parent=1 // pred_region
      _
    $region5: #{masked_vgg_forward.17} parent=1 // pred_fallthru
      _
    // Predicated region
    $region6: #{masked_vgg_forward.17} parent=1 // pred_check
      _
    $region7: #{masked_vgg_forward.17} parent=1 // pred_check_branch
      %17 = sbr.rel (0) target = $region9
    $region8: #{masked_vgg_forward.17} parent=1 // pred_region
      _
    $region9: #{masked_vgg_forward.17} parent=1 // pred_fallthru
      _
    // Predicated region
    $region10: #{masked_vgg_forward.17} parent=1 // pred_check
      _
    $region11: #{masked_vgg_forward.17} parent=1 // pred_check_branch
      %19 = sbr.rel (0) target = $region13
    $region12: #{masked_vgg_forward.17} parent=1 // pred_region
      _
    $region13: #{masked_vgg_forward.17} parent=1 // pred_fallthru
      _
    // Predicated region
    $region14: #{masked_vgg_forward.17} parent=1 // pred_check
      _
    $region15: #{masked_vgg_forward.17} parent=1 // pred_check_branch
      %21 = sbr.rel (0) target = $region17
    $region16: #{masked_vgg_forward.17} parent=1 // pred_region
      _
    $region17: #{masked_vgg_forward.17} parent=1 // pred_fallthru
      _
    // Predicated region
    $region18: #{masked_vgg_forward.17} parent=1 // pred_check
      _
    $region19: #{masked_vgg_forward.17} parent=1 // pred_check_branch
      %23 = sbr.rel (0) target = $region21
    $region20: #{masked_vgg_forward.17} parent=1 // pred_region
      _
    $region21: #{masked_vgg_forward.17} parent=1 // pred_fallthru
      _
    // Predicated region
    $region22: #{masked_vgg_forward.17} parent=1 // pred_check
      _
    $region23: #{masked_vgg_forward.17} parent=1 // pred_check_branch
      %25 = sbr.rel (0) target = $region25
    $region24: #{masked_vgg_forward.17} parent=1 // pred_region
      %27 = vsyncadd [#allocation3], 0
      %s28 = sshll.u32 %s5, 4
      %s29 = int_to_ptr.hbm [resolvable:$true] %s28
      %s30 = sshll.u32 [#allocation2], 4
      %s31 = int_to_ptr.vmem [resolvable:$true] %s30
      %36 = dma.hbm_to_vmem [thread:$0]  %s29, 4096, %s31, [#allocation3], 64, 64, 4
    $region25: #{masked_vgg_forward.17} parent=1 // pred_fallthru
      _
    // Predicated region
    $region26: #{masked_vgg_forward.17} parent=1 // pred_check
      _
    $region27: #{masked_vgg_forward.17} parent=1 // pred_check_branch
      %38 = sbr.rel (0) target = $region29
    $region28: #{masked_vgg_forward.17} parent=1 // pred_region
      _
    $region29: #{masked_vgg_forward.17} parent=1 // pred_fallthru
      _
    // Predicated region
    $region30: #{masked_vgg_forward.17} parent=1 // pred_check
      _
    $region31: #{masked_vgg_forward.17} parent=1 // pred_check_branch
      %40 = sbr.rel (0) target = $region33
    $region32: #{masked_vgg_forward.17} parent=1 // pred_region
      %42 = dma.done [#allocation3], 4096
    $region33: #{masked_vgg_forward.17} parent=1 // pred_fallthru
      _
    %v43 = vld [vmem:[%s0] sm:$0x1]
    %v44 = vld [vmem:[%s1] sm:$0xff]
    %v45 = vld [vmem:[%s1 + $0x8] sm:$0xff]
    %v46 = vld [vmem:[%s1 + $0x10] sm:$0xff]
    %v47 = vld [vmem:[%s1 + $0x18] sm:$0xff]
    %v48 = vld [vmem:[%s1 + $0x20] sm:$0xff]
    %v49 = vld [vmem:[%s1 + $0x28] sm:$0xff]
    %v50 = vld [vmem:[%s1 + $0x30] sm:$0xff]
    %v51 = vld [vmem:[%s1 + $0x38] sm:$0xff]
    %v52 = vld [vmem:[%s1 + $0x40] sm:$0xff]
    %v53 = vld [vmem:[%s1 + $0x48] sm:$0xff]
    %v54 = vld [vmem:[%s1 + $0x50] sm:$0xff]
    %v55 = vld [vmem:[%s1 + $0x58] sm:$0xff]
    %v56 = vld [vmem:[%s1 + $0x60] sm:$0xff]
    %v57 = vld [vmem:[%s1 + $0x68] sm:$0xff]
    %v58 = vld [vmem:[%s1 + $0x70] sm:$0xff]
    %v59 = vld [vmem:[%s1 + $0x78] sm:$0xff]
    %v60 = vld [vmem:[%s1 + $0x80] sm:$0xff]
    %v61 = vld [vmem:[%s1 + $0x88] sm:$0xff]
    %v62 = vld [vmem:[%s1 + $0x90] sm:$0xff]
    %v63 = vld [vmem:[%s1 + $0x98] sm:$0xff]
    %v64 = vld [vmem:[%s1 + $0xa0] sm:$0xff]
    %v65 = vld [vmem:[%s1 + $0xa8] sm:$0xff]
    %v66 = vld [vmem:[%s1 + $0xb0] sm:$0xff]
    %v67 = vld [vmem:[%s1 + $0xb8] sm:$0xff]
    %v68 = vld [vmem:[%s1 + $0xc0] sm:$0xff]
    %v69 = vld [vmem:[%s1 + $0xc8] sm:$0xff]
    %v70 = vld [vmem:[%s1 + $0xd0] sm:$0xff]
    %v71 = vld [vmem:[%s1 + $0xd8] sm:$0xff]
    %v72 = vld [vmem:[%s1 + $0xe0] sm:$0xff]
    %v73 = vld [vmem:[%s1 + $0xe8] sm:$0xff]
    %v74 = vld [vmem:[%s1 + $0xf0] sm:$0xff]
    %v75 = vld [vmem:[%s1 + $0xf8] sm:$0xff]
    %v76 = vld [vmem:[%s2] sm:$0xf]
    %v78 = vperm.slane %v76, 0
    %v79 = vperm.slane %v76, 1
    %v80 = vperm.slane %v76, 2
    %v81 = vperm.slane %v76, 3
    %v118 = vunpack.c.l.b16 %v44
    %v119 = vunpack.c.h.b16 %v44
    %v120 = vunpack.c.l.b16 %v45
    %v121 = vunpack.c.h.b16 %v45
    %v122 = vunpack.c.l.b16 %v46
    %v123 = vunpack.c.h.b16 %v46
    %v124 = vunpack.c.l.b16 %v47
    %v125 = vunpack.c.h.b16 %v47
    %v126 = vunpack.c.l.b16 %v48
    %v127 = vunpack.c.h.b16 %v48
    %v128 = vunpack.c.l.b16 %v49
    %v129 = vunpack.c.h.b16 %v49
    %v130 = vunpack.c.l.b16 %v50
    %v131 = vunpack.c.h.b16 %v50
    %v132 = vunpack.c.l.b16 %v51
    %v133 = vunpack.c.h.b16 %v51
    %v134 = vunpack.c.l.b16 %v52
    %v135 = vunpack.c.h.b16 %v52
    %v136 = vunpack.c.l.b16 %v53
    %v137 = vunpack.c.h.b16 %v53
    %v138 = vunpack.c.l.b16 %v54
    %v139 = vunpack.c.h.b16 %v54
    %v140 = vunpack.c.l.b16 %v55
    %v141 = vunpack.c.h.b16 %v55
    %v142 = vunpack.c.l.b16 %v56
    %v143 = vunpack.c.h.b16 %v56
    %v144 = vunpack.c.l.b16 %v57
    %v145 = vunpack.c.h.b16 %v57
    %v146 = vunpack.c.l.b16 %v58
    %v147 = vunpack.c.h.b16 %v58
    %v148 = vunpack.c.l.b16 %v59
    %v149 = vunpack.c.h.b16 %v59
    %v150 = vunpack.c.l.b16 %v60
    %v151 = vunpack.c.h.b16 %v60
    %v152 = vunpack.c.l.b16 %v61
    %v153 = vunpack.c.h.b16 %v61
    %v154 = vunpack.c.l.b16 %v62
    %v155 = vunpack.c.h.b16 %v62
    %v156 = vunpack.c.l.b16 %v63
    %v157 = vunpack.c.h.b16 %v63
    %v158 = vunpack.c.l.b16 %v64
    %v159 = vunpack.c.h.b16 %v64
    %v160 = vunpack.c.l.b16 %v65
    %v161 = vunpack.c.h.b16 %v65
    %v162 = vunpack.c.l.b16 %v66
    %v163 = vunpack.c.h.b16 %v66
    %v164 = vunpack.c.l.b16 %v67
    %v165 = vunpack.c.h.b16 %v67
    %v166 = vunpack.c.l.b16 %v68
    %v167 = vunpack.c.h.b16 %v68
    %v168 = vunpack.c.l.b16 %v69
    %v169 = vunpack.c.h.b16 %v69
    %v170 = vunpack.c.l.b16 %v70
    %v171 = vunpack.c.h.b16 %v70
    %v172 = vunpack.c.l.b16 %v71
    %v173 = vunpack.c.h.b16 %v71
    %v174 = vunpack.c.l.b16 %v72
    %v175 = vunpack.c.h.b16 %v72
    %v176 = vunpack.c.l.b16 %v73
    %v177 = vunpack.c.h.b16 %v73
    %v178 = vunpack.c.l.b16 %v74
    %v179 = vunpack.c.h.b16 %v74
    %v180 = vunpack.c.l.b16 %v75
    %v181 = vunpack.c.h.b16 %v75
    %v182 = vpack.c.b16 %v122, %v118
    %v183 = vpack.c.b16 %v123, %v119
    %v184 = vpack.c.b16 %v124, %v120
    %v185 = vpack.c.b16 %v125, %v121
    %v186 = vpack.c.b16 %v130, %v126
    %v187 = vpack.c.b16 %v131, %v127
    %v188 = vpack.c.b16 %v132, %v128
    %v189 = vpack.c.b16 %v133, %v129
    %v190 = vpack.c.b16 %v138, %v134
    %v191 = vpack.c.b16 %v139, %v135
    %v192 = vpack.c.b16 %v140, %v136
    %v193 = vpack.c.b16 %v141, %v137
    %v194 = vpack.c.b16 %v146, %v142
    %v195 = vpack.c.b16 %v147, %v143
    %v196 = vpack.c.b16 %v148, %v144
    %v197 = vpack.c.b16 %v149, %v145
    %v198 = vpack.c.b16 %v154, %v150
    %v199 = vpack.c.b16 %v155, %v151
    %v200 = vpack.c.b16 %v156, %v152
    %v201 = vpack.c.b16 %v157, %v153
    %v202 = vpack.c.b16 %v162, %v158
    %v203 = vpack.c.b16 %v163, %v159
    %v204 = vpack.c.b16 %v164, %v160
    %v205 = vpack.c.b16 %v165, %v161
    %v206 = vpack.c.b16 %v170, %v166
    %v207 = vpack.c.b16 %v171, %v167
    %v208 = vpack.c.b16 %v172, %v168
    %v209 = vpack.c.b16 %v173, %v169
    %v210 = vpack.c.b16 %v178, %v174
    %v211 = vpack.c.b16 %v179, %v175
    %v212 = vpack.c.b16 %v180, %v176
    %v213 = vpack.c.b16 %v181, %v177
    %246 = vmatpush.bf16.msra.mxu0 %v210
    %247 = vmatpush.bf16.msra.mxu0 %v206
    %248 = vmatpush.bf16.msra.mxu0 %v202
    %249 = vmatpush.bf16.msra.mxu0 %v198
    %250 = vmatpush.bf16.msra.mxu0 %v194
    %251 = vmatpush.bf16.msra.mxu0 %v190
    %252 = vmatpush.bf16.msra.mxu0 %v186
    %253 = vmatpush.bf16.msra.mxu0 %v182
    %254 = vmatmul.bf16.gmra.mxu0 %v43
    %v255 = vpop.f32.mrf.mxu0
    %v256 = vadd.f32 %v78, %v255
    %v257 = vpop.f32.mrf.mxu0
    %258 = vdwg.mxu0
    %259 = vmatpush.bf16.msra.mxu0 %v211
    %260 = vmatpush.bf16.msra.mxu0 %v207
    %261 = vmatpush.bf16.msra.mxu0 %v203
    %262 = vmatpush.bf16.msra.mxu0 %v199
    %263 = vmatpush.bf16.msra.mxu0 %v195
    %264 = vmatpush.bf16.msra.mxu0 %v191
    %265 = vmatpush.bf16.msra.mxu0 %v187
    %266 = vmatpush.bf16.msra.mxu0 %v183
    %267 = vmatmul.bf16.gmra.mxu0 %v43
    %v268 = vpop.f32.mrf.mxu0
    %v269 = vadd.f32 %v79, %v268
    %v270 = vpop.f32.mrf.mxu0
    %271 = vdwg.mxu0
    %272 = vmatpush.bf16.msra.mxu0 %v212
    %273 = vmatpush.bf16.msra.mxu0 %v208
    %274 = vmatpush.bf16.msra.mxu0 %v204
    %275 = vmatpush.bf16.msra.mxu0 %v200
    %276 = vmatpush.bf16.msra.mxu0 %v196
    %277 = vmatpush.bf16.msra.mxu0 %v192
    %278 = vmatpush.bf16.msra.mxu0 %v188
    %279 = vmatpush.bf16.msra.mxu0 %v184
    %280 = vmatmul.bf16.gmra.mxu0 %v43
    %v281 = vpop.f32.mrf.mxu0
    %v282 = vadd.f32 %v80, %v281
    %v283 = vpop.f32.mrf.mxu0
    %284 = vdwg.mxu0
    %285 = vmatpush.bf16.msra.mxu0 %v213
    %286 = vmatpush.bf16.msra.mxu0 %v209
    %287 = vmatpush.bf16.msra.mxu0 %v205
    %288 = vmatpush.bf16.msra.mxu0 %v201
    %289 = vmatpush.bf16.msra.mxu0 %v197
    %290 = vmatpush.bf16.msra.mxu0 %v193
    %291 = vmatpush.bf16.msra.mxu0 %v189
    %292 = vmatpush.bf16.msra.mxu0 %v185
    %293 = vmatmul.bf16.gmra.mxu0 %v43
    %v294 = vpop.f32.mrf.mxu0
    %v295 = vadd.f32 %v81, %v294
    %v296 = vpop.f32.mrf.mxu0
    %297 = vdwg.mxu0
    %vm298 = vcmask 1041408
    %v299 = vsel %vm298, %v256, 0.0
    %v300 = vrot.slane %v299, 4
    %v301 = vadd.f32 %v299, %v300
    %v302 = vrot.slane %v301, 2
    %v303 = vadd.f32 %v301, %v302
    %v304 = vrot.slane %v303, 1
    %v305 = vadd.f32 %v303, %v304
    %v306 = vsel %vm298, %v269, 0.0
    %v307 = vrot.slane %v306, 4
    %v308 = vadd.f32 %v306, %v307
    %v309 = vrot.slane %v308, 2
    %v310 = vadd.f32 %v308, %v309
    %v311 = vrot.slane %v310, 1
    %v312 = vadd.f32 %v310, %v311
    %v313 = vsel %vm298, %v282, 0.0
    %v314 = vrot.slane %v313, 4
    %v315 = vadd.f32 %v313, %v314
    %v316 = vrot.slane %v315, 2
    %v317 = vadd.f32 %v315, %v316
    %v318 = vrot.slane %v317, 1
    %v319 = vadd.f32 %v317, %v318
    %v320 = vsel %vm298, %v295, 0.0
    %v321 = vrot.slane %v320, 4
    %v322 = vadd.f32 %v320, %v321
    %v323 = vrot.slane %v322, 2
    %v324 = vadd.f32 %v322, %v323
    %v325 = vrot.slane %v324, 1
    %v326 = vadd.f32 %v324, %v325
    %v327 = vrcp.pop 2.0
    %v328 = vmul.f32 2.0, %v327
    %v329 = vsub.f32 1.0, %v328
    %v330 = vmul.f32 %v327, %v329
    %v331 = vadd.f32 %v327, %v330
    %vm332 = vweird.f32 %v327
    %v333 = vsel %vm332, %v327, %v331
    %v334 = vmul.f32 %v305, %v333
    %v335 = vmul.f32 %v312, %v333
    %v336 = vmul.f32 %v319, %v333
    %v337 = vmul.f32 %v326, %v333
    %v338 = vsub.f32 %v256, %v334
    %v339 = vsub.f32 %v269, %v335
    %v340 = vsub.f32 %v282, %v336
    %v341 = vsub.f32 %v295, %v337
    %v342 = vmul.f32 %v338, %v338
    %v343 = vmul.f32 %v339, %v339
    %v344 = vmul.f32 %v340, %v340
    %v345 = vmul.f32 %v341, %v341
    %v346 = vsel %vm298, %v342, 0.0
    %v347 = vrot.slane %v346, 4
    %v348 = vadd.f32 %v346, %v347
    %v349 = vrot.slane %v348, 2
    %v350 = vadd.f32 %v348, %v349
    %v351 = vrot.slane %v350, 1
    %v352 = vadd.f32 %v350, %v351
    %v353 = vsel %vm298, %v343, 0.0
    %v354 = vrot.slane %v353, 4
    %v355 = vadd.f32 %v353, %v354
    %v356 = vrot.slane %v355, 2
    %v357 = vadd.f32 %v355, %v356
    %v358 = vrot.slane %v357, 1
    %v359 = vadd.f32 %v357, %v358
    %v360 = vsel %vm298, %v344, 0.0
    %v361 = vrot.slane %v360, 4
    %v362 = vadd.f32 %v360, %v361
    %v363 = vrot.slane %v362, 2
    %v364 = vadd.f32 %v362, %v363
    %v365 = vrot.slane %v364, 1
    %v366 = vadd.f32 %v364, %v365
    %v367 = vsel %vm298, %v345, 0.0
    %v368 = vrot.slane %v367, 4
    %v369 = vadd.f32 %v367, %v368
    %v370 = vrot.slane %v369, 2
    %v371 = vadd.f32 %v369, %v370
    %v372 = vrot.slane %v371, 1
    %v373 = vadd.f32 %v371, %v372
    %v374 = vmul.f32 %v352, %v333
    %v375 = vmul.f32 %v359, %v333
    %v376 = vmul.f32 %v366, %v333
    %v377 = vmul.f32 %v373, %v333
    %v378 = vadd.f32 %v374, 1e-05
    %v379 = vadd.f32 %v375, 1e-05
    %v380 = vadd.f32 %v376, 1e-05
    %v381 = vadd.f32 %v377, 1e-05
    %v382 = vrsqrt.pop %v378
    %v383 = vmul.f32 %v382, %v378
    %v384 = vmul.f32 %v383, %v382
    %v385 = vmul.f32 0.5, %v384
    %v386 = vsub.f32 1.5, %v385
    %v387 = vmul.f32 %v382, %v386
    %vm388 = vweird.f32 %v378
    %vm389 = vweird.f32 %v382
    %vm390 = vmor %vm388, %vm389
    %v391 = vsel %vm390, %v382, %v387
    %v392 = vrsqrt.pop %v379
    %v393 = vmul.f32 %v392, %v379
    %v394 = vmul.f32 %v393, %v392
    %v395 = vmul.f32 0.5, %v394
    %v396 = vsub.f32 1.5, %v395
    %v397 = vmul.f32 %v392, %v396
    %vm398 = vweird.f32 %v379
    %vm399 = vweird.f32 %v392
    %vm400 = vmor %vm398, %vm399
    %v401 = vsel %vm400, %v392, %v397
    %v402 = vrsqrt.pop %v380
    %v403 = vmul.f32 %v402, %v380
    %v404 = vmul.f32 %v403, %v402
    %v405 = vmul.f32 0.5, %v404
    %v406 = vsub.f32 1.5, %v405
    %v407 = vmul.f32 %v402, %v406
    %vm408 = vweird.f32 %v380
    %vm409 = vweird.f32 %v402
    %vm410 = vmor %vm408, %vm409
    %v411 = vsel %vm410, %v402, %v407
    %v412 = vrsqrt.pop %v381
    %v413 = vmul.f32 %v412, %v381
    %v414 = vmul.f32 %v413, %v412
    %v415 = vmul.f32 0.5, %v414
    %v416 = vsub.f32 1.5, %v415
    %v417 = vmul.f32 %v412, %v416
    %vm418 = vweird.f32 %v381
    %vm419 = vweird.f32 %v412
    %vm420 = vmor %vm418, %vm419
    %v421 = vsel %vm420, %v412, %v417
    %v422 = vmul.f32 %v338, %v391
    %v423 = vmul.f32 %v339, %v401
    %v424 = vmul.f32 %v340, %v411
    %v425 = vmul.f32 %v341, %v421
    %v426 = vld [vmem:[%s3] sm:$0xf]
    %v428 = vperm.slane %v426, 0
    %v429 = vperm.slane %v426, 1
    %v430 = vperm.slane %v426, 2
    %v431 = vperm.slane %v426, 3
    %v436 = vmul.f32 %v422, %v428
    %v437 = vmul.f32 %v423, %v429
    %v438 = vmul.f32 %v424, %v430
    %v439 = vmul.f32 %v425, %v431
    %v440 = vld [vmem:[%s4] sm:$0xf]
    %v442 = vperm.slane %v440, 0
    %v443 = vperm.slane %v440, 1
    %v444 = vperm.slane %v440, 2
    %v445 = vperm.slane %v440, 3
    %v450 = vadd.f32 %v436, %v442
    %v451 = vadd.f32 %v437, %v443
    %v452 = vadd.f32 %v438, %v444
    %v453 = vadd.f32 %v439, %v445
    %v454 = vmax.f32 %v450, 0.0
    %v455 = vmax.f32 %v451, 0.0
    %v456 = vmax.f32 %v452, 0.0
    %v457 = vmax.f32 %v453, 0.0
    %v458 = vpack.c.bf16 %v454, %v454
    %v459 = vpack.c.bf16 %v455, %v455
    %v460 = vpack.c.bf16 %v456, %v456
    %v461 = vpack.c.bf16 %v457, %v457
    %v462 = vld [vmem:[#allocation2] sm:$0xf]
    %v463 = vld [vmem:[#allocation2 + $0x4] sm:$0xf]
    %v464 = vld [vmem:[#allocation2 + $0x8] sm:$0xf]
    %v465 = vld [vmem:[#allocation2 + $0xc] sm:$0xf]
    %v466 = vld [vmem:[#allocation2 + $0x10] sm:$0xf]
    %v467 = vld [vmem:[#allocation2 + $0x14] sm:$0xf]
    %v468 = vld [vmem:[#allocation2 + $0x18] sm:$0xf]
    %v469 = vld [vmem:[#allocation2 + $0x1c] sm:$0xf]
    %v470 = vld [vmem:[#allocation2 + $0x20] sm:$0xf]
    %v471 = vld [vmem:[#allocation2 + $0x24] sm:$0xf]
    %v472 = vld [vmem:[#allocation2 + $0x28] sm:$0xf]
    %v473 = vld [vmem:[#allocation2 + $0x2c] sm:$0xf]
    %v474 = vld [vmem:[#allocation2 + $0x30] sm:$0xf]
    %v475 = vld [vmem:[#allocation2 + $0x34] sm:$0xf]
    %v476 = vld [vmem:[#allocation2 + $0x38] sm:$0xf]
    %v477 = vld [vmem:[#allocation2 + $0x3c] sm:$0xf]
    %v478 = vld [vmem:[#allocation2 + $0x40] sm:$0xf]
    %v479 = vld [vmem:[#allocation2 + $0x44] sm:$0xf]
    %v480 = vld [vmem:[#allocation2 + $0x48] sm:$0xf]
    %v481 = vld [vmem:[#allocation2 + $0x4c] sm:$0xf]
    %v482 = vld [vmem:[#allocation2 + $0x50] sm:$0xf]
    %v483 = vld [vmem:[#allocation2 + $0x54] sm:$0xf]
    %v484 = vld [vmem:[#allocation2 + $0x58] sm:$0xf]
    %v485 = vld [vmem:[#allocation2 + $0x5c] sm:$0xf]
    %v486 = vld [vmem:[#allocation2 + $0x60] sm:$0xf]
    %v487 = vld [vmem:[#allocation2 + $0x64] sm:$0xf]
    %v488 = vld [vmem:[#allocation2 + $0x68] sm:$0xf]
    %v489 = vld [vmem:[#allocation2 + $0x6c] sm:$0xf]
    %v490 = vld [vmem:[#allocation2 + $0x70] sm:$0xf]
    %v491 = vld [vmem:[#allocation2 + $0x74] sm:$0xf]
    %v492 = vld [vmem:[#allocation2 + $0x78] sm:$0xf]
    %v493 = vld [vmem:[#allocation2 + $0x7c] sm:$0xf]
    %v494 = vld [vmem:[#allocation2 + $0x80] sm:$0xf]
    %v495 = vld [vmem:[#allocation2 + $0x84] sm:$0xf]
    %v496 = vld [vmem:[#allocation2 + $0x88] sm:$0xf]
    %v497 = vld [vmem:[#allocation2 + $0x8c] sm:$0xf]
    %v498 = vld [vmem:[#allocation2 + $0x90] sm:$0xf]
    %v499 = vld [vmem:[#allocation2 + $0x94] sm:$0xf]
    %v500 = vld [vmem:[#allocation2 + $0x98] sm:$0xf]
    %v501 = vld [vmem:[#allocation2 + $0x9c] sm:$0xf]
    %v502 = vld [vmem:[#allocation2 + $0xa0] sm:$0xf]
    %v503 = vld [vmem:[#allocation2 + $0xa4] sm:$0xf]
    %v504 = vld [vmem:[#allocation2 + $0xa8] sm:$0xf]
    %v505 = vld [vmem:[#allocation2 + $0xac] sm:$0xf]
    %v506 = vld [vmem:[#allocation2 + $0xb0] sm:$0xf]
    %v507 = vld [vmem:[#allocation2 + $0xb4] sm:$0xf]
    %v508 = vld [vmem:[#allocation2 + $0xb8] sm:$0xf]
    %v509 = vld [vmem:[#allocation2 + $0xbc] sm:$0xf]
    %v510 = vld [vmem:[#allocation2 + $0xc0] sm:$0xf]
    %v511 = vld [vmem:[#allocation2 + $0xc4] sm:$0xf]
    %v512 = vld [vmem:[#allocation2 + $0xc8] sm:$0xf]
    %v513 = vld [vmem:[#allocation2 + $0xcc] sm:$0xf]
    %v514 = vld [vmem:[#allocation2 + $0xd0] sm:$0xf]
    %v515 = vld [vmem:[#allocation2 + $0xd4] sm:$0xf]
    %v516 = vld [vmem:[#allocation2 + $0xd8] sm:$0xf]
    %v517 = vld [vmem:[#allocation2 + $0xdc] sm:$0xf]
    %v518 = vld [vmem:[#allocation2 + $0xe0] sm:$0xf]
    %v519 = vld [vmem:[#allocation2 + $0xe4] sm:$0xf]
    %v520 = vld [vmem:[#allocation2 + $0xe8] sm:$0xf]
    %v521 = vld [vmem:[#allocation2 + $0xec] sm:$0xf]
    %v522 = vld [vmem:[#allocation2 + $0xf0] sm:$0xf]
    %v523 = vld [vmem:[#allocation2 + $0xf4] sm:$0xf]
    %v524 = vld [vmem:[#allocation2 + $0xf8] sm:$0xf]
    %v525 = vld [vmem:[#allocation2 + $0xfc] sm:$0xf]
    %v526 = vld [vmem:[%s6] sm:$0x1]
    %v528 = vperm.slane %v526, 0
    %v594 = vunpack.c.l.b16 %v462
    %v595 = vunpack.c.l.b16 %v463
    %v596 = vunpack.c.l.b16 %v464
    %v597 = vunpack.c.l.b16 %v465
    %v598 = vunpack.c.l.b16 %v466
    %v599 = vunpack.c.l.b16 %v467
    %v600 = vunpack.c.l.b16 %v468
    %v601 = vunpack.c.l.b16 %v469
    %v602 = vunpack.c.l.b16 %v470
    %v603 = vunpack.c.l.b16 %v471
    %v604 = vunpack.c.l.b16 %v472
    %v605 = vunpack.c.l.b16 %v473
    %v606 = vunpack.c.l.b16 %v474
    %v607 = vunpack.c.l.b16 %v475
    %v608 = vunpack.c.l.b16 %v476
    %v609 = vunpack.c.l.b16 %v477
    %v610 = vunpack.c.l.b16 %v478
    %v611 = vunpack.c.l.b16 %v479
    %v612 = vunpack.c.l.b16 %v480
    %v613 = vunpack.c.l.b16 %v481
    %v614 = vunpack.c.l.b16 %v482
    %v615 = vunpack.c.l.b16 %v483
    %v616 = vunpack.c.l.b16 %v484
    %v617 = vunpack.c.l.b16 %v485
    %v618 = vunpack.c.l.b16 %v486
    %v619 = vunpack.c.l.b16 %v487
    %v620 = vunpack.c.l.b16 %v488
    %v621 = vunpack.c.l.b16 %v489
    %v622 = vunpack.c.l.b16 %v490
    %v623 = vunpack.c.l.b16 %v491
    %v624 = vunpack.c.l.b16 %v492
    %v625 = vunpack.c.l.b16 %v493
    %v626 = vunpack.c.l.b16 %v494
    %v627 = vunpack.c.l.b16 %v495
    %v628 = vunpack.c.l.b16 %v496
    %v629 = vunpack.c.l.b16 %v497
    %v630 = vunpack.c.l.b16 %v498
    %v631 = vunpack.c.l.b16 %v499
    %v632 = vunpack.c.l.b16 %v500
    %v633 = vunpack.c.l.b16 %v501
    %v634 = vunpack.c.l.b16 %v502
    %v635 = vunpack.c.l.b16 %v503
    %v636 = vunpack.c.l.b16 %v504
    %v637 = vunpack.c.l.b16 %v505
    %v638 = vunpack.c.l.b16 %v506
    %v639 = vunpack.c.l.b16 %v507
    %v640 = vunpack.c.l.b16 %v508
    %v641 = vunpack.c.l.b16 %v509
    %v642 = vunpack.c.l.b16 %v510
    %v643 = vunpack.c.l.b16 %v511
    %v644 = vunpack.c.l.b16 %v512
    %v645 = vunpack.c.l.b16 %v513
    %v646 = vunpack.c.l.b16 %v514
    %v647 = vunpack.c.l.b16 %v515
    %v648 = vunpack.c.l.b16 %v516
    %v649 = vunpack.c.l.b16 %v517
    %v650 = vunpack.c.l.b16 %v518
    %v651 = vunpack.c.l.b16 %v519
    %v652 = vunpack.c.l.b16 %v520
    %v653 = vunpack.c.l.b16 %v521
    %v654 = vunpack.c.l.b16 %v522
    %v655 = vunpack.c.l.b16 %v523
    %v656 = vunpack.c.l.b16 %v524
    %v657 = vunpack.c.l.b16 %v525
    %v658 = vpack.c.b16 %v595, %v594
    %v659 = vpack.c.b16 %v597, %v596
    %v660 = vpack.c.b16 %v599, %v598
    %v661 = vpack.c.b16 %v601, %v600
    %v662 = vpack.c.b16 %v603, %v602
    %v663 = vpack.c.b16 %v605, %v604
    %v664 = vpack.c.b16 %v607, %v606
    %v665 = vpack.c.b16 %v609, %v608
    %v666 = vpack.c.b16 %v611, %v610
    %v667 = vpack.c.b16 %v613, %v612
    %v668 = vpack.c.b16 %v615, %v614
    %v669 = vpack.c.b16 %v617, %v616
    %v670 = vpack.c.b16 %v619, %v618
    %v671 = vpack.c.b16 %v621, %v620
    %v672 = vpack.c.b16 %v623, %v622
    %v673 = vpack.c.b16 %v625, %v624
    %v674 = vpack.c.b16 %v627, %v626
    %v675 = vpack.c.b16 %v629, %v628
    %v676 = vpack.c.b16 %v631, %v630
    %v677 = vpack.c.b16 %v633, %v632
    %v678 = vpack.c.b16 %v635, %v634
    %v679 = vpack.c.b16 %v637, %v636
    %v680 = vpack.c.b16 %v639, %v638
    %v681 = vpack.c.b16 %v641, %v640
    %v682 = vpack.c.b16 %v643, %v642
    %v683 = vpack.c.b16 %v645, %v644
    %v684 = vpack.c.b16 %v647, %v646
    %v685 = vpack.c.b16 %v649, %v648
    %v686 = vpack.c.b16 %v651, %v650
    %v687 = vpack.c.b16 %v653, %v652
    %v688 = vpack.c.b16 %v655, %v654
    %v689 = vpack.c.b16 %v657, %v656
    %722 = vmatpush.bf16.msra.mxu0 %v665
    %723 = vmatpush.bf16.msra.mxu0 %v664
    %724 = vmatpush.bf16.msra.mxu0 %v663
    %725 = vmatpush.bf16.msra.mxu0 %v662
    %726 = vmatpush.bf16.msra.mxu0 %v661
    %727 = vmatpush.bf16.msra.mxu0 %v660
    %728 = vmatpush.bf16.msra.mxu0 %v659
    %729 = vmatpush.bf16.msra.mxu0 %v658
    %730 = vmatmul.bf16.gmra.mxu0 %v458
    %v731 = vpop.f32.mrf.mxu0
    %v732 = vadd.f32 %v528, %v731
    %v733 = vpop.f32.mrf.mxu0
    %734 = vdwg.mxu0
    %735 = vmatpush.bf16.msra.mxu0 %v673
    %736 = vmatpush.bf16.msra.mxu0 %v672
    %737 = vmatpush.bf16.msra.mxu0 %v671
    %738 = vmatpush.bf16.msra.mxu0 %v670
    %739 = vmatpush.bf16.msra.mxu0 %v669
    %740 = vmatpush.bf16.msra.mxu0 %v668
    %741 = vmatpush.bf16.msra.mxu0 %v667
    %742 = vmatpush.bf16.msra.mxu0 %v666
    %743 = vmatmul.bf16.gmra.mxu0 %v459
    %v744 = vpop.f32.mrf.mxu0
    %v745 = vadd.f32 %v732, %v744
    %v746 = vpop.f32.mrf.mxu0
    %747 = vdwg.mxu0
    %748 = vmatpush.bf16.msra.mxu0 %v681
    %749 = vmatpush.bf16.msra.mxu0 %v680
    %750 = vmatpush.bf16.msra.mxu0 %v679
    %751 = vmatpush.bf16.msra.mxu0 %v678
    %752 = vmatpush.bf16.msra.mxu0 %v677
    %753 = vmatpush.bf16.msra.mxu0 %v676
    %754 = vmatpush.bf16.msra.mxu0 %v675
    %755 = vmatpush.bf16.msra.mxu0 %v674
    %756 = vmatmul.bf16.gmra.mxu0 %v460
    %v757 = vpop.f32.mrf.mxu0
    %v758 = vadd.f32 %v745, %v757
    %v759 = vpop.f32.mrf.mxu0
    %760 = vdwg.mxu0
    %761 = vmatpush.bf16.msra.mxu0 %v689
    %762 = vmatpush.bf16.msra.mxu0 %v688
    %763 = vmatpush.bf16.msra.mxu0 %v687
    %764 = vmatpush.bf16.msra.mxu0 %v686
    %765 = vmatpush.bf16.msra.mxu0 %v685
    %766 = vmatpush.bf16.msra.mxu0 %v684
    %767 = vmatpush.bf16.msra.mxu0 %v683
    %768 = vmatpush.bf16.msra.mxu0 %v682
    %769 = vmatmul.bf16.gmra.mxu0 %v461
    %v770 = vpop.f32.mrf.mxu0
    %v771 = vadd.f32 %v758, %v770
    %v772 = vpop.f32.mrf.mxu0
    %773 = vdwg.mxu0
    %774 = vst [vmem:[#allocation5] sm:$0x3] %v771
    // Predicated region
    $region34: #{masked_vgg_forward.17} parent=1 // pred_check
      _
    $region35: #{masked_vgg_forward.17} parent=1 // pred_check_branch
      %776 = sbr.rel (0) target = $region37
    $region36: #{masked_vgg_forward.17} parent=1 // pred_region
      %778 = vsyncadd [#allocation4], 0
      %s780 = sshll.u32 [#allocation5], 4
      %s781 = int_to_ptr.vmem [resolvable:$true] %s780
      %s782 = sshll.u32 %s7, 4
      %s783 = int_to_ptr.hbm [resolvable:$true] %s782
      %785 = dma.vmem_to_hbm [thread:$0]  %s781, 32, %s783, [#allocation4]
    $region37: #{masked_vgg_forward.17} parent=1 // pred_fallthru
      _
    // Predicated region
    $region38: #{masked_vgg_forward.17} parent=1 // pred_check
      _
    $region39: #{masked_vgg_forward.17} parent=1 // pred_check_branch
      %787 = sbr.rel (0) target = $region41
    $region40: #{masked_vgg_forward.17} parent=1 // pred_region
      %789 = dma.done [#allocation4], 32
    $region41: #{masked_vgg_forward.17} parent=1 // pred_fallthru
      _
    %790 = vsyncpa [#allocation3], 1
    %791 = vsyncpa [#allocation4], 1

</llo_original>
